<compile_context>
chip_gen: v7x
topology: tpu7x:2x2x1
jax: 0.10.0
libtpu: 0.0.40
codegen_flags: <defaults>
</compile_context>

<pallas_src>
import functools

import jax
import jax.numpy as jnp
from jax import lax
from jax.experimental import pallas as pl
from jax.experimental.pallas import tpu as pltpu


def _silu(a):
    # silu(a) = a * sigmoid(a) = 0.5 * a * (tanh(a/2) + 1)  -> one EUP op.
    return (0.5 * a) * (jnp.tanh(0.5 * a) + 1.0)


# ----------------------------------------------------------------------------
# Fused ResNetBlock kernel (one grid step == BB images of the batch)
# ----------------------------------------------------------------------------
def _resnet_block_kernel(x_ref, w1sc_ref, b1sc_ref, w2_ref, b2_ref,
                         w3_ref, b3_ref, o_ref, h1pad_ref,
                         *, H, W, C2, C3, has_shortcut_conv):
    BB = x_ref.shape[0]
    C1 = x_ref.shape[-1]
    M = BB * H * W

    xm = x_ref[...].reshape(M, C1)                       # rows = pixels, bf16

    # ---- cv1 (1x1+BN+SiLU) and shortcut (1x1+BN) fused into ONE matmul ----
    a = jnp.dot(xm, w1sc_ref[...], preferred_element_type=jnp.float32)
    a = a + b1sc_ref[...]
    if has_shortcut_conv:
        sc = a[:, :C3]                                   # lane-aligned split
        a1 = a[:, C3:]
    else:
        a1 = a
        sc = xm.astype(jnp.float32)                      # identity shortcut
    h1 = _silu(a1)

    # ---- stage h1 into the zero-padded VMEM scratch ------------------------
    # Zero ONLY the 1-pixel border every step (interior is fully overwritten).
    # Not gated on program_id: safe when the grid is split across TensorCores.
    zrow = jnp.zeros((BB, 1, W + 2, C2), h1pad_ref.dtype)
    h1pad_ref[:, 0:1, :, :] = zrow
    h1pad_ref[:, H + 1:H + 2, :, :] = zrow
    zcol = jnp.zeros((BB, H + 2, 1, C2), h1pad_ref.dtype)
    h1pad_ref[:, :, 0:1, :] = zcol
    h1pad_ref[:, :, W + 1:W + 2, :] = zcol
    h1pad_ref[:, 1:1 + H, 1:1 + W, :] = (
        h1.reshape(BB, H, W, C2).astype(h1pad_ref.dtype))

    # ---- cv2: 3x3 conv as 9 accumulating tap matmuls (no im2col buffer) ---
    a2 = jnp.zeros((M, C2), jnp.float32)
    for t in range(9):                                   # static, unrolled
        kh, kw = t // 3, t % 3
        tap = h1pad_ref[:, kh:kh + H, kw:kw + W, :].reshape(M, C2)
        a2 = a2 + jnp.dot(tap, w2_ref[t * C2:(t + 1) * C2, :],
                          preferred_element_type=jnp.float32)
    a2 = a2 + b2_ref[...]
    h2 = _silu(a2).astype(jnp.bfloat16)

    # ---- cv3: 1x1 conv (+BN), no activation --------------------------------
    a3 = jnp.dot(h2, w3_ref[...], preferred_element_type=jnp.float32)
    a3 = a3 + b3_ref[...]

    out = jnp.maximum(a3 + sc, 0.0)                      # residual + ReLU, f32
    o_ref[...] = out.reshape(BB, H, W, C3).astype(o_ref.dtype)


def _pick_batch_tile(n):
    for cand in (4, 2):
        if n % cand == 0:
            return cand
    return 1


# ----------------------------------------------------------------------------
# Wrapper: NCHW in / NCHW out (matches the PyTorch module); bf16 output.
# ----------------------------------------------------------------------------
def resnet_block_forward(x_nchw, params):
    if params["s"] != 1:
        # TODO(synk): strided (s > 1) cv2/shortcut not implemented in the kernel.
        raise NotImplementedError("stride != 1 not supported")

    x = jnp.transpose(x_nchw, (0, 2, 3, 1)).astype(jnp.bfloat16)   # NHWC bf16
    N, H, W, C1 = x.shape
    C2, C3 = params["c2"], params["c3"]
    has_sc = params["shortcut"] is not None

    # Fuse cv1 + shortcut weights (shared LHS): [Wsc | W1] so the kernel-side
    # split is at the lane-aligned C3 boundary.
    w1, b1 = params["cv1"]["w"], params["cv1"]["b"]
    if has_sc:
        wsc, bsc = params["shortcut"]["w"], params["shortcut"]["b"]
        w1sc = jnp.concatenate([wsc, w1], axis=1)        # (C1, C3 + C2) bf16
        b1sc = jnp.concatenate([bsc, b1], axis=1)        # (1,  C3 + C2) f32
        Cf = C3 + C2
    else:
        w1sc, b1sc, Cf = w1, b1, C2

    BB = _pick_batch_tile(N)                             # images per grid step

    kernel = functools.partial(_resnet_block_kernel, H=H, W=W, C2=C2, C3=C3,
                               has_shortcut_conv=has_sc)

    out = pl.pallas_call(
        kernel,
        out_shape=jax.ShapeDtypeStruct((N, H, W, C3), jnp.bfloat16),
        grid_spec=pltpu.PrefetchScalarGridSpec(
            num_scalar_prefetch=0,
            grid=(N // BB,),
            in_specs=[
                pl.BlockSpec((BB, H, W, C1), lambda b: (b, 0, 0, 0)),  # x
                pl.BlockSpec((C1, Cf), lambda b: (0, 0)),              # [Wsc|W1]
                pl.BlockSpec((1, Cf), lambda b: (0, 0)),               # [bsc|b1]
                pl.BlockSpec((9 * C2, C2), lambda b: (0, 0)),          # W2 (taps in K)
                pl.BlockSpec((1, C2), lambda b: (0, 0)),               # b2
                pl.BlockSpec((C2, C3), lambda b: (0, 0)),              # W3
                pl.BlockSpec((1, C3), lambda b: (0, 0)),               # b3
            ],
            out_specs=pl.BlockSpec((BB, H, W, C3), lambda b: (b, 0, 0, 0)),
            scratch_shapes=[
                pltpu.VMEM((BB, H + 2, W + 2, C2), jnp.bfloat16),  # padded h1
            ],
        ),
        compiler_params=pltpu.CompilerParams(
            dimension_semantics=("parallel",)),          # batch axis: megacore
    )(x, w1sc, b1sc,
      params["cv2"]["w"], params["cv2"]["b"],
      params["cv3"]["w"], params["cv3"]["b"])

    return jnp.transpose(out, (0, 3, 1, 2))              # NCHW, bf16


# ----------------------------------------------------------------------------
# Parameter construction: Conv2d(bias=False) + BatchNorm2d(eps=1e-3) folded.
# Weights stored as (k*k*Cin, Cout) bf16, tap-major (kh, kw, cin) to match the
# in-kernel tap ordering.  Bias stays f32.
# ----------------------------------------------------------------------------
def make_conv_params(key, cin, cout, k):
    k1, k2, k3, k4, k5 = jax.random.split(key, 5)
    w = jax.random.normal(k1, (cout, cin, k, k), jnp.float32) * 0.1   # OIHW
    gamma = jax.random.uniform(k2, (cout,), minval=0.5, maxval=1.5)
    beta = jax.random.normal(k3, (cout,), jnp.float32) * 0.1
    mean = jax.random.normal(k4, (cout,), jnp.float32) * 0.1
    var = jax.random.uniform(k5, (cout,), minval=0.5, maxval=1.5)
    eps = 1e-3
    scale = gamma / jnp.sqrt(var + eps)
    w_eff = w * scale[:, None, None, None]
    b_eff = beta - mean * scale
    w_mat = jnp.transpose(w_eff, (2, 3, 1, 0)).reshape(k * k * cin, cout)
    return {"w": w_mat.astype(jnp.bfloat16), "b": b_eff.reshape(1, cout),
            "k": k, "cin": cin, "cout": cout}


def make_resnet_block_params(key, c1, c2, s=1, e=4):
    c3 = e * c2
    k1, k2, k3, k4 = jax.random.split(key, 4)
    return {
        "c1": c1, "c2": c2, "c3": c3, "s": s,
        "cv1": make_conv_params(k1, c1, c2, 1),
        "cv2": make_conv_params(k2, c2, c2, 3),
        "cv3": make_conv_params(k3, c2, c3, 1),
        "shortcut": (make_conv_params(k4, c1, c3, 1)
                     if (s != 1 or c1 != c3) else None),
    }


# ----------------------------------------------------------------------------
# Pure-JAX reference (lax.conv) with the same bf16 rounding of weights,
# inter-layer activations and the final output as the kernel.
# ----------------------------------------------------------------------------
def _ref_conv(x_nhwc_f32, p, act):
    k, cin, cout = p["k"], p["cin"], p["cout"]
    w = p["w"].astype(jnp.float32).reshape(k, k, cin, cout)   # HWIO
    pad = (k - 1) // 2
    y = lax.conv_general_dilated(
        x_nhwc_f32, w, (1, 1), [(pad, pad), (pad, pad)],
        dimension_numbers=("NHWC", "HWIO", "NHWC"))
    y = y + p["b"].reshape(1, 1, 1, -1)
    return jax.nn.silu(y) if act else y


def resnet_block_reference(x_nchw, params):
    x = jnp.transpose(x_nchw, (0, 2, 3, 1)).astype(jnp.bfloat16).astype(jnp.float32)
    h = _ref_conv(x, params["cv1"], act=True)
    h = h.astype(jnp.bfloat16).astype(jnp.float32)
    h = _ref_conv(h, params["cv2"], act=True)
    h = h.astype(jnp.bfloat16).astype(jnp.float32)
    h = _ref_conv(h, params["cv3"], act=False)
    sc = x if params["shortcut"] is None else _ref_conv(x, params["shortcut"], act=False)
    out = jnp.maximum(h + sc, 0.0).astype(jnp.bfloat16)       # kernel emits bf16
    return jnp.transpose(out, (0, 3, 1, 2)).astype(jnp.float32)


if __name__ == "__main__":
    key = jax.random.PRNGKey(0)
    kx, kp = jax.random.split(key)

    # Small shapes: batch=2, c1=16, c2=32, e=4 -> c3=128 (lane-dense output),
    # spatial 16x16, stride 1.  Shortcut conv is exercised (c1 != c3).
    N, C1, H, W = 2, 16, 16, 16
    C2_mid, stride, expansion = 32, 1, 4
    x = jax.random.normal(kx, (N, C1, H, W), jnp.float32)
    params = make_resnet_block_params(kp, C1, C2_mid, s=stride, e=expansion)

    fwd = jax.jit(functools.partial(resnet_block_forward, params=params))
    out = jax.block_until_ready(fwd(x))

    ref = jax.block_until_ready(resnet_block_reference(x, params))
    assert out.shape == (N, expansion * C2_mid, H, W), out.shape
    out_f32 = out.astype(jnp.float32)
    max_err = float(jnp.max(jnp.abs(out_f32 - ref)))
    assert jnp.allclose(out_f32, ref, atol=2e-2, rtol=2e-2), max_err

    print("KERNEL_OK")
</pallas_src>

<mosaic_0001>
module attributes {stable_mosaic.version = 11 : i64} {
  func.func @_resnet_block_kernel(%arg0: i32, %arg1: memref<2x16x16x16xbf16, #tpu.memory_space<vmem>>, %arg2: memref<16x160xbf16, #tpu.memory_space<vmem>>, %arg3: memref<1x160xf32, #tpu.memory_space<vmem>>, %arg4: memref<288x32xbf16, #tpu.memory_space<vmem>>, %arg5: memref<1x32xf32, #tpu.memory_space<vmem>>, %arg6: memref<32x128xbf16, #tpu.memory_space<vmem>>, %arg7: memref<1x128xf32, #tpu.memory_space<vmem>>, %arg8: memref<2x16x16x128xbf16, #tpu.memory_space<vmem>>, %arg9: memref<2x18x18x32xbf16, #tpu.memory_space<vmem>>) attributes {dimension_semantics = [#tpu.dimension_semantics<parallel>], iteration_bounds = array<i64: 1>, scalar_prefetch = 0 : i64, scratch_operands = 1 : i64, tpu.core_type = #tpu.core_type<tc>, window_params = [{transform_indices = @transform_0, window_bounds = array<i64: 2, 16, 16, 16>}, {pipeline_mode = #tpu.pipeline_mode<synchronous>, transform_indices = @transform_1, window_bounds = array<i64: 16, 160>}, {pipeline_mode = #tpu.pipeline_mode<synchronous>, transform_indices = @transform_2, window_bounds = array<i64: 1, 160>}, {pipeline_mode = #tpu.pipeline_mode<synchronous>, transform_indices = @transform_3, window_bounds = array<i64: 288, 32>}, {pipeline_mode = #tpu.pipeline_mode<synchronous>, transform_indices = @transform_4, window_bounds = array<i64: 1, 32>}, {pipeline_mode = #tpu.pipeline_mode<synchronous>, transform_indices = @transform_5, window_bounds = array<i64: 32, 128>}, {pipeline_mode = #tpu.pipeline_mode<synchronous>, transform_indices = @transform_6, window_bounds = array<i64: 1, 128>}, {transform_indices = @transform_7, window_bounds = array<i64: 2, 16, 16, 128>}]} {
    %c0 = arith.constant 0 : index
    %c0_0 = arith.constant 0 : index
    %c0_1 = arith.constant 0 : index
    %c0_2 = arith.constant 0 : index
    %0 = vector.load %arg1[%c0, %c0_0, %c0_1, %c0_2] : memref<2x16x16x16xbf16, #tpu.memory_space<vmem>>, vector<2x16x16x16xbf16>
    %1 = vector.shape_cast %0 : vector<2x16x16x16xbf16> to vector<512x16xbf16>
    %c0_3 = arith.constant 0 : index
    %c0_4 = arith.constant 0 : index
    %2 = vector.load %arg2[%c0_3, %c0_4] : memref<16x160xbf16, #tpu.memory_space<vmem>>, vector<16x160xbf16>
    %cst = arith.constant dense<0.000000e+00> : vector<512x160xf32>
    %3 = tpu.matmul %1, %2, %cst {dimension_numbers = #tpu.dot_dimension_numbers<[1], [0], [0], [1], [0, 0, 1, 1], [], []>} : vector<512x16xbf16>, vector<16x160xbf16>, vector<512x160xf32> -> vector<512x160xf32>
    %c0_5 = arith.constant 0 : index
    %c0_6 = arith.constant 0 : index
    %4 = vector.load %arg3[%c0_5, %c0_6] : memref<1x160xf32, #tpu.memory_space<vmem>>, vector<1x160xf32>
    %5 = vector.broadcast %4 : vector<1x160xf32> to vector<512x160xf32>
    %6 = arith.addf %3, %5 : vector<512x160xf32>
    %7 = vector.extract_strided_slice %6 {offsets = [0, 0], sizes = [512, 128], strides = [1, 1]} : vector<512x160xf32> to vector<512x128xf32>
    %8 = vector.extract_strided_slice %6 {offsets = [0, 128], sizes = [512, 32], strides = [1, 1]} : vector<512x160xf32> to vector<512x32xf32>
    %cst_7 = arith.constant 5.000000e-01 : f32
    %9 = vector.broadcast %cst_7 : f32 to vector<512x32xf32>
    %10 = arith.mulf %9, %8 : vector<512x32xf32>
    %cst_8 = arith.constant 5.000000e-01 : f32
    %11 = vector.broadcast %cst_8 : f32 to vector<512x32xf32>
    %12 = arith.mulf %11, %8 : vector<512x32xf32>
    %13 = math.tanh %12 : vector<512x32xf32>
    %cst_9 = arith.constant 1.000000e+00 : f32
    %14 = vector.broadcast %cst_9 : f32 to vector<512x32xf32>
    %15 = arith.addf %13, %14 : vector<512x32xf32>
    %16 = arith.mulf %10, %15 : vector<512x32xf32>
    %cst_10 = arith.constant 0.000000e+00 : bf16
    %17 = vector.broadcast %cst_10 : bf16 to vector<2x1x18x32xbf16>
    %c0_11 = arith.constant 0 : index
    %c0_12 = arith.constant 0 : index
    %c0_13 = arith.constant 0 : index
    %c0_14 = arith.constant 0 : index
    %18 = vector.load %arg9[%c0_11, %c0_12, %c0_13, %c0_14] : memref<2x18x18x32xbf16, #tpu.memory_space<vmem>>, vector<2x1x18x32xbf16>
    tpu.vector_store %arg9[%c0_11, %c0_12, %c0_13, %c0_14], %17 {strides = array<i32>} : memref<2x18x18x32xbf16, #tpu.memory_space<vmem>>, vector<2x1x18x32xbf16>,
    %c0_15 = arith.constant 0 : index
    %c17 = arith.constant 17 : index
    %c0_16 = arith.constant 0 : index
    %c0_17 = arith.constant 0 : index
    %19 = vector.load %arg9[%c0_15, %c17, %c0_16, %c0_17] : memref<2x18x18x32xbf16, #tpu.memory_space<vmem>>, vector<2x1x18x32xbf16>
    tpu.vector_store %arg9[%c0_15, %c17, %c0_16, %c0_17], %17 {strides = array<i32>} : memref<2x18x18x32xbf16, #tpu.memory_space<vmem>>, vector<2x1x18x32xbf16>,
    %cst_18 = arith.constant 0.000000e+00 : bf16
    %20 = vector.broadcast %cst_18 : bf16 to vector<2x18x1x32xbf16>
    %c0_19 = arith.constant 0 : index
    %c0_20 = arith.constant 0 : index
    %c0_21 = arith.constant 0 : index
    %c0_22 = arith.constant 0 : index
    %21 = vector.load %arg9[%c0_19, %c0_20, %c0_21, %c0_22] : memref<2x18x18x32xbf16, #tpu.memory_space<vmem>>, vector<2x18x1x32xbf16>
    tpu.vector_store %arg9[%c0_19, %c0_20, %c0_21, %c0_22], %20 {strides = array<i32>} : memref<2x18x18x32xbf16, #tpu.memory_space<vmem>>, vector<2x18x1x32xbf16>,
    %c0_23 = arith.constant 0 : index
    %c0_24 = arith.constant 0 : index
    %c17_25 = arith.constant 17 : index
    %c0_26 = arith.constant 0 : index
    %22 = vector.load %arg9[%c0_23, %c0_24, %c17_25, %c0_26] : memref<2x18x18x32xbf16, #tpu.memory_space<vmem>>, vector<2x18x1x32xbf16>
    tpu.vector_store %arg9[%c0_23, %c0_24, %c17_25, %c0_26], %20 {strides = array<i32>} : memref<2x18x18x32xbf16, #tpu.memory_space<vmem>>, vector<2x18x1x32xbf16>,
    %23 = vector.shape_cast %16 : vector<512x32xf32> to vector<2x16x16x32xf32>
    %24 = arith.truncf %23 : vector<2x16x16x32xf32> to vector<2x16x16x32xbf16>
    %c0_27 = arith.constant 0 : index
    %c1 = arith.constant 1 : index
    %c1_28 = arith.constant 1 : index
    %c0_29 = arith.constant 0 : index
    %25 = vector.load %arg9[%c0_27, %c1, %c1_28, %c0_29] : memref<2x18x18x32xbf16, #tpu.memory_space<vmem>>, vector<2x16x16x32xbf16>
    tpu.vector_store %arg9[%c0_27, %c1, %c1_28, %c0_29], %24 {strides = array<i32>} : memref<2x18x18x32xbf16, #tpu.memory_space<vmem>>, vector<2x16x16x32xbf16>,
    %cst_30 = arith.constant 0.000000e+00 : f32
    %26 = vector.broadcast %cst_30 : f32 to vector<512x32xf32>
    %c0_31 = arith.constant 0 : index
    %c0_32 = arith.constant 0 : index
    %c0_33 = arith.constant 0 : index
    %c0_34 = arith.constant 0 : index
    %27 = vector.load %arg9[%c0_31, %c0_32, %c0_33, %c0_34] : memref<2x18x18x32xbf16, #tpu.memory_space<vmem>>, vector<2x16x16x32xbf16>
    %28 = vector.shape_cast %27 : vector<2x16x16x32xbf16> to vector<512x32xbf16>
    %c0_35 = arith.constant 0 : index
    %c0_36 = arith.constant 0 : index
    %29 = vector.load %arg4[%c0_35, %c0_36] : memref<288x32xbf16, #tpu.memory_space<vmem>>, vector<32x32xbf16>
    %cst_37 = arith.constant dense<0.000000e+00> : vector<512x32xf32>
    %30 = tpu.matmul %28, %29, %cst_37 {dimension_numbers = #tpu.dot_dimension_numbers<[1], [0], [0], [1], [0, 0, 1, 1], [], []>} : vector<512x32xbf16>, vector<32x32xbf16>, vector<512x32xf32> -> vector<512x32xf32>
    %31 = arith.addf %26, %30 : vector<512x32xf32>
    %c0_38 = arith.constant 0 : index
    %c0_39 = arith.constant 0 : index
    %c1_40 = arith.constant 1 : index
    %c0_41 = arith.constant 0 : index
    %32 = vector.load %arg9[%c0_38, %c0_39, %c1_40, %c0_41] : memref<2x18x18x32xbf16, #tpu.memory_space<vmem>>, vector<2x16x16x32xbf16>
    %33 = vector.shape_cast %32 : vector<2x16x16x32xbf16> to vector<512x32xbf16>
    %c32 = arith.constant 32 : index
    %c0_42 = arith.constant 0 : index
    %34 = vector.load %arg4[%c32, %c0_42] : memref<288x32xbf16, #tpu.memory_space<vmem>>, vector<32x32xbf16>
    %cst_43 = arith.constant dense<0.000000e+00> : vector<512x32xf32>
    %35 = tpu.matmul %33, %34, %cst_43 {dimension_numbers = #tpu.dot_dimension_numbers<[1], [0], [0], [1], [0, 0, 1, 1], [], []>} : vector<512x32xbf16>, vector<32x32xbf16>, vector<512x32xf32> -> vector<512x32xf32>
    %36 = arith.addf %31, %35 : vector<512x32xf32>
    %c0_44 = arith.constant 0 : index
    %c0_45 = arith.constant 0 : index
    %c2 = arith.constant 2 : index
    %c0_46 = arith.constant 0 : index
    %37 = vector.load %arg9[%c0_44, %c0_45, %c2, %c0_46] : memref<2x18x18x32xbf16, #tpu.memory_space<vmem>>, vector<2x16x16x32xbf16>
    %38 = vector.shape_cast %37 : vector<2x16x16x32xbf16> to vector<512x32xbf16>
    %c64 = arith.constant 64 : index
    %c0_47 = arith.constant 0 : index
    %39 = vector.load %arg4[%c64, %c0_47] : memref<288x32xbf16, #tpu.memory_space<vmem>>, vector<32x32xbf16>
    %cst_48 = arith.constant dense<0.000000e+00> : vector<512x32xf32>
    %40 = tpu.matmul %38, %39, %cst_48 {dimension_numbers = #tpu.dot_dimension_numbers<[1], [0], [0], [1], [0, 0, 1, 1], [], []>} : vector<512x32xbf16>, vector<32x32xbf16>, vector<512x32xf32> -> vector<512x32xf32>
    %41 = arith.addf %36, %40 : vector<512x32xf32>
    %c0_49 = arith.constant 0 : index
    %c1_50 = arith.constant 1 : index
    %c0_51 = arith.constant 0 : index
    %c0_52 = arith.constant 0 : index
    %42 = vector.load %arg9[%c0_49, %c1_50, %c0_51, %c0_52] : memref<2x18x18x32xbf16, #tpu.memory_space<vmem>>, vector<2x16x16x32xbf16>
    %43 = vector.shape_cast %42 : vector<2x16x16x32xbf16> to vector<512x32xbf16>
    %c96 = arith.constant 96 : index
    %c0_53 = arith.constant 0 : index
    %44 = vector.load %arg4[%c96, %c0_53] : memref<288x32xbf16, #tpu.memory_space<vmem>>, vector<32x32xbf16>
    %cst_54 = arith.constant dense<0.000000e+00> : vector<512x32xf32>
    %45 = tpu.matmul %43, %44, %cst_54 {dimension_numbers = #tpu.dot_dimension_numbers<[1], [0], [0], [1], [0, 0, 1, 1], [], []>} : vector<512x32xbf16>, vector<32x32xbf16>, vector<512x32xf32> -> vector<512x32xf32>
    %46 = arith.addf %41, %45 : vector<512x32xf32>
    %c0_55 = arith.constant 0 : index
    %c1_56 = arith.constant 1 : index
    %c1_57 = arith.constant 1 : index
    %c0_58 = arith.constant 0 : index
    %47 = vector.load %arg9[%c0_55, %c1_56, %c1_57, %c0_58] : memref<2x18x18x32xbf16, #tpu.memory_space<vmem>>, vector<2x16x16x32xbf16>
    %48 = vector.shape_cast %47 : vector<2x16x16x32xbf16> to vector<512x32xbf16>
    %c128 = arith.constant 128 : index
    %c0_59 = arith.constant 0 : index
    %49 = vector.load %arg4[%c128, %c0_59] : memref<288x32xbf16, #tpu.memory_space<vmem>>, vector<32x32xbf16>
    %cst_60 = arith.constant dense<0.000000e+00> : vector<512x32xf32>
    %50 = tpu.matmul %48, %49, %cst_60 {dimension_numbers = #tpu.dot_dimension_numbers<[1], [0], [0], [1], [0, 0, 1, 1], [], []>} : vector<512x32xbf16>, vector<32x32xbf16>, vector<512x32xf32> -> vector<512x32xf32>
    %51 = arith.addf %46, %50 : vector<512x32xf32>
    %c0_61 = arith.constant 0 : index
    %c1_62 = arith.constant 1 : index
    %c2_63 = arith.constant 2 : index
    %c0_64 = arith.constant 0 : index
    %52 = vector.load %arg9[%c0_61, %c1_62, %c2_63, %c0_64] : memref<2x18x18x32xbf16, #tpu.memory_space<vmem>>, vector<2x16x16x32xbf16>
    %53 = vector.shape_cast %52 : vector<2x16x16x32xbf16> to vector<512x32xbf16>
    %c160 = arith.constant 160 : index
    %c0_65 = arith.constant 0 : index
    %54 = vector.load %arg4[%c160, %c0_65] : memref<288x32xbf16, #tpu.memory_space<vmem>>, vector<32x32xbf16>
    %cst_66 = arith.constant dense<0.000000e+00> : vector<512x32xf32>
    %55 = tpu.matmul %53, %54, %cst_66 {dimension_numbers = #tpu.dot_dimension_numbers<[1], [0], [0], [1], [0, 0, 1, 1], [], []>} : vector<512x32xbf16>, vector<32x32xbf16>, vector<512x32xf32> -> vector<512x32xf32>
    %56 = arith.addf %51, %55 : vector<512x32xf32>
    %c0_67 = arith.constant 0 : index
    %c2_68 = arith.constant 2 : index
    %c0_69 = arith.constant 0 : index
    %c0_70 = arith.constant 0 : index
    %57 = vector.load %arg9[%c0_67, %c2_68, %c0_69, %c0_70] : memref<2x18x18x32xbf16, #tpu.memory_space<vmem>>, vector<2x16x16x32xbf16>
    %58 = vector.shape_cast %57 : vector<2x16x16x32xbf16> to vector<512x32xbf16>
    %c192 = arith.constant 192 : index
    %c0_71 = arith.constant 0 : index
    %59 = vector.load %arg4[%c192, %c0_71] : memref<288x32xbf16, #tpu.memory_space<vmem>>, vector<32x32xbf16>
    %cst_72 = arith.constant dense<0.000000e+00> : vector<512x32xf32>
    %60 = tpu.matmul %58, %59, %cst_72 {dimension_numbers = #tpu.dot_dimension_numbers<[1], [0], [0], [1], [0, 0, 1, 1], [], []>} : vector<512x32xbf16>, vector<32x32xbf16>, vector<512x32xf32> -> vector<512x32xf32>
    %61 = arith.addf %56, %60 : vector<512x32xf32>
    %c0_73 = arith.constant 0 : index
    %c2_74 = arith.constant 2 : index
    %c1_75 = arith.constant 1 : index
    %c0_76 = arith.constant 0 : index
    %62 = vector.load %arg9[%c0_73, %c2_74, %c1_75, %c0_76] : memref<2x18x18x32xbf16, #tpu.memory_space<vmem>>, vector<2x16x16x32xbf16>
    %63 = vector.shape_cast %62 : vector<2x16x16x32xbf16> to vector<512x32xbf16>
    %c224 = arith.constant 224 : index
    %c0_77 = arith.constant 0 : index
    %64 = vector.load %arg4[%c224, %c0_77] : memref<288x32xbf16, #tpu.memory_space<vmem>>, vector<32x32xbf16>
    %cst_78 = arith.constant dense<0.000000e+00> : vector<512x32xf32>
    %65 = tpu.matmul %63, %64, %cst_78 {dimension_numbers = #tpu.dot_dimension_numbers<[1], [0], [0], [1], [0, 0, 1, 1], [], []>} : vector<512x32xbf16>, vector<32x32xbf16>, vector<512x32xf32> -> vector<512x32xf32>
    %66 = arith.addf %61, %65 : vector<512x32xf32>
    %c0_79 = arith.constant 0 : index
    %c2_80 = arith.constant 2 : index
    %c2_81 = arith.constant 2 : index
    %c0_82 = arith.constant 0 : index
    %67 = vector.load %arg9[%c0_79, %c2_80, %c2_81, %c0_82] : memref<2x18x18x32xbf16, #tpu.memory_space<vmem>>, vector<2x16x16x32xbf16>
    %68 = vector.shape_cast %67 : vector<2x16x16x32xbf16> to vector<512x32xbf16>
    %c256 = arith.constant 256 : index
    %c0_83 = arith.constant 0 : index
    %69 = vector.load %arg4[%c256, %c0_83] : memref<288x32xbf16, #tpu.memory_space<vmem>>, vector<32x32xbf16>
    %cst_84 = arith.constant dense<0.000000e+00> : vector<512x32xf32>
    %70 = tpu.matmul %68, %69, %cst_84 {dimension_numbers = #tpu.dot_dimension_numbers<[1], [0], [0], [1], [0, 0, 1, 1], [], []>} : vector<512x32xbf16>, vector<32x32xbf16>, vector<512x32xf32> -> vector<512x32xf32>
    %71 = arith.addf %66, %70 : vector<512x32xf32>
    %c0_85 = arith.constant 0 : index
    %c0_86 = arith.constant 0 : index
    %72 = vector.load %arg5[%c0_85, %c0_86] : memref<1x32xf32, #tpu.memory_space<vmem>>, vector<1x32xf32>
    %73 = vector.broadcast %72 : vector<1x32xf32> to vector<512x32xf32>
    %74 = arith.addf %71, %73 : vector<512x32xf32>
    %cst_87 = arith.constant 5.000000e-01 : f32
    %75 = vector.broadcast %cst_87 : f32 to vector<512x32xf32>
    %76 = arith.mulf %75, %74 : vector<512x32xf32>
    %cst_88 = arith.constant 5.000000e-01 : f32
    %77 = vector.broadcast %cst_88 : f32 to vector<512x32xf32>
    %78 = arith.mulf %77, %74 : vector<512x32xf32>
    %79 = math.tanh %78 : vector<512x32xf32>
    %cst_89 = arith.constant 1.000000e+00 : f32
    %80 = vector.broadcast %cst_89 : f32 to vector<512x32xf32>
    %81 = arith.addf %79, %80 : vector<512x32xf32>
    %82 = arith.mulf %76, %81 : vector<512x32xf32>
    %83 = arith.truncf %82 : vector<512x32xf32> to vector<512x32xbf16>
    %c0_90 = arith.constant 0 : index
    %c0_91 = arith.constant 0 : index
    %84 = vector.load %arg6[%c0_90, %c0_91] : memref<32x128xbf16, #tpu.memory_space<vmem>>, vector<32x128xbf16>
    %cst_92 = arith.constant dense<0.000000e+00> : vector<512x128xf32>
    %85 = tpu.matmul %83, %84, %cst_92 {dimension_numbers = #tpu.dot_dimension_numbers<[1], [0], [0], [1], [0, 0, 1, 1], [], []>} : vector<512x32xbf16>, vector<32x128xbf16>, vector<512x128xf32> -> vector<512x128xf32>
    %c0_93 = arith.constant 0 : index
    %c0_94 = arith.constant 0 : index
    %86 = vector.load %arg7[%c0_93, %c0_94] : memref<1x128xf32, #tpu.memory_space<vmem>>, vector<1x128xf32>
    %87 = vector.broadcast %86 : vector<1x128xf32> to vector<512x128xf32>
    %88 = arith.addf %85, %87 : vector<512x128xf32>
    %89 = arith.addf %88, %7 : vector<512x128xf32>
    %cst_95 = arith.constant 0.000000e+00 : f32
    %90 = vector.broadcast %cst_95 : f32 to vector<512x128xf32>
    %91 = arith.maximumf %89, %90 : vector<512x128xf32>
    %92 = vector.shape_cast %91 : vector<512x128xf32> to vector<2x16x16x128xf32>
    %93 = arith.truncf %92 : vector<2x16x16x128xf32> to vector<2x16x16x128xbf16>
    %c0_96 = arith.constant 0 : index
    %c0_97 = arith.constant 0 : index
    %c0_98 = arith.constant 0 : index
    %c0_99 = arith.constant 0 : index
    %94 = vector.load %arg8[%c0_96, %c0_97, %c0_98, %c0_99] : memref<2x16x16x128xbf16, #tpu.memory_space<vmem>>, vector<2x16x16x128xbf16>
    tpu.vector_store %arg8[%c0_96, %c0_97, %c0_98, %c0_99], %93 {strides = array<i32>} : memref<2x16x16x128xbf16, #tpu.memory_space<vmem>>, vector<2x16x16x128xbf16>,
    return
  }
  func.func @transform_0(%arg0: i32) -> (i32, i32, i32, i32) {
    %c0_i32 = arith.constant 0 : i32
    %c0_i32_0 = arith.constant 0 : i32
    %c0_i32_1 = arith.constant 0 : i32
    %c0_i32_2 = arith.constant 0 : i32
    return %arg0, %c0_i32, %c0_i32_0, %c0_i32_1 : i32, i32, i32, i32
  }
  func.func @transform_1(%arg0: i32) -> (i32, i32) {
    %c0_i32 = arith.constant 0 : i32
    %c0_i32_0 = arith.constant 0 : i32
    %c0_i32_1 = arith.constant 0 : i32
    return %c0_i32, %c0_i32_0 : i32, i32
  }
  func.func @transform_2(%arg0: i32) -> (i32, i32) {
    %c0_i32 = arith.constant 0 : i32
    %c0_i32_0 = arith.constant 0 : i32
    %c0_i32_1 = arith.constant 0 : i32
    return %c0_i32, %c0_i32_0 : i32, i32
  }
  func.func @transform_3(%arg0: i32) -> (i32, i32) {
    %c0_i32 = arith.constant 0 : i32
    %c0_i32_0 = arith.constant 0 : i32
    %c0_i32_1 = arith.constant 0 : i32
    return %c0_i32, %c0_i32_0 : i32, i32
  }
  func.func @transform_4(%arg0: i32) -> (i32, i32) {
    %c0_i32 = arith.constant 0 : i32
    %c0_i32_0 = arith.constant 0 : i32
    %c0_i32_1 = arith.constant 0 : i32
    return %c0_i32, %c0_i32_0 : i32, i32
  }
  func.func @transform_5(%arg0: i32) -> (i32, i32) {
    %c0_i32 = arith.constant 0 : i32
    %c0_i32_0 = arith.constant 0 : i32
    %c0_i32_1 = arith.constant 0 : i32
    return %c0_i32, %c0_i32_0 : i32, i32
  }
  func.func @transform_6(%arg0: i32) -> (i32, i32) {
    %c0_i32 = arith.constant 0 : i32
    %c0_i32_0 = arith.constant 0 : i32
    %c0_i32_1 = arith.constant 0 : i32
    return %c0_i32, %c0_i32_0 : i32, i32
  }
  func.func @transform_7(%arg0: i32) -> (i32, i32, i32, i32) {
    %c0_i32 = arith.constant 0 : i32
    %c0_i32_0 = arith.constant 0 : i32
    %c0_i32_1 = arith.constant 0 : i32
    %c0_i32_2 = arith.constant 0 : i32
    return %arg0, %c0_i32, %c0_i32_0, %c0_i32_1 : i32, i32, i32, i32
  }
}

</mosaic_0001>

<llo_original>
// kernel: resnet_block_forward.1
$region0: #{resnet_block_forward.1}
  #allocation0 [shape = 'u32[]', space=smem, size = 0x4, offset = 0x4, fixed_abs, tag = 'smem constant byte address 0x4 - core index']
  #allocation1 [shape = 'u32[144,128]{1,0:T(1,128)}', space=vmem, size = 0x12000, scoped, tag = 'internal scratch']
  #allocation2 [shape = 'bf16[2,18,18,32]{3,2,1,0:T(8,128)(2,1)}', space=vmem, size = 0x36000, scoped, tag = 'scratch operand']
  %s0 = inlined_call_operand.vmem [shape: bf16[2,16,16,16], index: 0, kind: input, shape index: {}]
  %s1 = inlined_call_operand.vmem [shape: bf16[16,160], index: 1, kind: input, shape index: {}]
  %s2 = inlined_call_operand.vmem [shape: f32[1,160], index: 2, kind: input, shape index: {}]
  %s3 = inlined_call_operand.vmem [shape: bf16[288,32], index: 3, kind: input, shape index: {}]
  %s4 = inlined_call_operand.vmem [shape: f32[1,32], index: 4, kind: input, shape index: {}]
  %s5 = inlined_call_operand.vmem [shape: bf16[32,128], index: 5, kind: input, shape index: {}]
  %s6 = inlined_call_operand.vmem [shape: f32[1,128], index: 6, kind: input, shape index: {}]
  %s7 = inlined_call_operand.hbm [shape: bf16[2,16,16,128], index: 7, kind: output, shape index: {}]
  %s8 = sld [smem:[#allocation0]]
  $region38: #{resnet_block_forward.1} parent=0
    _
  %s10 = ssub.s32 1, %s8
  %s11 = scalar_select 0, %s10, %s8
  $region1: #{resnet_block_forward.1} parent=0
    #allocation3 [shape = 'u8[131072]{0}', space=vmem, size = 0x20000, scoped, tag = 'output window, operand 0, single buffered']
    #allocation4 [shape = 's32[1]{0}', space=sflag, size = 0x4, scoped, tag = 'scoped memory for resnet_block_forward.1']
    %12 = vsyncpa [#allocation4], 0
    // Predicated region
    $region2: #{resnet_block_forward.1} parent=1 // pred_check
      _
    $region3: #{resnet_block_forward.1} parent=1 // pred_check_branch
      %14 = sbr.rel (0) target = $region5
    $region4: #{resnet_block_forward.1} parent=1 // pred_region
      _
    $region5: #{resnet_block_forward.1} parent=1 // pred_fallthru
      _
    // Predicated region
    $region6: #{resnet_block_forward.1} parent=1 // pred_check
      _
    $region7: #{resnet_block_forward.1} parent=1 // pred_check_branch
      %16 = sbr.rel (0) target = $region9
    $region8: #{resnet_block_forward.1} parent=1 // pred_region
      _
    $region9: #{resnet_block_forward.1} parent=1 // pred_fallthru
      _
    // Predicated region
    $region10: #{resnet_block_forward.1} parent=1 // pred_check
      _
    $region11: #{resnet_block_forward.1} parent=1 // pred_check_branch
      %18 = sbr.rel (0) target = $region13
    $region12: #{resnet_block_forward.1} parent=1 // pred_region
      _
    $region13: #{resnet_block_forward.1} parent=1 // pred_fallthru
      _
    // Predicated region
    $region14: #{resnet_block_forward.1} parent=1 // pred_check
      _
    $region15: #{resnet_block_forward.1} parent=1 // pred_check_branch
      %20 = sbr.rel (0) target = $region17
    $region16: #{resnet_block_forward.1} parent=1 // pred_region
      _
    $region17: #{resnet_block_forward.1} parent=1 // pred_fallthru
      _
    // Predicated region
    $region18: #{resnet_block_forward.1} parent=1 // pred_check
      _
    $region19: #{resnet_block_forward.1} parent=1 // pred_check_branch
      %22 = sbr.rel (0) target = $region21
    $region20: #{resnet_block_forward.1} parent=1 // pred_region
      _
    $region21: #{resnet_block_forward.1} parent=1 // pred_fallthru
      _
    // Predicated region
    $region22: #{resnet_block_forward.1} parent=1 // pred_check
      _
    $region23: #{resnet_block_forward.1} parent=1 // pred_check_branch
      %24 = sbr.rel (0) target = $region25
    $region24: #{resnet_block_forward.1} parent=1 // pred_region
      _
    $region25: #{resnet_block_forward.1} parent=1 // pred_fallthru
      _
    // Predicated region
    $region26: #{resnet_block_forward.1} parent=1 // pred_check
      _
    $region27: #{resnet_block_forward.1} parent=1 // pred_check_branch
      %26 = sbr.rel (0) target = $region29
    $region28: #{resnet_block_forward.1} parent=1 // pred_region
      _
    $region29: #{resnet_block_forward.1} parent=1 // pred_fallthru
      _
    %v28 = vld [vmem:[%s0] sm:$0xf]
    %v29 = vld [vmem:[%s0 + $0x4] sm:$0xf]
    %v30 = vld [vmem:[%s0 + $0x8] sm:$0xf]
    %v31 = vld [vmem:[%s0 + $0xc] sm:$0xf]
    %v32 = vld [vmem:[%s0 + $0x10] sm:$0xf]
    %v33 = vld [vmem:[%s0 + $0x14] sm:$0xf]
    %v34 = vld [vmem:[%s0 + $0x18] sm:$0xf]
    %v35 = vld [vmem:[%s0 + $0x1c] sm:$0xf]
    %v36 = vld [vmem:[%s0 + $0x20] sm:$0xf]
    %v37 = vld [vmem:[%s0 + $0x24] sm:$0xf]
    %v38 = vld [vmem:[%s0 + $0x28] sm:$0xf]
    %v39 = vld [vmem:[%s0 + $0x2c] sm:$0xf]
    %v40 = vld [vmem:[%s0 + $0x30] sm:$0xf]
    %v41 = vld [vmem:[%s0 + $0x34] sm:$0xf]
    %v42 = vld [vmem:[%s0 + $0x38] sm:$0xf]
    %v43 = vld [vmem:[%s0 + $0x3c] sm:$0xf]
    %v44 = vld [vmem:[%s0 + $0x40] sm:$0xf]
    %v45 = vld [vmem:[%s0 + $0x44] sm:$0xf]
    %v46 = vld [vmem:[%s0 + $0x48] sm:$0xf]
    %v47 = vld [vmem:[%s0 + $0x4c] sm:$0xf]
    %v48 = vld [vmem:[%s0 + $0x50] sm:$0xf]
    %v49 = vld [vmem:[%s0 + $0x54] sm:$0xf]
    %v50 = vld [vmem:[%s0 + $0x58] sm:$0xf]
    %v51 = vld [vmem:[%s0 + $0x5c] sm:$0xf]
    %v52 = vld [vmem:[%s0 + $0x60] sm:$0xf]
    %v53 = vld [vmem:[%s0 + $0x64] sm:$0xf]
    %v54 = vld [vmem:[%s0 + $0x68] sm:$0xf]
    %v55 = vld [vmem:[%s0 + $0x6c] sm:$0xf]
    %v56 = vld [vmem:[%s0 + $0x70] sm:$0xf]
    %v57 = vld [vmem:[%s0 + $0x74] sm:$0xf]
    %v58 = vld [vmem:[%s0 + $0x78] sm:$0xf]
    %v59 = vld [vmem:[%s0 + $0x7c] sm:$0xf]
    %v60 = vld [vmem:[%s0 + $0x80] sm:$0xf]
    %v61 = vld [vmem:[%s0 + $0x84] sm:$0xf]
    %v62 = vld [vmem:[%s0 + $0x88] sm:$0xf]
    %v63 = vld [vmem:[%s0 + $0x8c] sm:$0xf]
    %v64 = vld [vmem:[%s0 + $0x90] sm:$0xf]
    %v65 = vld [vmem:[%s0 + $0x94] sm:$0xf]
    %v66 = vld [vmem:[%s0 + $0x98] sm:$0xf]
    %v67 = vld [vmem:[%s0 + $0x9c] sm:$0xf]
    %v68 = vld [vmem:[%s0 + $0xa0] sm:$0xf]
    %v69 = vld [vmem:[%s0 + $0xa4] sm:$0xf]
    %v70 = vld [vmem:[%s0 + $0xa8] sm:$0xf]
    %v71 = vld [vmem:[%s0 + $0xac] sm:$0xf]
    %v72 = vld [vmem:[%s0 + $0xb0] sm:$0xf]
    %v73 = vld [vmem:[%s0 + $0xb4] sm:$0xf]
    %v74 = vld [vmem:[%s0 + $0xb8] sm:$0xf]
    %v75 = vld [vmem:[%s0 + $0xbc] sm:$0xf]
    %v76 = vld [vmem:[%s0 + $0xc0] sm:$0xf]
    %v77 = vld [vmem:[%s0 + $0xc4] sm:$0xf]
    %v78 = vld [vmem:[%s0 + $0xc8] sm:$0xf]
    %v79 = vld [vmem:[%s0 + $0xcc] sm:$0xf]
    %v80 = vld [vmem:[%s0 + $0xd0] sm:$0xf]
    %v81 = vld [vmem:[%s0 + $0xd4] sm:$0xf]
    %v82 = vld [vmem:[%s0 + $0xd8] sm:$0xf]
    %v83 = vld [vmem:[%s0 + $0xdc] sm:$0xf]
    %v84 = vld [vmem:[%s0 + $0xe0] sm:$0xf]
    %v85 = vld [vmem:[%s0 + $0xe4] sm:$0xf]
    %v86 = vld [vmem:[%s0 + $0xe8] sm:$0xf]
    %v87 = vld [vmem:[%s0 + $0xec] sm:$0xf]
    %v88 = vld [vmem:[%s0 + $0xf0] sm:$0xf]
    %v89 = vld [vmem:[%s0 + $0xf4] sm:$0xf]
    %v90 = vld [vmem:[%s0 + $0xf8] sm:$0xf]
    %v91 = vld [vmem:[%s0 + $0xfc] sm:$0xf]
    %v92 = vld [vmem:[%s1] sm:$0xff]
    %v93 = vld [vmem:[%s1 + $0x8] sm:$0xff]
    %v94 = vld [vmem:[%s2] sm:$0x3]
    %v96 = vlaneseq
    %v97 = vshrl.u32 %v96, 7
    %v98 = vsub.s32 0, %v97
    %v99 = vrot.slane %v94, %v98
    %v100 = vlaneseq
    %v101 = vshrl.u32 %v100, 7
    %v102 = vsub.s32 1, %v101
    %v103 = vrot.slane %v94, %v102
    %v170 = vunpack.c.l.b16 %v28
    %v171 = vunpack.c.l.b16 %v29
    %v172 = vunpack.c.l.b16 %v30
    %v173 = vunpack.c.l.b16 %v31
    %v174 = vunpack.c.l.b16 %v32
    %v175 = vunpack.c.l.b16 %v33
    %v176 = vunpack.c.l.b16 %v34
    %v177 = vunpack.c.l.b16 %v35
    %v178 = vunpack.c.l.b16 %v36
    %v179 = vunpack.c.l.b16 %v37
    %v180 = vunpack.c.l.b16 %v38
    %v181 = vunpack.c.l.b16 %v39
    %v182 = vunpack.c.l.b16 %v40
    %v183 = vunpack.c.l.b16 %v41
    %v184 = vunpack.c.l.b16 %v42
    %v185 = vunpack.c.l.b16 %v43
    %v186 = vunpack.c.l.b16 %v44
    %v187 = vunpack.c.l.b16 %v45
    %v188 = vunpack.c.l.b16 %v46
    %v189 = vunpack.c.l.b16 %v47
    %v190 = vunpack.c.l.b16 %v48
    %v191 = vunpack.c.l.b16 %v49
    %v192 = vunpack.c.l.b16 %v50
    %v193 = vunpack.c.l.b16 %v51
    %v194 = vunpack.c.l.b16 %v52
    %v195 = vunpack.c.l.b16 %v53
    %v196 = vunpack.c.l.b16 %v54
    %v197 = vunpack.c.l.b16 %v55
    %v198 = vunpack.c.l.b16 %v56
    %v199 = vunpack.c.l.b16 %v57
    %v200 = vunpack.c.l.b16 %v58
    %v201 = vunpack.c.l.b16 %v59
    %v202 = vunpack.c.l.b16 %v60
    %v203 = vunpack.c.l.b16 %v61
    %v204 = vunpack.c.l.b16 %v62
    %v205 = vunpack.c.l.b16 %v63
    %v206 = vunpack.c.l.b16 %v64
    %v207 = vunpack.c.l.b16 %v65
    %v208 = vunpack.c.l.b16 %v66
    %v209 = vunpack.c.l.b16 %v67
    %v210 = vunpack.c.l.b16 %v68
    %v211 = vunpack.c.l.b16 %v69
    %v212 = vunpack.c.l.b16 %v70
    %v213 = vunpack.c.l.b16 %v71
    %v214 = vunpack.c.l.b16 %v72
    %v215 = vunpack.c.l.b16 %v73
    %v216 = vunpack.c.l.b16 %v74
    %v217 = vunpack.c.l.b16 %v75
    %v218 = vunpack.c.l.b16 %v76
    %v219 = vunpack.c.l.b16 %v77
    %v220 = vunpack.c.l.b16 %v78
    %v221 = vunpack.c.l.b16 %v79
    %v222 = vunpack.c.l.b16 %v80
    %v223 = vunpack.c.l.b16 %v81
    %v224 = vunpack.c.l.b16 %v82
    %v225 = vunpack.c.l.b16 %v83
    %v226 = vunpack.c.l.b16 %v84
    %v227 = vunpack.c.l.b16 %v85
    %v228 = vunpack.c.l.b16 %v86
    %v229 = vunpack.c.l.b16 %v87
    %v230 = vunpack.c.l.b16 %v88
    %v231 = vunpack.c.l.b16 %v89
    %v232 = vunpack.c.l.b16 %v90
    %v233 = vunpack.c.l.b16 %v91
    %v234 = vpack.c.b16 %v171, %v170
    %v235 = vpack.c.b16 %v173, %v172
    %v236 = vpack.c.b16 %v175, %v174
    %v237 = vpack.c.b16 %v177, %v176
    %v238 = vpack.c.b16 %v179, %v178
    %v239 = vpack.c.b16 %v181, %v180
    %v240 = vpack.c.b16 %v183, %v182
    %v241 = vpack.c.b16 %v185, %v184
    %v242 = vpack.c.b16 %v187, %v186
    %v243 = vpack.c.b16 %v189, %v188
    %v244 = vpack.c.b16 %v191, %v190
    %v245 = vpack.c.b16 %v193, %v192
    %v246 = vpack.c.b16 %v195, %v194
    %v247 = vpack.c.b16 %v197, %v196
    %v248 = vpack.c.b16 %v199, %v198
    %v249 = vpack.c.b16 %v201, %v200
    %v250 = vpack.c.b16 %v203, %v202
    %v251 = vpack.c.b16 %v205, %v204
    %v252 = vpack.c.b16 %v207, %v206
    %v253 = vpack.c.b16 %v209, %v208
    %v254 = vpack.c.b16 %v211, %v210
    %v255 = vpack.c.b16 %v213, %v212
    %v256 = vpack.c.b16 %v215, %v214
    %v257 = vpack.c.b16 %v217, %v216
    %v258 = vpack.c.b16 %v219, %v218
    %v259 = vpack.c.b16 %v221, %v220
    %v260 = vpack.c.b16 %v223, %v222
    %v261 = vpack.c.b16 %v225, %v224
    %v262 = vpack.c.b16 %v227, %v226
    %v263 = vpack.c.b16 %v229, %v228
    %v264 = vpack.c.b16 %v231, %v230
    %v265 = vpack.c.b16 %v233, %v232
    %v268 = vunpack.c.l.b16 %v92
    %v269 = vunpack.c.h.b16 %v92
    %v270 = vunpack.c.l.b16 %v93
    %v271 = vunpack.c.h.b16 %v93
    %v272 = vpack.c.b16 %v270, %v268
    %v273 = vpack.c.b16 %v271, %v269
    %vm276 = vcmask 130048
    %v278 = vsel %vm276, %v234, 0
    %v281 = vsel %vm276, %v235, 0
    %v284 = vsel %vm276, %v236, 0
    %v287 = vsel %vm276, %v237, 0
    %v290 = vsel %vm276, %v238, 0
    %v293 = vsel %vm276, %v239, 0
    %v296 = vsel %vm276, %v240, 0
    %v299 = vsel %vm276, %v241, 0
    %v302 = vsel %vm276, %v242, 0
    %v305 = vsel %vm276, %v243, 0
    %v308 = vsel %vm276, %v244, 0
    %v311 = vsel %vm276, %v245, 0
    %v314 = vsel %vm276, %v246, 0
    %v317 = vsel %vm276, %v247, 0
    %v320 = vsel %vm276, %v248, 0
    %v323 = vsel %vm276, %v249, 0
    %v326 = vsel %vm276, %v250, 0
    %v329 = vsel %vm276, %v251, 0
    %v332 = vsel %vm276, %v252, 0
    %v335 = vsel %vm276, %v253, 0
    %v338 = vsel %vm276, %v254, 0
    %v341 = vsel %vm276, %v255, 0
    %v344 = vsel %vm276, %v256, 0
    %v347 = vsel %vm276, %v257, 0
    %v350 = vsel %vm276, %v258, 0
    %v353 = vsel %vm276, %v259, 0
    %v356 = vsel %vm276, %v260, 0
    %v359 = vsel %vm276, %v261, 0
    %v362 = vsel %vm276, %v262, 0
    %v365 = vsel %vm276, %v263, 0
    %v368 = vsel %vm276, %v264, 0
    %v371 = vsel %vm276, %v265, 0
    %373 = vmatprep.subr.bf16.mxu0 %v273
    %374 = vmatpush1.bf16.msra.mxu0 %v272
    %375 = vmatprep.subr.bf16.mxu0 0
    %376 = vmatpush1.bf16.msra.mxu0 0
    %377 = vmatprep.subr.bf16.mxu0 0
    %378 = vmatpush1.bf16.msra.mxu0 0
    %379 = vmatprep.subr.bf16.mxu0 0
    %380 = vmatpush1.bf16.msra.mxu0 0
    %381 = vmatprep.subr.bf16.mxu0 0
    %382 = vmatpush1.bf16.msra.mxu0 0
    %383 = vmatprep.subr.bf16.mxu0 0
    %384 = vmatpush1.bf16.msra.mxu0 0
    %385 = vmatprep.subr.bf16.mxu0 0
    %386 = vmatpush1.bf16.msra.mxu0 0
    %387 = vmatprep.subr.bf16.mxu0 0
    %388 = vmatpush1.bf16.msra.mxu0 0
    %389 = vmatprep.subr.bf16.mxu0 0
    %390 = vmatpush1.bf16.msra.mxu0 0
    %391 = vmatprep.subr.bf16.mxu0 0
    %392 = vmatpush1.bf16.msra.mxu0 0
    %393 = vmatprep.subr.bf16.mxu0 0
    %394 = vmatpush1.bf16.msra.mxu0 0
    %395 = vmatprep.subr.bf16.mxu0 0
    %396 = vmatpush1.bf16.msra.mxu0 0
    %397 = vmatprep.subr.bf16.mxu0 0
    %398 = vmatpush1.bf16.msra.mxu0 0
    %399 = vmatprep.subr.bf16.mxu0 0
    %400 = vmatpush1.bf16.msra.mxu0 0
    %401 = vmatprep.subr.bf16.mxu0 0
    %402 = vmatpush1.bf16.msra.mxu0 0
    %403 = vmatprep.subr.bf16.mxu0 0
    %404 = vmatpush1.bf16.msra.mxu0 0
    %405 = vmatprep.mubr.bf16.mxu0 0
    %406 = vmatmul.mubr.bf16.gmra.mrb[0].mxu0 %v278
    %v407 = vpop.f32.mrb[0].mxu0
    %v408 = vadd.f32 %v99, %v407
    %v409 = vpop.f32.mrb[0].mxu0
    %v410 = vadd.f32 %v103, %v409
    %v411 = vpop.f32.mrb[0].mxu0
    %v412 = vadd.f32 %v99, %v411
    %v413 = vpop.f32.mrb[0].mxu0
    %v414 = vadd.f32 %v103, %v413
    %415 = vmatprep.mubr.bf16.mxu0 0
    %416 = vmatmul.mubr.bf16.gmra.mrb[0].mxu0 %v281
    %v417 = vpop.f32.mrb[0].mxu0
    %v418 = vadd.f32 %v99, %v417
    %v419 = vpop.f32.mrb[0].mxu0
    %v420 = vadd.f32 %v103, %v419
    %v421 = vpop.f32.mrb[0].mxu0
    %v422 = vadd.f32 %v99, %v421
    %v423 = vpop.f32.mrb[0].mxu0
    %v424 = vadd.f32 %v103, %v423
    %425 = vmatprep.mubr.bf16.mxu0 0
    %426 = vmatmul.mubr.bf16.gmra.mrb[0].mxu0 %v284
    %v427 = vpop.f32.mrb[0].mxu0
    %v428 = vadd.f32 %v99, %v427
    %v429 = vpop.f32.mrb[0].mxu0
    %v430 = vadd.f32 %v103, %v429
    %v431 = vpop.f32.mrb[0].mxu0
    %v432 = vadd.f32 %v99, %v431
    %v433 = vpop.f32.mrb[0].mxu0
    %v434 = vadd.f32 %v103, %v433
    %435 = vmatprep.mubr.bf16.mxu0 0
    %436 = vmatmul.mubr.bf16.gmra.mrb[0].mxu0 %v287
    %v437 = vpop.f32.mrb[0].mxu0
    %v438 = vadd.f32 %v99, %v437
    %v439 = vpop.f32.mrb[0].mxu0
    %v440 = vadd.f32 %v103, %v439
    %v441 = vpop.f32.mrb[0].mxu0
    %v442 = vadd.f32 %v99, %v441
    %v443 = vpop.f32.mrb[0].mxu0
    %v444 = vadd.f32 %v103, %v443
    %445 = vmatprep.mubr.bf16.mxu0 0
    %446 = vmatmul.mubr.bf16.gmra.mrb[0].mxu0 %v290
    %v447 = vpop.f32.mrb[0].mxu0
    %v448 = vadd.f32 %v99, %v447
    %v449 = vpop.f32.mrb[0].mxu0
    %v450 = vadd.f32 %v103, %v449
    %v451 = vpop.f32.mrb[0].mxu0
    %v452 = vadd.f32 %v99, %v451
    %v453 = vpop.f32.mrb[0].mxu0
    %v454 = vadd.f32 %v103, %v453
    %455 = vmatprep.mubr.bf16.mxu0 0
    %456 = vmatmul.mubr.bf16.gmra.mrb[0].mxu0 %v293
    %v457 = vpop.f32.mrb[0].mxu0
    %v458 = vadd.f32 %v99, %v457
    %v459 = vpop.f32.mrb[0].mxu0
    %v460 = vadd.f32 %v103, %v459
    %v461 = vpop.f32.mrb[0].mxu0
    %v462 = vadd.f32 %v99, %v461
    %v463 = vpop.f32.mrb[0].mxu0
    %v464 = vadd.f32 %v103, %v463
    %465 = vmatprep.mubr.bf16.mxu0 0
    %466 = vmatmul.mubr.bf16.gmra.mrb[0].mxu0 %v296
    %v467 = vpop.f32.mrb[0].mxu0
    %v468 = vadd.f32 %v99, %v467
    %v469 = vpop.f32.mrb[0].mxu0
    %v470 = vadd.f32 %v103, %v469
    %v471 = vpop.f32.mrb[0].mxu0
    %v472 = vadd.f32 %v99, %v471
    %v473 = vpop.f32.mrb[0].mxu0
    %v474 = vadd.f32 %v103, %v473
    %475 = vmatprep.mubr.bf16.mxu0 0
    %476 = vmatmul.mubr.bf16.gmra.mrb[0].mxu0 %v299
    %v477 = vpop.f32.mrb[0].mxu0
    %v478 = vadd.f32 %v99, %v477
    %v479 = vpop.f32.mrb[0].mxu0
    %v480 = vadd.f32 %v103, %v479
    %v481 = vpop.f32.mrb[0].mxu0
    %v482 = vadd.f32 %v99, %v481
    %v483 = vpop.f32.mrb[0].mxu0
    %v484 = vadd.f32 %v103, %v483
    %485 = vmatprep.mubr.bf16.mxu0 0
    %486 = vmatmul.mubr.bf16.gmra.mrb[0].mxu0 %v302
    %v487 = vpop.f32.mrb[0].mxu0
    %v488 = vadd.f32 %v99, %v487
    %v489 = vpop.f32.mrb[0].mxu0
    %v490 = vadd.f32 %v103, %v489
    %v491 = vpop.f32.mrb[0].mxu0
    %v492 = vadd.f32 %v99, %v491
    %v493 = vpop.f32.mrb[0].mxu0
    %v494 = vadd.f32 %v103, %v493
    %495 = vmatprep.mubr.bf16.mxu0 0
    %496 = vmatmul.mubr.bf16.gmra.mrb[0].mxu0 %v305
    %v497 = vpop.f32.mrb[0].mxu0
    %v498 = vadd.f32 %v99, %v497
    %v499 = vpop.f32.mrb[0].mxu0
    %v500 = vadd.f32 %v103, %v499
    %v501 = vpop.f32.mrb[0].mxu0
    %v502 = vadd.f32 %v99, %v501
    %v503 = vpop.f32.mrb[0].mxu0
    %v504 = vadd.f32 %v103, %v503
    %505 = vmatprep.mubr.bf16.mxu0 0
    %506 = vmatmul.mubr.bf16.gmra.mrb[0].mxu0 %v308
    %v507 = vpop.f32.mrb[0].mxu0
    %v508 = vadd.f32 %v99, %v507
    %v509 = vpop.f32.mrb[0].mxu0
    %v510 = vadd.f32 %v103, %v509
    %v511 = vpop.f32.mrb[0].mxu0
    %v512 = vadd.f32 %v99, %v511
    %v513 = vpop.f32.mrb[0].mxu0
    %v514 = vadd.f32 %v103, %v513
    %515 = vmatprep.mubr.bf16.mxu0 0
    %516 = vmatmul.mubr.bf16.gmra.mrb[0].mxu0 %v311
    %v517 = vpop.f32.mrb[0].mxu0
    %v518 = vadd.f32 %v99, %v517
    %v519 = vpop.f32.mrb[0].mxu0
    %v520 = vadd.f32 %v103, %v519
    %v521 = vpop.f32.mrb[0].mxu0
    %v522 = vadd.f32 %v99, %v521
    %v523 = vpop.f32.mrb[0].mxu0
    %v524 = vadd.f32 %v103, %v523
    %525 = vmatprep.mubr.bf16.mxu0 0
    %526 = vmatmul.mubr.bf16.gmra.mrb[0].mxu0 %v314
    %v527 = vpop.f32.mrb[0].mxu0
    %v528 = vadd.f32 %v99, %v527
    %v529 = vpop.f32.mrb[0].mxu0
    %v530 = vadd.f32 %v103, %v529
    %v531 = vpop.f32.mrb[0].mxu0
    %v532 = vadd.f32 %v99, %v531
    %v533 = vpop.f32.mrb[0].mxu0
    %v534 = vadd.f32 %v103, %v533
    %535 = vmatprep.mubr.bf16.mxu0 0
    %536 = vmatmul.mubr.bf16.gmra.mrb[0].mxu0 %v317
    %v537 = vpop.f32.mrb[0].mxu0
    %v538 = vadd.f32 %v99, %v537
    %v539 = vpop.f32.mrb[0].mxu0
    %v540 = vadd.f32 %v103, %v539
    %v541 = vpop.f32.mrb[0].mxu0
    %v542 = vadd.f32 %v99, %v541
    %v543 = vpop.f32.mrb[0].mxu0
    %v544 = vadd.f32 %v103, %v543
    %545 = vmatprep.mubr.bf16.mxu0 0
    %546 = vmatmul.mubr.bf16.gmra.mrb[0].mxu0 %v320
    %v547 = vpop.f32.mrb[0].mxu0
    %v548 = vadd.f32 %v99, %v547
    %v549 = vpop.f32.mrb[0].mxu0
    %v550 = vadd.f32 %v103, %v549
    %v551 = vpop.f32.mrb[0].mxu0
    %v552 = vadd.f32 %v99, %v551
    %v553 = vpop.f32.mrb[0].mxu0
    %v554 = vadd.f32 %v103, %v553
    %555 = vmatprep.mubr.bf16.mxu0 0
    %556 = vmatmul.mubr.bf16.gmra.mrb[0].mxu0 %v323
    %v557 = vpop.f32.mrb[0].mxu0
    %v558 = vadd.f32 %v99, %v557
    %v559 = vpop.f32.mrb[0].mxu0
    %v560 = vadd.f32 %v103, %v559
    %v561 = vpop.f32.mrb[0].mxu0
    %v562 = vadd.f32 %v99, %v561
    %v563 = vpop.f32.mrb[0].mxu0
    %v564 = vadd.f32 %v103, %v563
    %565 = vmatprep.mubr.bf16.mxu0 0
    %566 = vmatmul.mubr.bf16.gmra.mrb[0].mxu0 %v326
    %v567 = vpop.f32.mrb[0].mxu0
    %v568 = vadd.f32 %v99, %v567
    %v569 = vpop.f32.mrb[0].mxu0
    %v570 = vadd.f32 %v103, %v569
    %v571 = vpop.f32.mrb[0].mxu0
    %v572 = vadd.f32 %v99, %v571
    %v573 = vpop.f32.mrb[0].mxu0
    %v574 = vadd.f32 %v103, %v573
    %575 = vmatprep.mubr.bf16.mxu0 0
    %576 = vmatmul.mubr.bf16.gmra.mrb[0].mxu0 %v329
    %v577 = vpop.f32.mrb[0].mxu0
    %v578 = vadd.f32 %v99, %v577
    %v579 = vpop.f32.mrb[0].mxu0
    %v580 = vadd.f32 %v103, %v579
    %v581 = vpop.f32.mrb[0].mxu0
    %v582 = vadd.f32 %v99, %v581
    %v583 = vpop.f32.mrb[0].mxu0
    %v584 = vadd.f32 %v103, %v583
    %585 = vmatprep.mubr.bf16.mxu0 0
    %586 = vmatmul.mubr.bf16.gmra.mrb[0].mxu0 %v332
    %v587 = vpop.f32.mrb[0].mxu0
    %v588 = vadd.f32 %v99, %v587
    %v589 = vpop.f32.mrb[0].mxu0
    %v590 = vadd.f32 %v103, %v589
    %v591 = vpop.f32.mrb[0].mxu0
    %v592 = vadd.f32 %v99, %v591
    %v593 = vpop.f32.mrb[0].mxu0
    %v594 = vadd.f32 %v103, %v593
    %595 = vmatprep.mubr.bf16.mxu0 0
    %596 = vmatmul.mubr.bf16.gmra.mrb[0].mxu0 %v335
    %v597 = vpop.f32.mrb[0].mxu0
    %v598 = vadd.f32 %v99, %v597
    %v599 = vpop.f32.mrb[0].mxu0
    %v600 = vadd.f32 %v103, %v599
    %v601 = vpop.f32.mrb[0].mxu0
    %v602 = vadd.f32 %v99, %v601
    %v603 = vpop.f32.mrb[0].mxu0
    %v604 = vadd.f32 %v103, %v603
    %605 = vmatprep.mubr.bf16.mxu0 0
    %606 = vmatmul.mubr.bf16.gmra.mrb[0].mxu0 %v338
    %v607 = vpop.f32.mrb[0].mxu0
    %v608 = vadd.f32 %v99, %v607
    %v609 = vpop.f32.mrb[0].mxu0
    %v610 = vadd.f32 %v103, %v609
    %v611 = vpop.f32.mrb[0].mxu0
    %v612 = vadd.f32 %v99, %v611
    %v613 = vpop.f32.mrb[0].mxu0
    %v614 = vadd.f32 %v103, %v613
    %615 = vmatprep.mubr.bf16.mxu0 0
    %616 = vmatmul.mubr.bf16.gmra.mrb[0].mxu0 %v341
    %v617 = vpop.f32.mrb[0].mxu0
    %v618 = vadd.f32 %v99, %v617
    %v619 = vpop.f32.mrb[0].mxu0
    %v620 = vadd.f32 %v103, %v619
    %v621 = vpop.f32.mrb[0].mxu0
    %v622 = vadd.f32 %v99, %v621
    %v623 = vpop.f32.mrb[0].mxu0
    %v624 = vadd.f32 %v103, %v623
    %625 = vmatprep.mubr.bf16.mxu0 0
    %626 = vmatmul.mubr.bf16.gmra.mrb[0].mxu0 %v344
    %v627 = vpop.f32.mrb[0].mxu0
    %v628 = vadd.f32 %v99, %v627
    %v629 = vpop.f32.mrb[0].mxu0
    %v630 = vadd.f32 %v103, %v629
    %v631 = vpop.f32.mrb[0].mxu0
    %v632 = vadd.f32 %v99, %v631
    %v633 = vpop.f32.mrb[0].mxu0
    %v634 = vadd.f32 %v103, %v633
    %635 = vmatprep.mubr.bf16.mxu0 0
    %636 = vmatmul.mubr.bf16.gmra.mrb[0].mxu0 %v347
    %v637 = vpop.f32.mrb[0].mxu0
    %v638 = vadd.f32 %v99, %v637
    %v639 = vpop.f32.mrb[0].mxu0
    %v640 = vadd.f32 %v103, %v639
    %v641 = vpop.f32.mrb[0].mxu0
    %v642 = vadd.f32 %v99, %v641
    %v643 = vpop.f32.mrb[0].mxu0
    %v644 = vadd.f32 %v103, %v643
    %645 = vmatprep.mubr.bf16.mxu0 0
    %646 = vmatmul.mubr.bf16.gmra.mrb[0].mxu0 %v350
    %v647 = vpop.f32.mrb[0].mxu0
    %v648 = vadd.f32 %v99, %v647
    %v649 = vpop.f32.mrb[0].mxu0
    %v650 = vadd.f32 %v103, %v649
    %v651 = vpop.f32.mrb[0].mxu0
    %v652 = vadd.f32 %v99, %v651
    %v653 = vpop.f32.mrb[0].mxu0
    %v654 = vadd.f32 %v103, %v653
    %655 = vmatprep.mubr.bf16.mxu0 0
    %656 = vmatmul.mubr.bf16.gmra.mrb[0].mxu0 %v353
    %v657 = vpop.f32.mrb[0].mxu0
    %v658 = vadd.f32 %v99, %v657
    %v659 = vpop.f32.mrb[0].mxu0
    %v660 = vadd.f32 %v103, %v659
    %v661 = vpop.f32.mrb[0].mxu0
    %v662 = vadd.f32 %v99, %v661
    %v663 = vpop.f32.mrb[0].mxu0
    %v664 = vadd.f32 %v103, %v663
    %665 = vmatprep.mubr.bf16.mxu0 0
    %666 = vmatmul.mubr.bf16.gmra.mrb[0].mxu0 %v356
    %v667 = vpop.f32.mrb[0].mxu0
    %v668 = vadd.f32 %v99, %v667
    %v669 = vpop.f32.mrb[0].mxu0
    %v670 = vadd.f32 %v103, %v669
    %v671 = vpop.f32.mrb[0].mxu0
    %v672 = vadd.f32 %v99, %v671
    %v673 = vpop.f32.mrb[0].mxu0
    %v674 = vadd.f32 %v103, %v673
    %675 = vmatprep.mubr.bf16.mxu0 0
    %676 = vmatmul.mubr.bf16.gmra.mrb[0].mxu0 %v359
    %v677 = vpop.f32.mrb[0].mxu0
    %v678 = vadd.f32 %v99, %v677
    %v679 = vpop.f32.mrb[0].mxu0
    %v680 = vadd.f32 %v103, %v679
    %v681 = vpop.f32.mrb[0].mxu0
    %v682 = vadd.f32 %v99, %v681
    %v683 = vpop.f32.mrb[0].mxu0
    %v684 = vadd.f32 %v103, %v683
    %685 = vmatprep.mubr.bf16.mxu0 0
    %686 = vmatmul.mubr.bf16.gmra.mrb[0].mxu0 %v362
    %v687 = vpop.f32.mrb[0].mxu0
    %v688 = vadd.f32 %v99, %v687
    %v689 = vpop.f32.mrb[0].mxu0
    %v690 = vadd.f32 %v103, %v689
    %v691 = vpop.f32.mrb[0].mxu0
    %v692 = vadd.f32 %v99, %v691
    %v693 = vpop.f32.mrb[0].mxu0
    %v694 = vadd.f32 %v103, %v693
    %695 = vmatprep.mubr.bf16.mxu0 0
    %696 = vmatmul.mubr.bf16.gmra.mrb[0].mxu0 %v365
    %v697 = vpop.f32.mrb[0].mxu0
    %v698 = vadd.f32 %v99, %v697
    %v699 = vpop.f32.mrb[0].mxu0
    %v700 = vadd.f32 %v103, %v699
    %v701 = vpop.f32.mrb[0].mxu0
    %v702 = vadd.f32 %v99, %v701
    %v703 = vpop.f32.mrb[0].mxu0
    %v704 = vadd.f32 %v103, %v703
    %705 = vmatprep.mubr.bf16.mxu0 0
    %706 = vmatmul.mubr.bf16.gmra.mrb[0].mxu0 %v368
    %v707 = vpop.f32.mrb[0].mxu0
    %v708 = vadd.f32 %v99, %v707
    %v709 = vpop.f32.mrb[0].mxu0
    %v710 = vadd.f32 %v103, %v709
    %v711 = vpop.f32.mrb[0].mxu0
    %v712 = vadd.f32 %v99, %v711
    %v713 = vpop.f32.mrb[0].mxu0
    %v714 = vadd.f32 %v103, %v713
    %715 = vmatprep.mubr.bf16.mxu0 0
    %716 = vmatmul.mubr.bf16.gmra.mrb[0].mxu0 %v371
    %v717 = vpop.f32.mrb[0].mxu0
    %v718 = vadd.f32 %v99, %v717
    %v719 = vpop.f32.mrb[0].mxu0
    %v720 = vadd.f32 %v103, %v719
    %v721 = vpop.f32.mrb[0].mxu0
    %v722 = vadd.f32 %v99, %v721
    %v723 = vpop.f32.mrb[0].mxu0
    %v724 = vadd.f32 %v103, %v723
    %725 = vdwg.mxu0
    %v726 = vmul.f32 %v410, 0.5
    %v727 = vmul.f32 %v414, 0.5
    %v728 = vmul.f32 %v420, 0.5
    %v729 = vmul.f32 %v424, 0.5
    %v730 = vmul.f32 %v430, 0.5
    %v731 = vmul.f32 %v434, 0.5
    %v732 = vmul.f32 %v440, 0.5
    %v733 = vmul.f32 %v444, 0.5
    %v734 = vmul.f32 %v450, 0.5
    %v735 = vmul.f32 %v454, 0.5
    %v736 = vmul.f32 %v460, 0.5
    %v737 = vmul.f32 %v464, 0.5
    %v738 = vmul.f32 %v470, 0.5
    %v739 = vmul.f32 %v474, 0.5
    %v740 = vmul.f32 %v480, 0.5
    %v741 = vmul.f32 %v484, 0.5
    %v742 = vmul.f32 %v490, 0.5
    %v743 = vmul.f32 %v494, 0.5
    %v744 = vmul.f32 %v500, 0.5
    %v745 = vmul.f32 %v504, 0.5
    %v746 = vmul.f32 %v510, 0.5
    %v747 = vmul.f32 %v514, 0.5
    %v748 = vmul.f32 %v520, 0.5
    %v749 = vmul.f32 %v524, 0.5
    %v750 = vmul.f32 %v530, 0.5
    %v751 = vmul.f32 %v534, 0.5
    %v752 = vmul.f32 %v540, 0.5
    %v753 = vmul.f32 %v544, 0.5
    %v754 = vmul.f32 %v550, 0.5
    %v755 = vmul.f32 %v554, 0.5
    %v756 = vmul.f32 %v560, 0.5
    %v757 = vmul.f32 %v564, 0.5
    %v758 = vmul.f32 %v570, 0.5
    %v759 = vmul.f32 %v574, 0.5
    %v760 = vmul.f32 %v580, 0.5
    %v761 = vmul.f32 %v584, 0.5
    %v762 = vmul.f32 %v590, 0.5
    %v763 = vmul.f32 %v594, 0.5
    %v764 = vmul.f32 %v600, 0.5
    %v765 = vmul.f32 %v604, 0.5
    %v766 = vmul.f32 %v610, 0.5
    %v767 = vmul.f32 %v614, 0.5
    %v768 = vmul.f32 %v620, 0.5
    %v769 = vmul.f32 %v624, 0.5
    %v770 = vmul.f32 %v630, 0.5
    %v771 = vmul.f32 %v634, 0.5
    %v772 = vmul.f32 %v640, 0.5
    %v773 = vmul.f32 %v644, 0.5
    %v774 = vmul.f32 %v650, 0.5
    %v775 = vmul.f32 %v654, 0.5
    %v776 = vmul.f32 %v660, 0.5
    %v777 = vmul.f32 %v664, 0.5
    %v778 = vmul.f32 %v670, 0.5
    %v779 = vmul.f32 %v674, 0.5
    %v780 = vmul.f32 %v680, 0.5
    %v781 = vmul.f32 %v684, 0.5
    %v782 = vmul.f32 %v690, 0.5
    %v783 = vmul.f32 %v694, 0.5
    %v784 = vmul.f32 %v700, 0.5
    %v785 = vmul.f32 %v704, 0.5
    %v786 = vmul.f32 %v710, 0.5
    %v787 = vmul.f32 %v714, 0.5
    %v788 = vmul.f32 %v720, 0.5
    %v789 = vmul.f32 %v724, 0.5
    %v790 = vtanh.pop %v726
    %v791 = vtanh.pop %v727
    %v792 = vtanh.pop %v728
    %v793 = vtanh.pop %v729
    %v794 = vtanh.pop %v730
    %v795 = vtanh.pop %v731
    %v796 = vtanh.pop %v732
    %v797 = vtanh.pop %v733
    %v798 = vtanh.pop %v734
    %v799 = vtanh.pop %v735
    %v800 = vtanh.pop %v736
    %v801 = vtanh.pop %v737
    %v802 = vtanh.pop %v738
    %v803 = vtanh.pop %v739
    %v804 = vtanh.pop %v740
    %v805 = vtanh.pop %v741
    %v806 = vtanh.pop %v742
    %v807 = vtanh.pop %v743
    %v808 = vtanh.pop %v744
    %v809 = vtanh.pop %v745
    %v810 = vtanh.pop %v746
    %v811 = vtanh.pop %v747
    %v812 = vtanh.pop %v748
    %v813 = vtanh.pop %v749
    %v814 = vtanh.pop %v750
    %v815 = vtanh.pop %v751
    %v816 = vtanh.pop %v752
    %v817 = vtanh.pop %v753
    %v818 = vtanh.pop %v754
    %v819 = vtanh.pop %v755
    %v820 = vtanh.pop %v756
    %v821 = vtanh.pop %v757
    %v822 = vtanh.pop %v758
    %v823 = vtanh.pop %v759
    %v824 = vtanh.pop %v760
    %v825 = vtanh.pop %v761
    %v826 = vtanh.pop %v762
    %v827 = vtanh.pop %v763
    %v828 = vtanh.pop %v764
    %v829 = vtanh.pop %v765
    %v830 = vtanh.pop %v766
    %v831 = vtanh.pop %v767
    %v832 = vtanh.pop %v768
    %v833 = vtanh.pop %v769
    %v834 = vtanh.pop %v770
    %v835 = vtanh.pop %v771
    %v836 = vtanh.pop %v772
    %v837 = vtanh.pop %v773
    %v838 = vtanh.pop %v774
    %v839 = vtanh.pop %v775
    %v840 = vtanh.pop %v776
    %v841 = vtanh.pop %v777
    %v842 = vtanh.pop %v778
    %v843 = vtanh.pop %v779
    %v844 = vtanh.pop %v780
    %v845 = vtanh.pop %v781
    %v846 = vtanh.pop %v782
    %v847 = vtanh.pop %v783
    %v848 = vtanh.pop %v784
    %v849 = vtanh.pop %v785
    %v850 = vtanh.pop %v786
    %v851 = vtanh.pop %v787
    %v852 = vtanh.pop %v788
    %v853 = vtanh.pop %v789
    %v854 = vadd.f32 %v790, 1.0
    %v855 = vadd.f32 %v791, 1.0
    %v856 = vadd.f32 %v792, 1.0
    %v857 = vadd.f32 %v793, 1.0
    %v858 = vadd.f32 %v794, 1.0
    %v859 = vadd.f32 %v795, 1.0
    %v860 = vadd.f32 %v796, 1.0
    %v861 = vadd.f32 %v797, 1.0
    %v862 = vadd.f32 %v798, 1.0
    %v863 = vadd.f32 %v799, 1.0
    %v864 = vadd.f32 %v800, 1.0
    %v865 = vadd.f32 %v801, 1.0
    %v866 = vadd.f32 %v802, 1.0
    %v867 = vadd.f32 %v803, 1.0
    %v868 = vadd.f32 %v804, 1.0
    %v869 = vadd.f32 %v805, 1.0
    %v870 = vadd.f32 %v806, 1.0
    %v871 = vadd.f32 %v807, 1.0
    %v872 = vadd.f32 %v808, 1.0
    %v873 = vadd.f32 %v809, 1.0
    %v874 = vadd.f32 %v810, 1.0
    %v875 = vadd.f32 %v811, 1.0
    %v876 = vadd.f32 %v812, 1.0
    %v877 = vadd.f32 %v813, 1.0
    %v878 = vadd.f32 %v814, 1.0
    %v879 = vadd.f32 %v815, 1.0
    %v880 = vadd.f32 %v816, 1.0
    %v881 = vadd.f32 %v817, 1.0
    %v882 = vadd.f32 %v818, 1.0
    %v883 = vadd.f32 %v819, 1.0
    %v884 = vadd.f32 %v820, 1.0
    %v885 = vadd.f32 %v821, 1.0
    %v886 = vadd.f32 %v822, 1.0
    %v887 = vadd.f32 %v823, 1.0
    %v888 = vadd.f32 %v824, 1.0
    %v889 = vadd.f32 %v825, 1.0
    %v890 = vadd.f32 %v826, 1.0
    %v891 = vadd.f32 %v827, 1.0
    %v892 = vadd.f32 %v828, 1.0
    %v893 = vadd.f32 %v829, 1.0
    %v894 = vadd.f32 %v830, 1.0
    %v895 = vadd.f32 %v831, 1.0
    %v896 = vadd.f32 %v832, 1.0
    %v897 = vadd.f32 %v833, 1.0
    %v898 = vadd.f32 %v834, 1.0
    %v899 = vadd.f32 %v835, 1.0
    %v900 = vadd.f32 %v836, 1.0
    %v901 = vadd.f32 %v837, 1.0
    %v902 = vadd.f32 %v838, 1.0
    %v903 = vadd.f32 %v839, 1.0
    %v904 = vadd.f32 %v840, 1.0
    %v905 = vadd.f32 %v841, 1.0
    %v906 = vadd.f32 %v842, 1.0
    %v907 = vadd.f32 %v843, 1.0
    %v908 = vadd.f32 %v844, 1.0
    %v909 = vadd.f32 %v845, 1.0
    %v910 = vadd.f32 %v846, 1.0
    %v911 = vadd.f32 %v847, 1.0
    %v912 = vadd.f32 %v848, 1.0
    %v913 = vadd.f32 %v849, 1.0
    %v914 = vadd.f32 %v850, 1.0
    %v915 = vadd.f32 %v851, 1.0
    %v916 = vadd.f32 %v852, 1.0
    %v917 = vadd.f32 %v853, 1.0
    %v918 = vmul.f32 %v726, %v854
    %v919 = vmul.f32 %v727, %v855
    %v920 = vmul.f32 %v728, %v856
    %v921 = vmul.f32 %v729, %v857
    %v922 = vmul.f32 %v730, %v858
    %v923 = vmul.f32 %v731, %v859
    %v924 = vmul.f32 %v732, %v860
    %v925 = vmul.f32 %v733, %v861
    %v926 = vmul.f32 %v734, %v862
    %v927 = vmul.f32 %v735, %v863
    %v928 = vmul.f32 %v736, %v864
    %v929 = vmul.f32 %v737, %v865
    %v930 = vmul.f32 %v738, %v866
    %v931 = vmul.f32 %v739, %v867
    %v932 = vmul.f32 %v740, %v868
    %v933 = vmul.f32 %v741, %v869
    %v934 = vmul.f32 %v742, %v870
    %v935 = vmul.f32 %v743, %v871
    %v936 = vmul.f32 %v744, %v872
    %v937 = vmul.f32 %v745, %v873
    %v938 = vmul.f32 %v746, %v874
    %v939 = vmul.f32 %v747, %v875
    %v940 = vmul.f32 %v748, %v876
    %v941 = vmul.f32 %v749, %v877
    %v942 = vmul.f32 %v750, %v878
    %v943 = vmul.f32 %v751, %v879
    %v944 = vmul.f32 %v752, %v880
    %v945 = vmul.f32 %v753, %v881
    %v946 = vmul.f32 %v754, %v882
    %v947 = vmul.f32 %v755, %v883
    %v948 = vmul.f32 %v756, %v884
    %v949 = vmul.f32 %v757, %v885
    %v950 = vmul.f32 %v758, %v886
    %v951 = vmul.f32 %v759, %v887
    %v952 = vmul.f32 %v760, %v888
    %v953 = vmul.f32 %v761, %v889
    %v954 = vmul.f32 %v762, %v890
    %v955 = vmul.f32 %v763, %v891
    %v956 = vmul.f32 %v764, %v892
    %v957 = vmul.f32 %v765, %v893
    %v958 = vmul.f32 %v766, %v894
    %v959 = vmul.f32 %v767, %v895
    %v960 = vmul.f32 %v768, %v896
    %v961 = vmul.f32 %v769, %v897
    %v962 = vmul.f32 %v770, %v898
    %v963 = vmul.f32 %v771, %v899
    %v964 = vmul.f32 %v772, %v900
    %v965 = vmul.f32 %v773, %v901
    %v966 = vmul.f32 %v774, %v902
    %v967 = vmul.f32 %v775, %v903
    %v968 = vmul.f32 %v776, %v904
    %v969 = vmul.f32 %v777, %v905
    %v970 = vmul.f32 %v778, %v906
    %v971 = vmul.f32 %v779, %v907
    %v972 = vmul.f32 %v780, %v908
    %v973 = vmul.f32 %v781, %v909
    %v974 = vmul.f32 %v782, %v910
    %v975 = vmul.f32 %v783, %v911
    %v976 = vmul.f32 %v784, %v912
    %v977 = vmul.f32 %v785, %v913
    %v978 = vmul.f32 %v786, %v914
    %v979 = vmul.f32 %v787, %v915
    %v980 = vmul.f32 %v788, %v916
    %v981 = vmul.f32 %v789, %v917
    %vm982 = vcmask 257024
    %983 = vst.msk [vmem:[#allocation2] sm:$0xf] %vm982, 0
    %984 = vst.msk [vmem:[#allocation2 + $0x4] sm:$0xf] %vm982, 0
    %vm985 = vcmask 253952
    %986 = vst.msk [vmem:[#allocation2 + $0x8] sm:$0x1] %vm985, 0
    %987 = vst.msk [vmem:[#allocation2 + $0xd8] sm:$0xf] %vm982, 0
    %988 = vst.msk [vmem:[#allocation2 + $0xdc] sm:$0xf] %vm982, 0
    %989 = vst.msk [vmem:[#allocation2 + $0xe0] sm:$0x1] %vm985, 0
    %s990 = scalar_lea.vmem [#allocation2], 204
    %991 = vst.msk [vmem:[%s990] sm:$0xf] %vm982, 0
    %992 = vst.msk [vmem:[%s990 + $0x4] sm:$0xf] %vm982, 0
    %993 = vst.msk [vmem:[%s990 + $0x8] sm:$0x1] %vm985, 0
    %994 = vst.msk [vmem:[%s990 + $0xd8] sm:$0xf] %vm982, 0
    %995 = vst.msk [vmem:[%s990 + $0xdc] sm:$0xf] %vm982, 0
    %996 = vst.msk [vmem:[%s990 + $0xe0] sm:$0x1] %vm985, 0
    %vm997 = vcmask 253952
    %vm998 = vsmask.f32 256
    %vm999 = vmand %vm997, %vm998
    %v1000 = vld [vmem:[#allocation2] sm:$0x1]
    %v1001 = vsel %vm999, 0, %v1000
    %1002 = vst [vmem:[#allocation2] sm:$0x1] %v1001
    %v1003 = vld [vmem:[#allocation2 + $0xc] sm:$0x1]
    %v1004 = vsel %vm999, 0, %v1003
    %1005 = vst [vmem:[#allocation2 + $0xc] sm:$0x1] %v1004
    %v1006 = vld [vmem:[#allocation2 + $0x18] sm:$0x1]
    %v1007 = vsel %vm999, 0, %v1006
    %1008 = vst [vmem:[#allocation2 + $0x18] sm:$0x1] %v1007
    %v1009 = vld [vmem:[#allocation2 + $0x24] sm:$0x1]
    %v1010 = vsel %vm999, 0, %v1009
    %1011 = vst [vmem:[#allocation2 + $0x24] sm:$0x1] %v1010
    %v1012 = vld [vmem:[#allocation2 + $0x30] sm:$0x1]
    %v1013 = vsel %vm999, 0, %v1012
    %1014 = vst [vmem:[#allocation2 + $0x30] sm:$0x1] %v1013
    %v1015 = vld [vmem:[#allocation2 + $0x3c] sm:$0x1]
    %v1016 = vsel %vm999, 0, %v1015
    %1017 = vst [vmem:[#allocation2 + $0x3c] sm:$0x1] %v1016
    %v1018 = vld [vmem:[#allocation2 + $0x48] sm:$0x1]
    %v1019 = vsel %vm999, 0, %v1018
    %1020 = vst [vmem:[#allocation2 + $0x48] sm:$0x1] %v1019
    %v1021 = vld [vmem:[#allocation2 + $0x54] sm:$0x1]
    %v1022 = vsel %vm999, 0, %v1021
    %1023 = vst [vmem:[#allocation2 + $0x54] sm:$0x1] %v1022
    %v1024 = vld [vmem:[#allocation2 + $0x60] sm:$0x1]
    %v1025 = vsel %vm999, 0, %v1024
    %1026 = vst [vmem:[#allocation2 + $0x60] sm:$0x1] %v1025
    %v1027 = vld [vmem:[#allocation2 + $0x6c] sm:$0x1]
    %v1028 = vsel %vm999, 0, %v1027
    %1029 = vst [vmem:[#allocation2 + $0x6c] sm:$0x1] %v1028
    %v1030 = vld [vmem:[#allocation2 + $0x78] sm:$0x1]
    %v1031 = vsel %vm999, 0, %v1030
    %1032 = vst [vmem:[#allocation2 + $0x78] sm:$0x1] %v1031
    %v1033 = vld [vmem:[#allocation2 + $0x84] sm:$0x1]
    %v1034 = vsel %vm999, 0, %v1033
    %1035 = vst [vmem:[#allocation2 + $0x84] sm:$0x1] %v1034
    %v1036 = vld [vmem:[#allocation2 + $0x90] sm:$0x1]
    %v1037 = vsel %vm999, 0, %v1036
    %1038 = vst [vmem:[#allocation2 + $0x90] sm:$0x1] %v1037
    %v1039 = vld [vmem:[#allocation2 + $0x9c] sm:$0x1]
    %v1040 = vsel %vm999, 0, %v1039
    %1041 = vst [vmem:[#allocation2 + $0x9c] sm:$0x1] %v1040
    %v1042 = vld [vmem:[#allocation2 + $0xa8] sm:$0x1]
    %v1043 = vsel %vm999, 0, %v1042
    %1044 = vst [vmem:[#allocation2 + $0xa8] sm:$0x1] %v1043
    %v1045 = vld [vmem:[#allocation2 + $0xb4] sm:$0x1]
    %v1046 = vsel %vm999, 0, %v1045
    %1047 = vst [vmem:[#allocation2 + $0xb4] sm:$0x1] %v1046
    %v1048 = vld [vmem:[#allocation2 + $0xc0] sm:$0x1]
    %v1049 = vsel %vm999, 0, %v1048
    %1050 = vst [vmem:[#allocation2 + $0xc0] sm:$0x1] %v1049
    %v1051 = vld [vmem:[#allocation2 + $0xcc] sm:$0x1]
    %v1052 = vsel %vm999, 0, %v1051
    %1053 = vst [vmem:[#allocation2 + $0xcc] sm:$0x1] %v1052
    %v1054 = vld [vmem:[#allocation2 + $0xd8] sm:$0x1]
    %v1055 = vsel %vm999, 0, %v1054
    %1056 = vst [vmem:[#allocation2 + $0xd8] sm:$0x1] %v1055
    %v1057 = vld [vmem:[#allocation2 + $0xe4] sm:$0x1]
    %v1058 = vsel %vm999, 0, %v1057
    %1059 = vst [vmem:[#allocation2 + $0xe4] sm:$0x1] %v1058
    %v1060 = vld [vmem:[#allocation2 + $0xf0] sm:$0x1]
    %v1061 = vsel %vm999, 0, %v1060
    %1062 = vst [vmem:[#allocation2 + $0xf0] sm:$0x1] %v1061
    %v1063 = vld [vmem:[#allocation2 + $0xfc] sm:$0x1]
    %v1064 = vsel %vm999, 0, %v1063
    %1065 = vst [vmem:[#allocation2 + $0xfc] sm:$0x1] %v1064
    %v1066 = vld [vmem:[#allocation2 + $0x108] sm:$0x1]
    %v1067 = vsel %vm999, 0, %v1066
    %1068 = vst [vmem:[#allocation2 + $0x108] sm:$0x1] %v1067
    %v1069 = vld [vmem:[#allocation2 + $0x114] sm:$0x1]
    %v1070 = vsel %vm999, 0, %v1069
    %1071 = vst [vmem:[#allocation2 + $0x114] sm:$0x1] %v1070
    %v1072 = vld [vmem:[#allocation2 + $0x120] sm:$0x1]
    %v1073 = vsel %vm999, 0, %v1072
    %1074 = vst [vmem:[#allocation2 + $0x120] sm:$0x1] %v1073
    %v1075 = vld [vmem:[#allocation2 + $0x12c] sm:$0x1]
    %v1076 = vsel %vm999, 0, %v1075
    %1077 = vst [vmem:[#allocation2 + $0x12c] sm:$0x1] %v1076
    %v1078 = vld [vmem:[#allocation2 + $0x138] sm:$0x1]
    %v1079 = vsel %vm999, 0, %v1078
    %1080 = vst [vmem:[#allocation2 + $0x138] sm:$0x1] %v1079
    %v1081 = vld [vmem:[#allocation2 + $0x144] sm:$0x1]
    %v1082 = vsel %vm999, 0, %v1081
    %1083 = vst [vmem:[#allocation2 + $0x144] sm:$0x1] %v1082
    %v1084 = vld [vmem:[#allocation2 + $0x150] sm:$0x1]
    %v1085 = vsel %vm999, 0, %v1084
    %1086 = vst [vmem:[#allocation2 + $0x150] sm:$0x1] %v1085
    %v1087 = vld [vmem:[#allocation2 + $0x15c] sm:$0x1]
    %v1088 = vsel %vm999, 0, %v1087
    %1089 = vst [vmem:[#allocation2 + $0x15c] sm:$0x1] %v1088
    %v1090 = vld [vmem:[#allocation2 + $0x168] sm:$0x1]
    %v1091 = vsel %vm999, 0, %v1090
    %1092 = vst [vmem:[#allocation2 + $0x168] sm:$0x1] %v1091
    %v1093 = vld [vmem:[#allocation2 + $0x174] sm:$0x1]
    %v1094 = vsel %vm999, 0, %v1093
    %1095 = vst [vmem:[#allocation2 + $0x174] sm:$0x1] %v1094
    %v1096 = vld [vmem:[#allocation2 + $0x180] sm:$0x1]
    %v1097 = vsel %vm999, 0, %v1096
    %1098 = vst [vmem:[#allocation2 + $0x180] sm:$0x1] %v1097
    %v1099 = vld [vmem:[#allocation2 + $0x18c] sm:$0x1]
    %v1100 = vsel %vm999, 0, %v1099
    %1101 = vst [vmem:[#allocation2 + $0x18c] sm:$0x1] %v1100
    %v1102 = vld [vmem:[#allocation2 + $0x198] sm:$0x1]
    %v1103 = vsel %vm999, 0, %v1102
    %1104 = vst [vmem:[#allocation2 + $0x198] sm:$0x1] %v1103
    %v1105 = vld [vmem:[#allocation2 + $0x1a4] sm:$0x1]
    %v1106 = vsel %vm999, 0, %v1105
    %1107 = vst [vmem:[#allocation2 + $0x1a4] sm:$0x1] %v1106
    %vm1108 = vsmask.f32 7938
    %vm1109 = vmand %vm997, %vm1108
    %v1110 = vld [vmem:[#allocation2 + $0x8] sm:$0x1]
    %v1111 = vsel %vm1109, 0, %v1110
    %1112 = vst [vmem:[#allocation2 + $0x8] sm:$0x1] %v1111
    %v1113 = vld [vmem:[#allocation2 + $0x14] sm:$0x1]
    %v1114 = vsel %vm1109, 0, %v1113
    %1115 = vst [vmem:[#allocation2 + $0x14] sm:$0x1] %v1114
    %v1116 = vld [vmem:[#allocation2 + $0x20] sm:$0x1]
    %v1117 = vsel %vm1109, 0, %v1116
    %1118 = vst [vmem:[#allocation2 + $0x20] sm:$0x1] %v1117
    %v1119 = vld [vmem:[#allocation2 + $0x2c] sm:$0x1]
    %v1120 = vsel %vm1109, 0, %v1119
    %1121 = vst [vmem:[#allocation2 + $0x2c] sm:$0x1] %v1120
    %v1122 = vld [vmem:[#allocation2 + $0x38] sm:$0x1]
    %v1123 = vsel %vm1109, 0, %v1122
    %1124 = vst [vmem:[#allocation2 + $0x38] sm:$0x1] %v1123
    %v1125 = vld [vmem:[#allocation2 + $0x44] sm:$0x1]
    %v1126 = vsel %vm1109, 0, %v1125
    %1127 = vst [vmem:[#allocation2 + $0x44] sm:$0x1] %v1126
    %v1128 = vld [vmem:[#allocation2 + $0x50] sm:$0x1]
    %v1129 = vsel %vm1109, 0, %v1128
    %1130 = vst [vmem:[#allocation2 + $0x50] sm:$0x1] %v1129
    %v1131 = vld [vmem:[#allocation2 + $0x5c] sm:$0x1]
    %v1132 = vsel %vm1109, 0, %v1131
    %1133 = vst [vmem:[#allocation2 + $0x5c] sm:$0x1] %v1132
    %v1134 = vld [vmem:[#allocation2 + $0x68] sm:$0x1]
    %v1135 = vsel %vm1109, 0, %v1134
    %1136 = vst [vmem:[#allocation2 + $0x68] sm:$0x1] %v1135
    %v1137 = vld [vmem:[#allocation2 + $0x74] sm:$0x1]
    %v1138 = vsel %vm1109, 0, %v1137
    %1139 = vst [vmem:[#allocation2 + $0x74] sm:$0x1] %v1138
    %v1140 = vld [vmem:[#allocation2 + $0x80] sm:$0x1]
    %v1141 = vsel %vm1109, 0, %v1140
    %1142 = vst [vmem:[#allocation2 + $0x80] sm:$0x1] %v1141
    %v1143 = vld [vmem:[#allocation2 + $0x8c] sm:$0x1]
    %v1144 = vsel %vm1109, 0, %v1143
    %1145 = vst [vmem:[#allocation2 + $0x8c] sm:$0x1] %v1144
    %v1146 = vld [vmem:[#allocation2 + $0x98] sm:$0x1]
    %v1147 = vsel %vm1109, 0, %v1146
    %1148 = vst [vmem:[#allocation2 + $0x98] sm:$0x1] %v1147
    %v1149 = vld [vmem:[#allocation2 + $0xa4] sm:$0x1]
    %v1150 = vsel %vm1109, 0, %v1149
    %1151 = vst [vmem:[#allocation2 + $0xa4] sm:$0x1] %v1150
    %v1152 = vld [vmem:[#allocation2 + $0xb0] sm:$0x1]
    %v1153 = vsel %vm1109, 0, %v1152
    %1154 = vst [vmem:[#allocation2 + $0xb0] sm:$0x1] %v1153
    %v1155 = vld [vmem:[#allocation2 + $0xbc] sm:$0x1]
    %v1156 = vsel %vm1109, 0, %v1155
    %1157 = vst [vmem:[#allocation2 + $0xbc] sm:$0x1] %v1156
    %v1158 = vld [vmem:[#allocation2 + $0xc8] sm:$0x1]
    %v1159 = vsel %vm1109, 0, %v1158
    %1160 = vst [vmem:[#allocation2 + $0xc8] sm:$0x1] %v1159
    %v1161 = vld [vmem:[#allocation2 + $0xd4] sm:$0x1]
    %v1162 = vsel %vm1109, 0, %v1161
    %1163 = vst [vmem:[#allocation2 + $0xd4] sm:$0x1] %v1162
    %v1164 = vld [vmem:[#allocation2 + $0xe0] sm:$0x1]
    %v1165 = vsel %vm1109, 0, %v1164
    %1166 = vst [vmem:[#allocation2 + $0xe0] sm:$0x1] %v1165
    %v1167 = vld [vmem:[#allocation2 + $0xec] sm:$0x1]
    %v1168 = vsel %vm1109, 0, %v1167
    %1169 = vst [vmem:[#allocation2 + $0xec] sm:$0x1] %v1168
    %v1170 = vld [vmem:[#allocation2 + $0xf8] sm:$0x1]
    %v1171 = vsel %vm1109, 0, %v1170
    %1172 = vst [vmem:[#allocation2 + $0xf8] sm:$0x1] %v1171
    %v1173 = vld [vmem:[#allocation2 + $0x104] sm:$0x1]
    %v1174 = vsel %vm1109, 0, %v1173
    %1175 = vst [vmem:[#allocation2 + $0x104] sm:$0x1] %v1174
    %v1176 = vld [vmem:[#allocation2 + $0x110] sm:$0x1]
    %v1177 = vsel %vm1109, 0, %v1176
    %1178 = vst [vmem:[#allocation2 + $0x110] sm:$0x1] %v1177
    %v1179 = vld [vmem:[#allocation2 + $0x11c] sm:$0x1]
    %v1180 = vsel %vm1109, 0, %v1179
    %1181 = vst [vmem:[#allocation2 + $0x11c] sm:$0x1] %v1180
    %v1182 = vld [vmem:[#allocation2 + $0x128] sm:$0x1]
    %v1183 = vsel %vm1109, 0, %v1182
    %1184 = vst [vmem:[#allocation2 + $0x128] sm:$0x1] %v1183
    %v1185 = vld [vmem:[#allocation2 + $0x134] sm:$0x1]
    %v1186 = vsel %vm1109, 0, %v1185
    %1187 = vst [vmem:[#allocation2 + $0x134] sm:$0x1] %v1186
    %v1188 = vld [vmem:[#allocation2 + $0x140] sm:$0x1]
    %v1189 = vsel %vm1109, 0, %v1188
    %1190 = vst [vmem:[#allocation2 + $0x140] sm:$0x1] %v1189
    %v1191 = vld [vmem:[#allocation2 + $0x14c] sm:$0x1]
    %v1192 = vsel %vm1109, 0, %v1191
    %1193 = vst [vmem:[#allocation2 + $0x14c] sm:$0x1] %v1192
    %v1194 = vld [vmem:[#allocation2 + $0x158] sm:$0x1]
    %v1195 = vsel %vm1109, 0, %v1194
    %1196 = vst [vmem:[#allocation2 + $0x158] sm:$0x1] %v1195
    %v1197 = vld [vmem:[#allocation2 + $0x164] sm:$0x1]
    %v1198 = vsel %vm1109, 0, %v1197
    %1199 = vst [vmem:[#allocation2 + $0x164] sm:$0x1] %v1198
    %v1200 = vld [vmem:[#allocation2 + $0x170] sm:$0x1]
    %v1201 = vsel %vm1109, 0, %v1200
    %1202 = vst [vmem:[#allocation2 + $0x170] sm:$0x1] %v1201
    %v1203 = vld [vmem:[#allocation2 + $0x17c] sm:$0x1]
    %v1204 = vsel %vm1109, 0, %v1203
    %1205 = vst [vmem:[#allocation2 + $0x17c] sm:$0x1] %v1204
    %v1206 = vld [vmem:[#allocation2 + $0x188] sm:$0x1]
    %v1207 = vsel %vm1109, 0, %v1206
    %1208 = vst [vmem:[#allocation2 + $0x188] sm:$0x1] %v1207
    %v1209 = vld [vmem:[#allocation2 + $0x194] sm:$0x1]
    %v1210 = vsel %vm1109, 0, %v1209
    %1211 = vst [vmem:[#allocation2 + $0x194] sm:$0x1] %v1210
    %v1212 = vld [vmem:[#allocation2 + $0x1a0] sm:$0x1]
    %v1213 = vsel %vm1109, 0, %v1212
    %1214 = vst [vmem:[#allocation2 + $0x1a0] sm:$0x1] %v1213
    %v1215 = vld [vmem:[#allocation2 + $0x1ac] sm:$0x1]
    %v1216 = vsel %vm1109, 0, %v1215
    %1217 = vst [vmem:[#allocation2 + $0x1ac] sm:$0x1] %v1216
    %v1218 = vpack.c.bf16 %v919, %v918
    %v1219 = vpack.c.bf16 %v921, %v920
    %v1220 = vpack.c.bf16 %v923, %v922
    %v1221 = vpack.c.bf16 %v925, %v924
    %v1222 = vpack.c.bf16 %v927, %v926
    %v1223 = vpack.c.bf16 %v929, %v928
    %v1224 = vpack.c.bf16 %v931, %v930
    %v1225 = vpack.c.bf16 %v933, %v932
    %v1226 = vpack.c.bf16 %v935, %v934
    %v1227 = vpack.c.bf16 %v937, %v936
    %v1228 = vpack.c.bf16 %v939, %v938
    %v1229 = vpack.c.bf16 %v941, %v940
    %v1230 = vpack.c.bf16 %v943, %v942
    %v1231 = vpack.c.bf16 %v945, %v944
    %v1232 = vpack.c.bf16 %v947, %v946
    %v1233 = vpack.c.bf16 %v949, %v948
    %v1234 = vpack.c.bf16 %v951, %v950
    %v1235 = vpack.c.bf16 %v953, %v952
    %v1236 = vpack.c.bf16 %v955, %v954
    %v1237 = vpack.c.bf16 %v957, %v956
    %v1238 = vpack.c.bf16 %v959, %v958
    %v1239 = vpack.c.bf16 %v961, %v960
    %v1240 = vpack.c.bf16 %v963, %v962
    %v1241 = vpack.c.bf16 %v965, %v964
    %v1242 = vpack.c.bf16 %v967, %v966
    %v1243 = vpack.c.bf16 %v969, %v968
    %v1244 = vpack.c.bf16 %v971, %v970
    %v1245 = vpack.c.bf16 %v973, %v972
    %v1246 = vpack.c.bf16 %v975, %v974
    %v1247 = vpack.c.bf16 %v977, %v976
    %v1248 = vpack.c.bf16 %v979, %v978
    %v1249 = vpack.c.bf16 %v981, %v980
    %v1282 = vunpack.c.l.b16 %v1218
    %v1283 = vunpack.c.h.b16 %v1218
    %v1284 = vunpack.c.l.b16 %v1219
    %v1285 = vunpack.c.h.b16 %v1219
    %v1286 = vunpack.c.l.b16 %v1220
    %v1287 = vunpack.c.h.b16 %v1220
    %v1288 = vunpack.c.l.b16 %v1221
    %v1289 = vunpack.c.h.b16 %v1221
    %v1290 = vunpack.c.l.b16 %v1222
    %v1291 = vunpack.c.h.b16 %v1222
    %v1292 = vunpack.c.l.b16 %v1223
    %v1293 = vunpack.c.h.b16 %v1223
    %v1294 = vunpack.c.l.b16 %v1224
    %v1295 = vunpack.c.h.b16 %v1224
    %v1296 = vunpack.c.l.b16 %v1225
    %v1297 = vunpack.c.h.b16 %v1225
    %v1298 = vunpack.c.l.b16 %v1226
    %v1299 = vunpack.c.h.b16 %v1226
    %v1300 = vunpack.c.l.b16 %v1227
    %v1301 = vunpack.c.h.b16 %v1227
    %v1302 = vunpack.c.l.b16 %v1228
    %v1303 = vunpack.c.h.b16 %v1228
    %v1304 = vunpack.c.l.b16 %v1229
    %v1305 = vunpack.c.h.b16 %v1229
    %v1306 = vunpack.c.l.b16 %v1230
    %v1307 = vunpack.c.h.b16 %v1230
    %v1308 = vunpack.c.l.b16 %v1231
    %v1309 = vunpack.c.h.b16 %v1231
    %v1310 = vunpack.c.l.b16 %v1232
    %v1311 = vunpack.c.h.b16 %v1232
    %v1312 = vunpack.c.l.b16 %v1233
    %v1313 = vunpack.c.h.b16 %v1233
    %v1314 = vunpack.c.l.b16 %v1234
    %v1315 = vunpack.c.h.b16 %v1234
    %v1316 = vunpack.c.l.b16 %v1235
    %v1317 = vunpack.c.h.b16 %v1235
    %v1318 = vunpack.c.l.b16 %v1236
    %v1319 = vunpack.c.h.b16 %v1236
    %v1320 = vunpack.c.l.b16 %v1237
    %v1321 = vunpack.c.h.b16 %v1237
    %v1322 = vunpack.c.l.b16 %v1238
    %v1323 = vunpack.c.h.b16 %v1238
    %v1324 = vunpack.c.l.b16 %v1239
    %v1325 = vunpack.c.h.b16 %v1239
    %v1326 = vunpack.c.l.b16 %v1240
    %v1327 = vunpack.c.h.b16 %v1240
    %v1328 = vunpack.c.l.b16 %v1241
    %v1329 = vunpack.c.h.b16 %v1241
    %v1330 = vunpack.c.l.b16 %v1242
    %v1331 = vunpack.c.h.b16 %v1242
    %v1332 = vunpack.c.l.b16 %v1243
    %v1333 = vunpack.c.h.b16 %v1243
    %v1334 = vunpack.c.l.b16 %v1244
    %v1335 = vunpack.c.h.b16 %v1244
    %v1336 = vunpack.c.l.b16 %v1245
    %v1337 = vunpack.c.h.b16 %v1245
    %v1338 = vunpack.c.l.b16 %v1246
    %v1339 = vunpack.c.h.b16 %v1246
    %v1340 = vunpack.c.l.b16 %v1247
    %v1341 = vunpack.c.h.b16 %v1247
    %v1342 = vunpack.c.l.b16 %v1248
    %v1343 = vunpack.c.h.b16 %v1248
    %v1344 = vunpack.c.l.b16 %v1249
    %v1345 = vunpack.c.h.b16 %v1249
    %v1346 = vpack.c.b16 %v1282, %v1282
    %v1347 = vpack.c.b16 %v1283, %v1283
    %v1348 = vpack.c.b16 %v1284, %v1284
    %v1349 = vpack.c.b16 %v1285, %v1285
    %v1350 = vpack.c.b16 %v1286, %v1286
    %v1351 = vpack.c.b16 %v1287, %v1287
    %v1352 = vpack.c.b16 %v1288, %v1288
    %v1353 = vpack.c.b16 %v1289, %v1289
    %v1354 = vpack.c.b16 %v1290, %v1290
    %v1355 = vpack.c.b16 %v1291, %v1291
    %v1356 = vpack.c.b16 %v1292, %v1292
    %v1357 = vpack.c.b16 %v1293, %v1293
    %v1358 = vpack.c.b16 %v1294, %v1294
    %v1359 = vpack.c.b16 %v1295, %v1295
    %v1360 = vpack.c.b16 %v1296, %v1296
    %v1361 = vpack.c.b16 %v1297, %v1297
    %v1362 = vpack.c.b16 %v1298, %v1298
    %v1363 = vpack.c.b16 %v1299, %v1299
    %v1364 = vpack.c.b16 %v1300, %v1300
    %v1365 = vpack.c.b16 %v1301, %v1301
    %v1366 = vpack.c.b16 %v1302, %v1302
    %v1367 = vpack.c.b16 %v1303, %v1303
    %v1368 = vpack.c.b16 %v1304, %v1304
    %v1369 = vpack.c.b16 %v1305, %v1305
    %v1370 = vpack.c.b16 %v1306, %v1306
    %v1371 = vpack.c.b16 %v1307, %v1307
    %v1372 = vpack.c.b16 %v1308, %v1308
    %v1373 = vpack.c.b16 %v1309, %v1309
    %v1374 = vpack.c.b16 %v1310, %v1310
    %v1375 = vpack.c.b16 %v1311, %v1311
    %v1376 = vpack.c.b16 %v1312, %v1312
    %v1377 = vpack.c.b16 %v1313, %v1313
    %v1378 = vpack.c.b16 %v1314, %v1314
    %v1379 = vpack.c.b16 %v1315, %v1315
    %v1380 = vpack.c.b16 %v1316, %v1316
    %v1381 = vpack.c.b16 %v1317, %v1317
    %v1382 = vpack.c.b16 %v1318, %v1318
    %v1383 = vpack.c.b16 %v1319, %v1319
    %v1384 = vpack.c.b16 %v1320, %v1320
    %v1385 = vpack.c.b16 %v1321, %v1321
    %v1386 = vpack.c.b16 %v1322, %v1322
    %v1387 = vpack.c.b16 %v1323, %v1323
    %v1388 = vpack.c.b16 %v1324, %v1324
    %v1389 = vpack.c.b16 %v1325, %v1325
    %v1390 = vpack.c.b16 %v1326, %v1326
    %v1391 = vpack.c.b16 %v1327, %v1327
    %v1392 = vpack.c.b16 %v1328, %v1328
    %v1393 = vpack.c.b16 %v1329, %v1329
    %v1394 = vpack.c.b16 %v1330, %v1330
    %v1395 = vpack.c.b16 %v1331, %v1331
    %v1396 = vpack.c.b16 %v1332, %v1332
    %v1397 = vpack.c.b16 %v1333, %v1333
    %v1398 = vpack.c.b16 %v1334, %v1334
    %v1399 = vpack.c.b16 %v1335, %v1335
    %v1400 = vpack.c.b16 %v1336, %v1336
    %v1401 = vpack.c.b16 %v1337, %v1337
    %v1402 = vpack.c.b16 %v1338, %v1338
    %v1403 = vpack.c.b16 %v1339, %v1339
    %v1404 = vpack.c.b16 %v1340, %v1340
    %v1405 = vpack.c.b16 %v1341, %v1341
    %v1406 = vpack.c.b16 %v1342, %v1342
    %v1407 = vpack.c.b16 %v1343, %v1343
    %v1408 = vpack.c.b16 %v1344, %v1344
    %v1409 = vpack.c.b16 %v1345, %v1345
    %vm1410 = vsmask.f32 4368
    %vm1411 = vmor %vm998, %vm1410
    %v1413 = vshrl.u32 %v1346, 16
    %v1415 = vrot.slane %v1413, 7
    %v1416 = vshll.u32 %v1346, 16
    %v1418 = vor.u32 %v1415, %v1416
    %v1419 = vrot.slane %v1415, 4
    %v1421 = vshrl.u32 %v1347, 16
    %v1423 = vrot.slane %v1421, 7
    %v1424 = vshll.u32 %v1347, 16
    %v1426 = vor.u32 %v1423, %v1424
    %v1427 = vsel %vm1411, %v1419, %v1426
    %v1428 = vrot.slane %v1423, 4
    %v1430 = vshrl.u32 %v1348, 16
    %v1432 = vrot.slane %v1430, 7
    %v1433 = vshll.u32 %v1348, 16
    %v1435 = vor.u32 %v1432, %v1433
    %v1436 = vrot.slane %v1432, 4
    %v1438 = vshrl.u32 %v1349, 16
    %v1440 = vrot.slane %v1438, 7
    %v1441 = vshll.u32 %v1349, 16
    %v1443 = vor.u32 %v1440, %v1441
    %v1444 = vsel %vm1411, %v1436, %v1443
    %v1445 = vrot.slane %v1440, 4
    %v1447 = vshrl.u32 %v1350, 16
    %v1449 = vrot.slane %v1447, 7
    %v1450 = vshll.u32 %v1350, 16
    %v1452 = vor.u32 %v1449, %v1450
    %v1453 = vrot.slane %v1449, 4
    %v1455 = vshrl.u32 %v1351, 16
    %v1457 = vrot.slane %v1455, 7
    %v1458 = vshll.u32 %v1351, 16
    %v1460 = vor.u32 %v1457, %v1458
    %v1461 = vsel %vm1411, %v1453, %v1460
    %v1462 = vrot.slane %v1457, 4
    %v1464 = vshrl.u32 %v1352, 16
    %v1466 = vrot.slane %v1464, 7
    %v1467 = vshll.u32 %v1352, 16
    %v1469 = vor.u32 %v1466, %v1467
    %v1470 = vrot.slane %v1466, 4
    %v1472 = vshrl.u32 %v1353, 16
    %v1474 = vrot.slane %v1472, 7
    %v1475 = vshll.u32 %v1353, 16
    %v1477 = vor.u32 %v1474, %v1475
    %v1478 = vsel %vm1411, %v1470, %v1477
    %v1479 = vrot.slane %v1474, 4
    %v1481 = vshrl.u32 %v1354, 16
    %v1483 = vrot.slane %v1481, 7
    %v1484 = vshll.u32 %v1354, 16
    %v1486 = vor.u32 %v1483, %v1484
    %v1487 = vrot.slane %v1483, 4
    %v1489 = vshrl.u32 %v1355, 16
    %v1491 = vrot.slane %v1489, 7
    %v1492 = vshll.u32 %v1355, 16
    %v1494 = vor.u32 %v1491, %v1492
    %v1495 = vsel %vm1411, %v1487, %v1494
    %v1496 = vrot.slane %v1491, 4
    %v1498 = vshrl.u32 %v1356, 16
    %v1500 = vrot.slane %v1498, 7
    %v1501 = vshll.u32 %v1356, 16
    %v1503 = vor.u32 %v1500, %v1501
    %v1504 = vrot.slane %v1500, 4
    %v1506 = vshrl.u32 %v1357, 16
    %v1508 = vrot.slane %v1506, 7
    %v1509 = vshll.u32 %v1357, 16
    %v1511 = vor.u32 %v1508, %v1509
    %v1512 = vsel %vm1411, %v1504, %v1511
    %v1513 = vrot.slane %v1508, 4
    %v1515 = vshrl.u32 %v1358, 16
    %v1517 = vrot.slane %v1515, 7
    %v1518 = vshll.u32 %v1358, 16
    %v1520 = vor.u32 %v1517, %v1518
    %v1521 = vrot.slane %v1517, 4
    %v1523 = vshrl.u32 %v1359, 16
    %v1525 = vrot.slane %v1523, 7
    %v1526 = vshll.u32 %v1359, 16
    %v1528 = vor.u32 %v1525, %v1526
    %v1529 = vsel %vm1411, %v1521, %v1528
    %v1530 = vrot.slane %v1525, 4
    %v1532 = vshrl.u32 %v1360, 16
    %v1534 = vrot.slane %v1532, 7
    %v1535 = vshll.u32 %v1360, 16
    %v1537 = vor.u32 %v1534, %v1535
    %v1538 = vrot.slane %v1534, 4
    %v1540 = vshrl.u32 %v1361, 16
    %v1542 = vrot.slane %v1540, 7
    %v1543 = vshll.u32 %v1361, 16
    %v1545 = vor.u32 %v1542, %v1543
    %v1546 = vsel %vm1411, %v1538, %v1545
    %v1547 = vrot.slane %v1542, 4
    %v1549 = vshrl.u32 %v1362, 16
    %v1551 = vrot.slane %v1549, 7
    %v1552 = vshll.u32 %v1362, 16
    %v1554 = vor.u32 %v1551, %v1552
    %v1555 = vrot.slane %v1551, 4
    %v1557 = vshrl.u32 %v1363, 16
    %v1559 = vrot.slane %v1557, 7
    %v1560 = vshll.u32 %v1363, 16
    %v1562 = vor.u32 %v1559, %v1560
    %v1563 = vsel %vm1411, %v1555, %v1562
    %v1564 = vrot.slane %v1559, 4
    %v1566 = vshrl.u32 %v1364, 16
    %v1568 = vrot.slane %v1566, 7
    %v1569 = vshll.u32 %v1364, 16
    %v1571 = vor.u32 %v1568, %v1569
    %v1572 = vrot.slane %v1568, 4
    %v1574 = vshrl.u32 %v1365, 16
    %v1576 = vrot.slane %v1574, 7
    %v1577 = vshll.u32 %v1365, 16
    %v1579 = vor.u32 %v1576, %v1577
    %v1580 = vsel %vm1411, %v1572, %v1579
    %v1581 = vrot.slane %v1576, 4
    %v1583 = vshrl.u32 %v1366, 16
    %v1585 = vrot.slane %v1583, 7
    %v1586 = vshll.u32 %v1366, 16
    %v1588 = vor.u32 %v1585, %v1586
    %v1589 = vrot.slane %v1585, 4
    %v1591 = vshrl.u32 %v1367, 16
    %v1593 = vrot.slane %v1591, 7
    %v1594 = vshll.u32 %v1367, 16
    %v1596 = vor.u32 %v1593, %v1594
    %v1597 = vsel %vm1411, %v1589, %v1596
    %v1598 = vrot.slane %v1593, 4
    %v1600 = vshrl.u32 %v1368, 16
    %v1602 = vrot.slane %v1600, 7
    %v1603 = vshll.u32 %v1368, 16
    %v1605 = vor.u32 %v1602, %v1603
    %v1606 = vrot.slane %v1602, 4
    %v1608 = vshrl.u32 %v1369, 16
    %v1610 = vrot.slane %v1608, 7
    %v1611 = vshll.u32 %v1369, 16
    %v1613 = vor.u32 %v1610, %v1611
    %v1614 = vsel %vm1411, %v1606, %v1613
    %v1615 = vrot.slane %v1610, 4
    %v1617 = vshrl.u32 %v1370, 16
    %v1619 = vrot.slane %v1617, 7
    %v1620 = vshll.u32 %v1370, 16
    %v1622 = vor.u32 %v1619, %v1620
    %v1623 = vrot.slane %v1619, 4
    %v1625 = vshrl.u32 %v1371, 16
    %v1627 = vrot.slane %v1625, 7
    %v1628 = vshll.u32 %v1371, 16
    %v1630 = vor.u32 %v1627, %v1628
    %v1631 = vsel %vm1411, %v1623, %v1630
    %v1632 = vrot.slane %v1627, 4
    %v1634 = vshrl.u32 %v1372, 16
    %v1636 = vrot.slane %v1634, 7
    %v1637 = vshll.u32 %v1372, 16
    %v1639 = vor.u32 %v1636, %v1637
    %v1640 = vrot.slane %v1636, 4
    %v1642 = vshrl.u32 %v1373, 16
    %v1644 = vrot.slane %v1642, 7
    %v1645 = vshll.u32 %v1373, 16
    %v1647 = vor.u32 %v1644, %v1645
    %v1648 = vsel %vm1411, %v1640, %v1647
    %v1649 = vrot.slane %v1644, 4
    %v1651 = vshrl.u32 %v1374, 16
    %v1653 = vrot.slane %v1651, 7
    %v1654 = vshll.u32 %v1374, 16
    %v1656 = vor.u32 %v1653, %v1654
    %v1657 = vrot.slane %v1653, 4
    %v1659 = vshrl.u32 %v1375, 16
    %v1661 = vrot.slane %v1659, 7
    %v1662 = vshll.u32 %v1375, 16
    %v1664 = vor.u32 %v1661, %v1662
    %v1665 = vsel %vm1411, %v1657, %v1664
    %v1666 = vrot.slane %v1661, 4
    %v1668 = vshrl.u32 %v1376, 16
    %v1670 = vrot.slane %v1668, 7
    %v1671 = vshll.u32 %v1376, 16
    %v1673 = vor.u32 %v1670, %v1671
    %v1674 = vrot.slane %v1670, 4
    %v1676 = vshrl.u32 %v1377, 16
    %v1678 = vrot.slane %v1676, 7
    %v1679 = vshll.u32 %v1377, 16
    %v1681 = vor.u32 %v1678, %v1679
    %v1682 = vsel %vm1411, %v1674, %v1681
    %v1683 = vrot.slane %v1678, 4
    %v1685 = vshrl.u32 %v1378, 16
    %v1687 = vrot.slane %v1685, 7
    %v1688 = vshll.u32 %v1378, 16
    %v1690 = vor.u32 %v1687, %v1688
    %v1691 = vrot.slane %v1687, 4
    %v1693 = vshrl.u32 %v1379, 16
    %v1695 = vrot.slane %v1693, 7
    %v1696 = vshll.u32 %v1379, 16
    %v1698 = vor.u32 %v1695, %v1696
    %v1699 = vsel %vm1411, %v1691, %v1698
    %v1700 = vrot.slane %v1695, 4
    %v1702 = vshrl.u32 %v1380, 16
    %v1704 = vrot.slane %v1702, 7
    %v1705 = vshll.u32 %v1380, 16
    %v1707 = vor.u32 %v1704, %v1705
    %v1708 = vrot.slane %v1704, 4
    %v1710 = vshrl.u32 %v1381, 16
    %v1712 = vrot.slane %v1710, 7
    %v1713 = vshll.u32 %v1381, 16
    %v1715 = vor.u32 %v1712, %v1713
    %v1716 = vsel %vm1411, %v1708, %v1715
    %v1717 = vrot.slane %v1712, 4
    %v1719 = vshrl.u32 %v1382, 16
    %v1721 = vrot.slane %v1719, 7
    %v1722 = vshll.u32 %v1382, 16
    %v1724 = vor.u32 %v1721, %v1722
    %v1725 = vrot.slane %v1721, 4
    %v1727 = vshrl.u32 %v1383, 16
    %v1729 = vrot.slane %v1727, 7
    %v1730 = vshll.u32 %v1383, 16
    %v1732 = vor.u32 %v1729, %v1730
    %v1733 = vsel %vm1411, %v1725, %v1732
    %v1734 = vrot.slane %v1729, 4
    %v1736 = vshrl.u32 %v1384, 16
    %v1738 = vrot.slane %v1736, 7
    %v1739 = vshll.u32 %v1384, 16
    %v1741 = vor.u32 %v1738, %v1739
    %v1742 = vrot.slane %v1738, 4
    %v1744 = vshrl.u32 %v1385, 16
    %v1746 = vrot.slane %v1744, 7
    %v1747 = vshll.u32 %v1385, 16
    %v1749 = vor.u32 %v1746, %v1747
    %v1750 = vsel %vm1411, %v1742, %v1749
    %v1751 = vrot.slane %v1746, 4
    %v1753 = vshrl.u32 %v1386, 16
    %v1755 = vrot.slane %v1753, 7
    %v1756 = vshll.u32 %v1386, 16
    %v1758 = vor.u32 %v1755, %v1756
    %v1759 = vrot.slane %v1755, 4
    %v1761 = vshrl.u32 %v1387, 16
    %v1763 = vrot.slane %v1761, 7
    %v1764 = vshll.u32 %v1387, 16
    %v1766 = vor.u32 %v1763, %v1764
    %v1767 = vsel %vm1411, %v1759, %v1766
    %v1768 = vrot.slane %v1763, 4
    %v1770 = vshrl.u32 %v1388, 16
    %v1772 = vrot.slane %v1770, 7
    %v1773 = vshll.u32 %v1388, 16
    %v1775 = vor.u32 %v1772, %v1773
    %v1776 = vrot.slane %v1772, 4
    %v1778 = vshrl.u32 %v1389, 16
    %v1780 = vrot.slane %v1778, 7
    %v1781 = vshll.u32 %v1389, 16
    %v1783 = vor.u32 %v1780, %v1781
    %v1784 = vsel %vm1411, %v1776, %v1783
    %v1785 = vrot.slane %v1780, 4
    %v1787 = vshrl.u32 %v1390, 16
    %v1789 = vrot.slane %v1787, 7
    %v1790 = vshll.u32 %v1390, 16
    %v1792 = vor.u32 %v1789, %v1790
    %v1793 = vrot.slane %v1789, 4
    %v1795 = vshrl.u32 %v1391, 16
    %v1797 = vrot.slane %v1795, 7
    %v1798 = vshll.u32 %v1391, 16
    %v1800 = vor.u32 %v1797, %v1798
    %v1801 = vsel %vm1411, %v1793, %v1800
    %v1802 = vrot.slane %v1797, 4
    %v1804 = vshrl.u32 %v1392, 16
    %v1806 = vrot.slane %v1804, 7
    %v1807 = vshll.u32 %v1392, 16
    %v1809 = vor.u32 %v1806, %v1807
    %v1810 = vrot.slane %v1806, 4
    %v1812 = vshrl.u32 %v1393, 16
    %v1814 = vrot.slane %v1812, 7
    %v1815 = vshll.u32 %v1393, 16
    %v1817 = vor.u32 %v1814, %v1815
    %v1818 = vsel %vm1411, %v1810, %v1817
    %v1819 = vrot.slane %v1814, 4
    %v1821 = vshrl.u32 %v1394, 16
    %v1823 = vrot.slane %v1821, 7
    %v1824 = vshll.u32 %v1394, 16
    %v1826 = vor.u32 %v1823, %v1824
    %v1827 = vrot.slane %v1823, 4
    %v1829 = vshrl.u32 %v1395, 16
    %v1831 = vrot.slane %v1829, 7
    %v1832 = vshll.u32 %v1395, 16
    %v1834 = vor.u32 %v1831, %v1832
    %v1835 = vsel %vm1411, %v1827, %v1834
    %v1836 = vrot.slane %v1831, 4
    %v1838 = vshrl.u32 %v1396, 16
    %v1840 = vrot.slane %v1838, 7
    %v1841 = vshll.u32 %v1396, 16
    %v1843 = vor.u32 %v1840, %v1841
    %v1844 = vrot.slane %v1840, 4
    %v1846 = vshrl.u32 %v1397, 16
    %v1848 = vrot.slane %v1846, 7
    %v1849 = vshll.u32 %v1397, 16
    %v1851 = vor.u32 %v1848, %v1849
    %v1852 = vsel %vm1411, %v1844, %v1851
    %v1853 = vrot.slane %v1848, 4
    %v1855 = vshrl.u32 %v1398, 16
    %v1857 = vrot.slane %v1855, 7
    %v1858 = vshll.u32 %v1398, 16
    %v1860 = vor.u32 %v1857, %v1858
    %v1861 = vrot.slane %v1857, 4
    %v1863 = vshrl.u32 %v1399, 16
    %v1865 = vrot.slane %v1863, 7
    %v1866 = vshll.u32 %v1399, 16
    %v1868 = vor.u32 %v1865, %v1866
    %v1869 = vsel %vm1411, %v1861, %v1868
    %v1870 = vrot.slane %v1865, 4
    %v1872 = vshrl.u32 %v1400, 16
    %v1874 = vrot.slane %v1872, 7
    %v1875 = vshll.u32 %v1400, 16
    %v1877 = vor.u32 %v1874, %v1875
    %v1878 = vrot.slane %v1874, 4
    %v1880 = vshrl.u32 %v1401, 16
    %v1882 = vrot.slane %v1880, 7
    %v1883 = vshll.u32 %v1401, 16
    %v1885 = vor.u32 %v1882, %v1883
    %v1886 = vsel %vm1411, %v1878, %v1885
    %v1887 = vrot.slane %v1882, 4
    %v1889 = vshrl.u32 %v1402, 16
    %v1891 = vrot.slane %v1889, 7
    %v1892 = vshll.u32 %v1402, 16
    %v1894 = vor.u32 %v1891, %v1892
    %v1895 = vrot.slane %v1891, 4
    %v1897 = vshrl.u32 %v1403, 16
    %v1899 = vrot.slane %v1897, 7
    %v1900 = vshll.u32 %v1403, 16
    %v1902 = vor.u32 %v1899, %v1900
    %v1903 = vsel %vm1411, %v1895, %v1902
    %v1904 = vrot.slane %v1899, 4
    %v1906 = vshrl.u32 %v1404, 16
    %v1908 = vrot.slane %v1906, 7
    %v1909 = vshll.u32 %v1404, 16
    %v1911 = vor.u32 %v1908, %v1909
    %v1912 = vrot.slane %v1908, 4
    %v1914 = vshrl.u32 %v1405, 16
    %v1916 = vrot.slane %v1914, 7
    %v1917 = vshll.u32 %v1405, 16
    %v1919 = vor.u32 %v1916, %v1917
    %v1920 = vsel %vm1411, %v1912, %v1919
    %v1921 = vrot.slane %v1916, 4
    %v1923 = vshrl.u32 %v1406, 16
    %v1925 = vrot.slane %v1923, 7
    %v1926 = vshll.u32 %v1406, 16
    %v1928 = vor.u32 %v1925, %v1926
    %v1929 = vrot.slane %v1925, 4
    %v1931 = vshrl.u32 %v1407, 16
    %v1933 = vrot.slane %v1931, 7
    %v1934 = vshll.u32 %v1407, 16
    %v1936 = vor.u32 %v1933, %v1934
    %v1937 = vsel %vm1411, %v1929, %v1936
    %v1938 = vrot.slane %v1933, 4
    %v1940 = vshrl.u32 %v1408, 16
    %v1942 = vrot.slane %v1940, 7
    %v1943 = vshll.u32 %v1408, 16
    %v1945 = vor.u32 %v1942, %v1943
    %v1946 = vrot.slane %v1942, 4
    %v1948 = vshrl.u32 %v1409, 16
    %v1950 = vrot.slane %v1948, 7
    %v1951 = vshll.u32 %v1409, 16
    %v1953 = vor.u32 %v1950, %v1951
    %v1954 = vsel %vm1411, %v1946, %v1953
    %v1955 = vrot.slane %v1950, 4
    %s2052 = scalar_lea.vmem [#allocation2], 12
    %vm2053 = vcmask 257024
    %vm2054 = vmand %vm2053, %vm1108
    %v2055 = vld [vmem:[%s2052] sm:$0xf]
    %v2056 = vsel %vm2054, %v1418, %v2055
    %2057 = vst [vmem:[%s2052] sm:$0xf] %v2056
    %2058 = vst.msk [vmem:[%s2052 + $0x4] sm:$0xf] %vm982, %v1427
    %v2059 = vld [vmem:[%s2052 + $0x8] sm:$0x1]
    %v2060 = vsel %vm999, %v1428, %v2059
    %2061 = vst [vmem:[%s2052 + $0x8] sm:$0x1] %v2060
    %v2062 = vld [vmem:[%s2052 + $0xc] sm:$0xf]
    %v2063 = vsel %vm2054, %v1435, %v2062
    %2064 = vst [vmem:[%s2052 + $0xc] sm:$0xf] %v2063
    %2065 = vst.msk [vmem:[%s2052 + $0x10] sm:$0xf] %vm982, %v1444
    %v2066 = vld [vmem:[%s2052 + $0x14] sm:$0x1]
    %v2067 = vsel %vm999, %v1445, %v2066
    %2068 = vst [vmem:[%s2052 + $0x14] sm:$0x1] %v2067
    %v2069 = vld [vmem:[%s2052 + $0x18] sm:$0xf]
    %v2070 = vsel %vm2054, %v1452, %v2069
    %2071 = vst [vmem:[%s2052 + $0x18] sm:$0xf] %v2070
    %2072 = vst.msk [vmem:[%s2052 + $0x1c] sm:$0xf] %vm982, %v1461
    %v2073 = vld [vmem:[%s2052 + $0x20] sm:$0x1]
    %v2074 = vsel %vm999, %v1462, %v2073
    %2075 = vst [vmem:[%s2052 + $0x20] sm:$0x1] %v2074
    %v2076 = vld [vmem:[%s2052 + $0x24] sm:$0xf]
    %v2077 = vsel %vm2054, %v1469, %v2076
    %2078 = vst [vmem:[%s2052 + $0x24] sm:$0xf] %v2077
    %2079 = vst.msk [vmem:[%s2052 + $0x28] sm:$0xf] %vm982, %v1478
    %v2080 = vld [vmem:[%s2052 + $0x2c] sm:$0x1]
    %v2081 = vsel %vm999, %v1479, %v2080
    %2082 = vst [vmem:[%s2052 + $0x2c] sm:$0x1] %v2081
    %v2083 = vld [vmem:[%s2052 + $0x30] sm:$0xf]
    %v2084 = vsel %vm2054, %v1486, %v2083
    %2085 = vst [vmem:[%s2052 + $0x30] sm:$0xf] %v2084
    %2086 = vst.msk [vmem:[%s2052 + $0x34] sm:$0xf] %vm982, %v1495
    %v2087 = vld [vmem:[%s2052 + $0x38] sm:$0x1]
    %v2088 = vsel %vm999, %v1496, %v2087
    %2089 = vst [vmem:[%s2052 + $0x38] sm:$0x1] %v2088
    %v2090 = vld [vmem:[%s2052 + $0x3c] sm:$0xf]
    %v2091 = vsel %vm2054, %v1503, %v2090
    %2092 = vst [vmem:[%s2052 + $0x3c] sm:$0xf] %v2091
    %2093 = vst.msk [vmem:[%s2052 + $0x40] sm:$0xf] %vm982, %v1512
    %v2094 = vld [vmem:[%s2052 + $0x44] sm:$0x1]
    %v2095 = vsel %vm999, %v1513, %v2094
    %2096 = vst [vmem:[%s2052 + $0x44] sm:$0x1] %v2095
    %v2097 = vld [vmem:[%s2052 + $0x48] sm:$0xf]
    %v2098 = vsel %vm2054, %v1520, %v2097
    %2099 = vst [vmem:[%s2052 + $0x48] sm:$0xf] %v2098
    %2100 = vst.msk [vmem:[%s2052 + $0x4c] sm:$0xf] %vm982, %v1529
    %v2101 = vld [vmem:[%s2052 + $0x50] sm:$0x1]
    %v2102 = vsel %vm999, %v1530, %v2101
    %2103 = vst [vmem:[%s2052 + $0x50] sm:$0x1] %v2102
    %v2104 = vld [vmem:[%s2052 + $0x54] sm:$0xf]
    %v2105 = vsel %vm2054, %v1537, %v2104
    %2106 = vst [vmem:[%s2052 + $0x54] sm:$0xf] %v2105
    %2107 = vst.msk [vmem:[%s2052 + $0x58] sm:$0xf] %vm982, %v1546
    %v2108 = vld [vmem:[%s2052 + $0x5c] sm:$0x1]
    %v2109 = vsel %vm999, %v1547, %v2108
    %2110 = vst [vmem:[%s2052 + $0x5c] sm:$0x1] %v2109
    %v2111 = vld [vmem:[%s2052 + $0x60] sm:$0xf]
    %v2112 = vsel %vm2054, %v1554, %v2111
    %2113 = vst [vmem:[%s2052 + $0x60] sm:$0xf] %v2112
    %2114 = vst.msk [vmem:[%s2052 + $0x64] sm:$0xf] %vm982, %v1563
    %v2115 = vld [vmem:[%s2052 + $0x68] sm:$0x1]
    %v2116 = vsel %vm999, %v1564, %v2115
    %2117 = vst [vmem:[%s2052 + $0x68] sm:$0x1] %v2116
    %v2118 = vld [vmem:[%s2052 + $0x6c] sm:$0xf]
    %v2119 = vsel %vm2054, %v1571, %v2118
    %2120 = vst [vmem:[%s2052 + $0x6c] sm:$0xf] %v2119
    %2121 = vst.msk [vmem:[%s2052 + $0x70] sm:$0xf] %vm982, %v1580
    %v2122 = vld [vmem:[%s2052 + $0x74] sm:$0x1]
    %v2123 = vsel %vm999, %v1581, %v2122
    %2124 = vst [vmem:[%s2052 + $0x74] sm:$0x1] %v2123
    %v2125 = vld [vmem:[%s2052 + $0x78] sm:$0xf]
    %v2126 = vsel %vm2054, %v1588, %v2125
    %2127 = vst [vmem:[%s2052 + $0x78] sm:$0xf] %v2126
    %2128 = vst.msk [vmem:[%s2052 + $0x7c] sm:$0xf] %vm982, %v1597
    %v2129 = vld [vmem:[%s2052 + $0x80] sm:$0x1]
    %v2130 = vsel %vm999, %v1598, %v2129
    %2131 = vst [vmem:[%s2052 + $0x80] sm:$0x1] %v2130
    %v2132 = vld [vmem:[%s2052 + $0x84] sm:$0xf]
    %v2133 = vsel %vm2054, %v1605, %v2132
    %2134 = vst [vmem:[%s2052 + $0x84] sm:$0xf] %v2133
    %2135 = vst.msk [vmem:[%s2052 + $0x88] sm:$0xf] %vm982, %v1614
    %v2136 = vld [vmem:[%s2052 + $0x8c] sm:$0x1]
    %v2137 = vsel %vm999, %v1615, %v2136
    %2138 = vst [vmem:[%s2052 + $0x8c] sm:$0x1] %v2137
    %v2139 = vld [vmem:[%s2052 + $0x90] sm:$0xf]
    %v2140 = vsel %vm2054, %v1622, %v2139
    %2141 = vst [vmem:[%s2052 + $0x90] sm:$0xf] %v2140
    %2142 = vst.msk [vmem:[%s2052 + $0x94] sm:$0xf] %vm982, %v1631
    %v2143 = vld [vmem:[%s2052 + $0x98] sm:$0x1]
    %v2144 = vsel %vm999, %v1632, %v2143
    %2145 = vst [vmem:[%s2052 + $0x98] sm:$0x1] %v2144
    %v2146 = vld [vmem:[%s2052 + $0x9c] sm:$0xf]
    %v2147 = vsel %vm2054, %v1639, %v2146
    %2148 = vst [vmem:[%s2052 + $0x9c] sm:$0xf] %v2147
    %2149 = vst.msk [vmem:[%s2052 + $0xa0] sm:$0xf] %vm982, %v1648
    %v2150 = vld [vmem:[%s2052 + $0xa4] sm:$0x1]
    %v2151 = vsel %vm999, %v1649, %v2150
    %2152 = vst [vmem:[%s2052 + $0xa4] sm:$0x1] %v2151
    %v2153 = vld [vmem:[%s2052 + $0xa8] sm:$0xf]
    %v2154 = vsel %vm2054, %v1656, %v2153
    %2155 = vst [vmem:[%s2052 + $0xa8] sm:$0xf] %v2154
    %2156 = vst.msk [vmem:[%s2052 + $0xac] sm:$0xf] %vm982, %v1665
    %v2157 = vld [vmem:[%s2052 + $0xb0] sm:$0x1]
    %v2158 = vsel %vm999, %v1666, %v2157
    %2159 = vst [vmem:[%s2052 + $0xb0] sm:$0x1] %v2158
    %v2160 = vld [vmem:[%s2052 + $0xb4] sm:$0xf]
    %v2161 = vsel %vm2054, %v1673, %v2160
    %2162 = vst [vmem:[%s2052 + $0xb4] sm:$0xf] %v2161
    %2163 = vst.msk [vmem:[%s2052 + $0xb8] sm:$0xf] %vm982, %v1682
    %v2164 = vld [vmem:[%s2052 + $0xbc] sm:$0x1]
    %v2165 = vsel %vm999, %v1683, %v2164
    %2166 = vst [vmem:[%s2052 + $0xbc] sm:$0x1] %v2165
    %v2167 = vld [vmem:[%s2052 + $0xd8] sm:$0xf]
    %v2168 = vsel %vm2054, %v1690, %v2167
    %2169 = vst [vmem:[%s2052 + $0xd8] sm:$0xf] %v2168
    %2170 = vst.msk [vmem:[%s2052 + $0xdc] sm:$0xf] %vm982, %v1699
    %v2171 = vld [vmem:[%s2052 + $0xe0] sm:$0x1]
    %v2172 = vsel %vm999, %v1700, %v2171
    %2173 = vst [vmem:[%s2052 + $0xe0] sm:$0x1] %v2172
    %v2174 = vld [vmem:[%s2052 + $0xe4] sm:$0xf]
    %v2175 = vsel %vm2054, %v1707, %v2174
    %2176 = vst [vmem:[%s2052 + $0xe4] sm:$0xf] %v2175
    %2177 = vst.msk [vmem:[%s2052 + $0xe8] sm:$0xf] %vm982, %v1716
    %v2178 = vld [vmem:[%s2052 + $0xec] sm:$0x1]
    %v2179 = vsel %vm999, %v1717, %v2178
    %2180 = vst [vmem:[%s2052 + $0xec] sm:$0x1] %v2179
    %v2181 = vld [vmem:[%s2052 + $0xf0] sm:$0xf]
    %v2182 = vsel %vm2054, %v1724, %v2181
    %2183 = vst [vmem:[%s2052 + $0xf0] sm:$0xf] %v2182
    %2184 = vst.msk [vmem:[%s2052 + $0xf4] sm:$0xf] %vm982, %v1733
    %v2185 = vld [vmem:[%s2052 + $0xf8] sm:$0x1]
    %v2186 = vsel %vm999, %v1734, %v2185
    %2187 = vst [vmem:[%s2052 + $0xf8] sm:$0x1] %v2186
    %v2188 = vld [vmem:[%s2052 + $0xfc] sm:$0xf]
    %v2189 = vsel %vm2054, %v1741, %v2188
    %2190 = vst [vmem:[%s2052 + $0xfc] sm:$0xf] %v2189
    %2191 = vst.msk [vmem:[%s2052 + $0x100] sm:$0xf] %vm982, %v1750
    %v2192 = vld [vmem:[%s2052 + $0x104] sm:$0x1]
    %v2193 = vsel %vm999, %v1751, %v2192
    %2194 = vst [vmem:[%s2052 + $0x104] sm:$0x1] %v2193
    %v2195 = vld [vmem:[%s2052 + $0x108] sm:$0xf]
    %v2196 = vsel %vm2054, %v1758, %v2195
    %2197 = vst [vmem:[%s2052 + $0x108] sm:$0xf] %v2196
    %2198 = vst.msk [vmem:[%s2052 + $0x10c] sm:$0xf] %vm982, %v1767
    %v2199 = vld [vmem:[%s2052 + $0x110] sm:$0x1]
    %v2200 = vsel %vm999, %v1768, %v2199
    %2201 = vst [vmem:[%s2052 + $0x110] sm:$0x1] %v2200
    %v2202 = vld [vmem:[%s2052 + $0x114] sm:$0xf]
    %v2203 = vsel %vm2054, %v1775, %v2202
    %2204 = vst [vmem:[%s2052 + $0x114] sm:$0xf] %v2203
    %2205 = vst.msk [vmem:[%s2052 + $0x118] sm:$0xf] %vm982, %v1784
    %v2206 = vld [vmem:[%s2052 + $0x11c] sm:$0x1]
    %v2207 = vsel %vm999, %v1785, %v2206
    %2208 = vst [vmem:[%s2052 + $0x11c] sm:$0x1] %v2207
    %v2209 = vld [vmem:[%s2052 + $0x120] sm:$0xf]
    %v2210 = vsel %vm2054, %v1792, %v2209
    %2211 = vst [vmem:[%s2052 + $0x120] sm:$0xf] %v2210
    %2212 = vst.msk [vmem:[%s2052 + $0x124] sm:$0xf] %vm982, %v1801
    %v2213 = vld [vmem:[%s2052 + $0x128] sm:$0x1]
    %v2214 = vsel %vm999, %v1802, %v2213
    %2215 = vst [vmem:[%s2052 + $0x128] sm:$0x1] %v2214
    %v2216 = vld [vmem:[%s2052 + $0x12c] sm:$0xf]
    %v2217 = vsel %vm2054, %v1809, %v2216
    %2218 = vst [vmem:[%s2052 + $0x12c] sm:$0xf] %v2217
    %2219 = vst.msk [vmem:[%s2052 + $0x130] sm:$0xf] %vm982, %v1818
    %v2220 = vld [vmem:[%s2052 + $0x134] sm:$0x1]
    %v2221 = vsel %vm999, %v1819, %v2220
    %2222 = vst [vmem:[%s2052 + $0x134] sm:$0x1] %v2221
    %v2223 = vld [vmem:[%s2052 + $0x138] sm:$0xf]
    %v2224 = vsel %vm2054, %v1826, %v2223
    %2225 = vst [vmem:[%s2052 + $0x138] sm:$0xf] %v2224
    %2226 = vst.msk [vmem:[%s2052 + $0x13c] sm:$0xf] %vm982, %v1835
    %v2227 = vld [vmem:[%s2052 + $0x140] sm:$0x1]
    %v2228 = vsel %vm999, %v1836, %v2227
    %2229 = vst [vmem:[%s2052 + $0x140] sm:$0x1] %v2228
    %v2230 = vld [vmem:[%s2052 + $0x144] sm:$0xf]
    %v2231 = vsel %vm2054, %v1843, %v2230
    %2232 = vst [vmem:[%s2052 + $0x144] sm:$0xf] %v2231
    %2233 = vst.msk [vmem:[%s2052 + $0x148] sm:$0xf] %vm982, %v1852
    %v2234 = vld [vmem:[%s2052 + $0x14c] sm:$0x1]
    %v2235 = vsel %vm999, %v1853, %v2234
    %2236 = vst [vmem:[%s2052 + $0x14c] sm:$0x1] %v2235
    %v2237 = vld [vmem:[%s2052 + $0x150] sm:$0xf]
    %v2238 = vsel %vm2054, %v1860, %v2237
    %2239 = vst [vmem:[%s2052 + $0x150] sm:$0xf] %v2238
    %2240 = vst.msk [vmem:[%s2052 + $0x154] sm:$0xf] %vm982, %v1869
    %v2241 = vld [vmem:[%s2052 + $0x158] sm:$0x1]
    %v2242 = vsel %vm999, %v1870, %v2241
    %2243 = vst [vmem:[%s2052 + $0x158] sm:$0x1] %v2242
    %v2244 = vld [vmem:[%s2052 + $0x15c] sm:$0xf]
    %v2245 = vsel %vm2054, %v1877, %v2244
    %2246 = vst [vmem:[%s2052 + $0x15c] sm:$0xf] %v2245
    %2247 = vst.msk [vmem:[%s2052 + $0x160] sm:$0xf] %vm982, %v1886
    %v2248 = vld [vmem:[%s2052 + $0x164] sm:$0x1]
    %v2249 = vsel %vm999, %v1887, %v2248
    %2250 = vst [vmem:[%s2052 + $0x164] sm:$0x1] %v2249
    %v2251 = vld [vmem:[%s2052 + $0x168] sm:$0xf]
    %v2252 = vsel %vm2054, %v1894, %v2251
    %2253 = vst [vmem:[%s2052 + $0x168] sm:$0xf] %v2252
    %2254 = vst.msk [vmem:[%s2052 + $0x16c] sm:$0xf] %vm982, %v1903
    %v2255 = vld [vmem:[%s2052 + $0x170] sm:$0x1]
    %v2256 = vsel %vm999, %v1904, %v2255
    %2257 = vst [vmem:[%s2052 + $0x170] sm:$0x1] %v2256
    %v2258 = vld [vmem:[%s2052 + $0x174] sm:$0xf]
    %v2259 = vsel %vm2054, %v1911, %v2258
    %2260 = vst [vmem:[%s2052 + $0x174] sm:$0xf] %v2259
    %2261 = vst.msk [vmem:[%s2052 + $0x178] sm:$0xf] %vm982, %v1920
    %v2262 = vld [vmem:[%s2052 + $0x17c] sm:$0x1]
    %v2263 = vsel %vm999, %v1921, %v2262
    %2264 = vst [vmem:[%s2052 + $0x17c] sm:$0x1] %v2263
    %v2265 = vld [vmem:[%s2052 + $0x180] sm:$0xf]
    %v2266 = vsel %vm2054, %v1928, %v2265
    %2267 = vst [vmem:[%s2052 + $0x180] sm:$0xf] %v2266
    %2268 = vst.msk [vmem:[%s2052 + $0x184] sm:$0xf] %vm982, %v1937
    %v2269 = vld [vmem:[%s2052 + $0x188] sm:$0x1]
    %v2270 = vsel %vm999, %v1938, %v2269
    %2271 = vst [vmem:[%s2052 + $0x188] sm:$0x1] %v2270
    %v2272 = vld [vmem:[%s2052 + $0x18c] sm:$0xf]
    %v2273 = vsel %vm2054, %v1945, %v2272
    %2274 = vst [vmem:[%s2052 + $0x18c] sm:$0xf] %v2273
    %2275 = vst.msk [vmem:[%s2052 + $0x190] sm:$0xf] %vm982, %v1954
    %v2276 = vld [vmem:[%s2052 + $0x194] sm:$0x1]
    %v2277 = vsel %vm999, %v1955, %v2276
    %2278 = vst [vmem:[%s2052 + $0x194] sm:$0x1] %v2277
    %v2279 = vld [vmem:[#allocation2] sm:$0xf]
    %v2280 = vld [vmem:[#allocation2 + $0x4] sm:$0xf]
    %v2281 = vld [vmem:[#allocation2 + $0xc] sm:$0xf]
    %v2282 = vld [vmem:[#allocation2 + $0x10] sm:$0xf]
    %v2283 = vld [vmem:[#allocation2 + $0x18] sm:$0xf]
    %v2284 = vld [vmem:[#allocation2 + $0x1c] sm:$0xf]
    %v2285 = vld [vmem:[#allocation2 + $0x24] sm:$0xf]
    %v2286 = vld [vmem:[#allocation2 + $0x28] sm:$0xf]
    %v2287 = vld [vmem:[#allocation2 + $0x30] sm:$0xf]
    %v2288 = vld [vmem:[#allocation2 + $0x34] sm:$0xf]
    %v2289 = vld [vmem:[#allocation2 + $0x3c] sm:$0xf]
    %v2290 = vld [vmem:[#allocation2 + $0x40] sm:$0xf]
    %v2291 = vld [vmem:[#allocation2 + $0x48] sm:$0xf]
    %v2292 = vld [vmem:[#allocation2 + $0x4c] sm:$0xf]
    %v2293 = vld [vmem:[#allocation2 + $0x54] sm:$0xf]
    %v2294 = vld [vmem:[#allocation2 + $0x58] sm:$0xf]
    %v2295 = vld [vmem:[#allocation2 + $0x60] sm:$0xf]
    %v2296 = vld [vmem:[#allocation2 + $0x64] sm:$0xf]
    %v2297 = vld [vmem:[#allocation2 + $0x6c] sm:$0xf]
    %v2298 = vld [vmem:[#allocation2 + $0x70] sm:$0xf]
    %v2299 = vld [vmem:[#allocation2 + $0x78] sm:$0xf]
    %v2300 = vld [vmem:[#allocation2 + $0x7c] sm:$0xf]
    %v2301 = vld [vmem:[#allocation2 + $0x84] sm:$0xf]
    %v2302 = vld [vmem:[#allocation2 + $0x88] sm:$0xf]
    %v2303 = vld [vmem:[#allocation2 + $0x90] sm:$0xf]
    %v2304 = vld [vmem:[#allocation2 + $0x94] sm:$0xf]
    %v2305 = vld [vmem:[#allocation2 + $0x9c] sm:$0xf]
    %v2306 = vld [vmem:[#allocation2 + $0xa0] sm:$0xf]
    %v2307 = vld [vmem:[#allocation2 + $0xa8] sm:$0xf]
    %v2308 = vld [vmem:[#allocation2 + $0xac] sm:$0xf]
    %v2309 = vld [vmem:[#allocation2 + $0xb4] sm:$0xf]
    %v2310 = vld [vmem:[#allocation2 + $0xb8] sm:$0xf]
    %v2311 = vld [vmem:[#allocation2 + $0xd8] sm:$0xf]
    %v2312 = vld [vmem:[#allocation2 + $0xdc] sm:$0xf]
    %v2313 = vld [vmem:[#allocation2 + $0xe4] sm:$0xf]
    %v2314 = vld [vmem:[#allocation2 + $0xe8] sm:$0xf]
    %v2315 = vld [vmem:[#allocation2 + $0xf0] sm:$0xf]
    %v2316 = vld [vmem:[#allocation2 + $0xf4] sm:$0xf]
    %v2317 = vld [vmem:[#allocation2 + $0xfc] sm:$0xf]
    %v2318 = vld [vmem:[#allocation2 + $0x100] sm:$0xf]
    %v2319 = vld [vmem:[#allocation2 + $0x108] sm:$0xf]
    %v2320 = vld [vmem:[#allocation2 + $0x10c] sm:$0xf]
    %v2321 = vld [vmem:[#allocation2 + $0x114] sm:$0xf]
    %v2322 = vld [vmem:[#allocation2 + $0x118] sm:$0xf]
    %v2323 = vld [vmem:[#allocation2 + $0x120] sm:$0xf]
    %v2324 = vld [vmem:[#allocation2 + $0x124] sm:$0xf]
    %v2325 = vld [vmem:[#allocation2 + $0x12c] sm:$0xf]
    %v2326 = vld [vmem:[#allocation2 + $0x130] sm:$0xf]
    %v2327 = vld [vmem:[#allocation2 + $0x138] sm:$0xf]
    %v2328 = vld [vmem:[#allocation2 + $0x13c] sm:$0xf]
    %v2329 = vld [vmem:[#allocation2 + $0x144] sm:$0xf]
    %v2330 = vld [vmem:[#allocation2 + $0x148] sm:$0xf]
    %v2331 = vld [vmem:[#allocation2 + $0x150] sm:$0xf]
    %v2332 = vld [vmem:[#allocation2 + $0x154] sm:$0xf]
    %v2333 = vld [vmem:[#allocation2 + $0x15c] sm:$0xf]
    %v2334 = vld [vmem:[#allocation2 + $0x160] sm:$0xf]
    %v2335 = vld [vmem:[#allocation2 + $0x168] sm:$0xf]
    %v2336 = vld [vmem:[#allocation2 + $0x16c] sm:$0xf]
    %v2337 = vld [vmem:[#allocation2 + $0x174] sm:$0xf]
    %v2338 = vld [vmem:[#allocation2 + $0x178] sm:$0xf]
    %v2339 = vld [vmem:[#allocation2 + $0x180] sm:$0xf]
    %v2340 = vld [vmem:[#allocation2 + $0x184] sm:$0xf]
    %v2341 = vld [vmem:[#allocation2 + $0x18c] sm:$0xf]
    %v2342 = vld [vmem:[#allocation2 + $0x190] sm:$0xf]
    %v2343 = vld [vmem:[%s3] sm:$0xf]
    %v2344 = vld [vmem:[%s3 + $0x4] sm:$0xf]
    %v2345 = vld [vmem:[%s3 + $0x8] sm:$0xf]
    %v2346 = vld [vmem:[%s3 + $0xc] sm:$0xf]
    %v2347 = vld [vmem:[#allocation2 + $0x8] sm:$0x1]
    %v2348 = vld [vmem:[#allocation2 + $0x14] sm:$0x1]
    %v2349 = vld [vmem:[#allocation2 + $0x20] sm:$0x1]
    %v2350 = vld [vmem:[#allocation2 + $0x2c] sm:$0x1]
    %v2351 = vld [vmem:[#allocation2 + $0x38] sm:$0x1]
    %v2352 = vld [vmem:[#allocation2 + $0x44] sm:$0x1]
    %v2353 = vld [vmem:[#allocation2 + $0x50] sm:$0x1]
    %v2354 = vld [vmem:[#allocation2 + $0x5c] sm:$0x1]
    %v2355 = vld [vmem:[#allocation2 + $0x68] sm:$0x1]
    %v2356 = vld [vmem:[#allocation2 + $0x74] sm:$0x1]
    %v2357 = vld [vmem:[#allocation2 + $0x80] sm:$0x1]
    %v2358 = vld [vmem:[#allocation2 + $0x8c] sm:$0x1]
    %v2359 = vld [vmem:[#allocation2 + $0x98] sm:$0x1]
    %v2360 = vld [vmem:[#allocation2 + $0xa4] sm:$0x1]
    %v2361 = vld [vmem:[#allocation2 + $0xb0] sm:$0x1]
    %v2362 = vld [vmem:[#allocation2 + $0xbc] sm:$0x1]
    %v2363 = vld [vmem:[#allocation2 + $0xe0] sm:$0x1]
    %v2364 = vld [vmem:[#allocation2 + $0xec] sm:$0x1]
    %v2365 = vld [vmem:[#allocation2 + $0xf8] sm:$0x1]
    %v2366 = vld [vmem:[#allocation2 + $0x104] sm:$0x1]
    %v2367 = vld [vmem:[#allocation2 + $0x110] sm:$0x1]
    %v2368 = vld [vmem:[#allocation2 + $0x11c] sm:$0x1]
    %v2369 = vld [vmem:[#allocation2 + $0x128] sm:$0x1]
    %v2370 = vld [vmem:[#allocation2 + $0x134] sm:$0x1]
    %v2371 = vld [vmem:[#allocation2 + $0x140] sm:$0x1]
    %v2372 = vld [vmem:[#allocation2 + $0x14c] sm:$0x1]
    %v2373 = vld [vmem:[#allocation2 + $0x158] sm:$0x1]
    %v2374 = vld [vmem:[#allocation2 + $0x164] sm:$0x1]
    %v2375 = vld [vmem:[#allocation2 + $0x170] sm:$0x1]
    %v2376 = vld [vmem:[#allocation2 + $0x17c] sm:$0x1]
    %v2377 = vld [vmem:[#allocation2 + $0x188] sm:$0x1]
    %v2378 = vld [vmem:[#allocation2 + $0x194] sm:$0x1]
    %vm2379 = vsmask.f32 3328
    %vm2380 = vsmask.f32 7440
    %vm2381 = vmor %vm2379, %vm2380
    %v2383 = vshrl.u32 %v2279, 16
    %v2385 = vrot.slane %v2383, 4
    %v2386 = vshll.u32 %v2279, 16
    %v2388 = vrot.slane %v2386, 5
    %v2389 = vor.u32 %v2385, %v2388
    %v2390 = vrot.slane %v2389, 4
    %v2392 = vshll.u32 %v2280, 16
    %v2394 = vrot.slane %v2392, 5
    %v2395 = vsel %vm2381, %v2390, %v2394
    %v2396 = vshrl.u32 %v2280, 16
    %v2398 = vrot.slane %v2396, 4
    %v2399 = vor.u32 %v2398, %v2394
    %v2400 = vrot.slane %v2399, 4
    %v2402 = vshll.u32 %v2347, 16
    %v2404 = vrot.slane %v2402, 5
    %v2405 = vsel %vm2381, %v2400, %v2404
    %v2407 = vshrl.u32 %v2281, 16
    %v2409 = vrot.slane %v2407, 4
    %v2410 = vshll.u32 %v2281, 16
    %v2412 = vrot.slane %v2410, 5
    %v2413 = vor.u32 %v2409, %v2412
    %v2414 = vrot.slane %v2413, 4
    %v2416 = vshll.u32 %v2282, 16
    %v2418 = vrot.slane %v2416, 5
    %v2419 = vsel %vm2381, %v2414, %v2418
    %v2420 = vshrl.u32 %v2282, 16
    %v2422 = vrot.slane %v2420, 4
    %v2423 = vor.u32 %v2422, %v2418
    %v2424 = vrot.slane %v2423, 4
    %v2426 = vshll.u32 %v2348, 16
    %v2428 = vrot.slane %v2426, 5
    %v2429 = vsel %vm2381, %v2424, %v2428
    %v2431 = vshrl.u32 %v2283, 16
    %v2433 = vrot.slane %v2431, 4
    %v2434 = vshll.u32 %v2283, 16
    %v2436 = vrot.slane %v2434, 5
    %v2437 = vor.u32 %v2433, %v2436
    %v2438 = vrot.slane %v2437, 4
    %v2440 = vshll.u32 %v2284, 16
    %v2442 = vrot.slane %v2440, 5
    %v2443 = vsel %vm2381, %v2438, %v2442
    %v2444 = vshrl.u32 %v2284, 16
    %v2446 = vrot.slane %v2444, 4
    %v2447 = vor.u32 %v2446, %v2442
    %v2448 = vrot.slane %v2447, 4
    %v2450 = vshll.u32 %v2349, 16
    %v2452 = vrot.slane %v2450, 5
    %v2453 = vsel %vm2381, %v2448, %v2452
    %v2455 = vshrl.u32 %v2285, 16
    %v2457 = vrot.slane %v2455, 4
    %v2458 = vshll.u32 %v2285, 16
    %v2460 = vrot.slane %v2458, 5
    %v2461 = vor.u32 %v2457, %v2460
    %v2462 = vrot.slane %v2461, 4
    %v2464 = vshll.u32 %v2286, 16
    %v2466 = vrot.slane %v2464, 5
    %v2467 = vsel %vm2381, %v2462, %v2466
    %v2468 = vshrl.u32 %v2286, 16
    %v2470 = vrot.slane %v2468, 4
    %v2471 = vor.u32 %v2470, %v2466
    %v2472 = vrot.slane %v2471, 4
    %v2474 = vshll.u32 %v2350, 16
    %v2476 = vrot.slane %v2474, 5
    %v2477 = vsel %vm2381, %v2472, %v2476
    %v2479 = vshrl.u32 %v2287, 16
    %v2481 = vrot.slane %v2479, 4
    %v2482 = vshll.u32 %v2287, 16
    %v2484 = vrot.slane %v2482, 5
    %v2485 = vor.u32 %v2481, %v2484
    %v2486 = vrot.slane %v2485, 4
    %v2488 = vshll.u32 %v2288, 16
    %v2490 = vrot.slane %v2488, 5
    %v2491 = vsel %vm2381, %v2486, %v2490
    %v2492 = vshrl.u32 %v2288, 16
    %v2494 = vrot.slane %v2492, 4
    %v2495 = vor.u32 %v2494, %v2490
    %v2496 = vrot.slane %v2495, 4
    %v2498 = vshll.u32 %v2351, 16
    %v2500 = vrot.slane %v2498, 5
    %v2501 = vsel %vm2381, %v2496, %v2500
    %v2503 = vshrl.u32 %v2289, 16
    %v2505 = vrot.slane %v2503, 4
    %v2506 = vshll.u32 %v2289, 16
    %v2508 = vrot.slane %v2506, 5
    %v2509 = vor.u32 %v2505, %v2508
    %v2510 = vrot.slane %v2509, 4
    %v2512 = vshll.u32 %v2290, 16
    %v2514 = vrot.slane %v2512, 5
    %v2515 = vsel %vm2381, %v2510, %v2514
    %v2516 = vshrl.u32 %v2290, 16
    %v2518 = vrot.slane %v2516, 4
    %v2519 = vor.u32 %v2518, %v2514
    %v2520 = vrot.slane %v2519, 4
    %v2522 = vshll.u32 %v2352, 16
    %v2524 = vrot.slane %v2522, 5
    %v2525 = vsel %vm2381, %v2520, %v2524
    %v2527 = vshrl.u32 %v2291, 16
    %v2529 = vrot.slane %v2527, 4
    %v2530 = vshll.u32 %v2291, 16
    %v2532 = vrot.slane %v2530, 5
    %v2533 = vor.u32 %v2529, %v2532
    %v2534 = vrot.slane %v2533, 4
    %v2536 = vshll.u32 %v2292, 16
    %v2538 = vrot.slane %v2536, 5
    %v2539 = vsel %vm2381, %v2534, %v2538
    %v2540 = vshrl.u32 %v2292, 16
    %v2542 = vrot.slane %v2540, 4
    %v2543 = vor.u32 %v2542, %v2538
    %v2544 = vrot.slane %v2543, 4
    %v2546 = vshll.u32 %v2353, 16
    %v2548 = vrot.slane %v2546, 5
    %v2549 = vsel %vm2381, %v2544, %v2548
    %v2551 = vshrl.u32 %v2293, 16
    %v2553 = vrot.slane %v2551, 4
    %v2554 = vshll.u32 %v2293, 16
    %v2556 = vrot.slane %v2554, 5
    %v2557 = vor.u32 %v2553, %v2556
    %v2558 = vrot.slane %v2557, 4
    %v2560 = vshll.u32 %v2294, 16
    %v2562 = vrot.slane %v2560, 5
    %v2563 = vsel %vm2381, %v2558, %v2562
    %v2564 = vshrl.u32 %v2294, 16
    %v2566 = vrot.slane %v2564, 4
    %v2567 = vor.u32 %v2566, %v2562
    %v2568 = vrot.slane %v2567, 4
    %v2570 = vshll.u32 %v2354, 16
    %v2572 = vrot.slane %v2570, 5
    %v2573 = vsel %vm2381, %v2568, %v2572
    %v2575 = vshrl.u32 %v2295, 16
    %v2577 = vrot.slane %v2575, 4
    %v2578 = vshll.u32 %v2295, 16
    %v2580 = vrot.slane %v2578, 5
    %v2581 = vor.u32 %v2577, %v2580
    %v2582 = vrot.slane %v2581, 4
    %v2584 = vshll.u32 %v2296, 16
    %v2586 = vrot.slane %v2584, 5
    %v2587 = vsel %vm2381, %v2582, %v2586
    %v2588 = vshrl.u32 %v2296, 16
    %v2590 = vrot.slane %v2588, 4
    %v2591 = vor.u32 %v2590, %v2586
    %v2592 = vrot.slane %v2591, 4
    %v2594 = vshll.u32 %v2355, 16
    %v2596 = vrot.slane %v2594, 5
    %v2597 = vsel %vm2381, %v2592, %v2596
    %v2599 = vshrl.u32 %v2297, 16
    %v2601 = vrot.slane %v2599, 4
    %v2602 = vshll.u32 %v2297, 16
    %v2604 = vrot.slane %v2602, 5
    %v2605 = vor.u32 %v2601, %v2604
    %v2606 = vrot.slane %v2605, 4
    %v2608 = vshll.u32 %v2298, 16
    %v2610 = vrot.slane %v2608, 5
    %v2611 = vsel %vm2381, %v2606, %v2610
    %v2612 = vshrl.u32 %v2298, 16
    %v2614 = vrot.slane %v2612, 4
    %v2615 = vor.u32 %v2614, %v2610
    %v2616 = vrot.slane %v2615, 4
    %v2618 = vshll.u32 %v2356, 16
    %v2620 = vrot.slane %v2618, 5
    %v2621 = vsel %vm2381, %v2616, %v2620
    %v2623 = vshrl.u32 %v2299, 16
    %v2625 = vrot.slane %v2623, 4
    %v2626 = vshll.u32 %v2299, 16
    %v2628 = vrot.slane %v2626, 5
    %v2629 = vor.u32 %v2625, %v2628
    %v2630 = vrot.slane %v2629, 4
    %v2632 = vshll.u32 %v2300, 16
    %v2634 = vrot.slane %v2632, 5
    %v2635 = vsel %vm2381, %v2630, %v2634
    %v2636 = vshrl.u32 %v2300, 16
    %v2638 = vrot.slane %v2636, 4
    %v2639 = vor.u32 %v2638, %v2634
    %v2640 = vrot.slane %v2639, 4
    %v2642 = vshll.u32 %v2357, 16
    %v2644 = vrot.slane %v2642, 5
    %v2645 = vsel %vm2381, %v2640, %v2644
    %v2647 = vshrl.u32 %v2301, 16
    %v2649 = vrot.slane %v2647, 4
    %v2650 = vshll.u32 %v2301, 16
    %v2652 = vrot.slane %v2650, 5
    %v2653 = vor.u32 %v2649, %v2652
    %v2654 = vrot.slane %v2653, 4
    %v2656 = vshll.u32 %v2302, 16
    %v2658 = vrot.slane %v2656, 5
    %v2659 = vsel %vm2381, %v2654, %v2658
    %v2660 = vshrl.u32 %v2302, 16
    %v2662 = vrot.slane %v2660, 4
    %v2663 = vor.u32 %v2662, %v2658
    %v2664 = vrot.slane %v2663, 4
    %v2666 = vshll.u32 %v2358, 16
    %v2668 = vrot.slane %v2666, 5
    %v2669 = vsel %vm2381, %v2664, %v2668
    %v2671 = vshrl.u32 %v2303, 16
    %v2673 = vrot.slane %v2671, 4
    %v2674 = vshll.u32 %v2303, 16
    %v2676 = vrot.slane %v2674, 5
    %v2677 = vor.u32 %v2673, %v2676
    %v2678 = vrot.slane %v2677, 4
    %v2680 = vshll.u32 %v2304, 16
    %v2682 = vrot.slane %v2680, 5
    %v2683 = vsel %vm2381, %v2678, %v2682
    %v2684 = vshrl.u32 %v2304, 16
    %v2686 = vrot.slane %v2684, 4
    %v2687 = vor.u32 %v2686, %v2682
    %v2688 = vrot.slane %v2687, 4
    %v2690 = vshll.u32 %v2359, 16
    %v2692 = vrot.slane %v2690, 5
    %v2693 = vsel %vm2381, %v2688, %v2692
    %v2695 = vshrl.u32 %v2305, 16
    %v2697 = vrot.slane %v2695, 4
    %v2698 = vshll.u32 %v2305, 16
    %v2700 = vrot.slane %v2698, 5
    %v2701 = vor.u32 %v2697, %v2700
    %v2702 = vrot.slane %v2701, 4
    %v2704 = vshll.u32 %v2306, 16
    %v2706 = vrot.slane %v2704, 5
    %v2707 = vsel %vm2381, %v2702, %v2706
    %v2708 = vshrl.u32 %v2306, 16
    %v2710 = vrot.slane %v2708, 4
    %v2711 = vor.u32 %v2710, %v2706
    %v2712 = vrot.slane %v2711, 4
    %v2714 = vshll.u32 %v2360, 16
    %v2716 = vrot.slane %v2714, 5
    %v2717 = vsel %vm2381, %v2712, %v2716
    %v2719 = vshrl.u32 %v2307, 16
    %v2721 = vrot.slane %v2719, 4
    %v2722 = vshll.u32 %v2307, 16
    %v2724 = vrot.slane %v2722, 5
    %v2725 = vor.u32 %v2721, %v2724
    %v2726 = vrot.slane %v2725, 4
    %v2728 = vshll.u32 %v2308, 16
    %v2730 = vrot.slane %v2728, 5
    %v2731 = vsel %vm2381, %v2726, %v2730
    %v2732 = vshrl.u32 %v2308, 16
    %v2734 = vrot.slane %v2732, 4
    %v2735 = vor.u32 %v2734, %v2730
    %v2736 = vrot.slane %v2735, 4
    %v2738 = vshll.u32 %v2361, 16
    %v2740 = vrot.slane %v2738, 5
    %v2741 = vsel %vm2381, %v2736, %v2740
    %v2743 = vshrl.u32 %v2309, 16
    %v2745 = vrot.slane %v2743, 4
    %v2746 = vshll.u32 %v2309, 16
    %v2748 = vrot.slane %v2746, 5
    %v2749 = vor.u32 %v2745, %v2748
    %v2750 = vrot.slane %v2749, 4
    %v2752 = vshll.u32 %v2310, 16
    %v2754 = vrot.slane %v2752, 5
    %v2755 = vsel %vm2381, %v2750, %v2754
    %v2756 = vshrl.u32 %v2310, 16
    %v2758 = vrot.slane %v2756, 4
    %v2759 = vor.u32 %v2758, %v2754
    %v2760 = vrot.slane %v2759, 4
    %v2762 = vshll.u32 %v2362, 16
    %v2764 = vrot.slane %v2762, 5
    %v2765 = vsel %vm2381, %v2760, %v2764
    %v2767 = vshrl.u32 %v2311, 16
    %v2769 = vrot.slane %v2767, 4
    %v2770 = vshll.u32 %v2311, 16
    %v2772 = vrot.slane %v2770, 5
    %v2773 = vor.u32 %v2769, %v2772
    %v2774 = vrot.slane %v2773, 4
    %v2776 = vshll.u32 %v2312, 16
    %v2778 = vrot.slane %v2776, 5
    %v2779 = vsel %vm2381, %v2774, %v2778
    %v2780 = vshrl.u32 %v2312, 16
    %v2782 = vrot.slane %v2780, 4
    %v2783 = vor.u32 %v2782, %v2778
    %v2784 = vrot.slane %v2783, 4
    %v2786 = vshll.u32 %v2363, 16
    %v2788 = vrot.slane %v2786, 5
    %v2789 = vsel %vm2381, %v2784, %v2788
    %v2791 = vshrl.u32 %v2313, 16
    %v2793 = vrot.slane %v2791, 4
    %v2794 = vshll.u32 %v2313, 16
    %v2796 = vrot.slane %v2794, 5
    %v2797 = vor.u32 %v2793, %v2796
    %v2798 = vrot.slane %v2797, 4
    %v2800 = vshll.u32 %v2314, 16
    %v2802 = vrot.slane %v2800, 5
    %v2803 = vsel %vm2381, %v2798, %v2802
    %v2804 = vshrl.u32 %v2314, 16
    %v2806 = vrot.slane %v2804, 4
    %v2807 = vor.u32 %v2806, %v2802
    %v2808 = vrot.slane %v2807, 4
    %v2810 = vshll.u32 %v2364, 16
    %v2812 = vrot.slane %v2810, 5
    %v2813 = vsel %vm2381, %v2808, %v2812
    %v2815 = vshrl.u32 %v2315, 16
    %v2817 = vrot.slane %v2815, 4
    %v2818 = vshll.u32 %v2315, 16
    %v2820 = vrot.slane %v2818, 5
    %v2821 = vor.u32 %v2817, %v2820
    %v2822 = vrot.slane %v2821, 4
    %v2824 = vshll.u32 %v2316, 16
    %v2826 = vrot.slane %v2824, 5
    %v2827 = vsel %vm2381, %v2822, %v2826
    %v2828 = vshrl.u32 %v2316, 16
    %v2830 = vrot.slane %v2828, 4
    %v2831 = vor.u32 %v2830, %v2826
    %v2832 = vrot.slane %v2831, 4
    %v2834 = vshll.u32 %v2365, 16
    %v2836 = vrot.slane %v2834, 5
    %v2837 = vsel %vm2381, %v2832, %v2836
    %v2839 = vshrl.u32 %v2317, 16
    %v2841 = vrot.slane %v2839, 4
    %v2842 = vshll.u32 %v2317, 16
    %v2844 = vrot.slane %v2842, 5
    %v2845 = vor.u32 %v2841, %v2844
    %v2846 = vrot.slane %v2845, 4
    %v2848 = vshll.u32 %v2318, 16
    %v2850 = vrot.slane %v2848, 5
    %v2851 = vsel %vm2381, %v2846, %v2850
    %v2852 = vshrl.u32 %v2318, 16
    %v2854 = vrot.slane %v2852, 4
    %v2855 = vor.u32 %v2854, %v2850
    %v2856 = vrot.slane %v2855, 4
    %v2858 = vshll.u32 %v2366, 16
    %v2860 = vrot.slane %v2858, 5
    %v2861 = vsel %vm2381, %v2856, %v2860
    %v2863 = vshrl.u32 %v2319, 16
    %v2865 = vrot.slane %v2863, 4
    %v2866 = vshll.u32 %v2319, 16
    %v2868 = vrot.slane %v2866, 5
    %v2869 = vor.u32 %v2865, %v2868
    %v2870 = vrot.slane %v2869, 4
    %v2872 = vshll.u32 %v2320, 16
    %v2874 = vrot.slane %v2872, 5
    %v2875 = vsel %vm2381, %v2870, %v2874
    %v2876 = vshrl.u32 %v2320, 16
    %v2878 = vrot.slane %v2876, 4
    %v2879 = vor.u32 %v2878, %v2874
    %v2880 = vrot.slane %v2879, 4
    %v2882 = vshll.u32 %v2367, 16
    %v2884 = vrot.slane %v2882, 5
    %v2885 = vsel %vm2381, %v2880, %v2884
    %v2887 = vshrl.u32 %v2321, 16
    %v2889 = vrot.slane %v2887, 4
    %v2890 = vshll.u32 %v2321, 16
    %v2892 = vrot.slane %v2890, 5
    %v2893 = vor.u32 %v2889, %v2892
    %v2894 = vrot.slane %v2893, 4
    %v2896 = vshll.u32 %v2322, 16
    %v2898 = vrot.slane %v2896, 5
    %v2899 = vsel %vm2381, %v2894, %v2898
    %v2900 = vshrl.u32 %v2322, 16
    %v2902 = vrot.slane %v2900, 4
    %v2903 = vor.u32 %v2902, %v2898
    %v2904 = vrot.slane %v2903, 4
    %v2906 = vshll.u32 %v2368, 16
    %v2908 = vrot.slane %v2906, 5
    %v2909 = vsel %vm2381, %v2904, %v2908
    %v2911 = vshrl.u32 %v2323, 16
    %v2913 = vrot.slane %v2911, 4
    %v2914 = vshll.u32 %v2323, 16
    %v2916 = vrot.slane %v2914, 5
    %v2917 = vor.u32 %v2913, %v2916
    %v2918 = vrot.slane %v2917, 4
    %v2920 = vshll.u32 %v2324, 16
    %v2922 = vrot.slane %v2920, 5
    %v2923 = vsel %vm2381, %v2918, %v2922
    %v2924 = vshrl.u32 %v2324, 16
    %v2926 = vrot.slane %v2924, 4
    %v2927 = vor.u32 %v2926, %v2922
    %v2928 = vrot.slane %v2927, 4
    %v2930 = vshll.u32 %v2369, 16
    %v2932 = vrot.slane %v2930, 5
    %v2933 = vsel %vm2381, %v2928, %v2932
    %v2935 = vshrl.u32 %v2325, 16
    %v2937 = vrot.slane %v2935, 4
    %v2938 = vshll.u32 %v2325, 16
    %v2940 = vrot.slane %v2938, 5
    %v2941 = vor.u32 %v2937, %v2940
    %v2942 = vrot.slane %v2941, 4
    %v2944 = vshll.u32 %v2326, 16
    %v2946 = vrot.slane %v2944, 5
    %v2947 = vsel %vm2381, %v2942, %v2946
    %v2948 = vshrl.u32 %v2326, 16
    %v2950 = vrot.slane %v2948, 4
    %v2951 = vor.u32 %v2950, %v2946
    %v2952 = vrot.slane %v2951, 4
    %v2954 = vshll.u32 %v2370, 16
    %v2956 = vrot.slane %v2954, 5
    %v2957 = vsel %vm2381, %v2952, %v2956
    %v2959 = vshrl.u32 %v2327, 16
    %v2961 = vrot.slane %v2959, 4
    %v2962 = vshll.u32 %v2327, 16
    %v2964 = vrot.slane %v2962, 5
    %v2965 = vor.u32 %v2961, %v2964
    %v2966 = vrot.slane %v2965, 4
    %v2968 = vshll.u32 %v2328, 16
    %v2970 = vrot.slane %v2968, 5
    %v2971 = vsel %vm2381, %v2966, %v2970
    %v2972 = vshrl.u32 %v2328, 16
    %v2974 = vrot.slane %v2972, 4
    %v2975 = vor.u32 %v2974, %v2970
    %v2976 = vrot.slane %v2975, 4
    %v2978 = vshll.u32 %v2371, 16
    %v2980 = vrot.slane %v2978, 5
    %v2981 = vsel %vm2381, %v2976, %v2980
    %v2983 = vshrl.u32 %v2329, 16
    %v2985 = vrot.slane %v2983, 4
    %v2986 = vshll.u32 %v2329, 16
    %v2988 = vrot.slane %v2986, 5
    %v2989 = vor.u32 %v2985, %v2988
    %v2990 = vrot.slane %v2989, 4
    %v2992 = vshll.u32 %v2330, 16
    %v2994 = vrot.slane %v2992, 5
    %v2995 = vsel %vm2381, %v2990, %v2994
    %v2996 = vshrl.u32 %v2330, 16
    %v2998 = vrot.slane %v2996, 4
    %v2999 = vor.u32 %v2998, %v2994
    %v3000 = vrot.slane %v2999, 4
    %v3002 = vshll.u32 %v2372, 16
    %v3004 = vrot.slane %v3002, 5
    %v3005 = vsel %vm2381, %v3000, %v3004
    %v3007 = vshrl.u32 %v2331, 16
    %v3009 = vrot.slane %v3007, 4
    %v3010 = vshll.u32 %v2331, 16
    %v3012 = vrot.slane %v3010, 5
    %v3013 = vor.u32 %v3009, %v3012
    %v3014 = vrot.slane %v3013, 4
    %v3016 = vshll.u32 %v2332, 16
    %v3018 = vrot.slane %v3016, 5
    %v3019 = vsel %vm2381, %v3014, %v3018
    %v3020 = vshrl.u32 %v2332, 16
    %v3022 = vrot.slane %v3020, 4
    %v3023 = vor.u32 %v3022, %v3018
    %v3024 = vrot.slane %v3023, 4
    %v3026 = vshll.u32 %v2373, 16
    %v3028 = vrot.slane %v3026, 5
    %v3029 = vsel %vm2381, %v3024, %v3028
    %v3031 = vshrl.u32 %v2333, 16
    %v3033 = vrot.slane %v3031, 4
    %v3034 = vshll.u32 %v2333, 16
    %v3036 = vrot.slane %v3034, 5
    %v3037 = vor.u32 %v3033, %v3036
    %v3038 = vrot.slane %v3037, 4
    %v3040 = vshll.u32 %v2334, 16
    %v3042 = vrot.slane %v3040, 5
    %v3043 = vsel %vm2381, %v3038, %v3042
    %v3044 = vshrl.u32 %v2334, 16
    %v3046 = vrot.slane %v3044, 4
    %v3047 = vor.u32 %v3046, %v3042
    %v3048 = vrot.slane %v3047, 4
    %v3050 = vshll.u32 %v2374, 16
    %v3052 = vrot.slane %v3050, 5
    %v3053 = vsel %vm2381, %v3048, %v3052
    %v3055 = vshrl.u32 %v2335, 16
    %v3057 = vrot.slane %v3055, 4
    %v3058 = vshll.u32 %v2335, 16
    %v3060 = vrot.slane %v3058, 5
    %v3061 = vor.u32 %v3057, %v3060
    %v3062 = vrot.slane %v3061, 4
    %v3064 = vshll.u32 %v2336, 16
    %v3066 = vrot.slane %v3064, 5
    %v3067 = vsel %vm2381, %v3062, %v3066
    %v3068 = vshrl.u32 %v2336, 16
    %v3070 = vrot.slane %v3068, 4
    %v3071 = vor.u32 %v3070, %v3066
    %v3072 = vrot.slane %v3071, 4
    %v3074 = vshll.u32 %v2375, 16
    %v3076 = vrot.slane %v3074, 5
    %v3077 = vsel %vm2381, %v3072, %v3076
    %v3079 = vshrl.u32 %v2337, 16
    %v3081 = vrot.slane %v3079, 4
    %v3082 = vshll.u32 %v2337, 16
    %v3084 = vrot.slane %v3082, 5
    %v3085 = vor.u32 %v3081, %v3084
    %v3086 = vrot.slane %v3085, 4
    %v3088 = vshll.u32 %v2338, 16
    %v3090 = vrot.slane %v3088, 5
    %v3091 = vsel %vm2381, %v3086, %v3090
    %v3092 = vshrl.u32 %v2338, 16
    %v3094 = vrot.slane %v3092, 4
    %v3095 = vor.u32 %v3094, %v3090
    %v3096 = vrot.slane %v3095, 4
    %v3098 = vshll.u32 %v2376, 16
    %v3100 = vrot.slane %v3098, 5
    %v3101 = vsel %vm2381, %v3096, %v3100
    %v3103 = vshrl.u32 %v2339, 16
    %v3105 = vrot.slane %v3103, 4
    %v3106 = vshll.u32 %v2339, 16
    %v3108 = vrot.slane %v3106, 5
    %v3109 = vor.u32 %v3105, %v3108
    %v3110 = vrot.slane %v3109, 4
    %v3112 = vshll.u32 %v2340, 16
    %v3114 = vrot.slane %v3112, 5
    %v3115 = vsel %vm2381, %v3110, %v3114
    %v3116 = vshrl.u32 %v2340, 16
    %v3118 = vrot.slane %v3116, 4
    %v3119 = vor.u32 %v3118, %v3114
    %v3120 = vrot.slane %v3119, 4
    %v3122 = vshll.u32 %v2377, 16
    %v3124 = vrot.slane %v3122, 5
    %v3125 = vsel %vm2381, %v3120, %v3124
    %v3127 = vshrl.u32 %v2341, 16
    %v3129 = vrot.slane %v3127, 4
    %v3130 = vshll.u32 %v2341, 16
    %v3132 = vrot.slane %v3130, 5
    %v3133 = vor.u32 %v3129, %v3132
    %v3134 = vrot.slane %v3133, 4
    %v3136 = vshll.u32 %v2342, 16
    %v3138 = vrot.slane %v3136, 5
    %v3139 = vsel %vm2381, %v3134, %v3138
    %v3140 = vshrl.u32 %v2342, 16
    %v3142 = vrot.slane %v3140, 4
    %v3143 = vor.u32 %v3142, %v3138
    %v3144 = vrot.slane %v3143, 4
    %v3146 = vshll.u32 %v2378, 16
    %v3148 = vrot.slane %v3146, 5
    %v3149 = vsel %vm2381, %v3144, %v3148
    %v3150 = vld [vmem:[%s3 + $0x10] sm:$0xf]
    %v3151 = vld [vmem:[%s3 + $0x14] sm:$0xf]
    %v3152 = vld [vmem:[%s3 + $0x18] sm:$0xf]
    %v3153 = vld [vmem:[%s3 + $0x1c] sm:$0xf]
    %v3154 = vunpack.c.l.b16 %v2395
    %v3155 = vunpack.c.l.b16 %v2405
    %v3156 = vunpack.c.l.b16 %v2419
    %v3157 = vunpack.c.l.b16 %v2429
    %v3158 = vunpack.c.l.b16 %v2443
    %v3159 = vunpack.c.l.b16 %v2453
    %v3160 = vunpack.c.l.b16 %v2467
    %v3161 = vunpack.c.l.b16 %v2477
    %v3162 = vunpack.c.l.b16 %v2491
    %v3163 = vunpack.c.l.b16 %v2501
    %v3164 = vunpack.c.l.b16 %v2515
    %v3165 = vunpack.c.l.b16 %v2525
    %v3166 = vunpack.c.l.b16 %v2539
    %v3167 = vunpack.c.l.b16 %v2549
    %v3168 = vunpack.c.l.b16 %v2563
    %v3169 = vunpack.c.l.b16 %v2573
    %v3170 = vunpack.c.l.b16 %v2587
    %v3171 = vunpack.c.l.b16 %v2597
    %v3172 = vunpack.c.l.b16 %v2611
    %v3173 = vunpack.c.l.b16 %v2621
    %v3174 = vunpack.c.l.b16 %v2635
    %v3175 = vunpack.c.l.b16 %v2645
    %v3176 = vunpack.c.l.b16 %v2659
    %v3177 = vunpack.c.l.b16 %v2669
    %v3178 = vunpack.c.l.b16 %v2683
    %v3179 = vunpack.c.l.b16 %v2693
    %v3180 = vunpack.c.l.b16 %v2707
    %v3181 = vunpack.c.l.b16 %v2717
    %v3182 = vunpack.c.l.b16 %v2731
    %v3183 = vunpack.c.l.b16 %v2741
    %v3184 = vunpack.c.l.b16 %v2755
    %v3185 = vunpack.c.l.b16 %v2765
    %v3186 = vunpack.c.l.b16 %v2779
    %v3187 = vunpack.c.l.b16 %v2789
    %v3188 = vunpack.c.l.b16 %v2803
    %v3189 = vunpack.c.l.b16 %v2813
    %v3190 = vunpack.c.l.b16 %v2827
    %v3191 = vunpack.c.l.b16 %v2837
    %v3192 = vunpack.c.l.b16 %v2851
    %v3193 = vunpack.c.l.b16 %v2861
    %v3194 = vunpack.c.l.b16 %v2875
    %v3195 = vunpack.c.l.b16 %v2885
    %v3196 = vunpack.c.l.b16 %v2899
    %v3197 = vunpack.c.l.b16 %v2909
    %v3198 = vunpack.c.l.b16 %v2923
    %v3199 = vunpack.c.l.b16 %v2933
    %v3200 = vunpack.c.l.b16 %v2947
    %v3201 = vunpack.c.l.b16 %v2957
    %v3202 = vunpack.c.l.b16 %v2971
    %v3203 = vunpack.c.l.b16 %v2981
    %v3204 = vunpack.c.l.b16 %v2995
    %v3205 = vunpack.c.l.b16 %v3005
    %v3206 = vunpack.c.l.b16 %v3019
    %v3207 = vunpack.c.l.b16 %v3029
    %v3208 = vunpack.c.l.b16 %v3043
    %v3209 = vunpack.c.l.b16 %v3053
    %v3210 = vunpack.c.l.b16 %v3067
    %v3211 = vunpack.c.l.b16 %v3077
    %v3212 = vunpack.c.l.b16 %v3091
    %v3213 = vunpack.c.l.b16 %v3101
    %v3214 = vunpack.c.l.b16 %v3115
    %v3215 = vunpack.c.l.b16 %v3125
    %v3216 = vunpack.c.l.b16 %v3139
    %v3217 = vunpack.c.l.b16 %v3149
    %v3218 = vpack.c.b16 %v3155, %v3154
    %v3219 = vpack.c.b16 %v3157, %v3156
    %v3220 = vpack.c.b16 %v3159, %v3158
    %v3221 = vpack.c.b16 %v3161, %v3160
    %v3222 = vpack.c.b16 %v3163, %v3162
    %v3223 = vpack.c.b16 %v3165, %v3164
    %v3224 = vpack.c.b16 %v3167, %v3166
    %v3225 = vpack.c.b16 %v3169, %v3168
    %v3226 = vpack.c.b16 %v3171, %v3170
    %v3227 = vpack.c.b16 %v3173, %v3172
    %v3228 = vpack.c.b16 %v3175, %v3174
    %v3229 = vpack.c.b16 %v3177, %v3176
    %v3230 = vpack.c.b16 %v3179, %v3178
    %v3231 = vpack.c.b16 %v3181, %v3180
    %v3232 = vpack.c.b16 %v3183, %v3182
    %v3233 = vpack.c.b16 %v3185, %v3184
    %v3234 = vpack.c.b16 %v3187, %v3186
    %v3235 = vpack.c.b16 %v3189, %v3188
    %v3236 = vpack.c.b16 %v3191, %v3190
    %v3237 = vpack.c.b16 %v3193, %v3192
    %v3238 = vpack.c.b16 %v3195, %v3194
    %v3239 = vpack.c.b16 %v3197, %v3196
    %v3240 = vpack.c.b16 %v3199, %v3198
    %v3241 = vpack.c.b16 %v3201, %v3200
    %v3242 = vpack.c.b16 %v3203, %v3202
    %v3243 = vpack.c.b16 %v3205, %v3204
    %v3244 = vpack.c.b16 %v3207, %v3206
    %v3245 = vpack.c.b16 %v3209, %v3208
    %v3246 = vpack.c.b16 %v3211, %v3210
    %v3247 = vpack.c.b16 %v3213, %v3212
    %v3248 = vpack.c.b16 %v3215, %v3214
    %v3249 = vpack.c.b16 %v3217, %v3216
    %v3254 = vunpack.c.l.b16 %v3150
    %v3255 = vunpack.c.l.b16 %v3151
    %v3256 = vunpack.c.l.b16 %v3152
    %v3257 = vunpack.c.l.b16 %v3153
    %v3258 = vpack.c.b16 %v3255, %v3254
    %v3259 = vpack.c.b16 %v3257, %v3256
    %vm3262 = vcmask 261120
    %v3264 = vsel %vm3262, %v3218, 0
    %v3267 = vsel %vm3262, %v3219, 0
    %v3270 = vsel %vm3262, %v3220, 0
    %v3273 = vsel %vm3262, %v3221, 0
    %v3276 = vsel %vm3262, %v3222, 0
    %v3279 = vsel %vm3262, %v3223, 0
    %v3282 = vsel %vm3262, %v3224, 0
    %v3285 = vsel %vm3262, %v3225, 0
    %v3288 = vsel %vm3262, %v3226, 0
    %v3291 = vsel %vm3262, %v3227, 0
    %v3294 = vsel %vm3262, %v3228, 0
    %v3297 = vsel %vm3262, %v3229, 0
    %v3300 = vsel %vm3262, %v3230, 0
    %v3303 = vsel %vm3262, %v3231, 0
    %v3306 = vsel %vm3262, %v3232, 0
    %v3309 = vsel %vm3262, %v3233, 0
    %v3312 = vsel %vm3262, %v3234, 0
    %v3315 = vsel %vm3262, %v3235, 0
    %v3318 = vsel %vm3262, %v3236, 0
    %v3321 = vsel %vm3262, %v3237, 0
    %v3324 = vsel %vm3262, %v3238, 0
    %v3327 = vsel %vm3262, %v3239, 0
    %v3330 = vsel %vm3262, %v3240, 0
    %v3333 = vsel %vm3262, %v3241, 0
    %v3336 = vsel %vm3262, %v3242, 0
    %v3339 = vsel %vm3262, %v3243, 0
    %v3342 = vsel %vm3262, %v3244, 0
    %v3345 = vsel %vm3262, %v3245, 0
    %v3348 = vsel %vm3262, %v3246, 0
    %v3351 = vsel %vm3262, %v3247, 0
    %v3354 = vsel %vm3262, %v3248, 0
    %v3357 = vsel %vm3262, %v3249, 0
    %3359 = vmatprep.subr.bf16.mxu0 0
    %3360 = vmatpush1.bf16.msra.mxu0 %v3258
    %3361 = vmatprep.subr.bf16.mxu0 0
    %3362 = vmatpush1.bf16.msra.mxu0 %v3259
    %3363 = vmatprep.subr.bf16.mxu0 0
    %3364 = vmatpush1.bf16.msra.mxu0 0
    %3365 = vmatprep.subr.bf16.mxu0 0
    %3366 = vmatpush1.bf16.msra.mxu0 0
    %3367 = vmatprep.subr.bf16.mxu0 0
    %3368 = vmatpush1.bf16.msra.mxu0 0
    %3369 = vmatprep.subr.bf16.mxu0 0
    %3370 = vmatpush1.bf16.msra.mxu0 0
    %3371 = vmatprep.subr.bf16.mxu0 0
    %3372 = vmatpush1.bf16.msra.mxu0 0
    %3373 = vmatprep.subr.bf16.mxu0 0
    %3374 = vmatpush1.bf16.msra.mxu0 0
    %3375 = vmatprep.subr.bf16.mxu0 0
    %3376 = vmatpush1.bf16.msra.mxu0 0
    %3377 = vmatprep.subr.bf16.mxu0 0
    %3378 = vmatpush1.bf16.msra.mxu0 0
    %3379 = vmatprep.subr.bf16.mxu0 0
    %3380 = vmatpush1.bf16.msra.mxu0 0
    %3381 = vmatprep.subr.bf16.mxu0 0
    %3382 = vmatpush1.bf16.msra.mxu0 0
    %3383 = vmatprep.subr.bf16.mxu0 0
    %3384 = vmatpush1.bf16.msra.mxu0 0
    %3385 = vmatprep.subr.bf16.mxu0 0
    %3386 = vmatpush1.bf16.msra.mxu0 0
    %3387 = vmatprep.subr.bf16.mxu0 0
    %3388 = vmatpush1.bf16.msra.mxu0 0
    %3389 = vmatprep.subr.bf16.mxu0 0
    %3390 = vmatpush1.bf16.msra.mxu0 0
    %3391 = vmatprep.mubr.bf16.mxu0 0
    %3392 = vmatmul.mubr.bf16.gmra.mrb[0].mxu0 %v3264
    %v3393 = vpop.f32.mrb[0].mxu0
    %v3394 = vadd.f32 0.0, %v3393
    %v3395 = vpop.f32.mrb[0].mxu0
    %v3396 = vpop.f32.mrb[0].mxu0
    %v3397 = vadd.f32 0.0, %v3396
    %v3398 = vpop.f32.mrb[0].mxu0
    %3399 = vmatprep.mubr.bf16.mxu0 0
    %3400 = vmatmul.mubr.bf16.gmra.mrb[0].mxu0 %v3267
    %v3401 = vpop.f32.mrb[0].mxu0
    %v3402 = vadd.f32 0.0, %v3401
    %v3403 = vpop.f32.mrb[0].mxu0
    %v3404 = vpop.f32.mrb[0].mxu0
    %v3405 = vadd.f32 0.0, %v3404
    %v3406 = vpop.f32.mrb[0].mxu0
    %3407 = vmatprep.mubr.bf16.mxu0 0
    %3408 = vmatmul.mubr.bf16.gmra.mrb[0].mxu0 %v3270
    %v3409 = vpop.f32.mrb[0].mxu0
    %v3410 = vadd.f32 0.0, %v3409
    %v3411 = vpop.f32.mrb[0].mxu0
    %v3412 = vpop.f32.mrb[0].mxu0
    %v3413 = vadd.f32 0.0, %v3412
    %v3414 = vpop.f32.mrb[0].mxu0
    %3415 = vmatprep.mubr.bf16.mxu0 0
    %3416 = vmatmul.mubr.bf16.gmra.mrb[0].mxu0 %v3273
    %v3417 = vpop.f32.mrb[0].mxu0
    %v3418 = vadd.f32 0.0, %v3417
    %v3419 = vpop.f32.mrb[0].mxu0
    %v3420 = vpop.f32.mrb[0].mxu0
    %v3421 = vadd.f32 0.0, %v3420
    %v3422 = vpop.f32.mrb[0].mxu0
    %3423 = vmatprep.mubr.bf16.mxu0 0
    %3424 = vmatmul.mubr.bf16.gmra.mrb[0].mxu0 %v3276
    %v3425 = vpop.f32.mrb[0].mxu0
    %v3426 = vadd.f32 0.0, %v3425
    %v3427 = vpop.f32.mrb[0].mxu0
    %v3428 = vpop.f32.mrb[0].mxu0
    %v3429 = vadd.f32 0.0, %v3428
    %v3430 = vpop.f32.mrb[0].mxu0
    %3431 = vmatprep.mubr.bf16.mxu0 0
    %3432 = vmatmul.mubr.bf16.gmra.mrb[0].mxu0 %v3279
    %v3433 = vpop.f32.mrb[0].mxu0
    %v3434 = vadd.f32 0.0, %v3433
    %v3435 = vpop.f32.mrb[0].mxu0
    %v3436 = vpop.f32.mrb[0].mxu0
    %v3437 = vadd.f32 0.0, %v3436
    %v3438 = vpop.f32.mrb[0].mxu0
    %3439 = vmatprep.mubr.bf16.mxu0 0
    %3440 = vmatmul.mubr.bf16.gmra.mrb[0].mxu0 %v3282
    %v3441 = vpop.f32.mrb[0].mxu0
    %v3442 = vadd.f32 0.0, %v3441
    %v3443 = vpop.f32.mrb[0].mxu0
    %v3444 = vpop.f32.mrb[0].mxu0
    %v3445 = vadd.f32 0.0, %v3444
    %v3446 = vpop.f32.mrb[0].mxu0
    %3447 = vmatprep.mubr.bf16.mxu0 0
    %3448 = vmatmul.mubr.bf16.gmra.mrb[0].mxu0 %v3285
    %v3449 = vpop.f32.mrb[0].mxu0
    %v3450 = vadd.f32 0.0, %v3449
    %v3451 = vpop.f32.mrb[0].mxu0
    %v3452 = vpop.f32.mrb[0].mxu0
    %v3453 = vadd.f32 0.0, %v3452
    %v3454 = vpop.f32.mrb[0].mxu0
    %3455 = vmatprep.mubr.bf16.mxu0 0
    %3456 = vmatmul.mubr.bf16.gmra.mrb[0].mxu0 %v3288
    %v3457 = vpop.f32.mrb[0].mxu0
    %v3458 = vadd.f32 0.0, %v3457
    %v3459 = vpop.f32.mrb[0].mxu0
    %v3460 = vpop.f32.mrb[0].mxu0
    %v3461 = vadd.f32 0.0, %v3460
    %v3462 = vpop.f32.mrb[0].mxu0
    %3463 = vmatprep.mubr.bf16.mxu0 0
    %3464 = vmatmul.mubr.bf16.gmra.mrb[0].mxu0 %v3291
    %v3465 = vpop.f32.mrb[0].mxu0
    %v3466 = vadd.f32 0.0, %v3465
    %v3467 = vpop.f32.mrb[0].mxu0
    %v3468 = vpop.f32.mrb[0].mxu0
    %v3469 = vadd.f32 0.0, %v3468
    %v3470 = vpop.f32.mrb[0].mxu0
    %3471 = vmatprep.mubr.bf16.mxu0 0
    %3472 = vmatmul.mubr.bf16.gmra.mrb[0].mxu0 %v3294
    %v3473 = vpop.f32.mrb[0].mxu0
    %v3474 = vadd.f32 0.0, %v3473
    %v3475 = vpop.f32.mrb[0].mxu0
    %v3476 = vpop.f32.mrb[0].mxu0
    %v3477 = vadd.f32 0.0, %v3476
    %v3478 = vpop.f32.mrb[0].mxu0
    %3479 = vmatprep.mubr.bf16.mxu0 0
    %3480 = vmatmul.mubr.bf16.gmra.mrb[0].mxu0 %v3297
    %v3481 = vpop.f32.mrb[0].mxu0
    %v3482 = vadd.f32 0.0, %v3481
    %v3483 = vpop.f32.mrb[0].mxu0
    %v3484 = vpop.f32.mrb[0].mxu0
    %v3485 = vadd.f32 0.0, %v3484
    %v3486 = vpop.f32.mrb[0].mxu0
    %3487 = vmatprep.mubr.bf16.mxu0 0
    %3488 = vmatmul.mubr.bf16.gmra.mrb[0].mxu0 %v3300
    %v3489 = vpop.f32.mrb[0].mxu0
    %v3490 = vadd.f32 0.0, %v3489
    %v3491 = vpop.f32.mrb[0].mxu0
    %v3492 = vpop.f32.mrb[0].mxu0
    %v3493 = vadd.f32 0.0, %v3492
    %v3494 = vpop.f32.mrb[0].mxu0
    %3495 = vmatprep.mubr.bf16.mxu0 0
    %3496 = vmatmul.mubr.bf16.gmra.mrb[0].mxu0 %v3303
    %v3497 = vpop.f32.mrb[0].mxu0
    %v3498 = vadd.f32 0.0, %v3497
    %v3499 = vpop.f32.mrb[0].mxu0
    %v3500 = vpop.f32.mrb[0].mxu0
    %v3501 = vadd.f32 0.0, %v3500
    %v3502 = vpop.f32.mrb[0].mxu0
    %3503 = vmatprep.mubr.bf16.mxu0 0
    %3504 = vmatmul.mubr.bf16.gmra.mrb[0].mxu0 %v3306
    %v3505 = vpop.f32.mrb[0].mxu0
    %v3506 = vadd.f32 0.0, %v3505
    %v3507 = vpop.f32.mrb[0].mxu0
    %v3508 = vpop.f32.mrb[0].mxu0
    %v3509 = vadd.f32 0.0, %v3508
    %v3510 = vpop.f32.mrb[0].mxu0
    %3511 = vmatprep.mubr.bf16.mxu0 0
    %3512 = vmatmul.mubr.bf16.gmra.mrb[0].mxu0 %v3309
    %v3513 = vpop.f32.mrb[0].mxu0
    %v3514 = vadd.f32 0.0, %v3513
    %v3515 = vpop.f32.mrb[0].mxu0
    %v3516 = vpop.f32.mrb[0].mxu0
    %v3517 = vadd.f32 0.0, %v3516
    %v3518 = vpop.f32.mrb[0].mxu0
    %3519 = vmatprep.mubr.bf16.mxu0 0
    %3520 = vmatmul.mubr.bf16.gmra.mrb[0].mxu0 %v3312
    %v3521 = vpop.f32.mrb[0].mxu0
    %v3522 = vadd.f32 0.0, %v3521
    %v3523 = vpop.f32.mrb[0].mxu0
    %v3524 = vpop.f32.mrb[0].mxu0
    %v3525 = vadd.f32 0.0, %v3524
    %v3526 = vpop.f32.mrb[0].mxu0
    %3527 = vmatprep.mubr.bf16.mxu0 0
    %3528 = vmatmul.mubr.bf16.gmra.mrb[0].mxu0 %v3315
    %v3529 = vpop.f32.mrb[0].mxu0
    %v3530 = vadd.f32 0.0, %v3529
    %v3531 = vpop.f32.mrb[0].mxu0
    %v3532 = vpop.f32.mrb[0].mxu0
    %v3533 = vadd.f32 0.0, %v3532
    %v3534 = vpop.f32.mrb[0].mxu0
    %3535 = vmatprep.mubr.bf16.mxu0 0
    %3536 = vmatmul.mubr.bf16.gmra.mrb[0].mxu0 %v3318
    %v3537 = vpop.f32.mrb[0].mxu0
    %v3538 = vadd.f32 0.0, %v3537
    %v3539 = vpop.f32.mrb[0].mxu0
    %v3540 = vpop.f32.mrb[0].mxu0
    %v3541 = vadd.f32 0.0, %v3540
    %v3542 = vpop.f32.mrb[0].mxu0
    %3543 = vmatprep.mubr.bf16.mxu0 0
    %3544 = vmatmul.mubr.bf16.gmra.mrb[0].mxu0 %v3321
    %v3545 = vpop.f32.mrb[0].mxu0
    %v3546 = vadd.f32 0.0, %v3545
    %v3547 = vpop.f32.mrb[0].mxu0
    %v3548 = vpop.f32.mrb[0].mxu0
    %v3549 = vadd.f32 0.0, %v3548
    %v3550 = vpop.f32.mrb[0].mxu0
    %3551 = vmatprep.mubr.bf16.mxu0 0
    %3552 = vmatmul.mubr.bf16.gmra.mrb[0].mxu0 %v3324
    %v3553 = vpop.f32.mrb[0].mxu0
    %v3554 = vadd.f32 0.0, %v3553
    %v3555 = vpop.f32.mrb[0].mxu0
    %v3556 = vpop.f32.mrb[0].mxu0
    %v3557 = vadd.f32 0.0, %v3556
    %v3558 = vpop.f32.mrb[0].mxu0
    %3559 = vmatprep.mubr.bf16.mxu0 0
    %3560 = vmatmul.mubr.bf16.gmra.mrb[0].mxu0 %v3327
    %v3561 = vpop.f32.mrb[0].mxu0
    %v3562 = vadd.f32 0.0, %v3561
    %v3563 = vpop.f32.mrb[0].mxu0
    %v3564 = vpop.f32.mrb[0].mxu0
    %v3565 = vadd.f32 0.0, %v3564
    %v3566 = vpop.f32.mrb[0].mxu0
    %3567 = vmatprep.mubr.bf16.mxu0 0
    %3568 = vmatmul.mubr.bf16.gmra.mrb[0].mxu0 %v3330
    %v3569 = vpop.f32.mrb[0].mxu0
    %v3570 = vadd.f32 0.0, %v3569
    %v3571 = vpop.f32.mrb[0].mxu0
    %v3572 = vpop.f32.mrb[0].mxu0
    %v3573 = vadd.f32 0.0, %v3572
    %v3574 = vpop.f32.mrb[0].mxu0
    %3575 = vmatprep.mubr.bf16.mxu0 0
    %3576 = vmatmul.mubr.bf16.gmra.mrb[0].mxu0 %v3333
    %v3577 = vpop.f32.mrb[0].mxu0
    %v3578 = vadd.f32 0.0, %v3577
    %v3579 = vpop.f32.mrb[0].mxu0
    %v3580 = vpop.f32.mrb[0].mxu0
    %v3581 = vadd.f32 0.0, %v3580
    %v3582 = vpop.f32.mrb[0].mxu0
    %3583 = vmatprep.mubr.bf16.mxu0 0
    %3584 = vmatmul.mubr.bf16.gmra.mrb[0].mxu0 %v3336
    %v3585 = vpop.f32.mrb[0].mxu0
    %v3586 = vadd.f32 0.0, %v3585
    %v3587 = vpop.f32.mrb[0].mxu0
    %v3588 = vpop.f32.mrb[0].mxu0
    %v3589 = vadd.f32 0.0, %v3588
    %v3590 = vpop.f32.mrb[0].mxu0
    %3591 = vmatprep.mubr.bf16.mxu0 0
    %3592 = vmatmul.mubr.bf16.gmra.mrb[0].mxu0 %v3339
    %v3593 = vpop.f32.mrb[0].mxu0
    %v3594 = vadd.f32 0.0, %v3593
    %v3595 = vpop.f32.mrb[0].mxu0
    %v3596 = vpop.f32.mrb[0].mxu0
    %v3597 = vadd.f32 0.0, %v3596
    %v3598 = vpop.f32.mrb[0].mxu0
    %3599 = vmatprep.mubr.bf16.mxu0 0
    %3600 = vmatmul.mubr.bf16.gmra.mrb[0].mxu0 %v3342
    %v3601 = vpop.f32.mrb[0].mxu0
    %v3602 = vadd.f32 0.0, %v3601
    %v3603 = vpop.f32.mrb[0].mxu0
    %v3604 = vpop.f32.mrb[0].mxu0
    %v3605 = vadd.f32 0.0, %v3604
    %v3606 = vpop.f32.mrb[0].mxu0
    %3607 = vmatprep.mubr.bf16.mxu0 0
    %3608 = vmatmul.mubr.bf16.gmra.mrb[0].mxu0 %v3345
    %v3609 = vpop.f32.mrb[0].mxu0
    %v3610 = vadd.f32 0.0, %v3609
    %v3611 = vpop.f32.mrb[0].mxu0
    %v3612 = vpop.f32.mrb[0].mxu0
    %v3613 = vadd.f32 0.0, %v3612
    %v3614 = vpop.f32.mrb[0].mxu0
    %3615 = vmatprep.mubr.bf16.mxu0 0
    %3616 = vmatmul.mubr.bf16.gmra.mrb[0].mxu0 %v3348
    %v3617 = vpop.f32.mrb[0].mxu0
    %v3618 = vadd.f32 0.0, %v3617
    %v3619 = vpop.f32.mrb[0].mxu0
    %v3620 = vpop.f32.mrb[0].mxu0
    %v3621 = vadd.f32 0.0, %v3620
    %v3622 = vpop.f32.mrb[0].mxu0
    %3623 = vmatprep.mubr.bf16.mxu0 0
    %3624 = vmatmul.mubr.bf16.gmra.mrb[0].mxu0 %v3351
    %v3625 = vpop.f32.mrb[0].mxu0
    %v3626 = vadd.f32 0.0, %v3625
    %v3627 = vpop.f32.mrb[0].mxu0
    %v3628 = vpop.f32.mrb[0].mxu0
    %v3629 = vadd.f32 0.0, %v3628
    %v3630 = vpop.f32.mrb[0].mxu0
    %3631 = vmatprep.mubr.bf16.mxu0 0
    %3632 = vmatmul.mubr.bf16.gmra.mrb[0].mxu0 %v3354
    %v3633 = vpop.f32.mrb[0].mxu0
    %v3634 = vadd.f32 0.0, %v3633
    %v3635 = vpop.f32.mrb[0].mxu0
    %v3636 = vpop.f32.mrb[0].mxu0
    %v3637 = vadd.f32 0.0, %v3636
    %v3638 = vpop.f32.mrb[0].mxu0
    %3639 = vmatprep.mubr.bf16.mxu0 0
    %3640 = vmatmul.mubr.bf16.gmra.mrb[0].mxu0 %v3357
    %v3641 = vpop.f32.mrb[0].mxu0
    %v3642 = vadd.f32 0.0, %v3641
    %v3643 = vpop.f32.mrb[0].mxu0
    %v3644 = vpop.f32.mrb[0].mxu0
    %v3645 = vadd.f32 0.0, %v3644
    %v3646 = vpop.f32.mrb[0].mxu0
    %3647 = vdwg.mxu0
    %v3712 = vunpack.c.l.b16 %v2279
    %v3713 = vunpack.c.l.b16 %v2280
    %v3714 = vunpack.c.l.b16 %v2281
    %v3715 = vunpack.c.l.b16 %v2282
    %v3716 = vunpack.c.l.b16 %v2283
    %v3717 = vunpack.c.l.b16 %v2284
    %v3718 = vunpack.c.l.b16 %v2285
    %v3719 = vunpack.c.l.b16 %v2286
    %v3720 = vunpack.c.l.b16 %v2287
    %v3721 = vunpack.c.l.b16 %v2288
    %v3722 = vunpack.c.l.b16 %v2289
    %v3723 = vunpack.c.l.b16 %v2290
    %v3724 = vunpack.c.l.b16 %v2291
    %v3725 = vunpack.c.l.b16 %v2292
    %v3726 = vunpack.c.l.b16 %v2293
    %v3727 = vunpack.c.l.b16 %v2294
    %v3728 = vunpack.c.l.b16 %v2295
    %v3729 = vunpack.c.l.b16 %v2296
    %v3730 = vunpack.c.l.b16 %v2297
    %v3731 = vunpack.c.l.b16 %v2298
    %v3732 = vunpack.c.l.b16 %v2299
    %v3733 = vunpack.c.l.b16 %v2300
    %v3734 = vunpack.c.l.b16 %v2301
    %v3735 = vunpack.c.l.b16 %v2302
    %v3736 = vunpack.c.l.b16 %v2303
    %v3737 = vunpack.c.l.b16 %v2304
    %v3738 = vunpack.c.l.b16 %v2305
    %v3739 = vunpack.c.l.b16 %v2306
    %v3740 = vunpack.c.l.b16 %v2307
    %v3741 = vunpack.c.l.b16 %v2308
    %v3742 = vunpack.c.l.b16 %v2309
    %v3743 = vunpack.c.l.b16 %v2310
    %v3744 = vunpack.c.l.b16 %v2311
    %v3745 = vunpack.c.l.b16 %v2312
    %v3746 = vunpack.c.l.b16 %v2313
    %v3747 = vunpack.c.l.b16 %v2314
    %v3748 = vunpack.c.l.b16 %v2315
    %v3749 = vunpack.c.l.b16 %v2316
    %v3750 = vunpack.c.l.b16 %v2317
    %v3751 = vunpack.c.l.b16 %v2318
    %v3752 = vunpack.c.l.b16 %v2319
    %v3753 = vunpack.c.l.b16 %v2320
    %v3754 = vunpack.c.l.b16 %v2321
    %v3755 = vunpack.c.l.b16 %v2322
    %v3756 = vunpack.c.l.b16 %v2323
    %v3757 = vunpack.c.l.b16 %v2324
    %v3758 = vunpack.c.l.b16 %v2325
    %v3759 = vunpack.c.l.b16 %v2326
    %v3760 = vunpack.c.l.b16 %v2327
    %v3761 = vunpack.c.l.b16 %v2328
    %v3762 = vunpack.c.l.b16 %v2329
    %v3763 = vunpack.c.l.b16 %v2330
    %v3764 = vunpack.c.l.b16 %v2331
    %v3765 = vunpack.c.l.b16 %v2332
    %v3766 = vunpack.c.l.b16 %v2333
    %v3767 = vunpack.c.l.b16 %v2334
    %v3768 = vunpack.c.l.b16 %v2335
    %v3769 = vunpack.c.l.b16 %v2336
    %v3770 = vunpack.c.l.b16 %v2337
    %v3771 = vunpack.c.l.b16 %v2338
    %v3772 = vunpack.c.l.b16 %v2339
    %v3773 = vunpack.c.l.b16 %v2340
    %v3774 = vunpack.c.l.b16 %v2341
    %v3775 = vunpack.c.l.b16 %v2342
    %v3776 = vpack.c.b16 %v3713, %v3712
    %v3777 = vpack.c.b16 %v3715, %v3714
    %v3778 = vpack.c.b16 %v3717, %v3716
    %v3779 = vpack.c.b16 %v3719, %v3718
    %v3780 = vpack.c.b16 %v3721, %v3720
    %v3781 = vpack.c.b16 %v3723, %v3722
    %v3782 = vpack.c.b16 %v3725, %v3724
    %v3783 = vpack.c.b16 %v3727, %v3726
    %v3784 = vpack.c.b16 %v3729, %v3728
    %v3785 = vpack.c.b16 %v3731, %v3730
    %v3786 = vpack.c.b16 %v3733, %v3732
    %v3787 = vpack.c.b16 %v3735, %v3734
    %v3788 = vpack.c.b16 %v3737, %v3736
    %v3789 = vpack.c.b16 %v3739, %v3738
    %v3790 = vpack.c.b16 %v3741, %v3740
    %v3791 = vpack.c.b16 %v3743, %v3742
    %v3792 = vpack.c.b16 %v3745, %v3744
    %v3793 = vpack.c.b16 %v3747, %v3746
    %v3794 = vpack.c.b16 %v3749, %v3748
    %v3795 = vpack.c.b16 %v3751, %v3750
    %v3796 = vpack.c.b16 %v3753, %v3752
    %v3797 = vpack.c.b16 %v3755, %v3754
    %v3798 = vpack.c.b16 %v3757, %v3756
    %v3799 = vpack.c.b16 %v3759, %v3758
    %v3800 = vpack.c.b16 %v3761, %v3760
    %v3801 = vpack.c.b16 %v3763, %v3762
    %v3802 = vpack.c.b16 %v3765, %v3764
    %v3803 = vpack.c.b16 %v3767, %v3766
    %v3804 = vpack.c.b16 %v3769, %v3768
    %v3805 = vpack.c.b16 %v3771, %v3770
    %v3806 = vpack.c.b16 %v3773, %v3772
    %v3807 = vpack.c.b16 %v3775, %v3774
    %v3812 = vunpack.c.l.b16 %v2343
    %v3813 = vunpack.c.l.b16 %v2344
    %v3814 = vunpack.c.l.b16 %v2345
    %v3815 = vunpack.c.l.b16 %v2346
    %v3816 = vpack.c.b16 %v3813, %v3812
    %v3817 = vpack.c.b16 %v3815, %v3814
    %v3821 = vsel %vm3262, %v3776, 0
    %v3824 = vsel %vm3262, %v3777, 0
    %v3827 = vsel %vm3262, %v3778, 0
    %v3830 = vsel %vm3262, %v3779, 0
    %v3833 = vsel %vm3262, %v3780, 0
    %v3836 = vsel %vm3262, %v3781, 0
    %v3839 = vsel %vm3262, %v3782, 0
    %v3842 = vsel %vm3262, %v3783, 0
    %v3845 = vsel %vm3262, %v3784, 0
    %v3848 = vsel %vm3262, %v3785, 0
    %v3851 = vsel %vm3262, %v3786, 0
    %v3854 = vsel %vm3262, %v3787, 0
    %v3857 = vsel %vm3262, %v3788, 0
    %v3860 = vsel %vm3262, %v3789, 0
    %v3863 = vsel %vm3262, %v3790, 0
    %v3866 = vsel %vm3262, %v3791, 0
    %v3869 = vsel %vm3262, %v3792, 0
    %v3872 = vsel %vm3262, %v3793, 0
    %v3875 = vsel %vm3262, %v3794, 0
    %v3878 = vsel %vm3262, %v3795, 0
    %v3881 = vsel %vm3262, %v3796, 0
    %v3884 = vsel %vm3262, %v3797, 0
    %v3887 = vsel %vm3262, %v3798, 0
    %v3890 = vsel %vm3262, %v3799, 0
    %v3893 = vsel %vm3262, %v3800, 0
    %v3896 = vsel %vm3262, %v3801, 0
    %v3899 = vsel %vm3262, %v3802, 0
    %v3902 = vsel %vm3262, %v3803, 0
    %v3905 = vsel %vm3262, %v3804, 0
    %v3908 = vsel %vm3262, %v3805, 0
    %v3911 = vsel %vm3262, %v3806, 0
    %v3914 = vsel %vm3262, %v3807, 0
    %3916 = vmatprep.subr.bf16.mxu0 0
    %3917 = vmatpush1.bf16.msra.mxu0 %v3816
    %3918 = vmatprep.subr.bf16.mxu0 0
    %3919 = vmatpush1.bf16.msra.mxu0 %v3817
    %3920 = vmatprep.subr.bf16.mxu0 0
    %3921 = vmatpush1.bf16.msra.mxu0 0
    %3922 = vmatprep.subr.bf16.mxu0 0
    %3923 = vmatpush1.bf16.msra.mxu0 0
    %3924 = vmatprep.subr.bf16.mxu0 0
    %3925 = vmatpush1.bf16.msra.mxu0 0
    %3926 = vmatprep.subr.bf16.mxu0 0
    %3927 = vmatpush1.bf16.msra.mxu0 0
    %3928 = vmatprep.subr.bf16.mxu0 0
    %3929 = vmatpush1.bf16.msra.mxu0 0
    %3930 = vmatprep.subr.bf16.mxu0 0
    %3931 = vmatpush1.bf16.msra.mxu0 0
    %3932 = vmatprep.subr.bf16.mxu0 0
    %3933 = vmatpush1.bf16.msra.mxu0 0
    %3934 = vmatprep.subr.bf16.mxu0 0
    %3935 = vmatpush1.bf16.msra.mxu0 0
    %3936 = vmatprep.subr.bf16.mxu0 0
    %3937 = vmatpush1.bf16.msra.mxu0 0
    %3938 = vmatprep.subr.bf16.mxu0 0
    %3939 = vmatpush1.bf16.msra.mxu0 0
    %3940 = vmatprep.subr.bf16.mxu0 0
    %3941 = vmatpush1.bf16.msra.mxu0 0
    %3942 = vmatprep.subr.bf16.mxu0 0
    %3943 = vmatpush1.bf16.msra.mxu0 0
    %3944 = vmatprep.subr.bf16.mxu0 0
    %3945 = vmatpush1.bf16.msra.mxu0 0
    %3946 = vmatprep.subr.bf16.mxu0 0
    %3947 = vmatpush1.bf16.msra.mxu0 0
    %3948 = vmatprep.mubr.bf16.mxu0 0
    %3949 = vmatmul.mubr.bf16.gmra.mrb[0].mxu0 %v3821
    %v3950 = vpop.f32.mrb[0].mxu0
    %v3951 = vadd.f32 %v3394, %v3950
    %v3952 = vpop.f32.mrb[0].mxu0
    %v3953 = vpop.f32.mrb[0].mxu0
    %v3954 = vadd.f32 %v3397, %v3953
    %v3955 = vpop.f32.mrb[0].mxu0
    %3956 = vmatprep.mubr.bf16.mxu0 0
    %3957 = vmatmul.mubr.bf16.gmra.mrb[0].mxu0 %v3824
    %v3958 = vpop.f32.mrb[0].mxu0
    %v3959 = vadd.f32 %v3402, %v3958
    %v3960 = vpop.f32.mrb[0].mxu0
    %v3961 = vpop.f32.mrb[0].mxu0
    %v3962 = vadd.f32 %v3405, %v3961
    %v3963 = vpop.f32.mrb[0].mxu0
    %3964 = vmatprep.mubr.bf16.mxu0 0
    %3965 = vmatmul.mubr.bf16.gmra.mrb[0].mxu0 %v3827
    %v3966 = vpop.f32.mrb[0].mxu0
    %v3967 = vadd.f32 %v3410, %v3966
    %v3968 = vpop.f32.mrb[0].mxu0
    %v3969 = vpop.f32.mrb[0].mxu0
    %v3970 = vadd.f32 %v3413, %v3969
    %v3971 = vpop.f32.mrb[0].mxu0
    %3972 = vmatprep.mubr.bf16.mxu0 0
    %3973 = vmatmul.mubr.bf16.gmra.mrb[0].mxu0 %v3830
    %v3974 = vpop.f32.mrb[0].mxu0
    %v3975 = vadd.f32 %v3418, %v3974
    %v3976 = vpop.f32.mrb[0].mxu0
    %v3977 = vpop.f32.mrb[0].mxu0
    %v3978 = vadd.f32 %v3421, %v3977
    %v3979 = vpop.f32.mrb[0].mxu0
    %3980 = vmatprep.mubr.bf16.mxu0 0
    %3981 = vmatmul.mubr.bf16.gmra.mrb[0].mxu0 %v3833
    %v3982 = vpop.f32.mrb[0].mxu0
    %v3983 = vadd.f32 %v3426, %v3982
    %v3984 = vpop.f32.mrb[0].mxu0
    %v3985 = vpop.f32.mrb[0].mxu0
    %v3986 = vadd.f32 %v3429, %v3985
    %v3987 = vpop.f32.mrb[0].mxu0
    %3988 = vmatprep.mubr.bf16.mxu0 0
    %3989 = vmatmul.mubr.bf16.gmra.mrb[0].mxu0 %v3836
    %v3990 = vpop.f32.mrb[0].mxu0
    %v3991 = vadd.f32 %v3434, %v3990
    %v3992 = vpop.f32.mrb[0].mxu0
    %v3993 = vpop.f32.mrb[0].mxu0
    %v3994 = vadd.f32 %v3437, %v3993
    %v3995 = vpop.f32.mrb[0].mxu0
    %3996 = vmatprep.mubr.bf16.mxu0 0
    %3997 = vmatmul.mubr.bf16.gmra.mrb[0].mxu0 %v3839
    %v3998 = vpop.f32.mrb[0].mxu0
    %v3999 = vadd.f32 %v3442, %v3998
    %v4000 = vpop.f32.mrb[0].mxu0
    %v4001 = vpop.f32.mrb[0].mxu0
    %v4002 = vadd.f32 %v3445, %v4001
    %v4003 = vpop.f32.mrb[0].mxu0
    %4004 = vmatprep.mubr.bf16.mxu0 0
    %4005 = vmatmul.mubr.bf16.gmra.mrb[0].mxu0 %v3842
    %v4006 = vpop.f32.mrb[0].mxu0
    %v4007 = vadd.f32 %v3450, %v4006
    %v4008 = vpop.f32.mrb[0].mxu0
    %v4009 = vpop.f32.mrb[0].mxu0
    %v4010 = vadd.f32 %v3453, %v4009
    %v4011 = vpop.f32.mrb[0].mxu0
    %4012 = vmatprep.mubr.bf16.mxu0 0
    %4013 = vmatmul.mubr.bf16.gmra.mrb[0].mxu0 %v3845
    %v4014 = vpop.f32.mrb[0].mxu0
    %v4015 = vadd.f32 %v3458, %v4014
    %v4016 = vpop.f32.mrb[0].mxu0
    %v4017 = vpop.f32.mrb[0].mxu0
    %v4018 = vadd.f32 %v3461, %v4017
    %v4019 = vpop.f32.mrb[0].mxu0
    %4020 = vmatprep.mubr.bf16.mxu0 0
    %4021 = vmatmul.mubr.bf16.gmra.mrb[0].mxu0 %v3848
    %v4022 = vpop.f32.mrb[0].mxu0
    %v4023 = vadd.f32 %v3466, %v4022
    %v4024 = vpop.f32.mrb[0].mxu0
    %v4025 = vpop.f32.mrb[0].mxu0
    %v4026 = vadd.f32 %v3469, %v4025
    %v4027 = vpop.f32.mrb[0].mxu0
    %4028 = vmatprep.mubr.bf16.mxu0 0
    %4029 = vmatmul.mubr.bf16.gmra.mrb[0].mxu0 %v3851
    %v4030 = vpop.f32.mrb[0].mxu0
    %v4031 = vadd.f32 %v3474, %v4030
    %v4032 = vpop.f32.mrb[0].mxu0
    %v4033 = vpop.f32.mrb[0].mxu0
    %v4034 = vadd.f32 %v3477, %v4033
    %v4035 = vpop.f32.mrb[0].mxu0
    %4036 = vmatprep.mubr.bf16.mxu0 0
    %4037 = vmatmul.mubr.bf16.gmra.mrb[0].mxu0 %v3854
    %v4038 = vpop.f32.mrb[0].mxu0
    %v4039 = vadd.f32 %v3482, %v4038
    %v4040 = vpop.f32.mrb[0].mxu0
    %v4041 = vpop.f32.mrb[0].mxu0
    %v4042 = vadd.f32 %v3485, %v4041
    %v4043 = vpop.f32.mrb[0].mxu0
    %4044 = vmatprep.mubr.bf16.mxu0 0
    %4045 = vmatmul.mubr.bf16.gmra.mrb[0].mxu0 %v3857
    %v4046 = vpop.f32.mrb[0].mxu0
    %v4047 = vadd.f32 %v3490, %v4046
    %v4048 = vpop.f32.mrb[0].mxu0
    %v4049 = vpop.f32.mrb[0].mxu0
    %v4050 = vadd.f32 %v3493, %v4049
    %v4051 = vpop.f32.mrb[0].mxu0
    %4052 = vmatprep.mubr.bf16.mxu0 0
    %4053 = vmatmul.mubr.bf16.gmra.mrb[0].mxu0 %v3860
    %v4054 = vpop.f32.mrb[0].mxu0
    %v4055 = vadd.f32 %v3498, %v4054
    %v4056 = vpop.f32.mrb[0].mxu0
    %v4057 = vpop.f32.mrb[0].mxu0
    %v4058 = vadd.f32 %v3501, %v4057
    %v4059 = vpop.f32.mrb[0].mxu0
    %4060 = vmatprep.mubr.bf16.mxu0 0
    %4061 = vmatmul.mubr.bf16.gmra.mrb[0].mxu0 %v3863
    %v4062 = vpop.f32.mrb[0].mxu0
    %v4063 = vadd.f32 %v3506, %v4062
    %v4064 = vpop.f32.mrb[0].mxu0
    %v4065 = vpop.f32.mrb[0].mxu0
    %v4066 = vadd.f32 %v3509, %v4065
    %v4067 = vpop.f32.mrb[0].mxu0
    %4068 = vmatprep.mubr.bf16.mxu0 0
    %4069 = vmatmul.mubr.bf16.gmra.mrb[0].mxu0 %v3866
    %v4070 = vpop.f32.mrb[0].mxu0
    %v4071 = vadd.f32 %v3514, %v4070
    %v4072 = vpop.f32.mrb[0].mxu0
    %v4073 = vpop.f32.mrb[0].mxu0
    %v4074 = vadd.f32 %v3517, %v4073
    %v4075 = vpop.f32.mrb[0].mxu0
    %4076 = vmatprep.mubr.bf16.mxu0 0
    %4077 = vmatmul.mubr.bf16.gmra.mrb[0].mxu0 %v3869
    %v4078 = vpop.f32.mrb[0].mxu0
    %v4079 = vadd.f32 %v3522, %v4078
    %v4080 = vpop.f32.mrb[0].mxu0
    %v4081 = vpop.f32.mrb[0].mxu0
    %v4082 = vadd.f32 %v3525, %v4081
    %v4083 = vpop.f32.mrb[0].mxu0
    %4084 = vmatprep.mubr.bf16.mxu0 0
    %4085 = vmatmul.mubr.bf16.gmra.mrb[0].mxu0 %v3872
    %v4086 = vpop.f32.mrb[0].mxu0
    %v4087 = vadd.f32 %v3530, %v4086
    %v4088 = vpop.f32.mrb[0].mxu0
    %v4089 = vpop.f32.mrb[0].mxu0
    %v4090 = vadd.f32 %v3533, %v4089
    %v4091 = vpop.f32.mrb[0].mxu0
    %4092 = vmatprep.mubr.bf16.mxu0 0
    %4093 = vmatmul.mubr.bf16.gmra.mrb[0].mxu0 %v3875
    %v4094 = vpop.f32.mrb[0].mxu0
    %v4095 = vadd.f32 %v3538, %v4094
    %v4096 = vpop.f32.mrb[0].mxu0
    %v4097 = vpop.f32.mrb[0].mxu0
    %v4098 = vadd.f32 %v3541, %v4097
    %v4099 = vpop.f32.mrb[0].mxu0
    %4100 = vmatprep.mubr.bf16.mxu0 0
    %4101 = vmatmul.mubr.bf16.gmra.mrb[0].mxu0 %v3878
    %v4102 = vpop.f32.mrb[0].mxu0
    %v4103 = vadd.f32 %v3546, %v4102
    %v4104 = vpop.f32.mrb[0].mxu0
    %v4105 = vpop.f32.mrb[0].mxu0
    %v4106 = vadd.f32 %v3549, %v4105
    %v4107 = vpop.f32.mrb[0].mxu0
    %4108 = vmatprep.mubr.bf16.mxu0 0
    %4109 = vmatmul.mubr.bf16.gmra.mrb[0].mxu0 %v3881
    %v4110 = vpop.f32.mrb[0].mxu0
    %v4111 = vadd.f32 %v3554, %v4110
    %v4112 = vpop.f32.mrb[0].mxu0
    %v4113 = vpop.f32.mrb[0].mxu0
    %v4114 = vadd.f32 %v3557, %v4113
    %v4115 = vpop.f32.mrb[0].mxu0
    %4116 = vmatprep.mubr.bf16.mxu0 0
    %4117 = vmatmul.mubr.bf16.gmra.mrb[0].mxu0 %v3884
    %v4118 = vpop.f32.mrb[0].mxu0
    %v4119 = vadd.f32 %v3562, %v4118
    %v4120 = vpop.f32.mrb[0].mxu0
    %v4121 = vpop.f32.mrb[0].mxu0
    %v4122 = vadd.f32 %v3565, %v4121
    %v4123 = vpop.f32.mrb[0].mxu0
    %4124 = vmatprep.mubr.bf16.mxu0 0
    %4125 = vmatmul.mubr.bf16.gmra.mrb[0].mxu0 %v3887
    %v4126 = vpop.f32.mrb[0].mxu0
    %v4127 = vadd.f32 %v3570, %v4126
    %v4128 = vpop.f32.mrb[0].mxu0
    %v4129 = vpop.f32.mrb[0].mxu0
    %v4130 = vadd.f32 %v3573, %v4129
    %v4131 = vpop.f32.mrb[0].mxu0
    %4132 = vmatprep.mubr.bf16.mxu0 0
    %4133 = vmatmul.mubr.bf16.gmra.mrb[0].mxu0 %v3890
    %v4134 = vpop.f32.mrb[0].mxu0
    %v4135 = vadd.f32 %v3578, %v4134
    %v4136 = vpop.f32.mrb[0].mxu0
    %v4137 = vpop.f32.mrb[0].mxu0
    %v4138 = vadd.f32 %v3581, %v4137
    %v4139 = vpop.f32.mrb[0].mxu0
    %4140 = vmatprep.mubr.bf16.mxu0 0
    %4141 = vmatmul.mubr.bf16.gmra.mrb[0].mxu0 %v3893
    %v4142 = vpop.f32.mrb[0].mxu0
    %v4143 = vadd.f32 %v3586, %v4142
    %v4144 = vpop.f32.mrb[0].mxu0
    %v4145 = vpop.f32.mrb[0].mxu0
    %v4146 = vadd.f32 %v3589, %v4145
    %v4147 = vpop.f32.mrb[0].mxu0
    %4148 = vmatprep.mubr.bf16.mxu0 0
    %4149 = vmatmul.mubr.bf16.gmra.mrb[0].mxu0 %v3896
    %v4150 = vpop.f32.mrb[0].mxu0
    %v4151 = vadd.f32 %v3594, %v4150
    %v4152 = vpop.f32.mrb[0].mxu0
    %v4153 = vpop.f32.mrb[0].mxu0
    %v4154 = vadd.f32 %v3597, %v4153
    %v4155 = vpop.f32.mrb[0].mxu0
    %4156 = vmatprep.mubr.bf16.mxu0 0
    %4157 = vmatmul.mubr.bf16.gmra.mrb[0].mxu0 %v3899
    %v4158 = vpop.f32.mrb[0].mxu0
    %v4159 = vadd.f32 %v3602, %v4158
    %v4160 = vpop.f32.mrb[0].mxu0
    %v4161 = vpop.f32.mrb[0].mxu0
    %v4162 = vadd.f32 %v3605, %v4161
    %v4163 = vpop.f32.mrb[0].mxu0
    %4164 = vmatprep.mubr.bf16.mxu0 0
    %4165 = vmatmul.mubr.bf16.gmra.mrb[0].mxu0 %v3902
    %v4166 = vpop.f32.mrb[0].mxu0
    %v4167 = vadd.f32 %v3610, %v4166
    %v4168 = vpop.f32.mrb[0].mxu0
    %v4169 = vpop.f32.mrb[0].mxu0
    %v4170 = vadd.f32 %v3613, %v4169
    %v4171 = vpop.f32.mrb[0].mxu0
    %4172 = vmatprep.mubr.bf16.mxu0 0
    %4173 = vmatmul.mubr.bf16.gmra.mrb[0].mxu0 %v3905
    %v4174 = vpop.f32.mrb[0].mxu0
    %v4175 = vadd.f32 %v3618, %v4174
    %v4176 = vpop.f32.mrb[0].mxu0
    %v4177 = vpop.f32.mrb[0].mxu0
    %v4178 = vadd.f32 %v3621, %v4177
    %v4179 = vpop.f32.mrb[0].mxu0
    %4180 = vmatprep.mubr.bf16.mxu0 0
    %4181 = vmatmul.mubr.bf16.gmra.mrb[0].mxu0 %v3908
    %v4182 = vpop.f32.mrb[0].mxu0
    %v4183 = vadd.f32 %v3626, %v4182
    %v4184 = vpop.f32.mrb[0].mxu0
    %v4185 = vpop.f32.mrb[0].mxu0
    %v4186 = vadd.f32 %v3629, %v4185
    %v4187 = vpop.f32.mrb[0].mxu0
    %4188 = vmatprep.mubr.bf16.mxu0 0
    %4189 = vmatmul.mubr.bf16.gmra.mrb[0].mxu0 %v3911
    %v4190 = vpop.f32.mrb[0].mxu0
    %v4191 = vadd.f32 %v3634, %v4190
    %v4192 = vpop.f32.mrb[0].mxu0
    %v4193 = vpop.f32.mrb[0].mxu0
    %v4194 = vadd.f32 %v3637, %v4193
    %v4195 = vpop.f32.mrb[0].mxu0
    %4196 = vmatprep.mubr.bf16.mxu0 0
    %4197 = vmatmul.mubr.bf16.gmra.mrb[0].mxu0 %v3914
    %v4198 = vpop.f32.mrb[0].mxu0
    %v4199 = vadd.f32 %v3642, %v4198
    %v4200 = vpop.f32.mrb[0].mxu0
    %v4201 = vpop.f32.mrb[0].mxu0
    %v4202 = vadd.f32 %v3645, %v4201
    %v4203 = vpop.f32.mrb[0].mxu0
    %4204 = vdwg.mxu0
    %v4205 = vld [vmem:[#allocation2] sm:$0xe]
    %v4206 = vld [vmem:[#allocation2 + $0xc] sm:$0xe]
    %v4207 = vld [vmem:[#allocation2 + $0x18] sm:$0xe]
    %v4208 = vld [vmem:[#allocation2 + $0x24] sm:$0xe]
    %v4209 = vld [vmem:[#allocation2 + $0x30] sm:$0xe]
    %v4210 = vld [vmem:[#allocation2 + $0x3c] sm:$0xe]
    %v4211 = vld [vmem:[#allocation2 + $0x48] sm:$0xe]
    %v4212 = vld [vmem:[#allocation2 + $0x54] sm:$0xe]
    %v4213 = vld [vmem:[#allocation2 + $0x60] sm:$0xe]
    %v4214 = vld [vmem:[#allocation2 + $0x6c] sm:$0xe]
    %v4215 = vld [vmem:[#allocation2 + $0x78] sm:$0xe]
    %v4216 = vld [vmem:[#allocation2 + $0x84] sm:$0xe]
    %v4217 = vld [vmem:[#allocation2 + $0x90] sm:$0xe]
    %v4218 = vld [vmem:[#allocation2 + $0x9c] sm:$0xe]
    %v4219 = vld [vmem:[#allocation2 + $0xa8] sm:$0xe]
    %v4220 = vld [vmem:[#allocation2 + $0xb4] sm:$0xe]
    %v4221 = vld [vmem:[#allocation2 + $0xd8] sm:$0xe]
    %v4222 = vld [vmem:[#allocation2 + $0xe4] sm:$0xe]
    %v4223 = vld [vmem:[#allocation2 + $0xf0] sm:$0xe]
    %v4224 = vld [vmem:[#allocation2 + $0xfc] sm:$0xe]
    %v4225 = vld [vmem:[#allocation2 + $0x108] sm:$0xe]
    %v4226 = vld [vmem:[#allocation2 + $0x114] sm:$0xe]
    %v4227 = vld [vmem:[#allocation2 + $0x120] sm:$0xe]
    %v4228 = vld [vmem:[#allocation2 + $0x12c] sm:$0xe]
    %v4229 = vld [vmem:[#allocation2 + $0x138] sm:$0xe]
    %v4230 = vld [vmem:[#allocation2 + $0x144] sm:$0xe]
    %v4231 = vld [vmem:[#allocation2 + $0x150] sm:$0xe]
    %v4232 = vld [vmem:[#allocation2 + $0x15c] sm:$0xe]
    %v4233 = vld [vmem:[#allocation2 + $0x168] sm:$0xe]
    %v4234 = vld [vmem:[#allocation2 + $0x174] sm:$0xe]
    %v4235 = vld [vmem:[#allocation2 + $0x180] sm:$0xe]
    %v4236 = vld [vmem:[#allocation2 + $0x18c] sm:$0xe]
    %vm4301 = vcmask 1042432
    %vm4302 = vcmask 1046532
    %vm4303 = vmor %vm4301, %vm4302
    %v4304 = vrot.slane %v4205, 5
    %v4305 = vrot.slane %v4304, 4
    %v4306 = vrot.slane %v2280, 5
    %v4307 = vsel %vm4303, %v4305, %v4306
    %v4308 = vrot.slane %v4306, 4
    %v4309 = vrot.slane %v2347, 5
    %v4310 = vsel %vm4303, %v4308, %v4309
    %v4311 = vrot.slane %v4206, 5
    %v4312 = vrot.slane %v4311, 4
    %v4313 = vrot.slane %v2282, 5
    %v4314 = vsel %vm4303, %v4312, %v4313
    %v4315 = vrot.slane %v4313, 4
    %v4316 = vrot.slane %v2348, 5
    %v4317 = vsel %vm4303, %v4315, %v4316
    %v4318 = vrot.slane %v4207, 5
    %v4319 = vrot.slane %v4318, 4
    %v4320 = vrot.slane %v2284, 5
    %v4321 = vsel %vm4303, %v4319, %v4320
    %v4322 = vrot.slane %v4320, 4
    %v4323 = vrot.slane %v2349, 5
    %v4324 = vsel %vm4303, %v4322, %v4323
    %v4325 = vrot.slane %v4208, 5
    %v4326 = vrot.slane %v4325, 4
    %v4327 = vrot.slane %v2286, 5
    %v4328 = vsel %vm4303, %v4326, %v4327
    %v4329 = vrot.slane %v4327, 4
    %v4330 = vrot.slane %v2350, 5
    %v4331 = vsel %vm4303, %v4329, %v4330
    %v4332 = vrot.slane %v4209, 5
    %v4333 = vrot.slane %v4332, 4
    %v4334 = vrot.slane %v2288, 5
    %v4335 = vsel %vm4303, %v4333, %v4334
    %v4336 = vrot.slane %v4334, 4
    %v4337 = vrot.slane %v2351, 5
    %v4338 = vsel %vm4303, %v4336, %v4337
    %v4339 = vrot.slane %v4210, 5
    %v4340 = vrot.slane %v4339, 4
    %v4341 = vrot.slane %v2290, 5
    %v4342 = vsel %vm4303, %v4340, %v4341
    %v4343 = vrot.slane %v4341, 4
    %v4344 = vrot.slane %v2352, 5
    %v4345 = vsel %vm4303, %v4343, %v4344
    %v4346 = vrot.slane %v4211, 5
    %v4347 = vrot.slane %v4346, 4
    %v4348 = vrot.slane %v2292, 5
    %v4349 = vsel %vm4303, %v4347, %v4348
    %v4350 = vrot.slane %v4348, 4
    %v4351 = vrot.slane %v2353, 5
    %v4352 = vsel %vm4303, %v4350, %v4351
    %v4353 = vrot.slane %v4212, 5
    %v4354 = vrot.slane %v4353, 4
    %v4355 = vrot.slane %v2294, 5
    %v4356 = vsel %vm4303, %v4354, %v4355
    %v4357 = vrot.slane %v4355, 4
    %v4358 = vrot.slane %v2354, 5
    %v4359 = vsel %vm4303, %v4357, %v4358
    %v4360 = vrot.slane %v4213, 5
    %v4361 = vrot.slane %v4360, 4
    %v4362 = vrot.slane %v2296, 5
    %v4363 = vsel %vm4303, %v4361, %v4362
    %v4364 = vrot.slane %v4362, 4
    %v4365 = vrot.slane %v2355, 5
    %v4366 = vsel %vm4303, %v4364, %v4365
    %v4367 = vrot.slane %v4214, 5
    %v4368 = vrot.slane %v4367, 4
    %v4369 = vrot.slane %v2298, 5
    %v4370 = vsel %vm4303, %v4368, %v4369
    %v4371 = vrot.slane %v4369, 4
    %v4372 = vrot.slane %v2356, 5
    %v4373 = vsel %vm4303, %v4371, %v4372
    %v4374 = vrot.slane %v4215, 5
    %v4375 = vrot.slane %v4374, 4
    %v4376 = vrot.slane %v2300, 5
    %v4377 = vsel %vm4303, %v4375, %v4376
    %v4378 = vrot.slane %v4376, 4
    %v4379 = vrot.slane %v2357, 5
    %v4380 = vsel %vm4303, %v4378, %v4379
    %v4381 = vrot.slane %v4216, 5
    %v4382 = vrot.slane %v4381, 4
    %v4383 = vrot.slane %v2302, 5
    %v4384 = vsel %vm4303, %v4382, %v4383
    %v4385 = vrot.slane %v4383, 4
    %v4386 = vrot.slane %v2358, 5
    %v4387 = vsel %vm4303, %v4385, %v4386
    %v4388 = vrot.slane %v4217, 5
    %v4389 = vrot.slane %v4388, 4
    %v4390 = vrot.slane %v2304, 5
    %v4391 = vsel %vm4303, %v4389, %v4390
    %v4392 = vrot.slane %v4390, 4
    %v4393 = vrot.slane %v2359, 5
    %v4394 = vsel %vm4303, %v4392, %v4393
    %v4395 = vrot.slane %v4218, 5
    %v4396 = vrot.slane %v4395, 4
    %v4397 = vrot.slane %v2306, 5
    %v4398 = vsel %vm4303, %v4396, %v4397
    %v4399 = vrot.slane %v4397, 4
    %v4400 = vrot.slane %v2360, 5
    %v4401 = vsel %vm4303, %v4399, %v4400
    %v4402 = vrot.slane %v4219, 5
    %v4403 = vrot.slane %v4402, 4
    %v4404 = vrot.slane %v2308, 5
    %v4405 = vsel %vm4303, %v4403, %v4404
    %v4406 = vrot.slane %v4404, 4
    %v4407 = vrot.slane %v2361, 5
    %v4408 = vsel %vm4303, %v4406, %v4407
    %v4409 = vrot.slane %v4220, 5
    %v4410 = vrot.slane %v4409, 4
    %v4411 = vrot.slane %v2310, 5
    %v4412 = vsel %vm4303, %v4410, %v4411
    %v4413 = vrot.slane %v4411, 4
    %v4414 = vrot.slane %v2362, 5
    %v4415 = vsel %vm4303, %v4413, %v4414
    %v4416 = vrot.slane %v4221, 5
    %v4417 = vrot.slane %v4416, 4
    %v4418 = vrot.slane %v2312, 5
    %v4419 = vsel %vm4303, %v4417, %v4418
    %v4420 = vrot.slane %v4418, 4
    %v4421 = vrot.slane %v2363, 5
    %v4422 = vsel %vm4303, %v4420, %v4421
    %v4423 = vrot.slane %v4222, 5
    %v4424 = vrot.slane %v4423, 4
    %v4425 = vrot.slane %v2314, 5
    %v4426 = vsel %vm4303, %v4424, %v4425
    %v4427 = vrot.slane %v4425, 4
    %v4428 = vrot.slane %v2364, 5
    %v4429 = vsel %vm4303, %v4427, %v4428
    %v4430 = vrot.slane %v4223, 5
    %v4431 = vrot.slane %v4430, 4
    %v4432 = vrot.slane %v2316, 5
    %v4433 = vsel %vm4303, %v4431, %v4432
    %v4434 = vrot.slane %v4432, 4
    %v4435 = vrot.slane %v2365, 5
    %v4436 = vsel %vm4303, %v4434, %v4435
    %v4437 = vrot.slane %v4224, 5
    %v4438 = vrot.slane %v4437, 4
    %v4439 = vrot.slane %v2318, 5
    %v4440 = vsel %vm4303, %v4438, %v4439
    %v4441 = vrot.slane %v4439, 4
    %v4442 = vrot.slane %v2366, 5
    %v4443 = vsel %vm4303, %v4441, %v4442
    %v4444 = vrot.slane %v4225, 5
    %v4445 = vrot.slane %v4444, 4
    %v4446 = vrot.slane %v2320, 5
    %v4447 = vsel %vm4303, %v4445, %v4446
    %v4448 = vrot.slane %v4446, 4
    %v4449 = vrot.slane %v2367, 5
    %v4450 = vsel %vm4303, %v4448, %v4449
    %v4451 = vrot.slane %v4226, 5
    %v4452 = vrot.slane %v4451, 4
    %v4453 = vrot.slane %v2322, 5
    %v4454 = vsel %vm4303, %v4452, %v4453
    %v4455 = vrot.slane %v4453, 4
    %v4456 = vrot.slane %v2368, 5
    %v4457 = vsel %vm4303, %v4455, %v4456
    %v4458 = vrot.slane %v4227, 5
    %v4459 = vrot.slane %v4458, 4
    %v4460 = vrot.slane %v2324, 5
    %v4461 = vsel %vm4303, %v4459, %v4460
    %v4462 = vrot.slane %v4460, 4
    %v4463 = vrot.slane %v2369, 5
    %v4464 = vsel %vm4303, %v4462, %v4463
    %v4465 = vrot.slane %v4228, 5
    %v4466 = vrot.slane %v4465, 4
    %v4467 = vrot.slane %v2326, 5
    %v4468 = vsel %vm4303, %v4466, %v4467
    %v4469 = vrot.slane %v4467, 4
    %v4470 = vrot.slane %v2370, 5
    %v4471 = vsel %vm4303, %v4469, %v4470
    %v4472 = vrot.slane %v4229, 5
    %v4473 = vrot.slane %v4472, 4
    %v4474 = vrot.slane %v2328, 5
    %v4475 = vsel %vm4303, %v4473, %v4474
    %v4476 = vrot.slane %v4474, 4
    %v4477 = vrot.slane %v2371, 5
    %v4478 = vsel %vm4303, %v4476, %v4477
    %v4479 = vrot.slane %v4230, 5
    %v4480 = vrot.slane %v4479, 4
    %v4481 = vrot.slane %v2330, 5
    %v4482 = vsel %vm4303, %v4480, %v4481
    %v4483 = vrot.slane %v4481, 4
    %v4484 = vrot.slane %v2372, 5
    %v4485 = vsel %vm4303, %v4483, %v4484
    %v4486 = vrot.slane %v4231, 5
    %v4487 = vrot.slane %v4486, 4
    %v4488 = vrot.slane %v2332, 5
    %v4489 = vsel %vm4303, %v4487, %v4488
    %v4490 = vrot.slane %v4488, 4
    %v4491 = vrot.slane %v2373, 5
    %v4492 = vsel %vm4303, %v4490, %v4491
    %v4493 = vrot.slane %v4232, 5
    %v4494 = vrot.slane %v4493, 4
    %v4495 = vrot.slane %v2334, 5
    %v4496 = vsel %vm4303, %v4494, %v4495
    %v4497 = vrot.slane %v4495, 4
    %v4498 = vrot.slane %v2374, 5
    %v4499 = vsel %vm4303, %v4497, %v4498
    %v4500 = vrot.slane %v4233, 5
    %v4501 = vrot.slane %v4500, 4
    %v4502 = vrot.slane %v2336, 5
    %v4503 = vsel %vm4303, %v4501, %v4502
    %v4504 = vrot.slane %v4502, 4
    %v4505 = vrot.slane %v2375, 5
    %v4506 = vsel %vm4303, %v4504, %v4505
    %v4507 = vrot.slane %v4234, 5
    %v4508 = vrot.slane %v4507, 4
    %v4509 = vrot.slane %v2338, 5
    %v4510 = vsel %vm4303, %v4508, %v4509
    %v4511 = vrot.slane %v4509, 4
    %v4512 = vrot.slane %v2376, 5
    %v4513 = vsel %vm4303, %v4511, %v4512
    %v4514 = vrot.slane %v4235, 5
    %v4515 = vrot.slane %v4514, 4
    %v4516 = vrot.slane %v2340, 5
    %v4517 = vsel %vm4303, %v4515, %v4516
    %v4518 = vrot.slane %v4516, 4
    %v4519 = vrot.slane %v2377, 5
    %v4520 = vsel %vm4303, %v4518, %v4519
    %v4521 = vrot.slane %v4236, 5
    %v4522 = vrot.slane %v4521, 4
    %v4523 = vrot.slane %v2342, 5
    %v4524 = vsel %vm4303, %v4522, %v4523
    %v4525 = vrot.slane %v4523, 4
    %v4526 = vrot.slane %v2378, 5
    %v4527 = vsel %vm4303, %v4525, %v4526
    %v4528 = vld [vmem:[%s3 + $0x20] sm:$0xf]
    %v4529 = vld [vmem:[%s3 + $0x24] sm:$0xf]
    %v4530 = vld [vmem:[%s3 + $0x28] sm:$0xf]
    %v4531 = vld [vmem:[%s3 + $0x2c] sm:$0xf]
    %v4532 = vunpack.c.l.b16 %v4307
    %v4533 = vunpack.c.l.b16 %v4310
    %v4534 = vunpack.c.l.b16 %v4314
    %v4535 = vunpack.c.l.b16 %v4317
    %v4536 = vunpack.c.l.b16 %v4321
    %v4537 = vunpack.c.l.b16 %v4324
    %v4538 = vunpack.c.l.b16 %v4328
    %v4539 = vunpack.c.l.b16 %v4331
    %v4540 = vunpack.c.l.b16 %v4335
    %v4541 = vunpack.c.l.b16 %v4338
    %v4542 = vunpack.c.l.b16 %v4342
    %v4543 = vunpack.c.l.b16 %v4345
    %v4544 = vunpack.c.l.b16 %v4349
    %v4545 = vunpack.c.l.b16 %v4352
    %v4546 = vunpack.c.l.b16 %v4356
    %v4547 = vunpack.c.l.b16 %v4359
    %v4548 = vunpack.c.l.b16 %v4363
    %v4549 = vunpack.c.l.b16 %v4366
    %v4550 = vunpack.c.l.b16 %v4370
    %v4551 = vunpack.c.l.b16 %v4373
    %v4552 = vunpack.c.l.b16 %v4377
    %v4553 = vunpack.c.l.b16 %v4380
    %v4554 = vunpack.c.l.b16 %v4384
    %v4555 = vunpack.c.l.b16 %v4387
    %v4556 = vunpack.c.l.b16 %v4391
    %v4557 = vunpack.c.l.b16 %v4394
    %v4558 = vunpack.c.l.b16 %v4398
    %v4559 = vunpack.c.l.b16 %v4401
    %v4560 = vunpack.c.l.b16 %v4405
    %v4561 = vunpack.c.l.b16 %v4408
    %v4562 = vunpack.c.l.b16 %v4412
    %v4563 = vunpack.c.l.b16 %v4415
    %v4564 = vunpack.c.l.b16 %v4419
    %v4565 = vunpack.c.l.b16 %v4422
    %v4566 = vunpack.c.l.b16 %v4426
    %v4567 = vunpack.c.l.b16 %v4429
    %v4568 = vunpack.c.l.b16 %v4433
    %v4569 = vunpack.c.l.b16 %v4436
    %v4570 = vunpack.c.l.b16 %v4440
    %v4571 = vunpack.c.l.b16 %v4443
    %v4572 = vunpack.c.l.b16 %v4447
    %v4573 = vunpack.c.l.b16 %v4450
    %v4574 = vunpack.c.l.b16 %v4454
    %v4575 = vunpack.c.l.b16 %v4457
    %v4576 = vunpack.c.l.b16 %v4461
    %v4577 = vunpack.c.l.b16 %v4464
    %v4578 = vunpack.c.l.b16 %v4468
    %v4579 = vunpack.c.l.b16 %v4471
    %v4580 = vunpack.c.l.b16 %v4475
    %v4581 = vunpack.c.l.b16 %v4478
    %v4582 = vunpack.c.l.b16 %v4482
    %v4583 = vunpack.c.l.b16 %v4485
    %v4584 = vunpack.c.l.b16 %v4489
    %v4585 = vunpack.c.l.b16 %v4492
    %v4586 = vunpack.c.l.b16 %v4496
    %v4587 = vunpack.c.l.b16 %v4499
    %v4588 = vunpack.c.l.b16 %v4503
    %v4589 = vunpack.c.l.b16 %v4506
    %v4590 = vunpack.c.l.b16 %v4510
    %v4591 = vunpack.c.l.b16 %v4513
    %v4592 = vunpack.c.l.b16 %v4517
    %v4593 = vunpack.c.l.b16 %v4520
    %v4594 = vunpack.c.l.b16 %v4524
    %v4595 = vunpack.c.l.b16 %v4527
    %v4596 = vpack.c.b16 %v4533, %v4532
    %v4597 = vpack.c.b16 %v4535, %v4534
    %v4598 = vpack.c.b16 %v4537, %v4536
    %v4599 = vpack.c.b16 %v4539, %v4538
    %v4600 = vpack.c.b16 %v4541, %v4540
    %v4601 = vpack.c.b16 %v4543, %v4542
    %v4602 = vpack.c.b16 %v4545, %v4544
    %v4603 = vpack.c.b16 %v4547, %v4546
    %v4604 = vpack.c.b16 %v4549, %v4548
    %v4605 = vpack.c.b16 %v4551, %v4550
    %v4606 = vpack.c.b16 %v4553, %v4552
    %v4607 = vpack.c.b16 %v4555, %v4554
    %v4608 = vpack.c.b16 %v4557, %v4556
    %v4609 = vpack.c.b16 %v4559, %v4558
    %v4610 = vpack.c.b16 %v4561, %v4560
    %v4611 = vpack.c.b16 %v4563, %v4562
    %v4612 = vpack.c.b16 %v4565, %v4564
    %v4613 = vpack.c.b16 %v4567, %v4566
    %v4614 = vpack.c.b16 %v4569, %v4568
    %v4615 = vpack.c.b16 %v4571, %v4570
    %v4616 = vpack.c.b16 %v4573, %v4572
    %v4617 = vpack.c.b16 %v4575, %v4574
    %v4618 = vpack.c.b16 %v4577, %v4576
    %v4619 = vpack.c.b16 %v4579, %v4578
    %v4620 = vpack.c.b16 %v4581, %v4580
    %v4621 = vpack.c.b16 %v4583, %v4582
    %v4622 = vpack.c.b16 %v4585, %v4584
    %v4623 = vpack.c.b16 %v4587, %v4586
    %v4624 = vpack.c.b16 %v4589, %v4588
    %v4625 = vpack.c.b16 %v4591, %v4590
    %v4626 = vpack.c.b16 %v4593, %v4592
    %v4627 = vpack.c.b16 %v4595, %v4594
    %v4632 = vunpack.c.l.b16 %v4528
    %v4633 = vunpack.c.l.b16 %v4529
    %v4634 = vunpack.c.l.b16 %v4530
    %v4635 = vunpack.c.l.b16 %v4531
    %v4636 = vpack.c.b16 %v4633, %v4632
    %v4637 = vpack.c.b16 %v4635, %v4634
    %v4641 = vsel %vm3262, %v4596, 0
    %v4644 = vsel %vm3262, %v4597, 0
    %v4647 = vsel %vm3262, %v4598, 0
    %v4650 = vsel %vm3262, %v4599, 0
    %v4653 = vsel %vm3262, %v4600, 0
    %v4656 = vsel %vm3262, %v4601, 0
    %v4659 = vsel %vm3262, %v4602, 0
    %v4662 = vsel %vm3262, %v4603, 0
    %v4665 = vsel %vm3262, %v4604, 0
    %v4668 = vsel %vm3262, %v4605, 0
    %v4671 = vsel %vm3262, %v4606, 0
    %v4674 = vsel %vm3262, %v4607, 0
    %v4677 = vsel %vm3262, %v4608, 0
    %v4680 = vsel %vm3262, %v4609, 0
    %v4683 = vsel %vm3262, %v4610, 0
    %v4686 = vsel %vm3262, %v4611, 0
    %v4689 = vsel %vm3262, %v4612, 0
    %v4692 = vsel %vm3262, %v4613, 0
    %v4695 = vsel %vm3262, %v4614, 0
    %v4698 = vsel %vm3262, %v4615, 0
    %v4701 = vsel %vm3262, %v4616, 0
    %v4704 = vsel %vm3262, %v4617, 0
    %v4707 = vsel %vm3262, %v4618, 0
    %v4710 = vsel %vm3262, %v4619, 0
    %v4713 = vsel %vm3262, %v4620, 0
    %v4716 = vsel %vm3262, %v4621, 0
    %v4719 = vsel %vm3262, %v4622, 0
    %v4722 = vsel %vm3262, %v4623, 0
    %v4725 = vsel %vm3262, %v4624, 0
    %v4728 = vsel %vm3262, %v4625, 0
    %v4731 = vsel %vm3262, %v4626, 0
    %v4734 = vsel %vm3262, %v4627, 0
    %4736 = vmatprep.subr.bf16.mxu0 0
    %4737 = vmatpush1.bf16.msra.mxu0 %v4636
    %4738 = vmatprep.subr.bf16.mxu0 0
    %4739 = vmatpush1.bf16.msra.mxu0 %v4637
    %4740 = vmatprep.subr.bf16.mxu0 0
    %4741 = vmatpush1.bf16.msra.mxu0 0
    %4742 = vmatprep.subr.bf16.mxu0 0
    %4743 = vmatpush1.bf16.msra.mxu0 0
    %4744 = vmatprep.subr.bf16.mxu0 0
    %4745 = vmatpush1.bf16.msra.mxu0 0
    %4746 = vmatprep.subr.bf16.mxu0 0
    %4747 = vmatpush1.bf16.msra.mxu0 0
    %4748 = vmatprep.subr.bf16.mxu0 0
    %4749 = vmatpush1.bf16.msra.mxu0 0
    %4750 = vmatprep.subr.bf16.mxu0 0
    %4751 = vmatpush1.bf16.msra.mxu0 0
    %4752 = vmatprep.subr.bf16.mxu0 0
    %4753 = vmatpush1.bf16.msra.mxu0 0
    %4754 = vmatprep.subr.bf16.mxu0 0
    %4755 = vmatpush1.bf16.msra.mxu0 0
    %4756 = vmatprep.subr.bf16.mxu0 0
    %4757 = vmatpush1.bf16.msra.mxu0 0
    %4758 = vmatprep.subr.bf16.mxu0 0
    %4759 = vmatpush1.bf16.msra.mxu0 0
    %4760 = vmatprep.subr.bf16.mxu0 0
    %4761 = vmatpush1.bf16.msra.mxu0 0
    %4762 = vmatprep.subr.bf16.mxu0 0
    %4763 = vmatpush1.bf16.msra.mxu0 0
    %4764 = vmatprep.subr.bf16.mxu0 0
    %4765 = vmatpush1.bf16.msra.mxu0 0
    %4766 = vmatprep.subr.bf16.mxu0 0
    %4767 = vmatpush1.bf16.msra.mxu0 0
    %4768 = vmatprep.mubr.bf16.mxu0 0
    %4769 = vmatmul.mubr.bf16.gmra.mrb[0].mxu0 %v4641
    %v4770 = vpop.f32.mrb[0].mxu0
    %v4771 = vadd.f32 0.0, %v4770
    %v4772 = vpop.f32.mrb[0].mxu0
    %v4773 = vpop.f32.mrb[0].mxu0
    %v4774 = vadd.f32 0.0, %v4773
    %v4775 = vpop.f32.mrb[0].mxu0
    %4776 = vmatprep.mubr.bf16.mxu0 0
    %4777 = vmatmul.mubr.bf16.gmra.mrb[0].mxu0 %v4644
    %v4778 = vpop.f32.mrb[0].mxu0
    %v4779 = vadd.f32 0.0, %v4778
    %v4780 = vpop.f32.mrb[0].mxu0
    %v4781 = vpop.f32.mrb[0].mxu0
    %v4782 = vadd.f32 0.0, %v4781
    %v4783 = vpop.f32.mrb[0].mxu0
    %4784 = vmatprep.mubr.bf16.mxu0 0
    %4785 = vmatmul.mubr.bf16.gmra.mrb[0].mxu0 %v4647
    %v4786 = vpop.f32.mrb[0].mxu0
    %v4787 = vadd.f32 0.0, %v4786
    %v4788 = vpop.f32.mrb[0].mxu0
    %v4789 = vpop.f32.mrb[0].mxu0
    %v4790 = vadd.f32 0.0, %v4789
    %v4791 = vpop.f32.mrb[0].mxu0
    %4792 = vmatprep.mubr.bf16.mxu0 0
    %4793 = vmatmul.mubr.bf16.gmra.mrb[0].mxu0 %v4650
    %v4794 = vpop.f32.mrb[0].mxu0
    %v4795 = vadd.f32 0.0, %v4794
    %v4796 = vpop.f32.mrb[0].mxu0
    %v4797 = vpop.f32.mrb[0].mxu0
    %v4798 = vadd.f32 0.0, %v4797
    %v4799 = vpop.f32.mrb[0].mxu0
    %4800 = vmatprep.mubr.bf16.mxu0 0
    %4801 = vmatmul.mubr.bf16.gmra.mrb[0].mxu0 %v4653
    %v4802 = vpop.f32.mrb[0].mxu0
    %v4803 = vadd.f32 0.0, %v4802
    %v4804 = vpop.f32.mrb[0].mxu0
    %v4805 = vpop.f32.mrb[0].mxu0
    %v4806 = vadd.f32 0.0, %v4805
    %v4807 = vpop.f32.mrb[0].mxu0
    %4808 = vmatprep.mubr.bf16.mxu0 0
    %4809 = vmatmul.mubr.bf16.gmra.mrb[0].mxu0 %v4656
    %v4810 = vpop.f32.mrb[0].mxu0
    %v4811 = vadd.f32 0.0, %v4810
    %v4812 = vpop.f32.mrb[0].mxu0
    %v4813 = vpop.f32.mrb[0].mxu0
    %v4814 = vadd.f32 0.0, %v4813
    %v4815 = vpop.f32.mrb[0].mxu0
    %4816 = vmatprep.mubr.bf16.mxu0 0
    %4817 = vmatmul.mubr.bf16.gmra.mrb[0].mxu0 %v4659
    %v4818 = vpop.f32.mrb[0].mxu0
    %v4819 = vadd.f32 0.0, %v4818
    %v4820 = vpop.f32.mrb[0].mxu0
    %v4821 = vpop.f32.mrb[0].mxu0
    %v4822 = vadd.f32 0.0, %v4821
    %v4823 = vpop.f32.mrb[0].mxu0
    %4824 = vmatprep.mubr.bf16.mxu0 0
    %4825 = vmatmul.mubr.bf16.gmra.mrb[0].mxu0 %v4662
    %v4826 = vpop.f32.mrb[0].mxu0
    %v4827 = vadd.f32 0.0, %v4826
    %v4828 = vpop.f32.mrb[0].mxu0
    %v4829 = vpop.f32.mrb[0].mxu0
    %v4830 = vadd.f32 0.0, %v4829
    %v4831 = vpop.f32.mrb[0].mxu0
    %4832 = vmatprep.mubr.bf16.mxu0 0
    %4833 = vmatmul.mubr.bf16.gmra.mrb[0].mxu0 %v4665
    %v4834 = vpop.f32.mrb[0].mxu0
    %v4835 = vadd.f32 0.0, %v4834
    %v4836 = vpop.f32.mrb[0].mxu0
    %v4837 = vpop.f32.mrb[0].mxu0
    %v4838 = vadd.f32 0.0, %v4837
    %v4839 = vpop.f32.mrb[0].mxu0
    %4840 = vmatprep.mubr.bf16.mxu0 0
    %4841 = vmatmul.mubr.bf16.gmra.mrb[0].mxu0 %v4668
    %v4842 = vpop.f32.mrb[0].mxu0
    %v4843 = vadd.f32 0.0, %v4842
    %v4844 = vpop.f32.mrb[0].mxu0
    %v4845 = vpop.f32.mrb[0].mxu0
    %v4846 = vadd.f32 0.0, %v4845
    %v4847 = vpop.f32.mrb[0].mxu0
    %4848 = vmatprep.mubr.bf16.mxu0 0
    %4849 = vmatmul.mubr.bf16.gmra.mrb[0].mxu0 %v4671
    %v4850 = vpop.f32.mrb[0].mxu0
    %v4851 = vadd.f32 0.0, %v4850
    %v4852 = vpop.f32.mrb[0].mxu0
    %v4853 = vpop.f32.mrb[0].mxu0
    %v4854 = vadd.f32 0.0, %v4853
    %v4855 = vpop.f32.mrb[0].mxu0
    %4856 = vmatprep.mubr.bf16.mxu0 0
    %4857 = vmatmul.mubr.bf16.gmra.mrb[0].mxu0 %v4674
    %v4858 = vpop.f32.mrb[0].mxu0
    %v4859 = vadd.f32 0.0, %v4858
    %v4860 = vpop.f32.mrb[0].mxu0
    %v4861 = vpop.f32.mrb[0].mxu0
    %v4862 = vadd.f32 0.0, %v4861
    %v4863 = vpop.f32.mrb[0].mxu0
    %4864 = vmatprep.mubr.bf16.mxu0 0
    %4865 = vmatmul.mubr.bf16.gmra.mrb[0].mxu0 %v4677
    %v4866 = vpop.f32.mrb[0].mxu0
    %v4867 = vadd.f32 0.0, %v4866
    %v4868 = vpop.f32.mrb[0].mxu0
    %v4869 = vpop.f32.mrb[0].mxu0
    %v4870 = vadd.f32 0.0, %v4869
    %v4871 = vpop.f32.mrb[0].mxu0
    %4872 = vmatprep.mubr.bf16.mxu0 0
    %4873 = vmatmul.mubr.bf16.gmra.mrb[0].mxu0 %v4680
    %v4874 = vpop.f32.mrb[0].mxu0
    %v4875 = vadd.f32 0.0, %v4874
    %v4876 = vpop.f32.mrb[0].mxu0
    %v4877 = vpop.f32.mrb[0].mxu0
    %v4878 = vadd.f32 0.0, %v4877
    %v4879 = vpop.f32.mrb[0].mxu0
    %4880 = vmatprep.mubr.bf16.mxu0 0
    %4881 = vmatmul.mubr.bf16.gmra.mrb[0].mxu0 %v4683
    %v4882 = vpop.f32.mrb[0].mxu0
    %v4883 = vadd.f32 0.0, %v4882
    %v4884 = vpop.f32.mrb[0].mxu0
    %v4885 = vpop.f32.mrb[0].mxu0
    %v4886 = vadd.f32 0.0, %v4885
    %v4887 = vpop.f32.mrb[0].mxu0
    %4888 = vmatprep.mubr.bf16.mxu0 0
    %4889 = vmatmul.mubr.bf16.gmra.mrb[0].mxu0 %v4686
    %v4890 = vpop.f32.mrb[0].mxu0
    %v4891 = vadd.f32 0.0, %v4890
    %v4892 = vpop.f32.mrb[0].mxu0
    %v4893 = vpop.f32.mrb[0].mxu0
    %v4894 = vadd.f32 0.0, %v4893
    %v4895 = vpop.f32.mrb[0].mxu0
    %4896 = vmatprep.mubr.bf16.mxu0 0
    %4897 = vmatmul.mubr.bf16.gmra.mrb[0].mxu0 %v4689
    %v4898 = vpop.f32.mrb[0].mxu0
    %v4899 = vadd.f32 0.0, %v4898
    %v4900 = vpop.f32.mrb[0].mxu0
    %v4901 = vpop.f32.mrb[0].mxu0
    %v4902 = vadd.f32 0.0, %v4901
    %v4903 = vpop.f32.mrb[0].mxu0
    %4904 = vmatprep.mubr.bf16.mxu0 0
    %4905 = vmatmul.mubr.bf16.gmra.mrb[0].mxu0 %v4692
    %v4906 = vpop.f32.mrb[0].mxu0
    %v4907 = vadd.f32 0.0, %v4906
    %v4908 = vpop.f32.mrb[0].mxu0
    %v4909 = vpop.f32.mrb[0].mxu0
    %v4910 = vadd.f32 0.0, %v4909
    %v4911 = vpop.f32.mrb[0].mxu0
    %4912 = vmatprep.mubr.bf16.mxu0 0
    %4913 = vmatmul.mubr.bf16.gmra.mrb[0].mxu0 %v4695
    %v4914 = vpop.f32.mrb[0].mxu0
    %v4915 = vadd.f32 0.0, %v4914
    %v4916 = vpop.f32.mrb[0].mxu0
    %v4917 = vpop.f32.mrb[0].mxu0
    %v4918 = vadd.f32 0.0, %v4917
    %v4919 = vpop.f32.mrb[0].mxu0
    %4920 = vmatprep.mubr.bf16.mxu0 0
    %4921 = vmatmul.mubr.bf16.gmra.mrb[0].mxu0 %v4698
    %v4922 = vpop.f32.mrb[0].mxu0
    %v4923 = vadd.f32 0.0, %v4922
    %v4924 = vpop.f32.mrb[0].mxu0
    %v4925 = vpop.f32.mrb[0].mxu0
    %v4926 = vadd.f32 0.0, %v4925
    %v4927 = vpop.f32.mrb[0].mxu0
    %4928 = vmatprep.mubr.bf16.mxu0 0
    %4929 = vmatmul.mubr.bf16.gmra.mrb[0].mxu0 %v4701
    %v4930 = vpop.f32.mrb[0].mxu0
    %v4931 = vadd.f32 0.0, %v4930
    %v4932 = vpop.f32.mrb[0].mxu0
    %v4933 = vpop.f32.mrb[0].mxu0
    %v4934 = vadd.f32 0.0, %v4933
    %v4935 = vpop.f32.mrb[0].mxu0
    %4936 = vmatprep.mubr.bf16.mxu0 0
    %4937 = vmatmul.mubr.bf16.gmra.mrb[0].mxu0 %v4704
    %v4938 = vpop.f32.mrb[0].mxu0
    %v4939 = vadd.f32 0.0, %v4938
    %v4940 = vpop.f32.mrb[0].mxu0
    %v4941 = vpop.f32.mrb[0].mxu0
    %v4942 = vadd.f32 0.0, %v4941
    %v4943 = vpop.f32.mrb[0].mxu0
    %4944 = vmatprep.mubr.bf16.mxu0 0
    %4945 = vmatmul.mubr.bf16.gmra.mrb[0].mxu0 %v4707
    %v4946 = vpop.f32.mrb[0].mxu0
    %v4947 = vadd.f32 0.0, %v4946
    %v4948 = vpop.f32.mrb[0].mxu0
    %v4949 = vpop.f32.mrb[0].mxu0
    %v4950 = vadd.f32 0.0, %v4949
    %v4951 = vpop.f32.mrb[0].mxu0
    %4952 = vmatprep.mubr.bf16.mxu0 0
    %4953 = vmatmul.mubr.bf16.gmra.mrb[0].mxu0 %v4710
    %v4954 = vpop.f32.mrb[0].mxu0
    %v4955 = vadd.f32 0.0, %v4954
    %v4956 = vpop.f32.mrb[0].mxu0
    %v4957 = vpop.f32.mrb[0].mxu0
    %v4958 = vadd.f32 0.0, %v4957
    %v4959 = vpop.f32.mrb[0].mxu0
    %4960 = vmatprep.mubr.bf16.mxu0 0
    %4961 = vmatmul.mubr.bf16.gmra.mrb[0].mxu0 %v4713
    %v4962 = vpop.f32.mrb[0].mxu0
    %v4963 = vadd.f32 0.0, %v4962
    %v4964 = vpop.f32.mrb[0].mxu0
    %v4965 = vpop.f32.mrb[0].mxu0
    %v4966 = vadd.f32 0.0, %v4965
    %v4967 = vpop.f32.mrb[0].mxu0
    %4968 = vmatprep.mubr.bf16.mxu0 0
    %4969 = vmatmul.mubr.bf16.gmra.mrb[0].mxu0 %v4716
    %v4970 = vpop.f32.mrb[0].mxu0
    %v4971 = vadd.f32 0.0, %v4970
    %v4972 = vpop.f32.mrb[0].mxu0
    %v4973 = vpop.f32.mrb[0].mxu0
    %v4974 = vadd.f32 0.0, %v4973
    %v4975 = vpop.f32.mrb[0].mxu0
    %4976 = vmatprep.mubr.bf16.mxu0 0
    %4977 = vmatmul.mubr.bf16.gmra.mrb[0].mxu0 %v4719
    %v4978 = vpop.f32.mrb[0].mxu0
    %v4979 = vadd.f32 0.0, %v4978
    %v4980 = vpop.f32.mrb[0].mxu0
    %v4981 = vpop.f32.mrb[0].mxu0
    %v4982 = vadd.f32 0.0, %v4981
    %v4983 = vpop.f32.mrb[0].mxu0
    %4984 = vmatprep.mubr.bf16.mxu0 0
    %4985 = vmatmul.mubr.bf16.gmra.mrb[0].mxu0 %v4722
    %v4986 = vpop.f32.mrb[0].mxu0
    %v4987 = vadd.f32 0.0, %v4986
    %v4988 = vpop.f32.mrb[0].mxu0
    %v4989 = vpop.f32.mrb[0].mxu0
    %v4990 = vadd.f32 0.0, %v4989
    %v4991 = vpop.f32.mrb[0].mxu0
    %4992 = vmatprep.mubr.bf16.mxu0 0
    %4993 = vmatmul.mubr.bf16.gmra.mrb[0].mxu0 %v4725
    %v4994 = vpop.f32.mrb[0].mxu0
    %v4995 = vadd.f32 0.0, %v4994
    %v4996 = vpop.f32.mrb[0].mxu0
    %v4997 = vpop.f32.mrb[0].mxu0
    %v4998 = vadd.f32 0.0, %v4997
    %v4999 = vpop.f32.mrb[0].mxu0
    %5000 = vmatprep.mubr.bf16.mxu0 0
    %5001 = vmatmul.mubr.bf16.gmra.mrb[0].mxu0 %v4728
    %v5002 = vpop.f32.mrb[0].mxu0
    %v5003 = vadd.f32 0.0, %v5002
    %v5004 = vpop.f32.mrb[0].mxu0
    %v5005 = vpop.f32.mrb[0].mxu0
    %v5006 = vadd.f32 0.0, %v5005
    %v5007 = vpop.f32.mrb[0].mxu0
    %5008 = vmatprep.mubr.bf16.mxu0 0
    %5009 = vmatmul.mubr.bf16.gmra.mrb[0].mxu0 %v4731
    %v5010 = vpop.f32.mrb[0].mxu0
    %v5011 = vadd.f32 0.0, %v5010
    %v5012 = vpop.f32.mrb[0].mxu0
    %v5013 = vpop.f32.mrb[0].mxu0
    %v5014 = vadd.f32 0.0, %v5013
    %v5015 = vpop.f32.mrb[0].mxu0
    %5016 = vmatprep.mubr.bf16.mxu0 0
    %5017 = vmatmul.mubr.bf16.gmra.mrb[0].mxu0 %v4734
    %v5018 = vpop.f32.mrb[0].mxu0
    %v5019 = vadd.f32 0.0, %v5018
    %v5020 = vpop.f32.mrb[0].mxu0
    %v5021 = vpop.f32.mrb[0].mxu0
    %v5022 = vadd.f32 0.0, %v5021
    %v5023 = vpop.f32.mrb[0].mxu0
    %5024 = vdwg.mxu0
    %v5025 = vadd.f32 %v3951, %v4771
    %v5026 = vadd.f32 %v3954, %v4774
    %v5027 = vadd.f32 %v3959, %v4779
    %v5028 = vadd.f32 %v3962, %v4782
    %v5029 = vadd.f32 %v3967, %v4787
    %v5030 = vadd.f32 %v3970, %v4790
    %v5031 = vadd.f32 %v3975, %v4795
    %v5032 = vadd.f32 %v3978, %v4798
    %v5033 = vadd.f32 %v3983, %v4803
    %v5034 = vadd.f32 %v3986, %v4806
    %v5035 = vadd.f32 %v3991, %v4811
    %v5036 = vadd.f32 %v3994, %v4814
    %v5037 = vadd.f32 %v3999, %v4819
    %v5038 = vadd.f32 %v4002, %v4822
    %v5039 = vadd.f32 %v4007, %v4827
    %v5040 = vadd.f32 %v4010, %v4830
    %v5041 = vadd.f32 %v4015, %v4835
    %v5042 = vadd.f32 %v4018, %v4838
    %v5043 = vadd.f32 %v4023, %v4843
    %v5044 = vadd.f32 %v4026, %v4846
    %v5045 = vadd.f32 %v4031, %v4851
    %v5046 = vadd.f32 %v4034, %v4854
    %v5047 = vadd.f32 %v4039, %v4859
    %v5048 = vadd.f32 %v4042, %v4862
    %v5049 = vadd.f32 %v4047, %v4867
    %v5050 = vadd.f32 %v4050, %v4870
    %v5051 = vadd.f32 %v4055, %v4875
    %v5052 = vadd.f32 %v4058, %v4878
    %v5053 = vadd.f32 %v4063, %v4883
    %v5054 = vadd.f32 %v4066, %v4886
    %v5055 = vadd.f32 %v4071, %v4891
    %v5056 = vadd.f32 %v4074, %v4894
    %v5057 = vadd.f32 %v4079, %v4899
    %v5058 = vadd.f32 %v4082, %v4902
    %v5059 = vadd.f32 %v4087, %v4907
    %v5060 = vadd.f32 %v4090, %v4910
    %v5061 = vadd.f32 %v4095, %v4915
    %v5062 = vadd.f32 %v4098, %v4918
    %v5063 = vadd.f32 %v4103, %v4923
    %v5064 = vadd.f32 %v4106, %v4926
    %v5065 = vadd.f32 %v4111, %v4931
    %v5066 = vadd.f32 %v4114, %v4934
    %v5067 = vadd.f32 %v4119, %v4939
    %v5068 = vadd.f32 %v4122, %v4942
    %v5069 = vadd.f32 %v4127, %v4947
    %v5070 = vadd.f32 %v4130, %v4950
    %v5071 = vadd.f32 %v4135, %v4955
    %v5072 = vadd.f32 %v4138, %v4958
    %v5073 = vadd.f32 %v4143, %v4963
    %v5074 = vadd.f32 %v4146, %v4966
    %v5075 = vadd.f32 %v4151, %v4971
    %v5076 = vadd.f32 %v4154, %v4974
    %v5077 = vadd.f32 %v4159, %v4979
    %v5078 = vadd.f32 %v4162, %v4982
    %v5079 = vadd.f32 %v4167, %v4987
    %v5080 = vadd.f32 %v4170, %v4990
    %v5081 = vadd.f32 %v4175, %v4995
    %v5082 = vadd.f32 %v4178, %v4998
    %v5083 = vadd.f32 %v4183, %v5003
    %v5084 = vadd.f32 %v4186, %v5006
    %v5085 = vadd.f32 %v4191, %v5011
    %v5086 = vadd.f32 %v4194, %v5014
    %v5087 = vadd.f32 %v4199, %v5019
    %v5088 = vadd.f32 %v4202, %v5022
    %v5089 = vld [vmem:[%s2052] sm:$0xf]
    %v5090 = vld [vmem:[%s2052 + $0x4] sm:$0xf]
    %v5091 = vld [vmem:[%s2052 + $0xc] sm:$0xf]
    %v5092 = vld [vmem:[%s2052 + $0x10] sm:$0xf]
    %v5093 = vld [vmem:[%s2052 + $0x18] sm:$0xf]
    %v5094 = vld [vmem:[%s2052 + $0x1c] sm:$0xf]
    %v5095 = vld [vmem:[%s2052 + $0x24] sm:$0xf]
    %v5096 = vld [vmem:[%s2052 + $0x28] sm:$0xf]
    %v5097 = vld [vmem:[%s2052 + $0x30] sm:$0xf]
    %v5098 = vld [vmem:[%s2052 + $0x34] sm:$0xf]
    %v5099 = vld [vmem:[%s2052 + $0x3c] sm:$0xf]
    %v5100 = vld [vmem:[%s2052 + $0x40] sm:$0xf]
    %v5101 = vld [vmem:[%s2052 + $0x48] sm:$0xf]
    %v5102 = vld [vmem:[%s2052 + $0x4c] sm:$0xf]
    %v5103 = vld [vmem:[%s2052 + $0x54] sm:$0xf]
    %v5104 = vld [vmem:[%s2052 + $0x58] sm:$0xf]
    %v5105 = vld [vmem:[%s2052 + $0x60] sm:$0xf]
    %v5106 = vld [vmem:[%s2052 + $0x64] sm:$0xf]
    %v5107 = vld [vmem:[%s2052 + $0x6c] sm:$0xf]
    %v5108 = vld [vmem:[%s2052 + $0x70] sm:$0xf]
    %v5109 = vld [vmem:[%s2052 + $0x78] sm:$0xf]
    %v5110 = vld [vmem:[%s2052 + $0x7c] sm:$0xf]
    %v5111 = vld [vmem:[%s2052 + $0x84] sm:$0xf]
    %v5112 = vld [vmem:[%s2052 + $0x88] sm:$0xf]
    %v5113 = vld [vmem:[%s2052 + $0x90] sm:$0xf]
    %v5114 = vld [vmem:[%s2052 + $0x94] sm:$0xf]
    %v5115 = vld [vmem:[%s2052 + $0x9c] sm:$0xf]
    %v5116 = vld [vmem:[%s2052 + $0xa0] sm:$0xf]
    %v5117 = vld [vmem:[%s2052 + $0xa8] sm:$0xf]
    %v5118 = vld [vmem:[%s2052 + $0xac] sm:$0xf]
    %v5119 = vld [vmem:[%s2052 + $0xb4] sm:$0xf]
    %v5120 = vld [vmem:[%s2052 + $0xb8] sm:$0xf]
    %v5121 = vld [vmem:[%s2052 + $0xd8] sm:$0xf]
    %v5122 = vld [vmem:[%s2052 + $0xdc] sm:$0xf]
    %v5123 = vld [vmem:[%s2052 + $0xe4] sm:$0xf]
    %v5124 = vld [vmem:[%s2052 + $0xe8] sm:$0xf]
    %v5125 = vld [vmem:[%s2052 + $0xf0] sm:$0xf]
    %v5126 = vld [vmem:[%s2052 + $0xf4] sm:$0xf]
    %v5127 = vld [vmem:[%s2052 + $0xfc] sm:$0xf]
    %v5128 = vld [vmem:[%s2052 + $0x100] sm:$0xf]
    %v5129 = vld [vmem:[%s2052 + $0x108] sm:$0xf]
    %v5130 = vld [vmem:[%s2052 + $0x10c] sm:$0xf]
    %v5131 = vld [vmem:[%s2052 + $0x114] sm:$0xf]
    %v5132 = vld [vmem:[%s2052 + $0x118] sm:$0xf]
    %v5133 = vld [vmem:[%s2052 + $0x120] sm:$0xf]
    %v5134 = vld [vmem:[%s2052 + $0x124] sm:$0xf]
    %v5135 = vld [vmem:[%s2052 + $0x12c] sm:$0xf]
    %v5136 = vld [vmem:[%s2052 + $0x130] sm:$0xf]
    %v5137 = vld [vmem:[%s2052 + $0x138] sm:$0xf]
    %v5138 = vld [vmem:[%s2052 + $0x13c] sm:$0xf]
    %v5139 = vld [vmem:[%s2052 + $0x144] sm:$0xf]
    %v5140 = vld [vmem:[%s2052 + $0x148] sm:$0xf]
    %v5141 = vld [vmem:[%s2052 + $0x150] sm:$0xf]
    %v5142 = vld [vmem:[%s2052 + $0x154] sm:$0xf]
    %v5143 = vld [vmem:[%s2052 + $0x15c] sm:$0xf]
    %v5144 = vld [vmem:[%s2052 + $0x160] sm:$0xf]
    %v5145 = vld [vmem:[%s2052 + $0x168] sm:$0xf]
    %v5146 = vld [vmem:[%s2052 + $0x16c] sm:$0xf]
    %v5147 = vld [vmem:[%s2052 + $0x174] sm:$0xf]
    %v5148 = vld [vmem:[%s2052 + $0x178] sm:$0xf]
    %v5149 = vld [vmem:[%s2052 + $0x180] sm:$0xf]
    %v5150 = vld [vmem:[%s2052 + $0x184] sm:$0xf]
    %v5151 = vld [vmem:[%s2052 + $0x18c] sm:$0xf]
    %v5152 = vld [vmem:[%s2052 + $0x190] sm:$0xf]
    %v5153 = vld [vmem:[%s3 + $0x30] sm:$0xf]
    %v5154 = vld [vmem:[%s3 + $0x34] sm:$0xf]
    %v5155 = vld [vmem:[%s3 + $0x38] sm:$0xf]
    %v5156 = vld [vmem:[%s3 + $0x3c] sm:$0xf]
    %v5221 = vunpack.c.l.b16 %v5089
    %v5222 = vunpack.c.l.b16 %v5090
    %v5223 = vunpack.c.l.b16 %v5091
    %v5224 = vunpack.c.l.b16 %v5092
    %v5225 = vunpack.c.l.b16 %v5093
    %v5226 = vunpack.c.l.b16 %v5094
    %v5227 = vunpack.c.l.b16 %v5095
    %v5228 = vunpack.c.l.b16 %v5096
    %v5229 = vunpack.c.l.b16 %v5097
    %v5230 = vunpack.c.l.b16 %v5098
    %v5231 = vunpack.c.l.b16 %v5099
    %v5232 = vunpack.c.l.b16 %v5100
    %v5233 = vunpack.c.l.b16 %v5101
    %v5234 = vunpack.c.l.b16 %v5102
    %v5235 = vunpack.c.l.b16 %v5103
    %v5236 = vunpack.c.l.b16 %v5104
    %v5237 = vunpack.c.l.b16 %v5105
    %v5238 = vunpack.c.l.b16 %v5106
    %v5239 = vunpack.c.l.b16 %v5107
    %v5240 = vunpack.c.l.b16 %v5108
    %v5241 = vunpack.c.l.b16 %v5109
    %v5242 = vunpack.c.l.b16 %v5110
    %v5243 = vunpack.c.l.b16 %v5111
    %v5244 = vunpack.c.l.b16 %v5112
    %v5245 = vunpack.c.l.b16 %v5113
    %v5246 = vunpack.c.l.b16 %v5114
    %v5247 = vunpack.c.l.b16 %v5115
    %v5248 = vunpack.c.l.b16 %v5116
    %v5249 = vunpack.c.l.b16 %v5117
    %v5250 = vunpack.c.l.b16 %v5118
    %v5251 = vunpack.c.l.b16 %v5119
    %v5252 = vunpack.c.l.b16 %v5120
    %v5253 = vunpack.c.l.b16 %v5121
    %v5254 = vunpack.c.l.b16 %v5122
    %v5255 = vunpack.c.l.b16 %v5123
    %v5256 = vunpack.c.l.b16 %v5124
    %v5257 = vunpack.c.l.b16 %v5125
    %v5258 = vunpack.c.l.b16 %v5126
    %v5259 = vunpack.c.l.b16 %v5127
    %v5260 = vunpack.c.l.b16 %v5128
    %v5261 = vunpack.c.l.b16 %v5129
    %v5262 = vunpack.c.l.b16 %v5130
    %v5263 = vunpack.c.l.b16 %v5131
    %v5264 = vunpack.c.l.b16 %v5132
    %v5265 = vunpack.c.l.b16 %v5133
    %v5266 = vunpack.c.l.b16 %v5134
    %v5267 = vunpack.c.l.b16 %v5135
    %v5268 = vunpack.c.l.b16 %v5136
    %v5269 = vunpack.c.l.b16 %v5137
    %v5270 = vunpack.c.l.b16 %v5138
    %v5271 = vunpack.c.l.b16 %v5139
    %v5272 = vunpack.c.l.b16 %v5140
    %v5273 = vunpack.c.l.b16 %v5141
    %v5274 = vunpack.c.l.b16 %v5142
    %v5275 = vunpack.c.l.b16 %v5143
    %v5276 = vunpack.c.l.b16 %v5144
    %v5277 = vunpack.c.l.b16 %v5145
    %v5278 = vunpack.c.l.b16 %v5146
    %v5279 = vunpack.c.l.b16 %v5147
    %v5280 = vunpack.c.l.b16 %v5148
    %v5281 = vunpack.c.l.b16 %v5149
    %v5282 = vunpack.c.l.b16 %v5150
    %v5283 = vunpack.c.l.b16 %v5151
    %v5284 = vunpack.c.l.b16 %v5152
    %v5285 = vpack.c.b16 %v5222, %v5221
    %v5286 = vpack.c.b16 %v5224, %v5223
    %v5287 = vpack.c.b16 %v5226, %v5225
    %v5288 = vpack.c.b16 %v5228, %v5227
    %v5289 = vpack.c.b16 %v5230, %v5229
    %v5290 = vpack.c.b16 %v5232, %v5231
    %v5291 = vpack.c.b16 %v5234, %v5233
    %v5292 = vpack.c.b16 %v5236, %v5235
    %v5293 = vpack.c.b16 %v5238, %v5237
    %v5294 = vpack.c.b16 %v5240, %v5239
    %v5295 = vpack.c.b16 %v5242, %v5241
    %v5296 = vpack.c.b16 %v5244, %v5243
    %v5297 = vpack.c.b16 %v5246, %v5245
    %v5298 = vpack.c.b16 %v5248, %v5247
    %v5299 = vpack.c.b16 %v5250, %v5249
    %v5300 = vpack.c.b16 %v5252, %v5251
    %v5301 = vpack.c.b16 %v5254, %v5253
    %v5302 = vpack.c.b16 %v5256, %v5255
    %v5303 = vpack.c.b16 %v5258, %v5257
    %v5304 = vpack.c.b16 %v5260, %v5259
    %v5305 = vpack.c.b16 %v5262, %v5261
    %v5306 = vpack.c.b16 %v5264, %v5263
    %v5307 = vpack.c.b16 %v5266, %v5265
    %v5308 = vpack.c.b16 %v5268, %v5267
    %v5309 = vpack.c.b16 %v5270, %v5269
    %v5310 = vpack.c.b16 %v5272, %v5271
    %v5311 = vpack.c.b16 %v5274, %v5273
    %v5312 = vpack.c.b16 %v5276, %v5275
    %v5313 = vpack.c.b16 %v5278, %v5277
    %v5314 = vpack.c.b16 %v5280, %v5279
    %v5315 = vpack.c.b16 %v5282, %v5281
    %v5316 = vpack.c.b16 %v5284, %v5283
    %v5321 = vunpack.c.l.b16 %v5153
    %v5322 = vunpack.c.l.b16 %v5154
    %v5323 = vunpack.c.l.b16 %v5155
    %v5324 = vunpack.c.l.b16 %v5156
    %v5325 = vpack.c.b16 %v5322, %v5321
    %v5326 = vpack.c.b16 %v5324, %v5323
    %v5330 = vsel %vm3262, %v5285, 0
    %v5333 = vsel %vm3262, %v5286, 0
    %v5336 = vsel %vm3262, %v5287, 0
    %v5339 = vsel %vm3262, %v5288, 0
    %v5342 = vsel %vm3262, %v5289, 0
    %v5345 = vsel %vm3262, %v5290, 0
    %v5348 = vsel %vm3262, %v5291, 0
    %v5351 = vsel %vm3262, %v5292, 0
    %v5354 = vsel %vm3262, %v5293, 0
    %v5357 = vsel %vm3262, %v5294, 0
    %v5360 = vsel %vm3262, %v5295, 0
    %v5363 = vsel %vm3262, %v5296, 0
    %v5366 = vsel %vm3262, %v5297, 0
    %v5369 = vsel %vm3262, %v5298, 0
    %v5372 = vsel %vm3262, %v5299, 0
    %v5375 = vsel %vm3262, %v5300, 0
    %v5378 = vsel %vm3262, %v5301, 0
    %v5381 = vsel %vm3262, %v5302, 0
    %v5384 = vsel %vm3262, %v5303, 0
    %v5387 = vsel %vm3262, %v5304, 0
    %v5390 = vsel %vm3262, %v5305, 0
    %v5393 = vsel %vm3262, %v5306, 0
    %v5396 = vsel %vm3262, %v5307, 0
    %v5399 = vsel %vm3262, %v5308, 0
    %v5402 = vsel %vm3262, %v5309, 0
    %v5405 = vsel %vm3262, %v5310, 0
    %v5408 = vsel %vm3262, %v5311, 0
    %v5411 = vsel %vm3262, %v5312, 0
    %v5414 = vsel %vm3262, %v5313, 0
    %v5417 = vsel %vm3262, %v5314, 0
    %v5420 = vsel %vm3262, %v5315, 0
    %v5423 = vsel %vm3262, %v5316, 0
    %5425 = vmatprep.subr.bf16.mxu0 0
    %5426 = vmatpush1.bf16.msra.mxu0 %v5325
    %5427 = vmatprep.subr.bf16.mxu0 0
    %5428 = vmatpush1.bf16.msra.mxu0 %v5326
    %5429 = vmatprep.subr.bf16.mxu0 0
    %5430 = vmatpush1.bf16.msra.mxu0 0
    %5431 = vmatprep.subr.bf16.mxu0 0
    %5432 = vmatpush1.bf16.msra.mxu0 0
    %5433 = vmatprep.subr.bf16.mxu0 0
    %5434 = vmatpush1.bf16.msra.mxu0 0
    %5435 = vmatprep.subr.bf16.mxu0 0
    %5436 = vmatpush1.bf16.msra.mxu0 0
    %5437 = vmatprep.subr.bf16.mxu0 0
    %5438 = vmatpush1.bf16.msra.mxu0 0
    %5439 = vmatprep.subr.bf16.mxu0 0
    %5440 = vmatpush1.bf16.msra.mxu0 0
    %5441 = vmatprep.subr.bf16.mxu0 0
    %5442 = vmatpush1.bf16.msra.mxu0 0
    %5443 = vmatprep.subr.bf16.mxu0 0
    %5444 = vmatpush1.bf16.msra.mxu0 0
    %5445 = vmatprep.subr.bf16.mxu0 0
    %5446 = vmatpush1.bf16.msra.mxu0 0
    %5447 = vmatprep.subr.bf16.mxu0 0
    %5448 = vmatpush1.bf16.msra.mxu0 0
    %5449 = vmatprep.subr.bf16.mxu0 0
    %5450 = vmatpush1.bf16.msra.mxu0 0
    %5451 = vmatprep.subr.bf16.mxu0 0
    %5452 = vmatpush1.bf16.msra.mxu0 0
    %5453 = vmatprep.subr.bf16.mxu0 0
    %5454 = vmatpush1.bf16.msra.mxu0 0
    %5455 = vmatprep.subr.bf16.mxu0 0
    %5456 = vmatpush1.bf16.msra.mxu0 0
    %5457 = vmatprep.mubr.bf16.mxu0 0
    %5458 = vmatmul.mubr.bf16.gmra.mrb[0].mxu0 %v5330
    %v5459 = vpop.f32.mrb[0].mxu0
    %v5460 = vadd.f32 0.0, %v5459
    %v5461 = vpop.f32.mrb[0].mxu0
    %v5462 = vpop.f32.mrb[0].mxu0
    %v5463 = vadd.f32 0.0, %v5462
    %v5464 = vpop.f32.mrb[0].mxu0
    %5465 = vmatprep.mubr.bf16.mxu0 0
    %5466 = vmatmul.mubr.bf16.gmra.mrb[0].mxu0 %v5333
    %v5467 = vpop.f32.mrb[0].mxu0
    %v5468 = vadd.f32 0.0, %v5467
    %v5469 = vpop.f32.mrb[0].mxu0
    %v5470 = vpop.f32.mrb[0].mxu0
    %v5471 = vadd.f32 0.0, %v5470
    %v5472 = vpop.f32.mrb[0].mxu0
    %5473 = vmatprep.mubr.bf16.mxu0 0
    %5474 = vmatmul.mubr.bf16.gmra.mrb[0].mxu0 %v5336
    %v5475 = vpop.f32.mrb[0].mxu0
    %v5476 = vadd.f32 0.0, %v5475
    %v5477 = vpop.f32.mrb[0].mxu0
    %v5478 = vpop.f32.mrb[0].mxu0
    %v5479 = vadd.f32 0.0, %v5478
    %v5480 = vpop.f32.mrb[0].mxu0
    %5481 = vmatprep.mubr.bf16.mxu0 0
    %5482 = vmatmul.mubr.bf16.gmra.mrb[0].mxu0 %v5339
    %v5483 = vpop.f32.mrb[0].mxu0
    %v5484 = vadd.f32 0.0, %v5483
    %v5485 = vpop.f32.mrb[0].mxu0
    %v5486 = vpop.f32.mrb[0].mxu0
    %v5487 = vadd.f32 0.0, %v5486
    %v5488 = vpop.f32.mrb[0].mxu0
    %5489 = vmatprep.mubr.bf16.mxu0 0
    %5490 = vmatmul.mubr.bf16.gmra.mrb[0].mxu0 %v5342
    %v5491 = vpop.f32.mrb[0].mxu0
    %v5492 = vadd.f32 0.0, %v5491
    %v5493 = vpop.f32.mrb[0].mxu0
    %v5494 = vpop.f32.mrb[0].mxu0
    %v5495 = vadd.f32 0.0, %v5494
    %v5496 = vpop.f32.mrb[0].mxu0
    %5497 = vmatprep.mubr.bf16.mxu0 0
    %5498 = vmatmul.mubr.bf16.gmra.mrb[0].mxu0 %v5345
    %v5499 = vpop.f32.mrb[0].mxu0
    %v5500 = vadd.f32 0.0, %v5499
    %v5501 = vpop.f32.mrb[0].mxu0
    %v5502 = vpop.f32.mrb[0].mxu0
    %v5503 = vadd.f32 0.0, %v5502
    %v5504 = vpop.f32.mrb[0].mxu0
    %5505 = vmatprep.mubr.bf16.mxu0 0
    %5506 = vmatmul.mubr.bf16.gmra.mrb[0].mxu0 %v5348
    %v5507 = vpop.f32.mrb[0].mxu0
    %v5508 = vadd.f32 0.0, %v5507
    %v5509 = vpop.f32.mrb[0].mxu0
    %v5510 = vpop.f32.mrb[0].mxu0
    %v5511 = vadd.f32 0.0, %v5510
    %v5512 = vpop.f32.mrb[0].mxu0
    %5513 = vmatprep.mubr.bf16.mxu0 0
    %5514 = vmatmul.mubr.bf16.gmra.mrb[0].mxu0 %v5351
    %v5515 = vpop.f32.mrb[0].mxu0
    %v5516 = vadd.f32 0.0, %v5515
    %v5517 = vpop.f32.mrb[0].mxu0
    %v5518 = vpop.f32.mrb[0].mxu0
    %v5519 = vadd.f32 0.0, %v5518
    %v5520 = vpop.f32.mrb[0].mxu0
    %5521 = vmatprep.mubr.bf16.mxu0 0
    %5522 = vmatmul.mubr.bf16.gmra.mrb[0].mxu0 %v5354
    %v5523 = vpop.f32.mrb[0].mxu0
    %v5524 = vadd.f32 0.0, %v5523
    %v5525 = vpop.f32.mrb[0].mxu0
    %v5526 = vpop.f32.mrb[0].mxu0
    %v5527 = vadd.f32 0.0, %v5526
    %v5528 = vpop.f32.mrb[0].mxu0
    %5529 = vmatprep.mubr.bf16.mxu0 0
    %5530 = vmatmul.mubr.bf16.gmra.mrb[0].mxu0 %v5357
    %v5531 = vpop.f32.mrb[0].mxu0
    %v5532 = vadd.f32 0.0, %v5531
    %v5533 = vpop.f32.mrb[0].mxu0
    %v5534 = vpop.f32.mrb[0].mxu0
    %v5535 = vadd.f32 0.0, %v5534
    %v5536 = vpop.f32.mrb[0].mxu0
    %5537 = vmatprep.mubr.bf16.mxu0 0
    %5538 = vmatmul.mubr.bf16.gmra.mrb[0].mxu0 %v5360
    %v5539 = vpop.f32.mrb[0].mxu0
    %v5540 = vadd.f32 0.0, %v5539
    %v5541 = vpop.f32.mrb[0].mxu0
    %v5542 = vpop.f32.mrb[0].mxu0
    %v5543 = vadd.f32 0.0, %v5542
    %v5544 = vpop.f32.mrb[0].mxu0
    %5545 = vmatprep.mubr.bf16.mxu0 0
    %5546 = vmatmul.mubr.bf16.gmra.mrb[0].mxu0 %v5363
    %v5547 = vpop.f32.mrb[0].mxu0
    %v5548 = vadd.f32 0.0, %v5547
    %v5549 = vpop.f32.mrb[0].mxu0
    %v5550 = vpop.f32.mrb[0].mxu0
    %v5551 = vadd.f32 0.0, %v5550
    %v5552 = vpop.f32.mrb[0].mxu0
    %5553 = vmatprep.mubr.bf16.mxu0 0
    %5554 = vmatmul.mubr.bf16.gmra.mrb[0].mxu0 %v5366
    %v5555 = vpop.f32.mrb[0].mxu0
    %v5556 = vadd.f32 0.0, %v5555
    %v5557 = vpop.f32.mrb[0].mxu0
    %v5558 = vpop.f32.mrb[0].mxu0
    %v5559 = vadd.f32 0.0, %v5558
    %v5560 = vpop.f32.mrb[0].mxu0
    %5561 = vmatprep.mubr.bf16.mxu0 0
    %5562 = vmatmul.mubr.bf16.gmra.mrb[0].mxu0 %v5369
    %v5563 = vpop.f32.mrb[0].mxu0
    %v5564 = vadd.f32 0.0, %v5563
    %v5565 = vpop.f32.mrb[0].mxu0
    %v5566 = vpop.f32.mrb[0].mxu0
    %v5567 = vadd.f32 0.0, %v5566
    %v5568 = vpop.f32.mrb[0].mxu0
    %5569 = vmatprep.mubr.bf16.mxu0 0
    %5570 = vmatmul.mubr.bf16.gmra.mrb[0].mxu0 %v5372
    %v5571 = vpop.f32.mrb[0].mxu0
    %v5572 = vadd.f32 0.0, %v5571
    %v5573 = vpop.f32.mrb[0].mxu0
    %v5574 = vpop.f32.mrb[0].mxu0
    %v5575 = vadd.f32 0.0, %v5574
    %v5576 = vpop.f32.mrb[0].mxu0
    %5577 = vmatprep.mubr.bf16.mxu0 0
    %5578 = vmatmul.mubr.bf16.gmra.mrb[0].mxu0 %v5375
    %v5579 = vpop.f32.mrb[0].mxu0
    %v5580 = vadd.f32 0.0, %v5579
    %v5581 = vpop.f32.mrb[0].mxu0
    %v5582 = vpop.f32.mrb[0].mxu0
    %v5583 = vadd.f32 0.0, %v5582
    %v5584 = vpop.f32.mrb[0].mxu0
    %5585 = vmatprep.mubr.bf16.mxu0 0
    %5586 = vmatmul.mubr.bf16.gmra.mrb[0].mxu0 %v5378
    %v5587 = vpop.f32.mrb[0].mxu0
    %v5588 = vadd.f32 0.0, %v5587
    %v5589 = vpop.f32.mrb[0].mxu0
    %v5590 = vpop.f32.mrb[0].mxu0
    %v5591 = vadd.f32 0.0, %v5590
    %v5592 = vpop.f32.mrb[0].mxu0
    %5593 = vmatprep.mubr.bf16.mxu0 0
    %5594 = vmatmul.mubr.bf16.gmra.mrb[0].mxu0 %v5381
    %v5595 = vpop.f32.mrb[0].mxu0
    %v5596 = vadd.f32 0.0, %v5595
    %v5597 = vpop.f32.mrb[0].mxu0
    %v5598 = vpop.f32.mrb[0].mxu0
    %v5599 = vadd.f32 0.0, %v5598
    %v5600 = vpop.f32.mrb[0].mxu0
    %5601 = vmatprep.mubr.bf16.mxu0 0
    %5602 = vmatmul.mubr.bf16.gmra.mrb[0].mxu0 %v5384
    %v5603 = vpop.f32.mrb[0].mxu0
    %v5604 = vadd.f32 0.0, %v5603
    %v5605 = vpop.f32.mrb[0].mxu0
    %v5606 = vpop.f32.mrb[0].mxu0
    %v5607 = vadd.f32 0.0, %v5606
    %v5608 = vpop.f32.mrb[0].mxu0
    %5609 = vmatprep.mubr.bf16.mxu0 0
    %5610 = vmatmul.mubr.bf16.gmra.mrb[0].mxu0 %v5387
    %v5611 = vpop.f32.mrb[0].mxu0
    %v5612 = vadd.f32 0.0, %v5611
    %v5613 = vpop.f32.mrb[0].mxu0
    %v5614 = vpop.f32.mrb[0].mxu0
    %v5615 = vadd.f32 0.0, %v5614
    %v5616 = vpop.f32.mrb[0].mxu0
    %5617 = vmatprep.mubr.bf16.mxu0 0
    %5618 = vmatmul.mubr.bf16.gmra.mrb[0].mxu0 %v5390
    %v5619 = vpop.f32.mrb[0].mxu0
    %v5620 = vadd.f32 0.0, %v5619
    %v5621 = vpop.f32.mrb[0].mxu0
    %v5622 = vpop.f32.mrb[0].mxu0
    %v5623 = vadd.f32 0.0, %v5622
    %v5624 = vpop.f32.mrb[0].mxu0
    %5625 = vmatprep.mubr.bf16.mxu0 0
    %5626 = vmatmul.mubr.bf16.gmra.mrb[0].mxu0 %v5393
    %v5627 = vpop.f32.mrb[0].mxu0
    %v5628 = vadd.f32 0.0, %v5627
    %v5629 = vpop.f32.mrb[0].mxu0
    %v5630 = vpop.f32.mrb[0].mxu0
    %v5631 = vadd.f32 0.0, %v5630
    %v5632 = vpop.f32.mrb[0].mxu0
    %5633 = vmatprep.mubr.bf16.mxu0 0
    %5634 = vmatmul.mubr.bf16.gmra.mrb[0].mxu0 %v5396
    %v5635 = vpop.f32.mrb[0].mxu0
    %v5636 = vadd.f32 0.0, %v5635
    %v5637 = vpop.f32.mrb[0].mxu0
    %v5638 = vpop.f32.mrb[0].mxu0
    %v5639 = vadd.f32 0.0, %v5638
    %v5640 = vpop.f32.mrb[0].mxu0
    %5641 = vmatprep.mubr.bf16.mxu0 0
    %5642 = vmatmul.mubr.bf16.gmra.mrb[0].mxu0 %v5399
    %v5643 = vpop.f32.mrb[0].mxu0
    %v5644 = vadd.f32 0.0, %v5643
    %v5645 = vpop.f32.mrb[0].mxu0
    %v5646 = vpop.f32.mrb[0].mxu0
    %v5647 = vadd.f32 0.0, %v5646
    %v5648 = vpop.f32.mrb[0].mxu0
    %5649 = vmatprep.mubr.bf16.mxu0 0
    %5650 = vmatmul.mubr.bf16.gmra.mrb[0].mxu0 %v5402
    %v5651 = vpop.f32.mrb[0].mxu0
    %v5652 = vadd.f32 0.0, %v5651
    %v5653 = vpop.f32.mrb[0].mxu0
    %v5654 = vpop.f32.mrb[0].mxu0
    %v5655 = vadd.f32 0.0, %v5654
    %v5656 = vpop.f32.mrb[0].mxu0
    %5657 = vmatprep.mubr.bf16.mxu0 0
    %5658 = vmatmul.mubr.bf16.gmra.mrb[0].mxu0 %v5405
    %v5659 = vpop.f32.mrb[0].mxu0
    %v5660 = vadd.f32 0.0, %v5659
    %v5661 = vpop.f32.mrb[0].mxu0
    %v5662 = vpop.f32.mrb[0].mxu0
    %v5663 = vadd.f32 0.0, %v5662
    %v5664 = vpop.f32.mrb[0].mxu0
    %5665 = vmatprep.mubr.bf16.mxu0 0
    %5666 = vmatmul.mubr.bf16.gmra.mrb[0].mxu0 %v5408
    %v5667 = vpop.f32.mrb[0].mxu0
    %v5668 = vadd.f32 0.0, %v5667
    %v5669 = vpop.f32.mrb[0].mxu0
    %v5670 = vpop.f32.mrb[0].mxu0
    %v5671 = vadd.f32 0.0, %v5670
    %v5672 = vpop.f32.mrb[0].mxu0
    %5673 = vmatprep.mubr.bf16.mxu0 0
    %5674 = vmatmul.mubr.bf16.gmra.mrb[0].mxu0 %v5411
    %v5675 = vpop.f32.mrb[0].mxu0
    %v5676 = vadd.f32 0.0, %v5675
    %v5677 = vpop.f32.mrb[0].mxu0
    %v5678 = vpop.f32.mrb[0].mxu0
    %v5679 = vadd.f32 0.0, %v5678
    %v5680 = vpop.f32.mrb[0].mxu0
    %5681 = vmatprep.mubr.bf16.mxu0 0
    %5682 = vmatmul.mubr.bf16.gmra.mrb[0].mxu0 %v5414
    %v5683 = vpop.f32.mrb[0].mxu0
    %v5684 = vadd.f32 0.0, %v5683
    %v5685 = vpop.f32.mrb[0].mxu0
    %v5686 = vpop.f32.mrb[0].mxu0
    %v5687 = vadd.f32 0.0, %v5686
    %v5688 = vpop.f32.mrb[0].mxu0
    %5689 = vmatprep.mubr.bf16.mxu0 0
    %5690 = vmatmul.mubr.bf16.gmra.mrb[0].mxu0 %v5417
    %v5691 = vpop.f32.mrb[0].mxu0
    %v5692 = vadd.f32 0.0, %v5691
    %v5693 = vpop.f32.mrb[0].mxu0
    %v5694 = vpop.f32.mrb[0].mxu0
    %v5695 = vadd.f32 0.0, %v5694
    %v5696 = vpop.f32.mrb[0].mxu0
    %5697 = vmatprep.mubr.bf16.mxu0 0
    %5698 = vmatmul.mubr.bf16.gmra.mrb[0].mxu0 %v5420
    %v5699 = vpop.f32.mrb[0].mxu0
    %v5700 = vadd.f32 0.0, %v5699
    %v5701 = vpop.f32.mrb[0].mxu0
    %v5702 = vpop.f32.mrb[0].mxu0
    %v5703 = vadd.f32 0.0, %v5702
    %v5704 = vpop.f32.mrb[0].mxu0
    %5705 = vmatprep.mubr.bf16.mxu0 0
    %5706 = vmatmul.mubr.bf16.gmra.mrb[0].mxu0 %v5423
    %v5707 = vpop.f32.mrb[0].mxu0
    %v5708 = vadd.f32 0.0, %v5707
    %v5709 = vpop.f32.mrb[0].mxu0
    %v5710 = vpop.f32.mrb[0].mxu0
    %v5711 = vadd.f32 0.0, %v5710
    %v5712 = vpop.f32.mrb[0].mxu0
    %5713 = vdwg.mxu0
    %v5714 = vadd.f32 %v5025, %v5460
    %v5715 = vadd.f32 %v5026, %v5463
    %v5716 = vadd.f32 %v5027, %v5468
    %v5717 = vadd.f32 %v5028, %v5471
    %v5718 = vadd.f32 %v5029, %v5476
    %v5719 = vadd.f32 %v5030, %v5479
    %v5720 = vadd.f32 %v5031, %v5484
    %v5721 = vadd.f32 %v5032, %v5487
    %v5722 = vadd.f32 %v5033, %v5492
    %v5723 = vadd.f32 %v5034, %v5495
    %v5724 = vadd.f32 %v5035, %v5500
    %v5725 = vadd.f32 %v5036, %v5503
    %v5726 = vadd.f32 %v5037, %v5508
    %v5727 = vadd.f32 %v5038, %v5511
    %v5728 = vadd.f32 %v5039, %v5516
    %v5729 = vadd.f32 %v5040, %v5519
    %v5730 = vadd.f32 %v5041, %v5524
    %v5731 = vadd.f32 %v5042, %v5527
    %v5732 = vadd.f32 %v5043, %v5532
    %v5733 = vadd.f32 %v5044, %v5535
    %v5734 = vadd.f32 %v5045, %v5540
    %v5735 = vadd.f32 %v5046, %v5543
    %v5736 = vadd.f32 %v5047, %v5548
    %v5737 = vadd.f32 %v5048, %v5551
    %v5738 = vadd.f32 %v5049, %v5556
    %v5739 = vadd.f32 %v5050, %v5559
    %v5740 = vadd.f32 %v5051, %v5564
    %v5741 = vadd.f32 %v5052, %v5567
    %v5742 = vadd.f32 %v5053, %v5572
    %v5743 = vadd.f32 %v5054, %v5575
    %v5744 = vadd.f32 %v5055, %v5580
    %v5745 = vadd.f32 %v5056, %v5583
    %v5746 = vadd.f32 %v5057, %v5588
    %v5747 = vadd.f32 %v5058, %v5591
    %v5748 = vadd.f32 %v5059, %v5596
    %v5749 = vadd.f32 %v5060, %v5599
    %v5750 = vadd.f32 %v5061, %v5604
    %v5751 = vadd.f32 %v5062, %v5607
    %v5752 = vadd.f32 %v5063, %v5612
    %v5753 = vadd.f32 %v5064, %v5615
    %v5754 = vadd.f32 %v5065, %v5620
    %v5755 = vadd.f32 %v5066, %v5623
    %v5756 = vadd.f32 %v5067, %v5628
    %v5757 = vadd.f32 %v5068, %v5631
    %v5758 = vadd.f32 %v5069, %v5636
    %v5759 = vadd.f32 %v5070, %v5639
    %v5760 = vadd.f32 %v5071, %v5644
    %v5761 = vadd.f32 %v5072, %v5647
    %v5762 = vadd.f32 %v5073, %v5652
    %v5763 = vadd.f32 %v5074, %v5655
    %v5764 = vadd.f32 %v5075, %v5660
    %v5765 = vadd.f32 %v5076, %v5663
    %v5766 = vadd.f32 %v5077, %v5668
    %v5767 = vadd.f32 %v5078, %v5671
    %v5768 = vadd.f32 %v5079, %v5676
    %v5769 = vadd.f32 %v5080, %v5679
    %v5770 = vadd.f32 %v5081, %v5684
    %v5771 = vadd.f32 %v5082, %v5687
    %v5772 = vadd.f32 %v5083, %v5692
    %v5773 = vadd.f32 %v5084, %v5695
    %v5774 = vadd.f32 %v5085, %v5700
    %v5775 = vadd.f32 %v5086, %v5703
    %v5776 = vadd.f32 %v5087, %v5708
    %v5777 = vadd.f32 %v5088, %v5711
    %v5778 = vld [vmem:[%s2052] sm:$0xf]
    %v5779 = vld [vmem:[%s2052 + $0x4] sm:$0xf]
    %v5780 = vld [vmem:[%s2052 + $0x8] sm:$0x1]
    %v5781 = vld [vmem:[%s2052 + $0xc] sm:$0xf]
    %v5782 = vld [vmem:[%s2052 + $0x10] sm:$0xf]
    %v5783 = vld [vmem:[%s2052 + $0x14] sm:$0x1]
    %v5784 = vld [vmem:[%s2052 + $0x18] sm:$0xf]
    %v5785 = vld [vmem:[%s2052 + $0x1c] sm:$0xf]
    %v5786 = vld [vmem:[%s2052 + $0x20] sm:$0x1]
    %v5787 = vld [vmem:[%s2052 + $0x24] sm:$0xf]
    %v5788 = vld [vmem:[%s2052 + $0x28] sm:$0xf]
    %v5789 = vld [vmem:[%s2052 + $0x2c] sm:$0x1]
    %v5790 = vld [vmem:[%s2052 + $0x30] sm:$0xf]
    %v5791 = vld [vmem:[%s2052 + $0x34] sm:$0xf]
    %v5792 = vld [vmem:[%s2052 + $0x38] sm:$0x1]
    %v5793 = vld [vmem:[%s2052 + $0x3c] sm:$0xf]
    %v5794 = vld [vmem:[%s2052 + $0x40] sm:$0xf]
    %v5795 = vld [vmem:[%s2052 + $0x44] sm:$0x1]
    %v5796 = vld [vmem:[%s2052 + $0x48] sm:$0xf]
    %v5797 = vld [vmem:[%s2052 + $0x4c] sm:$0xf]
    %v5798 = vld [vmem:[%s2052 + $0x50] sm:$0x1]
    %v5799 = vld [vmem:[%s2052 + $0x54] sm:$0xf]
    %v5800 = vld [vmem:[%s2052 + $0x58] sm:$0xf]
    %v5801 = vld [vmem:[%s2052 + $0x5c] sm:$0x1]
    %v5802 = vld [vmem:[%s2052 + $0x60] sm:$0xf]
    %v5803 = vld [vmem:[%s2052 + $0x64] sm:$0xf]
    %v5804 = vld [vmem:[%s2052 + $0x68] sm:$0x1]
    %v5805 = vld [vmem:[%s2052 + $0x6c] sm:$0xf]
    %v5806 = vld [vmem:[%s2052 + $0x70] sm:$0xf]
    %v5807 = vld [vmem:[%s2052 + $0x74] sm:$0x1]
    %v5808 = vld [vmem:[%s2052 + $0x78] sm:$0xf]
    %v5809 = vld [vmem:[%s2052 + $0x7c] sm:$0xf]
    %v5810 = vld [vmem:[%s2052 + $0x80] sm:$0x1]
    %v5811 = vld [vmem:[%s2052 + $0x84] sm:$0xf]
    %v5812 = vld [vmem:[%s2052 + $0x88] sm:$0xf]
    %v5813 = vld [vmem:[%s2052 + $0x8c] sm:$0x1]
    %v5814 = vld [vmem:[%s2052 + $0x90] sm:$0xf]
    %v5815 = vld [vmem:[%s2052 + $0x94] sm:$0xf]
    %v5816 = vld [vmem:[%s2052 + $0x98] sm:$0x1]
    %v5817 = vld [vmem:[%s2052 + $0x9c] sm:$0xf]
    %v5818 = vld [vmem:[%s2052 + $0xa0] sm:$0xf]
    %v5819 = vld [vmem:[%s2052 + $0xa4] sm:$0x1]
    %v5820 = vld [vmem:[%s2052 + $0xa8] sm:$0xf]
    %v5821 = vld [vmem:[%s2052 + $0xac] sm:$0xf]
    %v5822 = vld [vmem:[%s2052 + $0xb0] sm:$0x1]
    %v5823 = vld [vmem:[%s2052 + $0xb4] sm:$0xf]
    %v5824 = vld [vmem:[%s2052 + $0xb8] sm:$0xf]
    %v5825 = vld [vmem:[%s2052 + $0xbc] sm:$0x1]
    %v5826 = vld [vmem:[%s2052 + $0xd8] sm:$0xf]
    %v5827 = vld [vmem:[%s2052 + $0xdc] sm:$0xf]
    %v5828 = vld [vmem:[%s2052 + $0xe0] sm:$0x1]
    %v5829 = vld [vmem:[%s2052 + $0xe4] sm:$0xf]
    %v5830 = vld [vmem:[%s2052 + $0xe8] sm:$0xf]
    %v5831 = vld [vmem:[%s2052 + $0xec] sm:$0x1]
    %v5832 = vld [vmem:[%s2052 + $0xf0] sm:$0xf]
    %v5833 = vld [vmem:[%s2052 + $0xf4] sm:$0xf]
    %v5834 = vld [vmem:[%s2052 + $0xf8] sm:$0x1]
    %v5835 = vld [vmem:[%s2052 + $0xfc] sm:$0xf]
    %v5836 = vld [vmem:[%s2052 + $0x100] sm:$0xf]
    %v5837 = vld [vmem:[%s2052 + $0x104] sm:$0x1]
    %v5838 = vld [vmem:[%s2052 + $0x108] sm:$0xf]
    %v5839 = vld [vmem:[%s2052 + $0x10c] sm:$0xf]
    %v5840 = vld [vmem:[%s2052 + $0x110] sm:$0x1]
    %v5841 = vld [vmem:[%s2052 + $0x114] sm:$0xf]
    %v5842 = vld [vmem:[%s2052 + $0x118] sm:$0xf]
    %v5843 = vld [vmem:[%s2052 + $0x11c] sm:$0x1]
    %v5844 = vld [vmem:[%s2052 + $0x120] sm:$0xf]
    %v5845 = vld [vmem:[%s2052 + $0x124] sm:$0xf]
    %v5846 = vld [vmem:[%s2052 + $0x128] sm:$0x1]
    %v5847 = vld [vmem:[%s2052 + $0x12c] sm:$0xf]
    %v5848 = vld [vmem:[%s2052 + $0x130] sm:$0xf]
    %v5849 = vld [vmem:[%s2052 + $0x134] sm:$0x1]
    %v5850 = vld [vmem:[%s2052 + $0x138] sm:$0xf]
    %v5851 = vld [vmem:[%s2052 + $0x13c] sm:$0xf]
    %v5852 = vld [vmem:[%s2052 + $0x140] sm:$0x1]
    %v5853 = vld [vmem:[%s2052 + $0x144] sm:$0xf]
    %v5854 = vld [vmem:[%s2052 + $0x148] sm:$0xf]
    %v5855 = vld [vmem:[%s2052 + $0x14c] sm:$0x1]
    %v5856 = vld [vmem:[%s2052 + $0x150] sm:$0xf]
    %v5857 = vld [vmem:[%s2052 + $0x154] sm:$0xf]
    %v5858 = vld [vmem:[%s2052 + $0x158] sm:$0x1]
    %v5859 = vld [vmem:[%s2052 + $0x15c] sm:$0xf]
    %v5860 = vld [vmem:[%s2052 + $0x160] sm:$0xf]
    %v5861 = vld [vmem:[%s2052 + $0x164] sm:$0x1]
    %v5862 = vld [vmem:[%s2052 + $0x168] sm:$0xf]
    %v5863 = vld [vmem:[%s2052 + $0x16c] sm:$0xf]
    %v5864 = vld [vmem:[%s2052 + $0x170] sm:$0x1]
    %v5865 = vld [vmem:[%s2052 + $0x174] sm:$0xf]
    %v5866 = vld [vmem:[%s2052 + $0x178] sm:$0xf]
    %v5867 = vld [vmem:[%s2052 + $0x17c] sm:$0x1]
    %v5868 = vld [vmem:[%s2052 + $0x180] sm:$0xf]
    %v5869 = vld [vmem:[%s2052 + $0x184] sm:$0xf]
    %v5870 = vld [vmem:[%s2052 + $0x188] sm:$0x1]
    %v5871 = vld [vmem:[%s2052 + $0x18c] sm:$0xf]
    %v5872 = vld [vmem:[%s2052 + $0x190] sm:$0xf]
    %v5873 = vld [vmem:[%s2052 + $0x194] sm:$0x1]
    %v5875 = vshrl.u32 %v5778, 16
    %v5877 = vrot.slane %v5875, 4
    %v5878 = vshll.u32 %v5778, 16
    %v5880 = vrot.slane %v5878, 5
    %v5881 = vor.u32 %v5877, %v5880
    %v5882 = vrot.slane %v5881, 4
    %v5884 = vshll.u32 %v5779, 16
    %v5886 = vrot.slane %v5884, 5
    %v5887 = vsel %vm2381, %v5882, %v5886
    %v5888 = vshrl.u32 %v5779, 16
    %v5890 = vrot.slane %v5888, 4
    %v5891 = vor.u32 %v5890, %v5886
    %v5892 = vrot.slane %v5891, 4
    %v5894 = vshll.u32 %v5780, 16
    %v5896 = vrot.slane %v5894, 5
    %v5897 = vsel %vm2381, %v5892, %v5896
    %v5899 = vshrl.u32 %v5781, 16
    %v5901 = vrot.slane %v5899, 4
    %v5902 = vshll.u32 %v5781, 16
    %v5904 = vrot.slane %v5902, 5
    %v5905 = vor.u32 %v5901, %v5904
    %v5906 = vrot.slane %v5905, 4
    %v5908 = vshll.u32 %v5782, 16
    %v5910 = vrot.slane %v5908, 5
    %v5911 = vsel %vm2381, %v5906, %v5910
    %v5912 = vshrl.u32 %v5782, 16
    %v5914 = vrot.slane %v5912, 4
    %v5915 = vor.u32 %v5914, %v5910
    %v5916 = vrot.slane %v5915, 4
    %v5918 = vshll.u32 %v5783, 16
    %v5920 = vrot.slane %v5918, 5
    %v5921 = vsel %vm2381, %v5916, %v5920
    %v5923 = vshrl.u32 %v5784, 16
    %v5925 = vrot.slane %v5923, 4
    %v5926 = vshll.u32 %v5784, 16
    %v5928 = vrot.slane %v5926, 5
    %v5929 = vor.u32 %v5925, %v5928
    %v5930 = vrot.slane %v5929, 4
    %v5932 = vshll.u32 %v5785, 16
    %v5934 = vrot.slane %v5932, 5
    %v5935 = vsel %vm2381, %v5930, %v5934
    %v5936 = vshrl.u32 %v5785, 16
    %v5938 = vrot.slane %v5936, 4
    %v5939 = vor.u32 %v5938, %v5934
    %v5940 = vrot.slane %v5939, 4
    %v5942 = vshll.u32 %v5786, 16
    %v5944 = vrot.slane %v5942, 5
    %v5945 = vsel %vm2381, %v5940, %v5944
    %v5947 = vshrl.u32 %v5787, 16
    %v5949 = vrot.slane %v5947, 4
    %v5950 = vshll.u32 %v5787, 16
    %v5952 = vrot.slane %v5950, 5
    %v5953 = vor.u32 %v5949, %v5952
    %v5954 = vrot.slane %v5953, 4
    %v5956 = vshll.u32 %v5788, 16
    %v5958 = vrot.slane %v5956, 5
    %v5959 = vsel %vm2381, %v5954, %v5958
    %v5960 = vshrl.u32 %v5788, 16
    %v5962 = vrot.slane %v5960, 4
    %v5963 = vor.u32 %v5962, %v5958
    %v5964 = vrot.slane %v5963, 4
    %v5966 = vshll.u32 %v5789, 16
    %v5968 = vrot.slane %v5966, 5
    %v5969 = vsel %vm2381, %v5964, %v5968
    %v5971 = vshrl.u32 %v5790, 16
    %v5973 = vrot.slane %v5971, 4
    %v5974 = vshll.u32 %v5790, 16
    %v5976 = vrot.slane %v5974, 5
    %v5977 = vor.u32 %v5973, %v5976
    %v5978 = vrot.slane %v5977, 4
    %v5980 = vshll.u32 %v5791, 16
    %v5982 = vrot.slane %v5980, 5
    %v5983 = vsel %vm2381, %v5978, %v5982
    %v5984 = vshrl.u32 %v5791, 16
    %v5986 = vrot.slane %v5984, 4
    %v5987 = vor.u32 %v5986, %v5982
    %v5988 = vrot.slane %v5987, 4
    %v5990 = vshll.u32 %v5792, 16
    %v5992 = vrot.slane %v5990, 5
    %v5993 = vsel %vm2381, %v5988, %v5992
    %v5995 = vshrl.u32 %v5793, 16
    %v5997 = vrot.slane %v5995, 4
    %v5998 = vshll.u32 %v5793, 16
    %v6000 = vrot.slane %v5998, 5
    %v6001 = vor.u32 %v5997, %v6000
    %v6002 = vrot.slane %v6001, 4
    %v6004 = vshll.u32 %v5794, 16
    %v6006 = vrot.slane %v6004, 5
    %v6007 = vsel %vm2381, %v6002, %v6006
    %v6008 = vshrl.u32 %v5794, 16
    %v6010 = vrot.slane %v6008, 4
    %v6011 = vor.u32 %v6010, %v6006
    %v6012 = vrot.slane %v6011, 4
    %v6014 = vshll.u32 %v5795, 16
    %v6016 = vrot.slane %v6014, 5
    %v6017 = vsel %vm2381, %v6012, %v6016
    %v6019 = vshrl.u32 %v5796, 16
    %v6021 = vrot.slane %v6019, 4
    %v6022 = vshll.u32 %v5796, 16
    %v6024 = vrot.slane %v6022, 5
    %v6025 = vor.u32 %v6021, %v6024
    %v6026 = vrot.slane %v6025, 4
    %v6028 = vshll.u32 %v5797, 16
    %v6030 = vrot.slane %v6028, 5
    %v6031 = vsel %vm2381, %v6026, %v6030
    %v6032 = vshrl.u32 %v5797, 16
    %v6034 = vrot.slane %v6032, 4
    %v6035 = vor.u32 %v6034, %v6030
    %v6036 = vrot.slane %v6035, 4
    %v6038 = vshll.u32 %v5798, 16
    %v6040 = vrot.slane %v6038, 5
    %v6041 = vsel %vm2381, %v6036, %v6040
    %v6043 = vshrl.u32 %v5799, 16
    %v6045 = vrot.slane %v6043, 4
    %v6046 = vshll.u32 %v5799, 16
    %v6048 = vrot.slane %v6046, 5
    %v6049 = vor.u32 %v6045, %v6048
    %v6050 = vrot.slane %v6049, 4
    %v6052 = vshll.u32 %v5800, 16
    %v6054 = vrot.slane %v6052, 5
    %v6055 = vsel %vm2381, %v6050, %v6054
    %v6056 = vshrl.u32 %v5800, 16
    %v6058 = vrot.slane %v6056, 4
    %v6059 = vor.u32 %v6058, %v6054
    %v6060 = vrot.slane %v6059, 4
    %v6062 = vshll.u32 %v5801, 16
    %v6064 = vrot.slane %v6062, 5
    %v6065 = vsel %vm2381, %v6060, %v6064
    %v6067 = vshrl.u32 %v5802, 16
    %v6069 = vrot.slane %v6067, 4
    %v6070 = vshll.u32 %v5802, 16
    %v6072 = vrot.slane %v6070, 5
    %v6073 = vor.u32 %v6069, %v6072
    %v6074 = vrot.slane %v6073, 4
    %v6076 = vshll.u32 %v5803, 16
    %v6078 = vrot.slane %v6076, 5
    %v6079 = vsel %vm2381, %v6074, %v6078
    %v6080 = vshrl.u32 %v5803, 16
    %v6082 = vrot.slane %v6080, 4
    %v6083 = vor.u32 %v6082, %v6078
    %v6084 = vrot.slane %v6083, 4
    %v6086 = vshll.u32 %v5804, 16
    %v6088 = vrot.slane %v6086, 5
    %v6089 = vsel %vm2381, %v6084, %v6088
    %v6091 = vshrl.u32 %v5805, 16
    %v6093 = vrot.slane %v6091, 4
    %v6094 = vshll.u32 %v5805, 16
    %v6096 = vrot.slane %v6094, 5
    %v6097 = vor.u32 %v6093, %v6096
    %v6098 = vrot.slane %v6097, 4
    %v6100 = vshll.u32 %v5806, 16
    %v6102 = vrot.slane %v6100, 5
    %v6103 = vsel %vm2381, %v6098, %v6102
    %v6104 = vshrl.u32 %v5806, 16
    %v6106 = vrot.slane %v6104, 4
    %v6107 = vor.u32 %v6106, %v6102
    %v6108 = vrot.slane %v6107, 4
    %v6110 = vshll.u32 %v5807, 16
    %v6112 = vrot.slane %v6110, 5
    %v6113 = vsel %vm2381, %v6108, %v6112
    %v6115 = vshrl.u32 %v5808, 16
    %v6117 = vrot.slane %v6115, 4
    %v6118 = vshll.u32 %v5808, 16
    %v6120 = vrot.slane %v6118, 5
    %v6121 = vor.u32 %v6117, %v6120
    %v6122 = vrot.slane %v6121, 4
    %v6124 = vshll.u32 %v5809, 16
    %v6126 = vrot.slane %v6124, 5
    %v6127 = vsel %vm2381, %v6122, %v6126
    %v6128 = vshrl.u32 %v5809, 16
    %v6130 = vrot.slane %v6128, 4
    %v6131 = vor.u32 %v6130, %v6126
    %v6132 = vrot.slane %v6131, 4
    %v6134 = vshll.u32 %v5810, 16
    %v6136 = vrot.slane %v6134, 5
    %v6137 = vsel %vm2381, %v6132, %v6136
    %v6139 = vshrl.u32 %v5811, 16
    %v6141 = vrot.slane %v6139, 4
    %v6142 = vshll.u32 %v5811, 16
    %v6144 = vrot.slane %v6142, 5
    %v6145 = vor.u32 %v6141, %v6144
    %v6146 = vrot.slane %v6145, 4
    %v6148 = vshll.u32 %v5812, 16
    %v6150 = vrot.slane %v6148, 5
    %v6151 = vsel %vm2381, %v6146, %v6150
    %v6152 = vshrl.u32 %v5812, 16
    %v6154 = vrot.slane %v6152, 4
    %v6155 = vor.u32 %v6154, %v6150
    %v6156 = vrot.slane %v6155, 4
    %v6158 = vshll.u32 %v5813, 16
    %v6160 = vrot.slane %v6158, 5
    %v6161 = vsel %vm2381, %v6156, %v6160
    %v6163 = vshrl.u32 %v5814, 16
    %v6165 = vrot.slane %v6163, 4
    %v6166 = vshll.u32 %v5814, 16
    %v6168 = vrot.slane %v6166, 5
    %v6169 = vor.u32 %v6165, %v6168
    %v6170 = vrot.slane %v6169, 4
    %v6172 = vshll.u32 %v5815, 16
    %v6174 = vrot.slane %v6172, 5
    %v6175 = vsel %vm2381, %v6170, %v6174
    %v6176 = vshrl.u32 %v5815, 16
    %v6178 = vrot.slane %v6176, 4
    %v6179 = vor.u32 %v6178, %v6174
    %v6180 = vrot.slane %v6179, 4
    %v6182 = vshll.u32 %v5816, 16
    %v6184 = vrot.slane %v6182, 5
    %v6185 = vsel %vm2381, %v6180, %v6184
    %v6187 = vshrl.u32 %v5817, 16
    %v6189 = vrot.slane %v6187, 4
    %v6190 = vshll.u32 %v5817, 16
    %v6192 = vrot.slane %v6190, 5
    %v6193 = vor.u32 %v6189, %v6192
    %v6194 = vrot.slane %v6193, 4
    %v6196 = vshll.u32 %v5818, 16
    %v6198 = vrot.slane %v6196, 5
    %v6199 = vsel %vm2381, %v6194, %v6198
    %v6200 = vshrl.u32 %v5818, 16
    %v6202 = vrot.slane %v6200, 4
    %v6203 = vor.u32 %v6202, %v6198
    %v6204 = vrot.slane %v6203, 4
    %v6206 = vshll.u32 %v5819, 16
    %v6208 = vrot.slane %v6206, 5
    %v6209 = vsel %vm2381, %v6204, %v6208
    %v6211 = vshrl.u32 %v5820, 16
    %v6213 = vrot.slane %v6211, 4
    %v6214 = vshll.u32 %v5820, 16
    %v6216 = vrot.slane %v6214, 5
    %v6217 = vor.u32 %v6213, %v6216
    %v6218 = vrot.slane %v6217, 4
    %v6220 = vshll.u32 %v5821, 16
    %v6222 = vrot.slane %v6220, 5
    %v6223 = vsel %vm2381, %v6218, %v6222
    %v6224 = vshrl.u32 %v5821, 16
    %v6226 = vrot.slane %v6224, 4
    %v6227 = vor.u32 %v6226, %v6222
    %v6228 = vrot.slane %v6227, 4
    %v6230 = vshll.u32 %v5822, 16
    %v6232 = vrot.slane %v6230, 5
    %v6233 = vsel %vm2381, %v6228, %v6232
    %v6235 = vshrl.u32 %v5823, 16
    %v6237 = vrot.slane %v6235, 4
    %v6238 = vshll.u32 %v5823, 16
    %v6240 = vrot.slane %v6238, 5
    %v6241 = vor.u32 %v6237, %v6240
    %v6242 = vrot.slane %v6241, 4
    %v6244 = vshll.u32 %v5824, 16
    %v6246 = vrot.slane %v6244, 5
    %v6247 = vsel %vm2381, %v6242, %v6246
    %v6248 = vshrl.u32 %v5824, 16
    %v6250 = vrot.slane %v6248, 4
    %v6251 = vor.u32 %v6250, %v6246
    %v6252 = vrot.slane %v6251, 4
    %v6254 = vshll.u32 %v5825, 16
    %v6256 = vrot.slane %v6254, 5
    %v6257 = vsel %vm2381, %v6252, %v6256
    %v6259 = vshrl.u32 %v5826, 16
    %v6261 = vrot.slane %v6259, 4
    %v6262 = vshll.u32 %v5826, 16
    %v6264 = vrot.slane %v6262, 5
    %v6265 = vor.u32 %v6261, %v6264
    %v6266 = vrot.slane %v6265, 4
    %v6268 = vshll.u32 %v5827, 16
    %v6270 = vrot.slane %v6268, 5
    %v6271 = vsel %vm2381, %v6266, %v6270
    %v6272 = vshrl.u32 %v5827, 16
    %v6274 = vrot.slane %v6272, 4
    %v6275 = vor.u32 %v6274, %v6270
    %v6276 = vrot.slane %v6275, 4
    %v6278 = vshll.u32 %v5828, 16
    %v6280 = vrot.slane %v6278, 5
    %v6281 = vsel %vm2381, %v6276, %v6280
    %v6283 = vshrl.u32 %v5829, 16
    %v6285 = vrot.slane %v6283, 4
    %v6286 = vshll.u32 %v5829, 16
    %v6288 = vrot.slane %v6286, 5
    %v6289 = vor.u32 %v6285, %v6288
    %v6290 = vrot.slane %v6289, 4
    %v6292 = vshll.u32 %v5830, 16
    %v6294 = vrot.slane %v6292, 5
    %v6295 = vsel %vm2381, %v6290, %v6294
    %v6296 = vshrl.u32 %v5830, 16
    %v6298 = vrot.slane %v6296, 4
    %v6299 = vor.u32 %v6298, %v6294
    %v6300 = vrot.slane %v6299, 4
    %v6302 = vshll.u32 %v5831, 16
    %v6304 = vrot.slane %v6302, 5
    %v6305 = vsel %vm2381, %v6300, %v6304
    %v6307 = vshrl.u32 %v5832, 16
    %v6309 = vrot.slane %v6307, 4
    %v6310 = vshll.u32 %v5832, 16
    %v6312 = vrot.slane %v6310, 5
    %v6313 = vor.u32 %v6309, %v6312
    %v6314 = vrot.slane %v6313, 4
    %v6316 = vshll.u32 %v5833, 16
    %v6318 = vrot.slane %v6316, 5
    %v6319 = vsel %vm2381, %v6314, %v6318
    %v6320 = vshrl.u32 %v5833, 16
    %v6322 = vrot.slane %v6320, 4
    %v6323 = vor.u32 %v6322, %v6318
    %v6324 = vrot.slane %v6323, 4
    %v6326 = vshll.u32 %v5834, 16
    %v6328 = vrot.slane %v6326, 5
    %v6329 = vsel %vm2381, %v6324, %v6328
    %v6331 = vshrl.u32 %v5835, 16
    %v6333 = vrot.slane %v6331, 4
    %v6334 = vshll.u32 %v5835, 16
    %v6336 = vrot.slane %v6334, 5
    %v6337 = vor.u32 %v6333, %v6336
    %v6338 = vrot.slane %v6337, 4
    %v6340 = vshll.u32 %v5836, 16
    %v6342 = vrot.slane %v6340, 5
    %v6343 = vsel %vm2381, %v6338, %v6342
    %v6344 = vshrl.u32 %v5836, 16
    %v6346 = vrot.slane %v6344, 4
    %v6347 = vor.u32 %v6346, %v6342
    %v6348 = vrot.slane %v6347, 4
    %v6350 = vshll.u32 %v5837, 16
    %v6352 = vrot.slane %v6350, 5
    %v6353 = vsel %vm2381, %v6348, %v6352
    %v6355 = vshrl.u32 %v5838, 16
    %v6357 = vrot.slane %v6355, 4
    %v6358 = vshll.u32 %v5838, 16
    %v6360 = vrot.slane %v6358, 5
    %v6361 = vor.u32 %v6357, %v6360
    %v6362 = vrot.slane %v6361, 4
    %v6364 = vshll.u32 %v5839, 16
    %v6366 = vrot.slane %v6364, 5
    %v6367 = vsel %vm2381, %v6362, %v6366
    %v6368 = vshrl.u32 %v5839, 16
    %v6370 = vrot.slane %v6368, 4
    %v6371 = vor.u32 %v6370, %v6366
    %v6372 = vrot.slane %v6371, 4
    %v6374 = vshll.u32 %v5840, 16
    %v6376 = vrot.slane %v6374, 5
    %v6377 = vsel %vm2381, %v6372, %v6376
    %v6379 = vshrl.u32 %v5841, 16
    %v6381 = vrot.slane %v6379, 4
    %v6382 = vshll.u32 %v5841, 16
    %v6384 = vrot.slane %v6382, 5
    %v6385 = vor.u32 %v6381, %v6384
    %v6386 = vrot.slane %v6385, 4
    %v6388 = vshll.u32 %v5842, 16
    %v6390 = vrot.slane %v6388, 5
    %v6391 = vsel %vm2381, %v6386, %v6390
    %v6392 = vshrl.u32 %v5842, 16
    %v6394 = vrot.slane %v6392, 4
    %v6395 = vor.u32 %v6394, %v6390
    %v6396 = vrot.slane %v6395, 4
    %v6398 = vshll.u32 %v5843, 16
    %v6400 = vrot.slane %v6398, 5
    %v6401 = vsel %vm2381, %v6396, %v6400
    %v6403 = vshrl.u32 %v5844, 16
    %v6405 = vrot.slane %v6403, 4
    %v6406 = vshll.u32 %v5844, 16
    %v6408 = vrot.slane %v6406, 5
    %v6409 = vor.u32 %v6405, %v6408
    %v6410 = vrot.slane %v6409, 4
    %v6412 = vshll.u32 %v5845, 16
    %v6414 = vrot.slane %v6412, 5
    %v6415 = vsel %vm2381, %v6410, %v6414
    %v6416 = vshrl.u32 %v5845, 16
    %v6418 = vrot.slane %v6416, 4
    %v6419 = vor.u32 %v6418, %v6414
    %v6420 = vrot.slane %v6419, 4
    %v6422 = vshll.u32 %v5846, 16
    %v6424 = vrot.slane %v6422, 5
    %v6425 = vsel %vm2381, %v6420, %v6424
    %v6427 = vshrl.u32 %v5847, 16
    %v6429 = vrot.slane %v6427, 4
    %v6430 = vshll.u32 %v5847, 16
    %v6432 = vrot.slane %v6430, 5
    %v6433 = vor.u32 %v6429, %v6432
    %v6434 = vrot.slane %v6433, 4
    %v6436 = vshll.u32 %v5848, 16
    %v6438 = vrot.slane %v6436, 5
    %v6439 = vsel %vm2381, %v6434, %v6438
    %v6440 = vshrl.u32 %v5848, 16
    %v6442 = vrot.slane %v6440, 4
    %v6443 = vor.u32 %v6442, %v6438
    %v6444 = vrot.slane %v6443, 4
    %v6446 = vshll.u32 %v5849, 16
    %v6448 = vrot.slane %v6446, 5
    %v6449 = vsel %vm2381, %v6444, %v6448
    %v6451 = vshrl.u32 %v5850, 16
    %v6453 = vrot.slane %v6451, 4
    %v6454 = vshll.u32 %v5850, 16
    %v6456 = vrot.slane %v6454, 5
    %v6457 = vor.u32 %v6453, %v6456
    %v6458 = vrot.slane %v6457, 4
    %v6460 = vshll.u32 %v5851, 16
    %v6462 = vrot.slane %v6460, 5
    %v6463 = vsel %vm2381, %v6458, %v6462
    %v6464 = vshrl.u32 %v5851, 16
    %v6466 = vrot.slane %v6464, 4
    %v6467 = vor.u32 %v6466, %v6462
    %v6468 = vrot.slane %v6467, 4
    %v6470 = vshll.u32 %v5852, 16
    %v6472 = vrot.slane %v6470, 5
    %v6473 = vsel %vm2381, %v6468, %v6472
    %v6475 = vshrl.u32 %v5853, 16
    %v6477 = vrot.slane %v6475, 4
    %v6478 = vshll.u32 %v5853, 16
    %v6480 = vrot.slane %v6478, 5
    %v6481 = vor.u32 %v6477, %v6480
    %v6482 = vrot.slane %v6481, 4
    %v6484 = vshll.u32 %v5854, 16
    %v6486 = vrot.slane %v6484, 5
    %v6487 = vsel %vm2381, %v6482, %v6486
    %v6488 = vshrl.u32 %v5854, 16
    %v6490 = vrot.slane %v6488, 4
    %v6491 = vor.u32 %v6490, %v6486
    %v6492 = vrot.slane %v6491, 4
    %v6494 = vshll.u32 %v5855, 16
    %v6496 = vrot.slane %v6494, 5
    %v6497 = vsel %vm2381, %v6492, %v6496
    %v6499 = vshrl.u32 %v5856, 16
    %v6501 = vrot.slane %v6499, 4
    %v6502 = vshll.u32 %v5856, 16
    %v6504 = vrot.slane %v6502, 5
    %v6505 = vor.u32 %v6501, %v6504
    %v6506 = vrot.slane %v6505, 4
    %v6508 = vshll.u32 %v5857, 16
    %v6510 = vrot.slane %v6508, 5
    %v6511 = vsel %vm2381, %v6506, %v6510
    %v6512 = vshrl.u32 %v5857, 16
    %v6514 = vrot.slane %v6512, 4
    %v6515 = vor.u32 %v6514, %v6510
    %v6516 = vrot.slane %v6515, 4
    %v6518 = vshll.u32 %v5858, 16
    %v6520 = vrot.slane %v6518, 5
    %v6521 = vsel %vm2381, %v6516, %v6520
    %v6523 = vshrl.u32 %v5859, 16
    %v6525 = vrot.slane %v6523, 4
    %v6526 = vshll.u32 %v5859, 16
    %v6528 = vrot.slane %v6526, 5
    %v6529 = vor.u32 %v6525, %v6528
    %v6530 = vrot.slane %v6529, 4
    %v6532 = vshll.u32 %v5860, 16
    %v6534 = vrot.slane %v6532, 5
    %v6535 = vsel %vm2381, %v6530, %v6534
    %v6536 = vshrl.u32 %v5860, 16
    %v6538 = vrot.slane %v6536, 4
    %v6539 = vor.u32 %v6538, %v6534
    %v6540 = vrot.slane %v6539, 4
    %v6542 = vshll.u32 %v5861, 16
    %v6544 = vrot.slane %v6542, 5
    %v6545 = vsel %vm2381, %v6540, %v6544
    %v6547 = vshrl.u32 %v5862, 16
    %v6549 = vrot.slane %v6547, 4
    %v6550 = vshll.u32 %v5862, 16
    %v6552 = vrot.slane %v6550, 5
    %v6553 = vor.u32 %v6549, %v6552
    %v6554 = vrot.slane %v6553, 4
    %v6556 = vshll.u32 %v5863, 16
    %v6558 = vrot.slane %v6556, 5
    %v6559 = vsel %vm2381, %v6554, %v6558
    %v6560 = vshrl.u32 %v5863, 16
    %v6562 = vrot.slane %v6560, 4
    %v6563 = vor.u32 %v6562, %v6558
    %v6564 = vrot.slane %v6563, 4
    %v6566 = vshll.u32 %v5864, 16
    %v6568 = vrot.slane %v6566, 5
    %v6569 = vsel %vm2381, %v6564, %v6568
    %v6571 = vshrl.u32 %v5865, 16
    %v6573 = vrot.slane %v6571, 4
    %v6574 = vshll.u32 %v5865, 16
    %v6576 = vrot.slane %v6574, 5
    %v6577 = vor.u32 %v6573, %v6576
    %v6578 = vrot.slane %v6577, 4
    %v6580 = vshll.u32 %v5866, 16
    %v6582 = vrot.slane %v6580, 5
    %v6583 = vsel %vm2381, %v6578, %v6582
    %v6584 = vshrl.u32 %v5866, 16
    %v6586 = vrot.slane %v6584, 4
    %v6587 = vor.u32 %v6586, %v6582
    %v6588 = vrot.slane %v6587, 4
    %v6590 = vshll.u32 %v5867, 16
    %v6592 = vrot.slane %v6590, 5
    %v6593 = vsel %vm2381, %v6588, %v6592
    %v6595 = vshrl.u32 %v5868, 16
    %v6597 = vrot.slane %v6595, 4
    %v6598 = vshll.u32 %v5868, 16
    %v6600 = vrot.slane %v6598, 5
    %v6601 = vor.u32 %v6597, %v6600
    %v6602 = vrot.slane %v6601, 4
    %v6604 = vshll.u32 %v5869, 16
    %v6606 = vrot.slane %v6604, 5
    %v6607 = vsel %vm2381, %v6602, %v6606
    %v6608 = vshrl.u32 %v5869, 16
    %v6610 = vrot.slane %v6608, 4
    %v6611 = vor.u32 %v6610, %v6606
    %v6612 = vrot.slane %v6611, 4
    %v6614 = vshll.u32 %v5870, 16
    %v6616 = vrot.slane %v6614, 5
    %v6617 = vsel %vm2381, %v6612, %v6616
    %v6619 = vshrl.u32 %v5871, 16
    %v6621 = vrot.slane %v6619, 4
    %v6622 = vshll.u32 %v5871, 16
    %v6624 = vrot.slane %v6622, 5
    %v6625 = vor.u32 %v6621, %v6624
    %v6626 = vrot.slane %v6625, 4
    %v6628 = vshll.u32 %v5872, 16
    %v6630 = vrot.slane %v6628, 5
    %v6631 = vsel %vm2381, %v6626, %v6630
    %v6632 = vshrl.u32 %v5872, 16
    %v6634 = vrot.slane %v6632, 4
    %v6635 = vor.u32 %v6634, %v6630
    %v6636 = vrot.slane %v6635, 4
    %v6638 = vshll.u32 %v5873, 16
    %v6640 = vrot.slane %v6638, 5
    %v6641 = vsel %vm2381, %v6636, %v6640
    %v6642 = vld [vmem:[%s3 + $0x40] sm:$0xf]
    %v6643 = vld [vmem:[%s3 + $0x44] sm:$0xf]
    %v6644 = vld [vmem:[%s3 + $0x48] sm:$0xf]
    %v6645 = vld [vmem:[%s3 + $0x4c] sm:$0xf]
    %v6646 = vunpack.c.l.b16 %v5887
    %v6647 = vunpack.c.l.b16 %v5897
    %v6648 = vunpack.c.l.b16 %v5911
    %v6649 = vunpack.c.l.b16 %v5921
    %v6650 = vunpack.c.l.b16 %v5935
    %v6651 = vunpack.c.l.b16 %v5945
    %v6652 = vunpack.c.l.b16 %v5959
    %v6653 = vunpack.c.l.b16 %v5969
    %v6654 = vunpack.c.l.b16 %v5983
    %v6655 = vunpack.c.l.b16 %v5993
    %v6656 = vunpack.c.l.b16 %v6007
    %v6657 = vunpack.c.l.b16 %v6017
    %v6658 = vunpack.c.l.b16 %v6031
    %v6659 = vunpack.c.l.b16 %v6041
    %v6660 = vunpack.c.l.b16 %v6055
    %v6661 = vunpack.c.l.b16 %v6065
    %v6662 = vunpack.c.l.b16 %v6079
    %v6663 = vunpack.c.l.b16 %v6089
    %v6664 = vunpack.c.l.b16 %v6103
    %v6665 = vunpack.c.l.b16 %v6113
    %v6666 = vunpack.c.l.b16 %v6127
    %v6667 = vunpack.c.l.b16 %v6137
    %v6668 = vunpack.c.l.b16 %v6151
    %v6669 = vunpack.c.l.b16 %v6161
    %v6670 = vunpack.c.l.b16 %v6175
    %v6671 = vunpack.c.l.b16 %v6185
    %v6672 = vunpack.c.l.b16 %v6199
    %v6673 = vunpack.c.l.b16 %v6209
    %v6674 = vunpack.c.l.b16 %v6223
    %v6675 = vunpack.c.l.b16 %v6233
    %v6676 = vunpack.c.l.b16 %v6247
    %v6677 = vunpack.c.l.b16 %v6257
    %v6678 = vunpack.c.l.b16 %v6271
    %v6679 = vunpack.c.l.b16 %v6281
    %v6680 = vunpack.c.l.b16 %v6295
    %v6681 = vunpack.c.l.b16 %v6305
    %v6682 = vunpack.c.l.b16 %v6319
    %v6683 = vunpack.c.l.b16 %v6329
    %v6684 = vunpack.c.l.b16 %v6343
    %v6685 = vunpack.c.l.b16 %v6353
    %v6686 = vunpack.c.l.b16 %v6367
    %v6687 = vunpack.c.l.b16 %v6377
    %v6688 = vunpack.c.l.b16 %v6391
    %v6689 = vunpack.c.l.b16 %v6401
    %v6690 = vunpack.c.l.b16 %v6415
    %v6691 = vunpack.c.l.b16 %v6425
    %v6692 = vunpack.c.l.b16 %v6439
    %v6693 = vunpack.c.l.b16 %v6449
    %v6694 = vunpack.c.l.b16 %v6463
    %v6695 = vunpack.c.l.b16 %v6473
    %v6696 = vunpack.c.l.b16 %v6487
    %v6697 = vunpack.c.l.b16 %v6497
    %v6698 = vunpack.c.l.b16 %v6511
    %v6699 = vunpack.c.l.b16 %v6521
    %v6700 = vunpack.c.l.b16 %v6535
    %v6701 = vunpack.c.l.b16 %v6545
    %v6702 = vunpack.c.l.b16 %v6559
    %v6703 = vunpack.c.l.b16 %v6569
    %v6704 = vunpack.c.l.b16 %v6583
    %v6705 = vunpack.c.l.b16 %v6593
    %v6706 = vunpack.c.l.b16 %v6607
    %v6707 = vunpack.c.l.b16 %v6617
    %v6708 = vunpack.c.l.b16 %v6631
    %v6709 = vunpack.c.l.b16 %v6641
    %v6710 = vpack.c.b16 %v6647, %v6646
    %v6711 = vpack.c.b16 %v6649, %v6648
    %v6712 = vpack.c.b16 %v6651, %v6650
    %v6713 = vpack.c.b16 %v6653, %v6652
    %v6714 = vpack.c.b16 %v6655, %v6654
    %v6715 = vpack.c.b16 %v6657, %v6656
    %v6716 = vpack.c.b16 %v6659, %v6658
    %v6717 = vpack.c.b16 %v6661, %v6660
    %v6718 = vpack.c.b16 %v6663, %v6662
    %v6719 = vpack.c.b16 %v6665, %v6664
    %v6720 = vpack.c.b16 %v6667, %v6666
    %v6721 = vpack.c.b16 %v6669, %v6668
    %v6722 = vpack.c.b16 %v6671, %v6670
    %v6723 = vpack.c.b16 %v6673, %v6672
    %v6724 = vpack.c.b16 %v6675, %v6674
    %v6725 = vpack.c.b16 %v6677, %v6676
    %v6726 = vpack.c.b16 %v6679, %v6678
    %v6727 = vpack.c.b16 %v6681, %v6680
    %v6728 = vpack.c.b16 %v6683, %v6682
    %v6729 = vpack.c.b16 %v6685, %v6684
    %v6730 = vpack.c.b16 %v6687, %v6686
    %v6731 = vpack.c.b16 %v6689, %v6688
    %v6732 = vpack.c.b16 %v6691, %v6690
    %v6733 = vpack.c.b16 %v6693, %v6692
    %v6734 = vpack.c.b16 %v6695, %v6694
    %v6735 = vpack.c.b16 %v6697, %v6696
    %v6736 = vpack.c.b16 %v6699, %v6698
    %v6737 = vpack.c.b16 %v6701, %v6700
    %v6738 = vpack.c.b16 %v6703, %v6702
    %v6739 = vpack.c.b16 %v6705, %v6704
    %v6740 = vpack.c.b16 %v6707, %v6706
    %v6741 = vpack.c.b16 %v6709, %v6708
    %v6746 = vunpack.c.l.b16 %v6642
    %v6747 = vunpack.c.l.b16 %v6643
    %v6748 = vunpack.c.l.b16 %v6644
    %v6749 = vunpack.c.l.b16 %v6645
    %v6750 = vpack.c.b16 %v6747, %v6746
    %v6751 = vpack.c.b16 %v6749, %v6748
    %v6755 = vsel %vm3262, %v6710, 0
    %v6758 = vsel %vm3262, %v6711, 0
    %v6761 = vsel %vm3262, %v6712, 0
    %v6764 = vsel %vm3262, %v6713, 0
    %v6767 = vsel %vm3262, %v6714, 0
    %v6770 = vsel %vm3262, %v6715, 0
    %v6773 = vsel %vm3262, %v6716, 0
    %v6776 = vsel %vm3262, %v6717, 0
    %v6779 = vsel %vm3262, %v6718, 0
    %v6782 = vsel %vm3262, %v6719, 0
    %v6785 = vsel %vm3262, %v6720, 0
    %v6788 = vsel %vm3262, %v6721, 0
    %v6791 = vsel %vm3262, %v6722, 0
    %v6794 = vsel %vm3262, %v6723, 0
    %v6797 = vsel %vm3262, %v6724, 0
    %v6800 = vsel %vm3262, %v6725, 0
    %v6803 = vsel %vm3262, %v6726, 0
    %v6806 = vsel %vm3262, %v6727, 0
    %v6809 = vsel %vm3262, %v6728, 0
    %v6812 = vsel %vm3262, %v6729, 0
    %v6815 = vsel %vm3262, %v6730, 0
    %v6818 = vsel %vm3262, %v6731, 0
    %v6821 = vsel %vm3262, %v6732, 0
    %v6824 = vsel %vm3262, %v6733, 0
    %v6827 = vsel %vm3262, %v6734, 0
    %v6830 = vsel %vm3262, %v6735, 0
    %v6833 = vsel %vm3262, %v6736, 0
    %v6836 = vsel %vm3262, %v6737, 0
    %v6839 = vsel %vm3262, %v6738, 0
    %v6842 = vsel %vm3262, %v6739, 0
    %v6845 = vsel %vm3262, %v6740, 0
    %v6848 = vsel %vm3262, %v6741, 0
    %6850 = vmatprep.subr.bf16.mxu0 0
    %6851 = vmatpush1.bf16.msra.mxu0 %v6750
    %6852 = vmatprep.subr.bf16.mxu0 0
    %6853 = vmatpush1.bf16.msra.mxu0 %v6751
    %6854 = vmatprep.subr.bf16.mxu0 0
    %6855 = vmatpush1.bf16.msra.mxu0 0
    %6856 = vmatprep.subr.bf16.mxu0 0
    %6857 = vmatpush1.bf16.msra.mxu0 0
    %6858 = vmatprep.subr.bf16.mxu0 0
    %6859 = vmatpush1.bf16.msra.mxu0 0
    %6860 = vmatprep.subr.bf16.mxu0 0
    %6861 = vmatpush1.bf16.msra.mxu0 0
    %6862 = vmatprep.subr.bf16.mxu0 0
    %6863 = vmatpush1.bf16.msra.mxu0 0
    %6864 = vmatprep.subr.bf16.mxu0 0
    %6865 = vmatpush1.bf16.msra.mxu0 0
    %6866 = vmatprep.subr.bf16.mxu0 0
    %6867 = vmatpush1.bf16.msra.mxu0 0
    %6868 = vmatprep.subr.bf16.mxu0 0
    %6869 = vmatpush1.bf16.msra.mxu0 0
    %6870 = vmatprep.subr.bf16.mxu0 0
    %6871 = vmatpush1.bf16.msra.mxu0 0
    %6872 = vmatprep.subr.bf16.mxu0 0
    %6873 = vmatpush1.bf16.msra.mxu0 0
    %6874 = vmatprep.subr.bf16.mxu0 0
    %6875 = vmatpush1.bf16.msra.mxu0 0
    %6876 = vmatprep.subr.bf16.mxu0 0
    %6877 = vmatpush1.bf16.msra.mxu0 0
    %6878 = vmatprep.subr.bf16.mxu0 0
    %6879 = vmatpush1.bf16.msra.mxu0 0
    %6880 = vmatprep.subr.bf16.mxu0 0
    %6881 = vmatpush1.bf16.msra.mxu0 0
    %6882 = vmatprep.mubr.bf16.mxu0 0
    %6883 = vmatmul.mubr.bf16.gmra.mrb[0].mxu0 %v6755
    %v6884 = vpop.f32.mrb[0].mxu0
    %v6885 = vadd.f32 0.0, %v6884
    %v6886 = vpop.f32.mrb[0].mxu0
    %v6887 = vpop.f32.mrb[0].mxu0
    %v6888 = vadd.f32 0.0, %v6887
    %v6889 = vpop.f32.mrb[0].mxu0
    %6890 = vmatprep.mubr.bf16.mxu0 0
    %6891 = vmatmul.mubr.bf16.gmra.mrb[0].mxu0 %v6758
    %v6892 = vpop.f32.mrb[0].mxu0
    %v6893 = vadd.f32 0.0, %v6892
    %v6894 = vpop.f32.mrb[0].mxu0
    %v6895 = vpop.f32.mrb[0].mxu0
    %v6896 = vadd.f32 0.0, %v6895
    %v6897 = vpop.f32.mrb[0].mxu0
    %6898 = vmatprep.mubr.bf16.mxu0 0
    %6899 = vmatmul.mubr.bf16.gmra.mrb[0].mxu0 %v6761
    %v6900 = vpop.f32.mrb[0].mxu0
    %v6901 = vadd.f32 0.0, %v6900
    %v6902 = vpop.f32.mrb[0].mxu0
    %v6903 = vpop.f32.mrb[0].mxu0
    %v6904 = vadd.f32 0.0, %v6903
    %v6905 = vpop.f32.mrb[0].mxu0
    %6906 = vmatprep.mubr.bf16.mxu0 0
    %6907 = vmatmul.mubr.bf16.gmra.mrb[0].mxu0 %v6764
    %v6908 = vpop.f32.mrb[0].mxu0
    %v6909 = vadd.f32 0.0, %v6908
    %v6910 = vpop.f32.mrb[0].mxu0
    %v6911 = vpop.f32.mrb[0].mxu0
    %v6912 = vadd.f32 0.0, %v6911
    %v6913 = vpop.f32.mrb[0].mxu0
    %6914 = vmatprep.mubr.bf16.mxu0 0
    %6915 = vmatmul.mubr.bf16.gmra.mrb[0].mxu0 %v6767
    %v6916 = vpop.f32.mrb[0].mxu0
    %v6917 = vadd.f32 0.0, %v6916
    %v6918 = vpop.f32.mrb[0].mxu0
    %v6919 = vpop.f32.mrb[0].mxu0
    %v6920 = vadd.f32 0.0, %v6919
    %v6921 = vpop.f32.mrb[0].mxu0
    %6922 = vmatprep.mubr.bf16.mxu0 0
    %6923 = vmatmul.mubr.bf16.gmra.mrb[0].mxu0 %v6770
    %v6924 = vpop.f32.mrb[0].mxu0
    %v6925 = vadd.f32 0.0, %v6924
    %v6926 = vpop.f32.mrb[0].mxu0
    %v6927 = vpop.f32.mrb[0].mxu0
    %v6928 = vadd.f32 0.0, %v6927
    %v6929 = vpop.f32.mrb[0].mxu0
    %6930 = vmatprep.mubr.bf16.mxu0 0
    %6931 = vmatmul.mubr.bf16.gmra.mrb[0].mxu0 %v6773
    %v6932 = vpop.f32.mrb[0].mxu0
    %v6933 = vadd.f32 0.0, %v6932
    %v6934 = vpop.f32.mrb[0].mxu0
    %v6935 = vpop.f32.mrb[0].mxu0
    %v6936 = vadd.f32 0.0, %v6935
    %v6937 = vpop.f32.mrb[0].mxu0
    %6938 = vmatprep.mubr.bf16.mxu0 0
    %6939 = vmatmul.mubr.bf16.gmra.mrb[0].mxu0 %v6776
    %v6940 = vpop.f32.mrb[0].mxu0
    %v6941 = vadd.f32 0.0, %v6940
    %v6942 = vpop.f32.mrb[0].mxu0
    %v6943 = vpop.f32.mrb[0].mxu0
    %v6944 = vadd.f32 0.0, %v6943
    %v6945 = vpop.f32.mrb[0].mxu0
    %6946 = vmatprep.mubr.bf16.mxu0 0
    %6947 = vmatmul.mubr.bf16.gmra.mrb[0].mxu0 %v6779
    %v6948 = vpop.f32.mrb[0].mxu0
    %v6949 = vadd.f32 0.0, %v6948
    %v6950 = vpop.f32.mrb[0].mxu0
    %v6951 = vpop.f32.mrb[0].mxu0
    %v6952 = vadd.f32 0.0, %v6951
    %v6953 = vpop.f32.mrb[0].mxu0
    %6954 = vmatprep.mubr.bf16.mxu0 0
    %6955 = vmatmul.mubr.bf16.gmra.mrb[0].mxu0 %v6782
    %v6956 = vpop.f32.mrb[0].mxu0
    %v6957 = vadd.f32 0.0, %v6956
    %v6958 = vpop.f32.mrb[0].mxu0
    %v6959 = vpop.f32.mrb[0].mxu0
    %v6960 = vadd.f32 0.0, %v6959
    %v6961 = vpop.f32.mrb[0].mxu0
    %6962 = vmatprep.mubr.bf16.mxu0 0
    %6963 = vmatmul.mubr.bf16.gmra.mrb[0].mxu0 %v6785
    %v6964 = vpop.f32.mrb[0].mxu0
    %v6965 = vadd.f32 0.0, %v6964
    %v6966 = vpop.f32.mrb[0].mxu0
    %v6967 = vpop.f32.mrb[0].mxu0
    %v6968 = vadd.f32 0.0, %v6967
    %v6969 = vpop.f32.mrb[0].mxu0
    %6970 = vmatprep.mubr.bf16.mxu0 0
    %6971 = vmatmul.mubr.bf16.gmra.mrb[0].mxu0 %v6788
    %v6972 = vpop.f32.mrb[0].mxu0
    %v6973 = vadd.f32 0.0, %v6972
    %v6974 = vpop.f32.mrb[0].mxu0
    %v6975 = vpop.f32.mrb[0].mxu0
    %v6976 = vadd.f32 0.0, %v6975
    %v6977 = vpop.f32.mrb[0].mxu0
    %6978 = vmatprep.mubr.bf16.mxu0 0
    %6979 = vmatmul.mubr.bf16.gmra.mrb[0].mxu0 %v6791
    %v6980 = vpop.f32.mrb[0].mxu0
    %v6981 = vadd.f32 0.0, %v6980
    %v6982 = vpop.f32.mrb[0].mxu0
    %v6983 = vpop.f32.mrb[0].mxu0
    %v6984 = vadd.f32 0.0, %v6983
    %v6985 = vpop.f32.mrb[0].mxu0
    %6986 = vmatprep.mubr.bf16.mxu0 0
    %6987 = vmatmul.mubr.bf16.gmra.mrb[0].mxu0 %v6794
    %v6988 = vpop.f32.mrb[0].mxu0
    %v6989 = vadd.f32 0.0, %v6988
    %v6990 = vpop.f32.mrb[0].mxu0
    %v6991 = vpop.f32.mrb[0].mxu0
    %v6992 = vadd.f32 0.0, %v6991
    %v6993 = vpop.f32.mrb[0].mxu0
    %6994 = vmatprep.mubr.bf16.mxu0 0
    %6995 = vmatmul.mubr.bf16.gmra.mrb[0].mxu0 %v6797
    %v6996 = vpop.f32.mrb[0].mxu0
    %v6997 = vadd.f32 0.0, %v6996
    %v6998 = vpop.f32.mrb[0].mxu0
    %v6999 = vpop.f32.mrb[0].mxu0
    %v7000 = vadd.f32 0.0, %v6999
    %v7001 = vpop.f32.mrb[0].mxu0
    %7002 = vmatprep.mubr.bf16.mxu0 0
    %7003 = vmatmul.mubr.bf16.gmra.mrb[0].mxu0 %v6800
    %v7004 = vpop.f32.mrb[0].mxu0
    %v7005 = vadd.f32 0.0, %v7004
    %v7006 = vpop.f32.mrb[0].mxu0
    %v7007 = vpop.f32.mrb[0].mxu0
    %v7008 = vadd.f32 0.0, %v7007
    %v7009 = vpop.f32.mrb[0].mxu0
    %7010 = vmatprep.mubr.bf16.mxu0 0
    %7011 = vmatmul.mubr.bf16.gmra.mrb[0].mxu0 %v6803
    %v7012 = vpop.f32.mrb[0].mxu0
    %v7013 = vadd.f32 0.0, %v7012
    %v7014 = vpop.f32.mrb[0].mxu0
    %v7015 = vpop.f32.mrb[0].mxu0
    %v7016 = vadd.f32 0.0, %v7015
    %v7017 = vpop.f32.mrb[0].mxu0
    %7018 = vmatprep.mubr.bf16.mxu0 0
    %7019 = vmatmul.mubr.bf16.gmra.mrb[0].mxu0 %v6806
    %v7020 = vpop.f32.mrb[0].mxu0
    %v7021 = vadd.f32 0.0, %v7020
    %v7022 = vpop.f32.mrb[0].mxu0
    %v7023 = vpop.f32.mrb[0].mxu0
    %v7024 = vadd.f32 0.0, %v7023
    %v7025 = vpop.f32.mrb[0].mxu0
    %7026 = vmatprep.mubr.bf16.mxu0 0
    %7027 = vmatmul.mubr.bf16.gmra.mrb[0].mxu0 %v6809
    %v7028 = vpop.f32.mrb[0].mxu0
    %v7029 = vadd.f32 0.0, %v7028
    %v7030 = vpop.f32.mrb[0].mxu0
    %v7031 = vpop.f32.mrb[0].mxu0
    %v7032 = vadd.f32 0.0, %v7031
    %v7033 = vpop.f32.mrb[0].mxu0
    %7034 = vmatprep.mubr.bf16.mxu0 0
    %7035 = vmatmul.mubr.bf16.gmra.mrb[0].mxu0 %v6812
    %v7036 = vpop.f32.mrb[0].mxu0
    %v7037 = vadd.f32 0.0, %v7036
    %v7038 = vpop.f32.mrb[0].mxu0
    %v7039 = vpop.f32.mrb[0].mxu0
    %v7040 = vadd.f32 0.0, %v7039
    %v7041 = vpop.f32.mrb[0].mxu0
    %7042 = vmatprep.mubr.bf16.mxu0 0
    %7043 = vmatmul.mubr.bf16.gmra.mrb[0].mxu0 %v6815
    %v7044 = vpop.f32.mrb[0].mxu0
    %v7045 = vadd.f32 0.0, %v7044
    %v7046 = vpop.f32.mrb[0].mxu0
    %v7047 = vpop.f32.mrb[0].mxu0
    %v7048 = vadd.f32 0.0, %v7047
    %v7049 = vpop.f32.mrb[0].mxu0
    %7050 = vmatprep.mubr.bf16.mxu0 0
    %7051 = vmatmul.mubr.bf16.gmra.mrb[0].mxu0 %v6818
    %v7052 = vpop.f32.mrb[0].mxu0
    %v7053 = vadd.f32 0.0, %v7052
    %v7054 = vpop.f32.mrb[0].mxu0
    %v7055 = vpop.f32.mrb[0].mxu0
    %v7056 = vadd.f32 0.0, %v7055
    %v7057 = vpop.f32.mrb[0].mxu0
    %7058 = vmatprep.mubr.bf16.mxu0 0
    %7059 = vmatmul.mubr.bf16.gmra.mrb[0].mxu0 %v6821
    %v7060 = vpop.f32.mrb[0].mxu0
    %v7061 = vadd.f32 0.0, %v7060
    %v7062 = vpop.f32.mrb[0].mxu0
    %v7063 = vpop.f32.mrb[0].mxu0
    %v7064 = vadd.f32 0.0, %v7063
    %v7065 = vpop.f32.mrb[0].mxu0
    %7066 = vmatprep.mubr.bf16.mxu0 0
    %7067 = vmatmul.mubr.bf16.gmra.mrb[0].mxu0 %v6824
    %v7068 = vpop.f32.mrb[0].mxu0
    %v7069 = vadd.f32 0.0, %v7068
    %v7070 = vpop.f32.mrb[0].mxu0
    %v7071 = vpop.f32.mrb[0].mxu0
    %v7072 = vadd.f32 0.0, %v7071
    %v7073 = vpop.f32.mrb[0].mxu0
    %7074 = vmatprep.mubr.bf16.mxu0 0
    %7075 = vmatmul.mubr.bf16.gmra.mrb[0].mxu0 %v6827
    %v7076 = vpop.f32.mrb[0].mxu0
    %v7077 = vadd.f32 0.0, %v7076
    %v7078 = vpop.f32.mrb[0].mxu0
    %v7079 = vpop.f32.mrb[0].mxu0
    %v7080 = vadd.f32 0.0, %v7079
    %v7081 = vpop.f32.mrb[0].mxu0
    %7082 = vmatprep.mubr.bf16.mxu0 0
    %7083 = vmatmul.mubr.bf16.gmra.mrb[0].mxu0 %v6830
    %v7084 = vpop.f32.mrb[0].mxu0
    %v7085 = vadd.f32 0.0, %v7084
    %v7086 = vpop.f32.mrb[0].mxu0
    %v7087 = vpop.f32.mrb[0].mxu0
    %v7088 = vadd.f32 0.0, %v7087
    %v7089 = vpop.f32.mrb[0].mxu0
    %7090 = vmatprep.mubr.bf16.mxu0 0
    %7091 = vmatmul.mubr.bf16.gmra.mrb[0].mxu0 %v6833
    %v7092 = vpop.f32.mrb[0].mxu0
    %v7093 = vadd.f32 0.0, %v7092
    %v7094 = vpop.f32.mrb[0].mxu0
    %v7095 = vpop.f32.mrb[0].mxu0
    %v7096 = vadd.f32 0.0, %v7095
    %v7097 = vpop.f32.mrb[0].mxu0
    %7098 = vmatprep.mubr.bf16.mxu0 0
    %7099 = vmatmul.mubr.bf16.gmra.mrb[0].mxu0 %v6836
    %v7100 = vpop.f32.mrb[0].mxu0
    %v7101 = vadd.f32 0.0, %v7100
    %v7102 = vpop.f32.mrb[0].mxu0
    %v7103 = vpop.f32.mrb[0].mxu0
    %v7104 = vadd.f32 0.0, %v7103
    %v7105 = vpop.f32.mrb[0].mxu0
    %7106 = vmatprep.mubr.bf16.mxu0 0
    %7107 = vmatmul.mubr.bf16.gmra.mrb[0].mxu0 %v6839
    %v7108 = vpop.f32.mrb[0].mxu0
    %v7109 = vadd.f32 0.0, %v7108
    %v7110 = vpop.f32.mrb[0].mxu0
    %v7111 = vpop.f32.mrb[0].mxu0
    %v7112 = vadd.f32 0.0, %v7111
    %v7113 = vpop.f32.mrb[0].mxu0
    %7114 = vmatprep.mubr.bf16.mxu0 0
    %7115 = vmatmul.mubr.bf16.gmra.mrb[0].mxu0 %v6842
    %v7116 = vpop.f32.mrb[0].mxu0
    %v7117 = vadd.f32 0.0, %v7116
    %v7118 = vpop.f32.mrb[0].mxu0
    %v7119 = vpop.f32.mrb[0].mxu0
    %v7120 = vadd.f32 0.0, %v7119
    %v7121 = vpop.f32.mrb[0].mxu0
    %7122 = vmatprep.mubr.bf16.mxu0 0
    %7123 = vmatmul.mubr.bf16.gmra.mrb[0].mxu0 %v6845
    %v7124 = vpop.f32.mrb[0].mxu0
    %v7125 = vadd.f32 0.0, %v7124
    %v7126 = vpop.f32.mrb[0].mxu0
    %v7127 = vpop.f32.mrb[0].mxu0
    %v7128 = vadd.f32 0.0, %v7127
    %v7129 = vpop.f32.mrb[0].mxu0
    %7130 = vmatprep.mubr.bf16.mxu0 0
    %7131 = vmatmul.mubr.bf16.gmra.mrb[0].mxu0 %v6848
    %v7132 = vpop.f32.mrb[0].mxu0
    %v7133 = vadd.f32 0.0, %v7132
    %v7134 = vpop.f32.mrb[0].mxu0
    %v7135 = vpop.f32.mrb[0].mxu0
    %v7136 = vadd.f32 0.0, %v7135
    %v7137 = vpop.f32.mrb[0].mxu0
    %7138 = vdwg.mxu0
    %v7139 = vadd.f32 %v5714, %v6885
    %v7140 = vadd.f32 %v5715, %v6888
    %v7141 = vadd.f32 %v5716, %v6893
    %v7142 = vadd.f32 %v5717, %v6896
    %v7143 = vadd.f32 %v5718, %v6901
    %v7144 = vadd.f32 %v5719, %v6904
    %v7145 = vadd.f32 %v5720, %v6909
    %v7146 = vadd.f32 %v5721, %v6912
    %v7147 = vadd.f32 %v5722, %v6917
    %v7148 = vadd.f32 %v5723, %v6920
    %v7149 = vadd.f32 %v5724, %v6925
    %v7150 = vadd.f32 %v5725, %v6928
    %v7151 = vadd.f32 %v5726, %v6933
    %v7152 = vadd.f32 %v5727, %v6936
    %v7153 = vadd.f32 %v5728, %v6941
    %v7154 = vadd.f32 %v5729, %v6944
    %v7155 = vadd.f32 %v5730, %v6949
    %v7156 = vadd.f32 %v5731, %v6952
    %v7157 = vadd.f32 %v5732, %v6957
    %v7158 = vadd.f32 %v5733, %v6960
    %v7159 = vadd.f32 %v5734, %v6965
    %v7160 = vadd.f32 %v5735, %v6968
    %v7161 = vadd.f32 %v5736, %v6973
    %v7162 = vadd.f32 %v5737, %v6976
    %v7163 = vadd.f32 %v5738, %v6981
    %v7164 = vadd.f32 %v5739, %v6984
    %v7165 = vadd.f32 %v5740, %v6989
    %v7166 = vadd.f32 %v5741, %v6992
    %v7167 = vadd.f32 %v5742, %v6997
    %v7168 = vadd.f32 %v5743, %v7000
    %v7169 = vadd.f32 %v5744, %v7005
    %v7170 = vadd.f32 %v5745, %v7008
    %v7171 = vadd.f32 %v5746, %v7013
    %v7172 = vadd.f32 %v5747, %v7016
    %v7173 = vadd.f32 %v5748, %v7021
    %v7174 = vadd.f32 %v5749, %v7024
    %v7175 = vadd.f32 %v5750, %v7029
    %v7176 = vadd.f32 %v5751, %v7032
    %v7177 = vadd.f32 %v5752, %v7037
    %v7178 = vadd.f32 %v5753, %v7040
    %v7179 = vadd.f32 %v5754, %v7045
    %v7180 = vadd.f32 %v5755, %v7048
    %v7181 = vadd.f32 %v5756, %v7053
    %v7182 = vadd.f32 %v5757, %v7056
    %v7183 = vadd.f32 %v5758, %v7061
    %v7184 = vadd.f32 %v5759, %v7064
    %v7185 = vadd.f32 %v5760, %v7069
    %v7186 = vadd.f32 %v5761, %v7072
    %v7187 = vadd.f32 %v5762, %v7077
    %v7188 = vadd.f32 %v5763, %v7080
    %v7189 = vadd.f32 %v5764, %v7085
    %v7190 = vadd.f32 %v5765, %v7088
    %v7191 = vadd.f32 %v5766, %v7093
    %v7192 = vadd.f32 %v5767, %v7096
    %v7193 = vadd.f32 %v5768, %v7101
    %v7194 = vadd.f32 %v5769, %v7104
    %v7195 = vadd.f32 %v5770, %v7109
    %v7196 = vadd.f32 %v5771, %v7112
    %v7197 = vadd.f32 %v5772, %v7117
    %v7198 = vadd.f32 %v5773, %v7120
    %v7199 = vadd.f32 %v5774, %v7125
    %v7200 = vadd.f32 %v5775, %v7128
    %v7201 = vadd.f32 %v5776, %v7133
    %v7202 = vadd.f32 %v5777, %v7136
    %v7203 = vld [vmem:[%s2052] sm:$0xe]
    %v7204 = vld [vmem:[%s2052 + $0xc] sm:$0xe]
    %v7205 = vld [vmem:[%s2052 + $0x18] sm:$0xe]
    %v7206 = vld [vmem:[%s2052 + $0x24] sm:$0xe]
    %v7207 = vld [vmem:[%s2052 + $0x30] sm:$0xe]
    %v7208 = vld [vmem:[%s2052 + $0x3c] sm:$0xe]
    %v7209 = vld [vmem:[%s2052 + $0x48] sm:$0xe]
    %v7210 = vld [vmem:[%s2052 + $0x54] sm:$0xe]
    %v7211 = vld [vmem:[%s2052 + $0x60] sm:$0xe]
    %v7212 = vld [vmem:[%s2052 + $0x6c] sm:$0xe]
    %v7213 = vld [vmem:[%s2052 + $0x78] sm:$0xe]
    %v7214 = vld [vmem:[%s2052 + $0x84] sm:$0xe]
    %v7215 = vld [vmem:[%s2052 + $0x90] sm:$0xe]
    %v7216 = vld [vmem:[%s2052 + $0x9c] sm:$0xe]
    %v7217 = vld [vmem:[%s2052 + $0xa8] sm:$0xe]
    %v7218 = vld [vmem:[%s2052 + $0xb4] sm:$0xe]
    %v7219 = vld [vmem:[%s2052 + $0xd8] sm:$0xe]
    %v7220 = vld [vmem:[%s2052 + $0xe4] sm:$0xe]
    %v7221 = vld [vmem:[%s2052 + $0xf0] sm:$0xe]
    %v7222 = vld [vmem:[%s2052 + $0xfc] sm:$0xe]
    %v7223 = vld [vmem:[%s2052 + $0x108] sm:$0xe]
    %v7224 = vld [vmem:[%s2052 + $0x114] sm:$0xe]
    %v7225 = vld [vmem:[%s2052 + $0x120] sm:$0xe]
    %v7226 = vld [vmem:[%s2052 + $0x12c] sm:$0xe]
    %v7227 = vld [vmem:[%s2052 + $0x138] sm:$0xe]
    %v7228 = vld [vmem:[%s2052 + $0x144] sm:$0xe]
    %v7229 = vld [vmem:[%s2052 + $0x150] sm:$0xe]
    %v7230 = vld [vmem:[%s2052 + $0x15c] sm:$0xe]
    %v7231 = vld [vmem:[%s2052 + $0x168] sm:$0xe]
    %v7232 = vld [vmem:[%s2052 + $0x174] sm:$0xe]
    %v7233 = vld [vmem:[%s2052 + $0x180] sm:$0xe]
    %v7234 = vld [vmem:[%s2052 + $0x18c] sm:$0xe]
    %v7331 = vrot.slane %v7203, 5
    %v7332 = vrot.slane %v7331, 4
    %v7333 = vrot.slane %v5779, 5
    %v7334 = vsel %vm4303, %v7332, %v7333
    %v7335 = vrot.slane %v7333, 4
    %v7336 = vrot.slane %v5780, 5
    %v7337 = vsel %vm4303, %v7335, %v7336
    %v7338 = vrot.slane %v7204, 5
    %v7339 = vrot.slane %v7338, 4
    %v7340 = vrot.slane %v5782, 5
    %v7341 = vsel %vm4303, %v7339, %v7340
    %v7342 = vrot.slane %v7340, 4
    %v7343 = vrot.slane %v5783, 5
    %v7344 = vsel %vm4303, %v7342, %v7343
    %v7345 = vrot.slane %v7205, 5
    %v7346 = vrot.slane %v7345, 4
    %v7347 = vrot.slane %v5785, 5
    %v7348 = vsel %vm4303, %v7346, %v7347
    %v7349 = vrot.slane %v7347, 4
    %v7350 = vrot.slane %v5786, 5
    %v7351 = vsel %vm4303, %v7349, %v7350
    %v7352 = vrot.slane %v7206, 5
    %v7353 = vrot.slane %v7352, 4
    %v7354 = vrot.slane %v5788, 5
    %v7355 = vsel %vm4303, %v7353, %v7354
    %v7356 = vrot.slane %v7354, 4
    %v7357 = vrot.slane %v5789, 5
    %v7358 = vsel %vm4303, %v7356, %v7357
    %v7359 = vrot.slane %v7207, 5
    %v7360 = vrot.slane %v7359, 4
    %v7361 = vrot.slane %v5791, 5
    %v7362 = vsel %vm4303, %v7360, %v7361
    %v7363 = vrot.slane %v7361, 4
    %v7364 = vrot.slane %v5792, 5
    %v7365 = vsel %vm4303, %v7363, %v7364
    %v7366 = vrot.slane %v7208, 5
    %v7367 = vrot.slane %v7366, 4
    %v7368 = vrot.slane %v5794, 5
    %v7369 = vsel %vm4303, %v7367, %v7368
    %v7370 = vrot.slane %v7368, 4
    %v7371 = vrot.slane %v5795, 5
    %v7372 = vsel %vm4303, %v7370, %v7371
    %v7373 = vrot.slane %v7209, 5
    %v7374 = vrot.slane %v7373, 4
    %v7375 = vrot.slane %v5797, 5
    %v7376 = vsel %vm4303, %v7374, %v7375
    %v7377 = vrot.slane %v7375, 4
    %v7378 = vrot.slane %v5798, 5
    %v7379 = vsel %vm4303, %v7377, %v7378
    %v7380 = vrot.slane %v7210, 5
    %v7381 = vrot.slane %v7380, 4
    %v7382 = vrot.slane %v5800, 5
    %v7383 = vsel %vm4303, %v7381, %v7382
    %v7384 = vrot.slane %v7382, 4
    %v7385 = vrot.slane %v5801, 5
    %v7386 = vsel %vm4303, %v7384, %v7385
    %v7387 = vrot.slane %v7211, 5
    %v7388 = vrot.slane %v7387, 4
    %v7389 = vrot.slane %v5803, 5
    %v7390 = vsel %vm4303, %v7388, %v7389
    %v7391 = vrot.slane %v7389, 4
    %v7392 = vrot.slane %v5804, 5
    %v7393 = vsel %vm4303, %v7391, %v7392
    %v7394 = vrot.slane %v7212, 5
    %v7395 = vrot.slane %v7394, 4
    %v7396 = vrot.slane %v5806, 5
    %v7397 = vsel %vm4303, %v7395, %v7396
    %v7398 = vrot.slane %v7396, 4
    %v7399 = vrot.slane %v5807, 5
    %v7400 = vsel %vm4303, %v7398, %v7399
    %v7401 = vrot.slane %v7213, 5
    %v7402 = vrot.slane %v7401, 4
    %v7403 = vrot.slane %v5809, 5
    %v7404 = vsel %vm4303, %v7402, %v7403
    %v7405 = vrot.slane %v7403, 4
    %v7406 = vrot.slane %v5810, 5
    %v7407 = vsel %vm4303, %v7405, %v7406
    %v7408 = vrot.slane %v7214, 5
    %v7409 = vrot.slane %v7408, 4
    %v7410 = vrot.slane %v5812, 5
    %v7411 = vsel %vm4303, %v7409, %v7410
    %v7412 = vrot.slane %v7410, 4
    %v7413 = vrot.slane %v5813, 5
    %v7414 = vsel %vm4303, %v7412, %v7413
    %v7415 = vrot.slane %v7215, 5
    %v7416 = vrot.slane %v7415, 4
    %v7417 = vrot.slane %v5815, 5
    %v7418 = vsel %vm4303, %v7416, %v7417
    %v7419 = vrot.slane %v7417, 4
    %v7420 = vrot.slane %v5816, 5
    %v7421 = vsel %vm4303, %v7419, %v7420
    %v7422 = vrot.slane %v7216, 5
    %v7423 = vrot.slane %v7422, 4
    %v7424 = vrot.slane %v5818, 5
    %v7425 = vsel %vm4303, %v7423, %v7424
    %v7426 = vrot.slane %v7424, 4
    %v7427 = vrot.slane %v5819, 5
    %v7428 = vsel %vm4303, %v7426, %v7427
    %v7429 = vrot.slane %v7217, 5
    %v7430 = vrot.slane %v7429, 4
    %v7431 = vrot.slane %v5821, 5
    %v7432 = vsel %vm4303, %v7430, %v7431
    %v7433 = vrot.slane %v7431, 4
    %v7434 = vrot.slane %v5822, 5
    %v7435 = vsel %vm4303, %v7433, %v7434
    %v7436 = vrot.slane %v7218, 5
    %v7437 = vrot.slane %v7436, 4
    %v7438 = vrot.slane %v5824, 5
    %v7439 = vsel %vm4303, %v7437, %v7438
    %v7440 = vrot.slane %v7438, 4
    %v7441 = vrot.slane %v5825, 5
    %v7442 = vsel %vm4303, %v7440, %v7441
    %v7443 = vrot.slane %v7219, 5
    %v7444 = vrot.slane %v7443, 4
    %v7445 = vrot.slane %v5827, 5
    %v7446 = vsel %vm4303, %v7444, %v7445
    %v7447 = vrot.slane %v7445, 4
    %v7448 = vrot.slane %v5828, 5
    %v7449 = vsel %vm4303, %v7447, %v7448
    %v7450 = vrot.slane %v7220, 5
    %v7451 = vrot.slane %v7450, 4
    %v7452 = vrot.slane %v5830, 5
    %v7453 = vsel %vm4303, %v7451, %v7452
    %v7454 = vrot.slane %v7452, 4
    %v7455 = vrot.slane %v5831, 5
    %v7456 = vsel %vm4303, %v7454, %v7455
    %v7457 = vrot.slane %v7221, 5
    %v7458 = vrot.slane %v7457, 4
    %v7459 = vrot.slane %v5833, 5
    %v7460 = vsel %vm4303, %v7458, %v7459
    %v7461 = vrot.slane %v7459, 4
    %v7462 = vrot.slane %v5834, 5
    %v7463 = vsel %vm4303, %v7461, %v7462
    %v7464 = vrot.slane %v7222, 5
    %v7465 = vrot.slane %v7464, 4
    %v7466 = vrot.slane %v5836, 5
    %v7467 = vsel %vm4303, %v7465, %v7466
    %v7468 = vrot.slane %v7466, 4
    %v7469 = vrot.slane %v5837, 5
    %v7470 = vsel %vm4303, %v7468, %v7469
    %v7471 = vrot.slane %v7223, 5
    %v7472 = vrot.slane %v7471, 4
    %v7473 = vrot.slane %v5839, 5
    %v7474 = vsel %vm4303, %v7472, %v7473
    %v7475 = vrot.slane %v7473, 4
    %v7476 = vrot.slane %v5840, 5
    %v7477 = vsel %vm4303, %v7475, %v7476
    %v7478 = vrot.slane %v7224, 5
    %v7479 = vrot.slane %v7478, 4
    %v7480 = vrot.slane %v5842, 5
    %v7481 = vsel %vm4303, %v7479, %v7480
    %v7482 = vrot.slane %v7480, 4
    %v7483 = vrot.slane %v5843, 5
    %v7484 = vsel %vm4303, %v7482, %v7483
    %v7485 = vrot.slane %v7225, 5
    %v7486 = vrot.slane %v7485, 4
    %v7487 = vrot.slane %v5845, 5
    %v7488 = vsel %vm4303, %v7486, %v7487
    %v7489 = vrot.slane %v7487, 4
    %v7490 = vrot.slane %v5846, 5
    %v7491 = vsel %vm4303, %v7489, %v7490
    %v7492 = vrot.slane %v7226, 5
    %v7493 = vrot.slane %v7492, 4
    %v7494 = vrot.slane %v5848, 5
    %v7495 = vsel %vm4303, %v7493, %v7494
    %v7496 = vrot.slane %v7494, 4
    %v7497 = vrot.slane %v5849, 5
    %v7498 = vsel %vm4303, %v7496, %v7497
    %v7499 = vrot.slane %v7227, 5
    %v7500 = vrot.slane %v7499, 4
    %v7501 = vrot.slane %v5851, 5
    %v7502 = vsel %vm4303, %v7500, %v7501
    %v7503 = vrot.slane %v7501, 4
    %v7504 = vrot.slane %v5852, 5
    %v7505 = vsel %vm4303, %v7503, %v7504
    %v7506 = vrot.slane %v7228, 5
    %v7507 = vrot.slane %v7506, 4
    %v7508 = vrot.slane %v5854, 5
    %v7509 = vsel %vm4303, %v7507, %v7508
    %v7510 = vrot.slane %v7508, 4
    %v7511 = vrot.slane %v5855, 5
    %v7512 = vsel %vm4303, %v7510, %v7511
    %v7513 = vrot.slane %v7229, 5
    %v7514 = vrot.slane %v7513, 4
    %v7515 = vrot.slane %v5857, 5
    %v7516 = vsel %vm4303, %v7514, %v7515
    %v7517 = vrot.slane %v7515, 4
    %v7518 = vrot.slane %v5858, 5
    %v7519 = vsel %vm4303, %v7517, %v7518
    %v7520 = vrot.slane %v7230, 5
    %v7521 = vrot.slane %v7520, 4
    %v7522 = vrot.slane %v5860, 5
    %v7523 = vsel %vm4303, %v7521, %v7522
    %v7524 = vrot.slane %v7522, 4
    %v7525 = vrot.slane %v5861, 5
    %v7526 = vsel %vm4303, %v7524, %v7525
    %v7527 = vrot.slane %v7231, 5
    %v7528 = vrot.slane %v7527, 4
    %v7529 = vrot.slane %v5863, 5
    %v7530 = vsel %vm4303, %v7528, %v7529
    %v7531 = vrot.slane %v7529, 4
    %v7532 = vrot.slane %v5864, 5
    %v7533 = vsel %vm4303, %v7531, %v7532
    %v7534 = vrot.slane %v7232, 5
    %v7535 = vrot.slane %v7534, 4
    %v7536 = vrot.slane %v5866, 5
    %v7537 = vsel %vm4303, %v7535, %v7536
    %v7538 = vrot.slane %v7536, 4
    %v7539 = vrot.slane %v5867, 5
    %v7540 = vsel %vm4303, %v7538, %v7539
    %v7541 = vrot.slane %v7233, 5
    %v7542 = vrot.slane %v7541, 4
    %v7543 = vrot.slane %v5869, 5
    %v7544 = vsel %vm4303, %v7542, %v7543
    %v7545 = vrot.slane %v7543, 4
    %v7546 = vrot.slane %v5870, 5
    %v7547 = vsel %vm4303, %v7545, %v7546
    %v7548 = vrot.slane %v7234, 5
    %v7549 = vrot.slane %v7548, 4
    %v7550 = vrot.slane %v5872, 5
    %v7551 = vsel %vm4303, %v7549, %v7550
    %v7552 = vrot.slane %v7550, 4
    %v7553 = vrot.slane %v5873, 5
    %v7554 = vsel %vm4303, %v7552, %v7553
    %v7555 = vld [vmem:[%s3 + $0x50] sm:$0xf]
    %v7556 = vld [vmem:[%s3 + $0x54] sm:$0xf]
    %v7557 = vld [vmem:[%s3 + $0x58] sm:$0xf]
    %v7558 = vld [vmem:[%s3 + $0x5c] sm:$0xf]
    %v7559 = vunpack.c.l.b16 %v7334
    %v7560 = vunpack.c.l.b16 %v7337
    %v7561 = vunpack.c.l.b16 %v7341
    %v7562 = vunpack.c.l.b16 %v7344
    %v7563 = vunpack.c.l.b16 %v7348
    %v7564 = vunpack.c.l.b16 %v7351
    %v7565 = vunpack.c.l.b16 %v7355
    %v7566 = vunpack.c.l.b16 %v7358
    %v7567 = vunpack.c.l.b16 %v7362
    %v7568 = vunpack.c.l.b16 %v7365
    %v7569 = vunpack.c.l.b16 %v7369
    %v7570 = vunpack.c.l.b16 %v7372
    %v7571 = vunpack.c.l.b16 %v7376
    %v7572 = vunpack.c.l.b16 %v7379
    %v7573 = vunpack.c.l.b16 %v7383
    %v7574 = vunpack.c.l.b16 %v7386
    %v7575 = vunpack.c.l.b16 %v7390
    %v7576 = vunpack.c.l.b16 %v7393
    %v7577 = vunpack.c.l.b16 %v7397
    %v7578 = vunpack.c.l.b16 %v7400
    %v7579 = vunpack.c.l.b16 %v7404
    %v7580 = vunpack.c.l.b16 %v7407
    %v7581 = vunpack.c.l.b16 %v7411
    %v7582 = vunpack.c.l.b16 %v7414
    %v7583 = vunpack.c.l.b16 %v7418
    %v7584 = vunpack.c.l.b16 %v7421
    %v7585 = vunpack.c.l.b16 %v7425
    %v7586 = vunpack.c.l.b16 %v7428
    %v7587 = vunpack.c.l.b16 %v7432
    %v7588 = vunpack.c.l.b16 %v7435
    %v7589 = vunpack.c.l.b16 %v7439
    %v7590 = vunpack.c.l.b16 %v7442
    %v7591 = vunpack.c.l.b16 %v7446
    %v7592 = vunpack.c.l.b16 %v7449
    %v7593 = vunpack.c.l.b16 %v7453
    %v7594 = vunpack.c.l.b16 %v7456
    %v7595 = vunpack.c.l.b16 %v7460
    %v7596 = vunpack.c.l.b16 %v7463
    %v7597 = vunpack.c.l.b16 %v7467
    %v7598 = vunpack.c.l.b16 %v7470
    %v7599 = vunpack.c.l.b16 %v7474
    %v7600 = vunpack.c.l.b16 %v7477
    %v7601 = vunpack.c.l.b16 %v7481
    %v7602 = vunpack.c.l.b16 %v7484
    %v7603 = vunpack.c.l.b16 %v7488
    %v7604 = vunpack.c.l.b16 %v7491
    %v7605 = vunpack.c.l.b16 %v7495
    %v7606 = vunpack.c.l.b16 %v7498
    %v7607 = vunpack.c.l.b16 %v7502
    %v7608 = vunpack.c.l.b16 %v7505
    %v7609 = vunpack.c.l.b16 %v7509
    %v7610 = vunpack.c.l.b16 %v7512
    %v7611 = vunpack.c.l.b16 %v7516
    %v7612 = vunpack.c.l.b16 %v7519
    %v7613 = vunpack.c.l.b16 %v7523
    %v7614 = vunpack.c.l.b16 %v7526
    %v7615 = vunpack.c.l.b16 %v7530
    %v7616 = vunpack.c.l.b16 %v7533
    %v7617 = vunpack.c.l.b16 %v7537
    %v7618 = vunpack.c.l.b16 %v7540
    %v7619 = vunpack.c.l.b16 %v7544
    %v7620 = vunpack.c.l.b16 %v7547
    %v7621 = vunpack.c.l.b16 %v7551
    %v7622 = vunpack.c.l.b16 %v7554
    %v7623 = vpack.c.b16 %v7560, %v7559
    %v7624 = vpack.c.b16 %v7562, %v7561
    %v7625 = vpack.c.b16 %v7564, %v7563
    %v7626 = vpack.c.b16 %v7566, %v7565
    %v7627 = vpack.c.b16 %v7568, %v7567
    %v7628 = vpack.c.b16 %v7570, %v7569
    %v7629 = vpack.c.b16 %v7572, %v7571
    %v7630 = vpack.c.b16 %v7574, %v7573
    %v7631 = vpack.c.b16 %v7576, %v7575
    %v7632 = vpack.c.b16 %v7578, %v7577
    %v7633 = vpack.c.b16 %v7580, %v7579
    %v7634 = vpack.c.b16 %v7582, %v7581
    %v7635 = vpack.c.b16 %v7584, %v7583
    %v7636 = vpack.c.b16 %v7586, %v7585
    %v7637 = vpack.c.b16 %v7588, %v7587
    %v7638 = vpack.c.b16 %v7590, %v7589
    %v7639 = vpack.c.b16 %v7592, %v7591
    %v7640 = vpack.c.b16 %v7594, %v7593
    %v7641 = vpack.c.b16 %v7596, %v7595
    %v7642 = vpack.c.b16 %v7598, %v7597
    %v7643 = vpack.c.b16 %v7600, %v7599
    %v7644 = vpack.c.b16 %v7602, %v7601
    %v7645 = vpack.c.b16 %v7604, %v7603
    %v7646 = vpack.c.b16 %v7606, %v7605
    %v7647 = vpack.c.b16 %v7608, %v7607
    %v7648 = vpack.c.b16 %v7610, %v7609
    %v7649 = vpack.c.b16 %v7612, %v7611
    %v7650 = vpack.c.b16 %v7614, %v7613
    %v7651 = vpack.c.b16 %v7616, %v7615
    %v7652 = vpack.c.b16 %v7618, %v7617
    %v7653 = vpack.c.b16 %v7620, %v7619
    %v7654 = vpack.c.b16 %v7622, %v7621
    %v7659 = vunpack.c.l.b16 %v7555
    %v7660 = vunpack.c.l.b16 %v7556
    %v7661 = vunpack.c.l.b16 %v7557
    %v7662 = vunpack.c.l.b16 %v7558
    %v7663 = vpack.c.b16 %v7660, %v7659
    %v7664 = vpack.c.b16 %v7662, %v7661
    %v7668 = vsel %vm3262, %v7623, 0
    %v7671 = vsel %vm3262, %v7624, 0
    %v7674 = vsel %vm3262, %v7625, 0
    %v7677 = vsel %vm3262, %v7626, 0
    %v7680 = vsel %vm3262, %v7627, 0
    %v7683 = vsel %vm3262, %v7628, 0
    %v7686 = vsel %vm3262, %v7629, 0
    %v7689 = vsel %vm3262, %v7630, 0
    %v7692 = vsel %vm3262, %v7631, 0
    %v7695 = vsel %vm3262, %v7632, 0
    %v7698 = vsel %vm3262, %v7633, 0
    %v7701 = vsel %vm3262, %v7634, 0
    %v7704 = vsel %vm3262, %v7635, 0
    %v7707 = vsel %vm3262, %v7636, 0
    %v7710 = vsel %vm3262, %v7637, 0
    %v7713 = vsel %vm3262, %v7638, 0
    %v7716 = vsel %vm3262, %v7639, 0
    %v7719 = vsel %vm3262, %v7640, 0
    %v7722 = vsel %vm3262, %v7641, 0
    %v7725 = vsel %vm3262, %v7642, 0
    %v7728 = vsel %vm3262, %v7643, 0
    %v7731 = vsel %vm3262, %v7644, 0
    %v7734 = vsel %vm3262, %v7645, 0
    %v7737 = vsel %vm3262, %v7646, 0
    %v7740 = vsel %vm3262, %v7647, 0
    %v7743 = vsel %vm3262, %v7648, 0
    %v7746 = vsel %vm3262, %v7649, 0
    %v7749 = vsel %vm3262, %v7650, 0
    %v7752 = vsel %vm3262, %v7651, 0
    %v7755 = vsel %vm3262, %v7652, 0
    %v7758 = vsel %vm3262, %v7653, 0
    %v7761 = vsel %vm3262, %v7654, 0
    %7763 = vmatprep.subr.bf16.mxu0 0
    %7764 = vmatpush1.bf16.msra.mxu0 %v7663
    %7765 = vmatprep.subr.bf16.mxu0 0
    %7766 = vmatpush1.bf16.msra.mxu0 %v7664
    %7767 = vmatprep.subr.bf16.mxu0 0
    %7768 = vmatpush1.bf16.msra.mxu0 0
    %7769 = vmatprep.subr.bf16.mxu0 0
    %7770 = vmatpush1.bf16.msra.mxu0 0
    %7771 = vmatprep.subr.bf16.mxu0 0
    %7772 = vmatpush1.bf16.msra.mxu0 0
    %7773 = vmatprep.subr.bf16.mxu0 0
    %7774 = vmatpush1.bf16.msra.mxu0 0
    %7775 = vmatprep.subr.bf16.mxu0 0
    %7776 = vmatpush1.bf16.msra.mxu0 0
    %7777 = vmatprep.subr.bf16.mxu0 0
    %7778 = vmatpush1.bf16.msra.mxu0 0
    %7779 = vmatprep.subr.bf16.mxu0 0
    %7780 = vmatpush1.bf16.msra.mxu0 0
    %7781 = vmatprep.subr.bf16.mxu0 0
    %7782 = vmatpush1.bf16.msra.mxu0 0
    %7783 = vmatprep.subr.bf16.mxu0 0
    %7784 = vmatpush1.bf16.msra.mxu0 0
    %7785 = vmatprep.subr.bf16.mxu0 0
    %7786 = vmatpush1.bf16.msra.mxu0 0
    %7787 = vmatprep.subr.bf16.mxu0 0
    %7788 = vmatpush1.bf16.msra.mxu0 0
    %7789 = vmatprep.subr.bf16.mxu0 0
    %7790 = vmatpush1.bf16.msra.mxu0 0
    %7791 = vmatprep.subr.bf16.mxu0 0
    %7792 = vmatpush1.bf16.msra.mxu0 0
    %7793 = vmatprep.subr.bf16.mxu0 0
    %7794 = vmatpush1.bf16.msra.mxu0 0
    %7795 = vmatprep.mubr.bf16.mxu0 0
    %7796 = vmatmul.mubr.bf16.gmra.mrb[0].mxu0 %v7668
    %v7797 = vpop.f32.mrb[0].mxu0
    %v7798 = vadd.f32 0.0, %v7797
    %v7799 = vpop.f32.mrb[0].mxu0
    %v7800 = vpop.f32.mrb[0].mxu0
    %v7801 = vadd.f32 0.0, %v7800
    %v7802 = vpop.f32.mrb[0].mxu0
    %7803 = vmatprep.mubr.bf16.mxu0 0
    %7804 = vmatmul.mubr.bf16.gmra.mrb[0].mxu0 %v7671
    %v7805 = vpop.f32.mrb[0].mxu0
    %v7806 = vadd.f32 0.0, %v7805
    %v7807 = vpop.f32.mrb[0].mxu0
    %v7808 = vpop.f32.mrb[0].mxu0
    %v7809 = vadd.f32 0.0, %v7808
    %v7810 = vpop.f32.mrb[0].mxu0
    %7811 = vmatprep.mubr.bf16.mxu0 0
    %7812 = vmatmul.mubr.bf16.gmra.mrb[0].mxu0 %v7674
    %v7813 = vpop.f32.mrb[0].mxu0
    %v7814 = vadd.f32 0.0, %v7813
    %v7815 = vpop.f32.mrb[0].mxu0
    %v7816 = vpop.f32.mrb[0].mxu0
    %v7817 = vadd.f32 0.0, %v7816
    %v7818 = vpop.f32.mrb[0].mxu0
    %7819 = vmatprep.mubr.bf16.mxu0 0
    %7820 = vmatmul.mubr.bf16.gmra.mrb[0].mxu0 %v7677
    %v7821 = vpop.f32.mrb[0].mxu0
    %v7822 = vadd.f32 0.0, %v7821
    %v7823 = vpop.f32.mrb[0].mxu0
    %v7824 = vpop.f32.mrb[0].mxu0
    %v7825 = vadd.f32 0.0, %v7824
    %v7826 = vpop.f32.mrb[0].mxu0
    %7827 = vmatprep.mubr.bf16.mxu0 0
    %7828 = vmatmul.mubr.bf16.gmra.mrb[0].mxu0 %v7680
    %v7829 = vpop.f32.mrb[0].mxu0
    %v7830 = vadd.f32 0.0, %v7829
    %v7831 = vpop.f32.mrb[0].mxu0
    %v7832 = vpop.f32.mrb[0].mxu0
    %v7833 = vadd.f32 0.0, %v7832
    %v7834 = vpop.f32.mrb[0].mxu0
    %7835 = vmatprep.mubr.bf16.mxu0 0
    %7836 = vmatmul.mubr.bf16.gmra.mrb[0].mxu0 %v7683
    %v7837 = vpop.f32.mrb[0].mxu0
    %v7838 = vadd.f32 0.0, %v7837
    %v7839 = vpop.f32.mrb[0].mxu0
    %v7840 = vpop.f32.mrb[0].mxu0
    %v7841 = vadd.f32 0.0, %v7840
    %v7842 = vpop.f32.mrb[0].mxu0
    %7843 = vmatprep.mubr.bf16.mxu0 0
    %7844 = vmatmul.mubr.bf16.gmra.mrb[0].mxu0 %v7686
    %v7845 = vpop.f32.mrb[0].mxu0
    %v7846 = vadd.f32 0.0, %v7845
    %v7847 = vpop.f32.mrb[0].mxu0
    %v7848 = vpop.f32.mrb[0].mxu0
    %v7849 = vadd.f32 0.0, %v7848
    %v7850 = vpop.f32.mrb[0].mxu0
    %7851 = vmatprep.mubr.bf16.mxu0 0
    %7852 = vmatmul.mubr.bf16.gmra.mrb[0].mxu0 %v7689
    %v7853 = vpop.f32.mrb[0].mxu0
    %v7854 = vadd.f32 0.0, %v7853
    %v7855 = vpop.f32.mrb[0].mxu0
    %v7856 = vpop.f32.mrb[0].mxu0
    %v7857 = vadd.f32 0.0, %v7856
    %v7858 = vpop.f32.mrb[0].mxu0
    %7859 = vmatprep.mubr.bf16.mxu0 0
    %7860 = vmatmul.mubr.bf16.gmra.mrb[0].mxu0 %v7692
    %v7861 = vpop.f32.mrb[0].mxu0
    %v7862 = vadd.f32 0.0, %v7861
    %v7863 = vpop.f32.mrb[0].mxu0
    %v7864 = vpop.f32.mrb[0].mxu0
    %v7865 = vadd.f32 0.0, %v7864
    %v7866 = vpop.f32.mrb[0].mxu0
    %7867 = vmatprep.mubr.bf16.mxu0 0
    %7868 = vmatmul.mubr.bf16.gmra.mrb[0].mxu0 %v7695
    %v7869 = vpop.f32.mrb[0].mxu0
    %v7870 = vadd.f32 0.0, %v7869
    %v7871 = vpop.f32.mrb[0].mxu0
    %v7872 = vpop.f32.mrb[0].mxu0
    %v7873 = vadd.f32 0.0, %v7872
    %v7874 = vpop.f32.mrb[0].mxu0
    %7875 = vmatprep.mubr.bf16.mxu0 0
    %7876 = vmatmul.mubr.bf16.gmra.mrb[0].mxu0 %v7698
    %v7877 = vpop.f32.mrb[0].mxu0
    %v7878 = vadd.f32 0.0, %v7877
    %v7879 = vpop.f32.mrb[0].mxu0
    %v7880 = vpop.f32.mrb[0].mxu0
    %v7881 = vadd.f32 0.0, %v7880
    %v7882 = vpop.f32.mrb[0].mxu0
    %7883 = vmatprep.mubr.bf16.mxu0 0
    %7884 = vmatmul.mubr.bf16.gmra.mrb[0].mxu0 %v7701
    %v7885 = vpop.f32.mrb[0].mxu0
    %v7886 = vadd.f32 0.0, %v7885
    %v7887 = vpop.f32.mrb[0].mxu0
    %v7888 = vpop.f32.mrb[0].mxu0
    %v7889 = vadd.f32 0.0, %v7888
    %v7890 = vpop.f32.mrb[0].mxu0
    %7891 = vmatprep.mubr.bf16.mxu0 0
    %7892 = vmatmul.mubr.bf16.gmra.mrb[0].mxu0 %v7704
    %v7893 = vpop.f32.mrb[0].mxu0
    %v7894 = vadd.f32 0.0, %v7893
    %v7895 = vpop.f32.mrb[0].mxu0
    %v7896 = vpop.f32.mrb[0].mxu0
    %v7897 = vadd.f32 0.0, %v7896
    %v7898 = vpop.f32.mrb[0].mxu0
    %7899 = vmatprep.mubr.bf16.mxu0 0
    %7900 = vmatmul.mubr.bf16.gmra.mrb[0].mxu0 %v7707
    %v7901 = vpop.f32.mrb[0].mxu0
    %v7902 = vadd.f32 0.0, %v7901
    %v7903 = vpop.f32.mrb[0].mxu0
    %v7904 = vpop.f32.mrb[0].mxu0
    %v7905 = vadd.f32 0.0, %v7904
    %v7906 = vpop.f32.mrb[0].mxu0
    %7907 = vmatprep.mubr.bf16.mxu0 0
    %7908 = vmatmul.mubr.bf16.gmra.mrb[0].mxu0 %v7710
    %v7909 = vpop.f32.mrb[0].mxu0
    %v7910 = vadd.f32 0.0, %v7909
    %v7911 = vpop.f32.mrb[0].mxu0
    %v7912 = vpop.f32.mrb[0].mxu0
    %v7913 = vadd.f32 0.0, %v7912
    %v7914 = vpop.f32.mrb[0].mxu0
    %7915 = vmatprep.mubr.bf16.mxu0 0
    %7916 = vmatmul.mubr.bf16.gmra.mrb[0].mxu0 %v7713
    %v7917 = vpop.f32.mrb[0].mxu0
    %v7918 = vadd.f32 0.0, %v7917
    %v7919 = vpop.f32.mrb[0].mxu0
    %v7920 = vpop.f32.mrb[0].mxu0
    %v7921 = vadd.f32 0.0, %v7920
    %v7922 = vpop.f32.mrb[0].mxu0
    %7923 = vmatprep.mubr.bf16.mxu0 0
    %7924 = vmatmul.mubr.bf16.gmra.mrb[0].mxu0 %v7716
    %v7925 = vpop.f32.mrb[0].mxu0
    %v7926 = vadd.f32 0.0, %v7925
    %v7927 = vpop.f32.mrb[0].mxu0
    %v7928 = vpop.f32.mrb[0].mxu0
    %v7929 = vadd.f32 0.0, %v7928
    %v7930 = vpop.f32.mrb[0].mxu0
    %7931 = vmatprep.mubr.bf16.mxu0 0
    %7932 = vmatmul.mubr.bf16.gmra.mrb[0].mxu0 %v7719
    %v7933 = vpop.f32.mrb[0].mxu0
    %v7934 = vadd.f32 0.0, %v7933
    %v7935 = vpop.f32.mrb[0].mxu0
    %v7936 = vpop.f32.mrb[0].mxu0
    %v7937 = vadd.f32 0.0, %v7936
    %v7938 = vpop.f32.mrb[0].mxu0
    %7939 = vmatprep.mubr.bf16.mxu0 0
    %7940 = vmatmul.mubr.bf16.gmra.mrb[0].mxu0 %v7722
    %v7941 = vpop.f32.mrb[0].mxu0
    %v7942 = vadd.f32 0.0, %v7941
    %v7943 = vpop.f32.mrb[0].mxu0
    %v7944 = vpop.f32.mrb[0].mxu0
    %v7945 = vadd.f32 0.0, %v7944
    %v7946 = vpop.f32.mrb[0].mxu0
    %7947 = vmatprep.mubr.bf16.mxu0 0
    %7948 = vmatmul.mubr.bf16.gmra.mrb[0].mxu0 %v7725
    %v7949 = vpop.f32.mrb[0].mxu0
    %v7950 = vadd.f32 0.0, %v7949
    %v7951 = vpop.f32.mrb[0].mxu0
    %v7952 = vpop.f32.mrb[0].mxu0
    %v7953 = vadd.f32 0.0, %v7952
    %v7954 = vpop.f32.mrb[0].mxu0
    %7955 = vmatprep.mubr.bf16.mxu0 0
    %7956 = vmatmul.mubr.bf16.gmra.mrb[0].mxu0 %v7728
    %v7957 = vpop.f32.mrb[0].mxu0
    %v7958 = vadd.f32 0.0, %v7957
    %v7959 = vpop.f32.mrb[0].mxu0
    %v7960 = vpop.f32.mrb[0].mxu0
    %v7961 = vadd.f32 0.0, %v7960
    %v7962 = vpop.f32.mrb[0].mxu0
    %7963 = vmatprep.mubr.bf16.mxu0 0
    %7964 = vmatmul.mubr.bf16.gmra.mrb[0].mxu0 %v7731
    %v7965 = vpop.f32.mrb[0].mxu0
    %v7966 = vadd.f32 0.0, %v7965
    %v7967 = vpop.f32.mrb[0].mxu0
    %v7968 = vpop.f32.mrb[0].mxu0
    %v7969 = vadd.f32 0.0, %v7968
    %v7970 = vpop.f32.mrb[0].mxu0
    %7971 = vmatprep.mubr.bf16.mxu0 0
    %7972 = vmatmul.mubr.bf16.gmra.mrb[0].mxu0 %v7734
    %v7973 = vpop.f32.mrb[0].mxu0
    %v7974 = vadd.f32 0.0, %v7973
    %v7975 = vpop.f32.mrb[0].mxu0
    %v7976 = vpop.f32.mrb[0].mxu0
    %v7977 = vadd.f32 0.0, %v7976
    %v7978 = vpop.f32.mrb[0].mxu0
    %7979 = vmatprep.mubr.bf16.mxu0 0
    %7980 = vmatmul.mubr.bf16.gmra.mrb[0].mxu0 %v7737
    %v7981 = vpop.f32.mrb[0].mxu0
    %v7982 = vadd.f32 0.0, %v7981
    %v7983 = vpop.f32.mrb[0].mxu0
    %v7984 = vpop.f32.mrb[0].mxu0
    %v7985 = vadd.f32 0.0, %v7984
    %v7986 = vpop.f32.mrb[0].mxu0
    %7987 = vmatprep.mubr.bf16.mxu0 0
    %7988 = vmatmul.mubr.bf16.gmra.mrb[0].mxu0 %v7740
    %v7989 = vpop.f32.mrb[0].mxu0
    %v7990 = vadd.f32 0.0, %v7989
    %v7991 = vpop.f32.mrb[0].mxu0
    %v7992 = vpop.f32.mrb[0].mxu0
    %v7993 = vadd.f32 0.0, %v7992
    %v7994 = vpop.f32.mrb[0].mxu0
    %7995 = vmatprep.mubr.bf16.mxu0 0
    %7996 = vmatmul.mubr.bf16.gmra.mrb[0].mxu0 %v7743
    %v7997 = vpop.f32.mrb[0].mxu0
    %v7998 = vadd.f32 0.0, %v7997
    %v7999 = vpop.f32.mrb[0].mxu0
    %v8000 = vpop.f32.mrb[0].mxu0
    %v8001 = vadd.f32 0.0, %v8000
    %v8002 = vpop.f32.mrb[0].mxu0
    %8003 = vmatprep.mubr.bf16.mxu0 0
    %8004 = vmatmul.mubr.bf16.gmra.mrb[0].mxu0 %v7746
    %v8005 = vpop.f32.mrb[0].mxu0
    %v8006 = vadd.f32 0.0, %v8005
    %v8007 = vpop.f32.mrb[0].mxu0
    %v8008 = vpop.f32.mrb[0].mxu0
    %v8009 = vadd.f32 0.0, %v8008
    %v8010 = vpop.f32.mrb[0].mxu0
    %8011 = vmatprep.mubr.bf16.mxu0 0
    %8012 = vmatmul.mubr.bf16.gmra.mrb[0].mxu0 %v7749
    %v8013 = vpop.f32.mrb[0].mxu0
    %v8014 = vadd.f32 0.0, %v8013
    %v8015 = vpop.f32.mrb[0].mxu0
    %v8016 = vpop.f32.mrb[0].mxu0
    %v8017 = vadd.f32 0.0, %v8016
    %v8018 = vpop.f32.mrb[0].mxu0
    %8019 = vmatprep.mubr.bf16.mxu0 0
    %8020 = vmatmul.mubr.bf16.gmra.mrb[0].mxu0 %v7752
    %v8021 = vpop.f32.mrb[0].mxu0
    %v8022 = vadd.f32 0.0, %v8021
    %v8023 = vpop.f32.mrb[0].mxu0
    %v8024 = vpop.f32.mrb[0].mxu0
    %v8025 = vadd.f32 0.0, %v8024
    %v8026 = vpop.f32.mrb[0].mxu0
    %8027 = vmatprep.mubr.bf16.mxu0 0
    %8028 = vmatmul.mubr.bf16.gmra.mrb[0].mxu0 %v7755
    %v8029 = vpop.f32.mrb[0].mxu0
    %v8030 = vadd.f32 0.0, %v8029
    %v8031 = vpop.f32.mrb[0].mxu0
    %v8032 = vpop.f32.mrb[0].mxu0
    %v8033 = vadd.f32 0.0, %v8032
    %v8034 = vpop.f32.mrb[0].mxu0
    %8035 = vmatprep.mubr.bf16.mxu0 0
    %8036 = vmatmul.mubr.bf16.gmra.mrb[0].mxu0 %v7758
    %v8037 = vpop.f32.mrb[0].mxu0
    %v8038 = vadd.f32 0.0, %v8037
    %v8039 = vpop.f32.mrb[0].mxu0
    %v8040 = vpop.f32.mrb[0].mxu0
    %v8041 = vadd.f32 0.0, %v8040
    %v8042 = vpop.f32.mrb[0].mxu0
    %8043 = vmatprep.mubr.bf16.mxu0 0
    %8044 = vmatmul.mubr.bf16.gmra.mrb[0].mxu0 %v7761
    %v8045 = vpop.f32.mrb[0].mxu0
    %v8046 = vadd.f32 0.0, %v8045
    %v8047 = vpop.f32.mrb[0].mxu0
    %v8048 = vpop.f32.mrb[0].mxu0
    %v8049 = vadd.f32 0.0, %v8048
    %v8050 = vpop.f32.mrb[0].mxu0
    %8051 = vdwg.mxu0
    %v8052 = vadd.f32 %v7139, %v7798
    %v8053 = vadd.f32 %v7140, %v7801
    %v8054 = vadd.f32 %v7141, %v7806
    %v8055 = vadd.f32 %v7142, %v7809
    %v8056 = vadd.f32 %v7143, %v7814
    %v8057 = vadd.f32 %v7144, %v7817
    %v8058 = vadd.f32 %v7145, %v7822
    %v8059 = vadd.f32 %v7146, %v7825
    %v8060 = vadd.f32 %v7147, %v7830
    %v8061 = vadd.f32 %v7148, %v7833
    %v8062 = vadd.f32 %v7149, %v7838
    %v8063 = vadd.f32 %v7150, %v7841
    %v8064 = vadd.f32 %v7151, %v7846
    %v8065 = vadd.f32 %v7152, %v7849
    %v8066 = vadd.f32 %v7153, %v7854
    %v8067 = vadd.f32 %v7154, %v7857
    %v8068 = vadd.f32 %v7155, %v7862
    %v8069 = vadd.f32 %v7156, %v7865
    %v8070 = vadd.f32 %v7157, %v7870
    %v8071 = vadd.f32 %v7158, %v7873
    %v8072 = vadd.f32 %v7159, %v7878
    %v8073 = vadd.f32 %v7160, %v7881
    %v8074 = vadd.f32 %v7161, %v7886
    %v8075 = vadd.f32 %v7162, %v7889
    %v8076 = vadd.f32 %v7163, %v7894
    %v8077 = vadd.f32 %v7164, %v7897
    %v8078 = vadd.f32 %v7165, %v7902
    %v8079 = vadd.f32 %v7166, %v7905
    %v8080 = vadd.f32 %v7167, %v7910
    %v8081 = vadd.f32 %v7168, %v7913
    %v8082 = vadd.f32 %v7169, %v7918
    %v8083 = vadd.f32 %v7170, %v7921
    %v8084 = vadd.f32 %v7171, %v7926
    %v8085 = vadd.f32 %v7172, %v7929
    %v8086 = vadd.f32 %v7173, %v7934
    %v8087 = vadd.f32 %v7174, %v7937
    %v8088 = vadd.f32 %v7175, %v7942
    %v8089 = vadd.f32 %v7176, %v7945
    %v8090 = vadd.f32 %v7177, %v7950
    %v8091 = vadd.f32 %v7178, %v7953
    %v8092 = vadd.f32 %v7179, %v7958
    %v8093 = vadd.f32 %v7180, %v7961
    %v8094 = vadd.f32 %v7181, %v7966
    %v8095 = vadd.f32 %v7182, %v7969
    %v8096 = vadd.f32 %v7183, %v7974
    %v8097 = vadd.f32 %v7184, %v7977
    %v8098 = vadd.f32 %v7185, %v7982
    %v8099 = vadd.f32 %v7186, %v7985
    %v8100 = vadd.f32 %v7187, %v7990
    %v8101 = vadd.f32 %v7188, %v7993
    %v8102 = vadd.f32 %v7189, %v7998
    %v8103 = vadd.f32 %v7190, %v8001
    %v8104 = vadd.f32 %v7191, %v8006
    %v8105 = vadd.f32 %v7192, %v8009
    %v8106 = vadd.f32 %v7193, %v8014
    %v8107 = vadd.f32 %v7194, %v8017
    %v8108 = vadd.f32 %v7195, %v8022
    %v8109 = vadd.f32 %v7196, %v8025
    %v8110 = vadd.f32 %v7197, %v8030
    %v8111 = vadd.f32 %v7198, %v8033
    %v8112 = vadd.f32 %v7199, %v8038
    %v8113 = vadd.f32 %v7200, %v8041
    %v8114 = vadd.f32 %v7201, %v8046
    %v8115 = vadd.f32 %v7202, %v8049
    %s8116 = scalar_lea.vmem [#allocation2], 24
    %v8117 = vld [vmem:[%s8116] sm:$0xf]
    %v8118 = vld [vmem:[%s8116 + $0x4] sm:$0xf]
    %v8119 = vld [vmem:[%s8116 + $0xc] sm:$0xf]
    %v8120 = vld [vmem:[%s8116 + $0x10] sm:$0xf]
    %v8121 = vld [vmem:[%s8116 + $0x18] sm:$0xf]
    %v8122 = vld [vmem:[%s8116 + $0x1c] sm:$0xf]
    %v8123 = vld [vmem:[%s8116 + $0x24] sm:$0xf]
    %v8124 = vld [vmem:[%s8116 + $0x28] sm:$0xf]
    %v8125 = vld [vmem:[%s8116 + $0x30] sm:$0xf]
    %v8126 = vld [vmem:[%s8116 + $0x34] sm:$0xf]
    %v8127 = vld [vmem:[%s8116 + $0x3c] sm:$0xf]
    %v8128 = vld [vmem:[%s8116 + $0x40] sm:$0xf]
    %v8129 = vld [vmem:[%s8116 + $0x48] sm:$0xf]
    %v8130 = vld [vmem:[%s8116 + $0x4c] sm:$0xf]
    %v8131 = vld [vmem:[%s8116 + $0x54] sm:$0xf]
    %v8132 = vld [vmem:[%s8116 + $0x58] sm:$0xf]
    %v8133 = vld [vmem:[%s8116 + $0x60] sm:$0xf]
    %v8134 = vld [vmem:[%s8116 + $0x64] sm:$0xf]
    %v8135 = vld [vmem:[%s8116 + $0x6c] sm:$0xf]
    %v8136 = vld [vmem:[%s8116 + $0x70] sm:$0xf]
    %v8137 = vld [vmem:[%s8116 + $0x78] sm:$0xf]
    %v8138 = vld [vmem:[%s8116 + $0x7c] sm:$0xf]
    %v8139 = vld [vmem:[%s8116 + $0x84] sm:$0xf]
    %v8140 = vld [vmem:[%s8116 + $0x88] sm:$0xf]
    %v8141 = vld [vmem:[%s8116 + $0x90] sm:$0xf]
    %v8142 = vld [vmem:[%s8116 + $0x94] sm:$0xf]
    %v8143 = vld [vmem:[%s8116 + $0x9c] sm:$0xf]
    %v8144 = vld [vmem:[%s8116 + $0xa0] sm:$0xf]
    %v8145 = vld [vmem:[%s8116 + $0xa8] sm:$0xf]
    %v8146 = vld [vmem:[%s8116 + $0xac] sm:$0xf]
    %v8147 = vld [vmem:[%s8116 + $0xb4] sm:$0xf]
    %v8148 = vld [vmem:[%s8116 + $0xb8] sm:$0xf]
    %v8149 = vld [vmem:[%s8116 + $0xd8] sm:$0xf]
    %v8150 = vld [vmem:[%s8116 + $0xdc] sm:$0xf]
    %v8151 = vld [vmem:[%s8116 + $0xe4] sm:$0xf]
    %v8152 = vld [vmem:[%s8116 + $0xe8] sm:$0xf]
    %v8153 = vld [vmem:[%s8116 + $0xf0] sm:$0xf]
    %v8154 = vld [vmem:[%s8116 + $0xf4] sm:$0xf]
    %v8155 = vld [vmem:[%s8116 + $0xfc] sm:$0xf]
    %v8156 = vld [vmem:[%s8116 + $0x100] sm:$0xf]
    %v8157 = vld [vmem:[%s8116 + $0x108] sm:$0xf]
    %v8158 = vld [vmem:[%s8116 + $0x10c] sm:$0xf]
    %v8159 = vld [vmem:[%s8116 + $0x114] sm:$0xf]
    %v8160 = vld [vmem:[%s8116 + $0x118] sm:$0xf]
    %v8161 = vld [vmem:[%s8116 + $0x120] sm:$0xf]
    %v8162 = vld [vmem:[%s8116 + $0x124] sm:$0xf]
    %v8163 = vld [vmem:[%s8116 + $0x12c] sm:$0xf]
    %v8164 = vld [vmem:[%s8116 + $0x130] sm:$0xf]
    %v8165 = vld [vmem:[%s8116 + $0x138] sm:$0xf]
    %v8166 = vld [vmem:[%s8116 + $0x13c] sm:$0xf]
    %v8167 = vld [vmem:[%s8116 + $0x144] sm:$0xf]
    %v8168 = vld [vmem:[%s8116 + $0x148] sm:$0xf]
    %v8169 = vld [vmem:[%s8116 + $0x150] sm:$0xf]
    %v8170 = vld [vmem:[%s8116 + $0x154] sm:$0xf]
    %v8171 = vld [vmem:[%s8116 + $0x15c] sm:$0xf]
    %v8172 = vld [vmem:[%s8116 + $0x160] sm:$0xf]
    %v8173 = vld [vmem:[%s8116 + $0x168] sm:$0xf]
    %v8174 = vld [vmem:[%s8116 + $0x16c] sm:$0xf]
    %v8175 = vld [vmem:[%s8116 + $0x174] sm:$0xf]
    %v8176 = vld [vmem:[%s8116 + $0x178] sm:$0xf]
    %v8177 = vld [vmem:[%s8116 + $0x180] sm:$0xf]
    %v8178 = vld [vmem:[%s8116 + $0x184] sm:$0xf]
    %v8179 = vld [vmem:[%s8116 + $0x18c] sm:$0xf]
    %v8180 = vld [vmem:[%s8116 + $0x190] sm:$0xf]
    %v8181 = vld [vmem:[%s3 + $0x60] sm:$0xf]
    %v8182 = vld [vmem:[%s3 + $0x64] sm:$0xf]
    %v8183 = vld [vmem:[%s3 + $0x68] sm:$0xf]
    %v8184 = vld [vmem:[%s3 + $0x6c] sm:$0xf]
    %v8249 = vunpack.c.l.b16 %v8117
    %v8250 = vunpack.c.l.b16 %v8118
    %v8251 = vunpack.c.l.b16 %v8119
    %v8252 = vunpack.c.l.b16 %v8120
    %v8253 = vunpack.c.l.b16 %v8121
    %v8254 = vunpack.c.l.b16 %v8122
    %v8255 = vunpack.c.l.b16 %v8123
    %v8256 = vunpack.c.l.b16 %v8124
    %v8257 = vunpack.c.l.b16 %v8125
    %v8258 = vunpack.c.l.b16 %v8126
    %v8259 = vunpack.c.l.b16 %v8127
    %v8260 = vunpack.c.l.b16 %v8128
    %v8261 = vunpack.c.l.b16 %v8129
    %v8262 = vunpack.c.l.b16 %v8130
    %v8263 = vunpack.c.l.b16 %v8131
    %v8264 = vunpack.c.l.b16 %v8132
    %v8265 = vunpack.c.l.b16 %v8133
    %v8266 = vunpack.c.l.b16 %v8134
    %v8267 = vunpack.c.l.b16 %v8135
    %v8268 = vunpack.c.l.b16 %v8136
    %v8269 = vunpack.c.l.b16 %v8137
    %v8270 = vunpack.c.l.b16 %v8138
    %v8271 = vunpack.c.l.b16 %v8139
    %v8272 = vunpack.c.l.b16 %v8140
    %v8273 = vunpack.c.l.b16 %v8141
    %v8274 = vunpack.c.l.b16 %v8142
    %v8275 = vunpack.c.l.b16 %v8143
    %v8276 = vunpack.c.l.b16 %v8144
    %v8277 = vunpack.c.l.b16 %v8145
    %v8278 = vunpack.c.l.b16 %v8146
    %v8279 = vunpack.c.l.b16 %v8147
    %v8280 = vunpack.c.l.b16 %v8148
    %v8281 = vunpack.c.l.b16 %v8149
    %v8282 = vunpack.c.l.b16 %v8150
    %v8283 = vunpack.c.l.b16 %v8151
    %v8284 = vunpack.c.l.b16 %v8152
    %v8285 = vunpack.c.l.b16 %v8153
    %v8286 = vunpack.c.l.b16 %v8154
    %v8287 = vunpack.c.l.b16 %v8155
    %v8288 = vunpack.c.l.b16 %v8156
    %v8289 = vunpack.c.l.b16 %v8157
    %v8290 = vunpack.c.l.b16 %v8158
    %v8291 = vunpack.c.l.b16 %v8159
    %v8292 = vunpack.c.l.b16 %v8160
    %v8293 = vunpack.c.l.b16 %v8161
    %v8294 = vunpack.c.l.b16 %v8162
    %v8295 = vunpack.c.l.b16 %v8163
    %v8296 = vunpack.c.l.b16 %v8164
    %v8297 = vunpack.c.l.b16 %v8165
    %v8298 = vunpack.c.l.b16 %v8166
    %v8299 = vunpack.c.l.b16 %v8167
    %v8300 = vunpack.c.l.b16 %v8168
    %v8301 = vunpack.c.l.b16 %v8169
    %v8302 = vunpack.c.l.b16 %v8170
    %v8303 = vunpack.c.l.b16 %v8171
    %v8304 = vunpack.c.l.b16 %v8172
    %v8305 = vunpack.c.l.b16 %v8173
    %v8306 = vunpack.c.l.b16 %v8174
    %v8307 = vunpack.c.l.b16 %v8175
    %v8308 = vunpack.c.l.b16 %v8176
    %v8309 = vunpack.c.l.b16 %v8177
    %v8310 = vunpack.c.l.b16 %v8178
    %v8311 = vunpack.c.l.b16 %v8179
    %v8312 = vunpack.c.l.b16 %v8180
    %v8313 = vpack.c.b16 %v8250, %v8249
    %v8314 = vpack.c.b16 %v8252, %v8251
    %v8315 = vpack.c.b16 %v8254, %v8253
    %v8316 = vpack.c.b16 %v8256, %v8255
    %v8317 = vpack.c.b16 %v8258, %v8257
    %v8318 = vpack.c.b16 %v8260, %v8259
    %v8319 = vpack.c.b16 %v8262, %v8261
    %v8320 = vpack.c.b16 %v8264, %v8263
    %v8321 = vpack.c.b16 %v8266, %v8265
    %v8322 = vpack.c.b16 %v8268, %v8267
    %v8323 = vpack.c.b16 %v8270, %v8269
    %v8324 = vpack.c.b16 %v8272, %v8271
    %v8325 = vpack.c.b16 %v8274, %v8273
    %v8326 = vpack.c.b16 %v8276, %v8275
    %v8327 = vpack.c.b16 %v8278, %v8277
    %v8328 = vpack.c.b16 %v8280, %v8279
    %v8329 = vpack.c.b16 %v8282, %v8281
    %v8330 = vpack.c.b16 %v8284, %v8283
    %v8331 = vpack.c.b16 %v8286, %v8285
    %v8332 = vpack.c.b16 %v8288, %v8287
    %v8333 = vpack.c.b16 %v8290, %v8289
    %v8334 = vpack.c.b16 %v8292, %v8291
    %v8335 = vpack.c.b16 %v8294, %v8293
    %v8336 = vpack.c.b16 %v8296, %v8295
    %v8337 = vpack.c.b16 %v8298, %v8297
    %v8338 = vpack.c.b16 %v8300, %v8299
    %v8339 = vpack.c.b16 %v8302, %v8301
    %v8340 = vpack.c.b16 %v8304, %v8303
    %v8341 = vpack.c.b16 %v8306, %v8305
    %v8342 = vpack.c.b16 %v8308, %v8307
    %v8343 = vpack.c.b16 %v8310, %v8309
    %v8344 = vpack.c.b16 %v8312, %v8311
    %v8349 = vunpack.c.l.b16 %v8181
    %v8350 = vunpack.c.l.b16 %v8182
    %v8351 = vunpack.c.l.b16 %v8183
    %v8352 = vunpack.c.l.b16 %v8184
    %v8353 = vpack.c.b16 %v8350, %v8349
    %v8354 = vpack.c.b16 %v8352, %v8351
    %v8358 = vsel %vm3262, %v8313, 0
    %v8361 = vsel %vm3262, %v8314, 0
    %v8364 = vsel %vm3262, %v8315, 0
    %v8367 = vsel %vm3262, %v8316, 0
    %v8370 = vsel %vm3262, %v8317, 0
    %v8373 = vsel %vm3262, %v8318, 0
    %v8376 = vsel %vm3262, %v8319, 0
    %v8379 = vsel %vm3262, %v8320, 0
    %v8382 = vsel %vm3262, %v8321, 0
    %v8385 = vsel %vm3262, %v8322, 0
    %v8388 = vsel %vm3262, %v8323, 0
    %v8391 = vsel %vm3262, %v8324, 0
    %v8394 = vsel %vm3262, %v8325, 0
    %v8397 = vsel %vm3262, %v8326, 0
    %v8400 = vsel %vm3262, %v8327, 0
    %v8403 = vsel %vm3262, %v8328, 0
    %v8406 = vsel %vm3262, %v8329, 0
    %v8409 = vsel %vm3262, %v8330, 0
    %v8412 = vsel %vm3262, %v8331, 0
    %v8415 = vsel %vm3262, %v8332, 0
    %v8418 = vsel %vm3262, %v8333, 0
    %v8421 = vsel %vm3262, %v8334, 0
    %v8424 = vsel %vm3262, %v8335, 0
    %v8427 = vsel %vm3262, %v8336, 0
    %v8430 = vsel %vm3262, %v8337, 0
    %v8433 = vsel %vm3262, %v8338, 0
    %v8436 = vsel %vm3262, %v8339, 0
    %v8439 = vsel %vm3262, %v8340, 0
    %v8442 = vsel %vm3262, %v8341, 0
    %v8445 = vsel %vm3262, %v8342, 0
    %v8448 = vsel %vm3262, %v8343, 0
    %v8451 = vsel %vm3262, %v8344, 0
    %8453 = vmatprep.subr.bf16.mxu0 0
    %8454 = vmatpush1.bf16.msra.mxu0 %v8353
    %8455 = vmatprep.subr.bf16.mxu0 0
    %8456 = vmatpush1.bf16.msra.mxu0 %v8354
    %8457 = vmatprep.subr.bf16.mxu0 0
    %8458 = vmatpush1.bf16.msra.mxu0 0
    %8459 = vmatprep.subr.bf16.mxu0 0
    %8460 = vmatpush1.bf16.msra.mxu0 0
    %8461 = vmatprep.subr.bf16.mxu0 0
    %8462 = vmatpush1.bf16.msra.mxu0 0
    %8463 = vmatprep.subr.bf16.mxu0 0
    %8464 = vmatpush1.bf16.msra.mxu0 0
    %8465 = vmatprep.subr.bf16.mxu0 0
    %8466 = vmatpush1.bf16.msra.mxu0 0
    %8467 = vmatprep.subr.bf16.mxu0 0
    %8468 = vmatpush1.bf16.msra.mxu0 0
    %8469 = vmatprep.subr.bf16.mxu0 0
    %8470 = vmatpush1.bf16.msra.mxu0 0
    %8471 = vmatprep.subr.bf16.mxu0 0
    %8472 = vmatpush1.bf16.msra.mxu0 0
    %8473 = vmatprep.subr.bf16.mxu0 0
    %8474 = vmatpush1.bf16.msra.mxu0 0
    %8475 = vmatprep.subr.bf16.mxu0 0
    %8476 = vmatpush1.bf16.msra.mxu0 0
    %8477 = vmatprep.subr.bf16.mxu0 0
    %8478 = vmatpush1.bf16.msra.mxu0 0
    %8479 = vmatprep.subr.bf16.mxu0 0
    %8480 = vmatpush1.bf16.msra.mxu0 0
    %8481 = vmatprep.subr.bf16.mxu0 0
    %8482 = vmatpush1.bf16.msra.mxu0 0
    %8483 = vmatprep.subr.bf16.mxu0 0
    %8484 = vmatpush1.bf16.msra.mxu0 0
    %8485 = vmatprep.mubr.bf16.mxu0 0
    %8486 = vmatmul.mubr.bf16.gmra.mrb[0].mxu0 %v8358
    %v8487 = vpop.f32.mrb[0].mxu0
    %v8488 = vadd.f32 0.0, %v8487
    %v8489 = vpop.f32.mrb[0].mxu0
    %v8490 = vpop.f32.mrb[0].mxu0
    %v8491 = vadd.f32 0.0, %v8490
    %v8492 = vpop.f32.mrb[0].mxu0
    %8493 = vmatprep.mubr.bf16.mxu0 0
    %8494 = vmatmul.mubr.bf16.gmra.mrb[0].mxu0 %v8361
    %v8495 = vpop.f32.mrb[0].mxu0
    %v8496 = vadd.f32 0.0, %v8495
    %v8497 = vpop.f32.mrb[0].mxu0
    %v8498 = vpop.f32.mrb[0].mxu0
    %v8499 = vadd.f32 0.0, %v8498
    %v8500 = vpop.f32.mrb[0].mxu0
    %8501 = vmatprep.mubr.bf16.mxu0 0
    %8502 = vmatmul.mubr.bf16.gmra.mrb[0].mxu0 %v8364
    %v8503 = vpop.f32.mrb[0].mxu0
    %v8504 = vadd.f32 0.0, %v8503
    %v8505 = vpop.f32.mrb[0].mxu0
    %v8506 = vpop.f32.mrb[0].mxu0
    %v8507 = vadd.f32 0.0, %v8506
    %v8508 = vpop.f32.mrb[0].mxu0
    %8509 = vmatprep.mubr.bf16.mxu0 0
    %8510 = vmatmul.mubr.bf16.gmra.mrb[0].mxu0 %v8367
    %v8511 = vpop.f32.mrb[0].mxu0
    %v8512 = vadd.f32 0.0, %v8511
    %v8513 = vpop.f32.mrb[0].mxu0
    %v8514 = vpop.f32.mrb[0].mxu0
    %v8515 = vadd.f32 0.0, %v8514
    %v8516 = vpop.f32.mrb[0].mxu0
    %8517 = vmatprep.mubr.bf16.mxu0 0
    %8518 = vmatmul.mubr.bf16.gmra.mrb[0].mxu0 %v8370
    %v8519 = vpop.f32.mrb[0].mxu0
    %v8520 = vadd.f32 0.0, %v8519
    %v8521 = vpop.f32.mrb[0].mxu0
    %v8522 = vpop.f32.mrb[0].mxu0
    %v8523 = vadd.f32 0.0, %v8522
    %v8524 = vpop.f32.mrb[0].mxu0
    %8525 = vmatprep.mubr.bf16.mxu0 0
    %8526 = vmatmul.mubr.bf16.gmra.mrb[0].mxu0 %v8373
    %v8527 = vpop.f32.mrb[0].mxu0
    %v8528 = vadd.f32 0.0, %v8527
    %v8529 = vpop.f32.mrb[0].mxu0
    %v8530 = vpop.f32.mrb[0].mxu0
    %v8531 = vadd.f32 0.0, %v8530
    %v8532 = vpop.f32.mrb[0].mxu0
    %8533 = vmatprep.mubr.bf16.mxu0 0
    %8534 = vmatmul.mubr.bf16.gmra.mrb[0].mxu0 %v8376
    %v8535 = vpop.f32.mrb[0].mxu0
    %v8536 = vadd.f32 0.0, %v8535
    %v8537 = vpop.f32.mrb[0].mxu0
    %v8538 = vpop.f32.mrb[0].mxu0
    %v8539 = vadd.f32 0.0, %v8538
    %v8540 = vpop.f32.mrb[0].mxu0
    %8541 = vmatprep.mubr.bf16.mxu0 0
    %8542 = vmatmul.mubr.bf16.gmra.mrb[0].mxu0 %v8379
    %v8543 = vpop.f32.mrb[0].mxu0
    %v8544 = vadd.f32 0.0, %v8543
    %v8545 = vpop.f32.mrb[0].mxu0
    %v8546 = vpop.f32.mrb[0].mxu0
    %v8547 = vadd.f32 0.0, %v8546
    %v8548 = vpop.f32.mrb[0].mxu0
    %8549 = vmatprep.mubr.bf16.mxu0 0
    %8550 = vmatmul.mubr.bf16.gmra.mrb[0].mxu0 %v8382
    %v8551 = vpop.f32.mrb[0].mxu0
    %v8552 = vadd.f32 0.0, %v8551
    %v8553 = vpop.f32.mrb[0].mxu0
    %v8554 = vpop.f32.mrb[0].mxu0
    %v8555 = vadd.f32 0.0, %v8554
    %v8556 = vpop.f32.mrb[0].mxu0
    %8557 = vmatprep.mubr.bf16.mxu0 0
    %8558 = vmatmul.mubr.bf16.gmra.mrb[0].mxu0 %v8385
    %v8559 = vpop.f32.mrb[0].mxu0
    %v8560 = vadd.f32 0.0, %v8559
    %v8561 = vpop.f32.mrb[0].mxu0
    %v8562 = vpop.f32.mrb[0].mxu0
    %v8563 = vadd.f32 0.0, %v8562
    %v8564 = vpop.f32.mrb[0].mxu0
    %8565 = vmatprep.mubr.bf16.mxu0 0
    %8566 = vmatmul.mubr.bf16.gmra.mrb[0].mxu0 %v8388
    %v8567 = vpop.f32.mrb[0].mxu0
    %v8568 = vadd.f32 0.0, %v8567
    %v8569 = vpop.f32.mrb[0].mxu0
    %v8570 = vpop.f32.mrb[0].mxu0
    %v8571 = vadd.f32 0.0, %v8570
    %v8572 = vpop.f32.mrb[0].mxu0
    %8573 = vmatprep.mubr.bf16.mxu0 0
    %8574 = vmatmul.mubr.bf16.gmra.mrb[0].mxu0 %v8391
    %v8575 = vpop.f32.mrb[0].mxu0
    %v8576 = vadd.f32 0.0, %v8575
    %v8577 = vpop.f32.mrb[0].mxu0
    %v8578 = vpop.f32.mrb[0].mxu0
    %v8579 = vadd.f32 0.0, %v8578
    %v8580 = vpop.f32.mrb[0].mxu0
    %8581 = vmatprep.mubr.bf16.mxu0 0
    %8582 = vmatmul.mubr.bf16.gmra.mrb[0].mxu0 %v8394
    %v8583 = vpop.f32.mrb[0].mxu0
    %v8584 = vadd.f32 0.0, %v8583
    %v8585 = vpop.f32.mrb[0].mxu0
    %v8586 = vpop.f32.mrb[0].mxu0
    %v8587 = vadd.f32 0.0, %v8586
    %v8588 = vpop.f32.mrb[0].mxu0
    %8589 = vmatprep.mubr.bf16.mxu0 0
    %8590 = vmatmul.mubr.bf16.gmra.mrb[0].mxu0 %v8397
    %v8591 = vpop.f32.mrb[0].mxu0
    %v8592 = vadd.f32 0.0, %v8591
    %v8593 = vpop.f32.mrb[0].mxu0
    %v8594 = vpop.f32.mrb[0].mxu0
    %v8595 = vadd.f32 0.0, %v8594
    %v8596 = vpop.f32.mrb[0].mxu0
    %8597 = vmatprep.mubr.bf16.mxu0 0
    %8598 = vmatmul.mubr.bf16.gmra.mrb[0].mxu0 %v8400
    %v8599 = vpop.f32.mrb[0].mxu0
    %v8600 = vadd.f32 0.0, %v8599
    %v8601 = vpop.f32.mrb[0].mxu0
    %v8602 = vpop.f32.mrb[0].mxu0
    %v8603 = vadd.f32 0.0, %v8602
    %v8604 = vpop.f32.mrb[0].mxu0
    %8605 = vmatprep.mubr.bf16.mxu0 0
    %8606 = vmatmul.mubr.bf16.gmra.mrb[0].mxu0 %v8403
    %v8607 = vpop.f32.mrb[0].mxu0
    %v8608 = vadd.f32 0.0, %v8607
    %v8609 = vpop.f32.mrb[0].mxu0
    %v8610 = vpop.f32.mrb[0].mxu0
    %v8611 = vadd.f32 0.0, %v8610
    %v8612 = vpop.f32.mrb[0].mxu0
    %8613 = vmatprep.mubr.bf16.mxu0 0
    %8614 = vmatmul.mubr.bf16.gmra.mrb[0].mxu0 %v8406
    %v8615 = vpop.f32.mrb[0].mxu0
    %v8616 = vadd.f32 0.0, %v8615
    %v8617 = vpop.f32.mrb[0].mxu0
    %v8618 = vpop.f32.mrb[0].mxu0
    %v8619 = vadd.f32 0.0, %v8618
    %v8620 = vpop.f32.mrb[0].mxu0
    %8621 = vmatprep.mubr.bf16.mxu0 0
    %8622 = vmatmul.mubr.bf16.gmra.mrb[0].mxu0 %v8409
    %v8623 = vpop.f32.mrb[0].mxu0
    %v8624 = vadd.f32 0.0, %v8623
    %v8625 = vpop.f32.mrb[0].mxu0
    %v8626 = vpop.f32.mrb[0].mxu0
    %v8627 = vadd.f32 0.0, %v8626
    %v8628 = vpop.f32.mrb[0].mxu0
    %8629 = vmatprep.mubr.bf16.mxu0 0
    %8630 = vmatmul.mubr.bf16.gmra.mrb[0].mxu0 %v8412
    %v8631 = vpop.f32.mrb[0].mxu0
    %v8632 = vadd.f32 0.0, %v8631
    %v8633 = vpop.f32.mrb[0].mxu0
    %v8634 = vpop.f32.mrb[0].mxu0
    %v8635 = vadd.f32 0.0, %v8634
    %v8636 = vpop.f32.mrb[0].mxu0
    %8637 = vmatprep.mubr.bf16.mxu0 0
    %8638 = vmatmul.mubr.bf16.gmra.mrb[0].mxu0 %v8415
    %v8639 = vpop.f32.mrb[0].mxu0
    %v8640 = vadd.f32 0.0, %v8639
    %v8641 = vpop.f32.mrb[0].mxu0
    %v8642 = vpop.f32.mrb[0].mxu0
    %v8643 = vadd.f32 0.0, %v8642
    %v8644 = vpop.f32.mrb[0].mxu0
    %8645 = vmatprep.mubr.bf16.mxu0 0
    %8646 = vmatmul.mubr.bf16.gmra.mrb[0].mxu0 %v8418
    %v8647 = vpop.f32.mrb[0].mxu0
    %v8648 = vadd.f32 0.0, %v8647
    %v8649 = vpop.f32.mrb[0].mxu0
    %v8650 = vpop.f32.mrb[0].mxu0
    %v8651 = vadd.f32 0.0, %v8650
    %v8652 = vpop.f32.mrb[0].mxu0
    %8653 = vmatprep.mubr.bf16.mxu0 0
    %8654 = vmatmul.mubr.bf16.gmra.mrb[0].mxu0 %v8421
    %v8655 = vpop.f32.mrb[0].mxu0
    %v8656 = vadd.f32 0.0, %v8655
    %v8657 = vpop.f32.mrb[0].mxu0
    %v8658 = vpop.f32.mrb[0].mxu0
    %v8659 = vadd.f32 0.0, %v8658
    %v8660 = vpop.f32.mrb[0].mxu0
    %8661 = vmatprep.mubr.bf16.mxu0 0
    %8662 = vmatmul.mubr.bf16.gmra.mrb[0].mxu0 %v8424
    %v8663 = vpop.f32.mrb[0].mxu0
    %v8664 = vadd.f32 0.0, %v8663
    %v8665 = vpop.f32.mrb[0].mxu0
    %v8666 = vpop.f32.mrb[0].mxu0
    %v8667 = vadd.f32 0.0, %v8666
    %v8668 = vpop.f32.mrb[0].mxu0
    %8669 = vmatprep.mubr.bf16.mxu0 0
    %8670 = vmatmul.mubr.bf16.gmra.mrb[0].mxu0 %v8427
    %v8671 = vpop.f32.mrb[0].mxu0
    %v8672 = vadd.f32 0.0, %v8671
    %v8673 = vpop.f32.mrb[0].mxu0
    %v8674 = vpop.f32.mrb[0].mxu0
    %v8675 = vadd.f32 0.0, %v8674
    %v8676 = vpop.f32.mrb[0].mxu0
    %8677 = vmatprep.mubr.bf16.mxu0 0
    %8678 = vmatmul.mubr.bf16.gmra.mrb[0].mxu0 %v8430
    %v8679 = vpop.f32.mrb[0].mxu0
    %v8680 = vadd.f32 0.0, %v8679
    %v8681 = vpop.f32.mrb[0].mxu0
    %v8682 = vpop.f32.mrb[0].mxu0
    %v8683 = vadd.f32 0.0, %v8682
    %v8684 = vpop.f32.mrb[0].mxu0
    %8685 = vmatprep.mubr.bf16.mxu0 0
    %8686 = vmatmul.mubr.bf16.gmra.mrb[0].mxu0 %v8433
    %v8687 = vpop.f32.mrb[0].mxu0
    %v8688 = vadd.f32 0.0, %v8687
    %v8689 = vpop.f32.mrb[0].mxu0
    %v8690 = vpop.f32.mrb[0].mxu0
    %v8691 = vadd.f32 0.0, %v8690
    %v8692 = vpop.f32.mrb[0].mxu0
    %8693 = vmatprep.mubr.bf16.mxu0 0
    %8694 = vmatmul.mubr.bf16.gmra.mrb[0].mxu0 %v8436
    %v8695 = vpop.f32.mrb[0].mxu0
    %v8696 = vadd.f32 0.0, %v8695
    %v8697 = vpop.f32.mrb[0].mxu0
    %v8698 = vpop.f32.mrb[0].mxu0
    %v8699 = vadd.f32 0.0, %v8698
    %v8700 = vpop.f32.mrb[0].mxu0
    %8701 = vmatprep.mubr.bf16.mxu0 0
    %8702 = vmatmul.mubr.bf16.gmra.mrb[0].mxu0 %v8439
    %v8703 = vpop.f32.mrb[0].mxu0
    %v8704 = vadd.f32 0.0, %v8703
    %v8705 = vpop.f32.mrb[0].mxu0
    %v8706 = vpop.f32.mrb[0].mxu0
    %v8707 = vadd.f32 0.0, %v8706
    %v8708 = vpop.f32.mrb[0].mxu0
    %8709 = vmatprep.mubr.bf16.mxu0 0
    %8710 = vmatmul.mubr.bf16.gmra.mrb[0].mxu0 %v8442
    %v8711 = vpop.f32.mrb[0].mxu0
    %v8712 = vadd.f32 0.0, %v8711
    %v8713 = vpop.f32.mrb[0].mxu0
    %v8714 = vpop.f32.mrb[0].mxu0
    %v8715 = vadd.f32 0.0, %v8714
    %v8716 = vpop.f32.mrb[0].mxu0
    %8717 = vmatprep.mubr.bf16.mxu0 0
    %8718 = vmatmul.mubr.bf16.gmra.mrb[0].mxu0 %v8445
    %v8719 = vpop.f32.mrb[0].mxu0
    %v8720 = vadd.f32 0.0, %v8719
    %v8721 = vpop.f32.mrb[0].mxu0
    %v8722 = vpop.f32.mrb[0].mxu0
    %v8723 = vadd.f32 0.0, %v8722
    %v8724 = vpop.f32.mrb[0].mxu0
    %8725 = vmatprep.mubr.bf16.mxu0 0
    %8726 = vmatmul.mubr.bf16.gmra.mrb[0].mxu0 %v8448
    %v8727 = vpop.f32.mrb[0].mxu0
    %v8728 = vadd.f32 0.0, %v8727
    %v8729 = vpop.f32.mrb[0].mxu0
    %v8730 = vpop.f32.mrb[0].mxu0
    %v8731 = vadd.f32 0.0, %v8730
    %v8732 = vpop.f32.mrb[0].mxu0
    %8733 = vmatprep.mubr.bf16.mxu0 0
    %8734 = vmatmul.mubr.bf16.gmra.mrb[0].mxu0 %v8451
    %v8735 = vpop.f32.mrb[0].mxu0
    %v8736 = vadd.f32 0.0, %v8735
    %v8737 = vpop.f32.mrb[0].mxu0
    %v8738 = vpop.f32.mrb[0].mxu0
    %v8739 = vadd.f32 0.0, %v8738
    %v8740 = vpop.f32.mrb[0].mxu0
    %8741 = vdwg.mxu0
    %v8742 = vadd.f32 %v8052, %v8488
    %v8743 = vadd.f32 %v8053, %v8491
    %v8744 = vadd.f32 %v8054, %v8496
    %v8745 = vadd.f32 %v8055, %v8499
    %v8746 = vadd.f32 %v8056, %v8504
    %v8747 = vadd.f32 %v8057, %v8507
    %v8748 = vadd.f32 %v8058, %v8512
    %v8749 = vadd.f32 %v8059, %v8515
    %v8750 = vadd.f32 %v8060, %v8520
    %v8751 = vadd.f32 %v8061, %v8523
    %v8752 = vadd.f32 %v8062, %v8528
    %v8753 = vadd.f32 %v8063, %v8531
    %v8754 = vadd.f32 %v8064, %v8536
    %v8755 = vadd.f32 %v8065, %v8539
    %v8756 = vadd.f32 %v8066, %v8544
    %v8757 = vadd.f32 %v8067, %v8547
    %v8758 = vadd.f32 %v8068, %v8552
    %v8759 = vadd.f32 %v8069, %v8555
    %v8760 = vadd.f32 %v8070, %v8560
    %v8761 = vadd.f32 %v8071, %v8563
    %v8762 = vadd.f32 %v8072, %v8568
    %v8763 = vadd.f32 %v8073, %v8571
    %v8764 = vadd.f32 %v8074, %v8576
    %v8765 = vadd.f32 %v8075, %v8579
    %v8766 = vadd.f32 %v8076, %v8584
    %v8767 = vadd.f32 %v8077, %v8587
    %v8768 = vadd.f32 %v8078, %v8592
    %v8769 = vadd.f32 %v8079, %v8595
    %v8770 = vadd.f32 %v8080, %v8600
    %v8771 = vadd.f32 %v8081, %v8603
    %v8772 = vadd.f32 %v8082, %v8608
    %v8773 = vadd.f32 %v8083, %v8611
    %v8774 = vadd.f32 %v8084, %v8616
    %v8775 = vadd.f32 %v8085, %v8619
    %v8776 = vadd.f32 %v8086, %v8624
    %v8777 = vadd.f32 %v8087, %v8627
    %v8778 = vadd.f32 %v8088, %v8632
    %v8779 = vadd.f32 %v8089, %v8635
    %v8780 = vadd.f32 %v8090, %v8640
    %v8781 = vadd.f32 %v8091, %v8643
    %v8782 = vadd.f32 %v8092, %v8648
    %v8783 = vadd.f32 %v8093, %v8651
    %v8784 = vadd.f32 %v8094, %v8656
    %v8785 = vadd.f32 %v8095, %v8659
    %v8786 = vadd.f32 %v8096, %v8664
    %v8787 = vadd.f32 %v8097, %v8667
    %v8788 = vadd.f32 %v8098, %v8672
    %v8789 = vadd.f32 %v8099, %v8675
    %v8790 = vadd.f32 %v8100, %v8680
    %v8791 = vadd.f32 %v8101, %v8683
    %v8792 = vadd.f32 %v8102, %v8688
    %v8793 = vadd.f32 %v8103, %v8691
    %v8794 = vadd.f32 %v8104, %v8696
    %v8795 = vadd.f32 %v8105, %v8699
    %v8796 = vadd.f32 %v8106, %v8704
    %v8797 = vadd.f32 %v8107, %v8707
    %v8798 = vadd.f32 %v8108, %v8712
    %v8799 = vadd.f32 %v8109, %v8715
    %v8800 = vadd.f32 %v8110, %v8720
    %v8801 = vadd.f32 %v8111, %v8723
    %v8802 = vadd.f32 %v8112, %v8728
    %v8803 = vadd.f32 %v8113, %v8731
    %v8804 = vadd.f32 %v8114, %v8736
    %v8805 = vadd.f32 %v8115, %v8739
    %v8806 = vld [vmem:[%s8116] sm:$0xf]
    %v8807 = vld [vmem:[%s8116 + $0x4] sm:$0xf]
    %v8808 = vld [vmem:[%s8116 + $0x8] sm:$0x1]
    %v8809 = vld [vmem:[%s8116 + $0xc] sm:$0xf]
    %v8810 = vld [vmem:[%s8116 + $0x10] sm:$0xf]
    %v8811 = vld [vmem:[%s8116 + $0x14] sm:$0x1]
    %v8812 = vld [vmem:[%s8116 + $0x18] sm:$0xf]
    %v8813 = vld [vmem:[%s8116 + $0x1c] sm:$0xf]
    %v8814 = vld [vmem:[%s8116 + $0x20] sm:$0x1]
    %v8815 = vld [vmem:[%s8116 + $0x24] sm:$0xf]
    %v8816 = vld [vmem:[%s8116 + $0x28] sm:$0xf]
    %v8817 = vld [vmem:[%s8116 + $0x2c] sm:$0x1]
    %v8818 = vld [vmem:[%s8116 + $0x30] sm:$0xf]
    %v8819 = vld [vmem:[%s8116 + $0x34] sm:$0xf]
    %v8820 = vld [vmem:[%s8116 + $0x38] sm:$0x1]
    %v8821 = vld [vmem:[%s8116 + $0x3c] sm:$0xf]
    %v8822 = vld [vmem:[%s8116 + $0x40] sm:$0xf]
    %v8823 = vld [vmem:[%s8116 + $0x44] sm:$0x1]
    %v8824 = vld [vmem:[%s8116 + $0x48] sm:$0xf]
    %v8825 = vld [vmem:[%s8116 + $0x4c] sm:$0xf]
    %v8826 = vld [vmem:[%s8116 + $0x50] sm:$0x1]
    %v8827 = vld [vmem:[%s8116 + $0x54] sm:$0xf]
    %v8828 = vld [vmem:[%s8116 + $0x58] sm:$0xf]
    %v8829 = vld [vmem:[%s8116 + $0x5c] sm:$0x1]
    %v8830 = vld [vmem:[%s8116 + $0x60] sm:$0xf]
    %v8831 = vld [vmem:[%s8116 + $0x64] sm:$0xf]
    %v8832 = vld [vmem:[%s8116 + $0x68] sm:$0x1]
    %v8833 = vld [vmem:[%s8116 + $0x6c] sm:$0xf]
    %v8834 = vld [vmem:[%s8116 + $0x70] sm:$0xf]
    %v8835 = vld [vmem:[%s8116 + $0x74] sm:$0x1]
    %v8836 = vld [vmem:[%s8116 + $0x78] sm:$0xf]
    %v8837 = vld [vmem:[%s8116 + $0x7c] sm:$0xf]
    %v8838 = vld [vmem:[%s8116 + $0x80] sm:$0x1]
    %v8839 = vld [vmem:[%s8116 + $0x84] sm:$0xf]
    %v8840 = vld [vmem:[%s8116 + $0x88] sm:$0xf]
    %v8841 = vld [vmem:[%s8116 + $0x8c] sm:$0x1]
    %v8842 = vld [vmem:[%s8116 + $0x90] sm:$0xf]
    %v8843 = vld [vmem:[%s8116 + $0x94] sm:$0xf]
    %v8844 = vld [vmem:[%s8116 + $0x98] sm:$0x1]
    %v8845 = vld [vmem:[%s8116 + $0x9c] sm:$0xf]
    %v8846 = vld [vmem:[%s8116 + $0xa0] sm:$0xf]
    %v8847 = vld [vmem:[%s8116 + $0xa4] sm:$0x1]
    %v8848 = vld [vmem:[%s8116 + $0xa8] sm:$0xf]
    %v8849 = vld [vmem:[%s8116 + $0xac] sm:$0xf]
    %v8850 = vld [vmem:[%s8116 + $0xb0] sm:$0x1]
    %v8851 = vld [vmem:[%s8116 + $0xb4] sm:$0xf]
    %v8852 = vld [vmem:[%s8116 + $0xb8] sm:$0xf]
    %v8853 = vld [vmem:[%s8116 + $0xbc] sm:$0x1]
    %v8854 = vld [vmem:[%s8116 + $0xd8] sm:$0xf]
    %v8855 = vld [vmem:[%s8116 + $0xdc] sm:$0xf]
    %v8856 = vld [vmem:[%s8116 + $0xe0] sm:$0x1]
    %v8857 = vld [vmem:[%s8116 + $0xe4] sm:$0xf]
    %v8858 = vld [vmem:[%s8116 + $0xe8] sm:$0xf]
    %v8859 = vld [vmem:[%s8116 + $0xec] sm:$0x1]
    %v8860 = vld [vmem:[%s8116 + $0xf0] sm:$0xf]
    %v8861 = vld [vmem:[%s8116 + $0xf4] sm:$0xf]
    %v8862 = vld [vmem:[%s8116 + $0xf8] sm:$0x1]
    %v8863 = vld [vmem:[%s8116 + $0xfc] sm:$0xf]
    %v8864 = vld [vmem:[%s8116 + $0x100] sm:$0xf]
    %v8865 = vld [vmem:[%s8116 + $0x104] sm:$0x1]
    %v8866 = vld [vmem:[%s8116 + $0x108] sm:$0xf]
    %v8867 = vld [vmem:[%s8116 + $0x10c] sm:$0xf]
    %v8868 = vld [vmem:[%s8116 + $0x110] sm:$0x1]
    %v8869 = vld [vmem:[%s8116 + $0x114] sm:$0xf]
    %v8870 = vld [vmem:[%s8116 + $0x118] sm:$0xf]
    %v8871 = vld [vmem:[%s8116 + $0x11c] sm:$0x1]
    %v8872 = vld [vmem:[%s8116 + $0x120] sm:$0xf]
    %v8873 = vld [vmem:[%s8116 + $0x124] sm:$0xf]
    %v8874 = vld [vmem:[%s8116 + $0x128] sm:$0x1]
    %v8875 = vld [vmem:[%s8116 + $0x12c] sm:$0xf]
    %v8876 = vld [vmem:[%s8116 + $0x130] sm:$0xf]
    %v8877 = vld [vmem:[%s8116 + $0x134] sm:$0x1]
    %v8878 = vld [vmem:[%s8116 + $0x138] sm:$0xf]
    %v8879 = vld [vmem:[%s8116 + $0x13c] sm:$0xf]
    %v8880 = vld [vmem:[%s8116 + $0x140] sm:$0x1]
    %v8881 = vld [vmem:[%s8116 + $0x144] sm:$0xf]
    %v8882 = vld [vmem:[%s8116 + $0x148] sm:$0xf]
    %v8883 = vld [vmem:[%s8116 + $0x14c] sm:$0x1]
    %v8884 = vld [vmem:[%s8116 + $0x150] sm:$0xf]
    %v8885 = vld [vmem:[%s8116 + $0x154] sm:$0xf]
    %v8886 = vld [vmem:[%s8116 + $0x158] sm:$0x1]
    %v8887 = vld [vmem:[%s8116 + $0x15c] sm:$0xf]
    %v8888 = vld [vmem:[%s8116 + $0x160] sm:$0xf]
    %v8889 = vld [vmem:[%s8116 + $0x164] sm:$0x1]
    %v8890 = vld [vmem:[%s8116 + $0x168] sm:$0xf]
    %v8891 = vld [vmem:[%s8116 + $0x16c] sm:$0xf]
    %v8892 = vld [vmem:[%s8116 + $0x170] sm:$0x1]
    %v8893 = vld [vmem:[%s8116 + $0x174] sm:$0xf]
    %v8894 = vld [vmem:[%s8116 + $0x178] sm:$0xf]
    %v8895 = vld [vmem:[%s8116 + $0x17c] sm:$0x1]
    %v8896 = vld [vmem:[%s8116 + $0x180] sm:$0xf]
    %v8897 = vld [vmem:[%s8116 + $0x184] sm:$0xf]
    %v8898 = vld [vmem:[%s8116 + $0x188] sm:$0x1]
    %v8899 = vld [vmem:[%s8116 + $0x18c] sm:$0xf]
    %v8900 = vld [vmem:[%s8116 + $0x190] sm:$0xf]
    %v8901 = vld [vmem:[%s8116 + $0x194] sm:$0x1]
    %v8903 = vshrl.u32 %v8806, 16
    %v8905 = vrot.slane %v8903, 4
    %v8906 = vshll.u32 %v8806, 16
    %v8908 = vrot.slane %v8906, 5
    %v8909 = vor.u32 %v8905, %v8908
    %v8910 = vrot.slane %v8909, 4
    %v8912 = vshll.u32 %v8807, 16
    %v8914 = vrot.slane %v8912, 5
    %v8915 = vsel %vm2381, %v8910, %v8914
    %v8916 = vshrl.u32 %v8807, 16
    %v8918 = vrot.slane %v8916, 4
    %v8919 = vor.u32 %v8918, %v8914
    %v8920 = vrot.slane %v8919, 4
    %v8922 = vshll.u32 %v8808, 16
    %v8924 = vrot.slane %v8922, 5
    %v8925 = vsel %vm2381, %v8920, %v8924
    %v8927 = vshrl.u32 %v8809, 16
    %v8929 = vrot.slane %v8927, 4
    %v8930 = vshll.u32 %v8809, 16
    %v8932 = vrot.slane %v8930, 5
    %v8933 = vor.u32 %v8929, %v8932
    %v8934 = vrot.slane %v8933, 4
    %v8936 = vshll.u32 %v8810, 16
    %v8938 = vrot.slane %v8936, 5
    %v8939 = vsel %vm2381, %v8934, %v8938
    %v8940 = vshrl.u32 %v8810, 16
    %v8942 = vrot.slane %v8940, 4
    %v8943 = vor.u32 %v8942, %v8938
    %v8944 = vrot.slane %v8943, 4
    %v8946 = vshll.u32 %v8811, 16
    %v8948 = vrot.slane %v8946, 5
    %v8949 = vsel %vm2381, %v8944, %v8948
    %v8951 = vshrl.u32 %v8812, 16
    %v8953 = vrot.slane %v8951, 4
    %v8954 = vshll.u32 %v8812, 16
    %v8956 = vrot.slane %v8954, 5
    %v8957 = vor.u32 %v8953, %v8956
    %v8958 = vrot.slane %v8957, 4
    %v8960 = vshll.u32 %v8813, 16
    %v8962 = vrot.slane %v8960, 5
    %v8963 = vsel %vm2381, %v8958, %v8962
    %v8964 = vshrl.u32 %v8813, 16
    %v8966 = vrot.slane %v8964, 4
    %v8967 = vor.u32 %v8966, %v8962
    %v8968 = vrot.slane %v8967, 4
    %v8970 = vshll.u32 %v8814, 16
    %v8972 = vrot.slane %v8970, 5
    %v8973 = vsel %vm2381, %v8968, %v8972
    %v8975 = vshrl.u32 %v8815, 16
    %v8977 = vrot.slane %v8975, 4
    %v8978 = vshll.u32 %v8815, 16
    %v8980 = vrot.slane %v8978, 5
    %v8981 = vor.u32 %v8977, %v8980
    %v8982 = vrot.slane %v8981, 4
    %v8984 = vshll.u32 %v8816, 16
    %v8986 = vrot.slane %v8984, 5
    %v8987 = vsel %vm2381, %v8982, %v8986
    %v8988 = vshrl.u32 %v8816, 16
    %v8990 = vrot.slane %v8988, 4
    %v8991 = vor.u32 %v8990, %v8986
    %v8992 = vrot.slane %v8991, 4
    %v8994 = vshll.u32 %v8817, 16
    %v8996 = vrot.slane %v8994, 5
    %v8997 = vsel %vm2381, %v8992, %v8996
    %v8999 = vshrl.u32 %v8818, 16
    %v9001 = vrot.slane %v8999, 4
    %v9002 = vshll.u32 %v8818, 16
    %v9004 = vrot.slane %v9002, 5
    %v9005 = vor.u32 %v9001, %v9004
    %v9006 = vrot.slane %v9005, 4
    %v9008 = vshll.u32 %v8819, 16
    %v9010 = vrot.slane %v9008, 5
    %v9011 = vsel %vm2381, %v9006, %v9010
    %v9012 = vshrl.u32 %v8819, 16
    %v9014 = vrot.slane %v9012, 4
    %v9015 = vor.u32 %v9014, %v9010
    %v9016 = vrot.slane %v9015, 4
    %v9018 = vshll.u32 %v8820, 16
    %v9020 = vrot.slane %v9018, 5
    %v9021 = vsel %vm2381, %v9016, %v9020
    %v9023 = vshrl.u32 %v8821, 16
    %v9025 = vrot.slane %v9023, 4
    %v9026 = vshll.u32 %v8821, 16
    %v9028 = vrot.slane %v9026, 5
    %v9029 = vor.u32 %v9025, %v9028
    %v9030 = vrot.slane %v9029, 4
    %v9032 = vshll.u32 %v8822, 16
    %v9034 = vrot.slane %v9032, 5
    %v9035 = vsel %vm2381, %v9030, %v9034
    %v9036 = vshrl.u32 %v8822, 16
    %v9038 = vrot.slane %v9036, 4
    %v9039 = vor.u32 %v9038, %v9034
    %v9040 = vrot.slane %v9039, 4
    %v9042 = vshll.u32 %v8823, 16
    %v9044 = vrot.slane %v9042, 5
    %v9045 = vsel %vm2381, %v9040, %v9044
    %v9047 = vshrl.u32 %v8824, 16
    %v9049 = vrot.slane %v9047, 4
    %v9050 = vshll.u32 %v8824, 16
    %v9052 = vrot.slane %v9050, 5
    %v9053 = vor.u32 %v9049, %v9052
    %v9054 = vrot.slane %v9053, 4
    %v9056 = vshll.u32 %v8825, 16
    %v9058 = vrot.slane %v9056, 5
    %v9059 = vsel %vm2381, %v9054, %v9058
    %v9060 = vshrl.u32 %v8825, 16
    %v9062 = vrot.slane %v9060, 4
    %v9063 = vor.u32 %v9062, %v9058
    %v9064 = vrot.slane %v9063, 4
    %v9066 = vshll.u32 %v8826, 16
    %v9068 = vrot.slane %v9066, 5
    %v9069 = vsel %vm2381, %v9064, %v9068
    %v9071 = vshrl.u32 %v8827, 16
    %v9073 = vrot.slane %v9071, 4
    %v9074 = vshll.u32 %v8827, 16
    %v9076 = vrot.slane %v9074, 5
    %v9077 = vor.u32 %v9073, %v9076
    %v9078 = vrot.slane %v9077, 4
    %v9080 = vshll.u32 %v8828, 16
    %v9082 = vrot.slane %v9080, 5
    %v9083 = vsel %vm2381, %v9078, %v9082
    %v9084 = vshrl.u32 %v8828, 16
    %v9086 = vrot.slane %v9084, 4
    %v9087 = vor.u32 %v9086, %v9082
    %v9088 = vrot.slane %v9087, 4
    %v9090 = vshll.u32 %v8829, 16
    %v9092 = vrot.slane %v9090, 5
    %v9093 = vsel %vm2381, %v9088, %v9092
    %v9095 = vshrl.u32 %v8830, 16
    %v9097 = vrot.slane %v9095, 4
    %v9098 = vshll.u32 %v8830, 16
    %v9100 = vrot.slane %v9098, 5
    %v9101 = vor.u32 %v9097, %v9100
    %v9102 = vrot.slane %v9101, 4
    %v9104 = vshll.u32 %v8831, 16
    %v9106 = vrot.slane %v9104, 5
    %v9107 = vsel %vm2381, %v9102, %v9106
    %v9108 = vshrl.u32 %v8831, 16
    %v9110 = vrot.slane %v9108, 4
    %v9111 = vor.u32 %v9110, %v9106
    %v9112 = vrot.slane %v9111, 4
    %v9114 = vshll.u32 %v8832, 16
    %v9116 = vrot.slane %v9114, 5
    %v9117 = vsel %vm2381, %v9112, %v9116
    %v9119 = vshrl.u32 %v8833, 16
    %v9121 = vrot.slane %v9119, 4
    %v9122 = vshll.u32 %v8833, 16
    %v9124 = vrot.slane %v9122, 5
    %v9125 = vor.u32 %v9121, %v9124
    %v9126 = vrot.slane %v9125, 4
    %v9128 = vshll.u32 %v8834, 16
    %v9130 = vrot.slane %v9128, 5
    %v9131 = vsel %vm2381, %v9126, %v9130
    %v9132 = vshrl.u32 %v8834, 16
    %v9134 = vrot.slane %v9132, 4
    %v9135 = vor.u32 %v9134, %v9130
    %v9136 = vrot.slane %v9135, 4
    %v9138 = vshll.u32 %v8835, 16
    %v9140 = vrot.slane %v9138, 5
    %v9141 = vsel %vm2381, %v9136, %v9140
    %v9143 = vshrl.u32 %v8836, 16
    %v9145 = vrot.slane %v9143, 4
    %v9146 = vshll.u32 %v8836, 16
    %v9148 = vrot.slane %v9146, 5
    %v9149 = vor.u32 %v9145, %v9148
    %v9150 = vrot.slane %v9149, 4
    %v9152 = vshll.u32 %v8837, 16
    %v9154 = vrot.slane %v9152, 5
    %v9155 = vsel %vm2381, %v9150, %v9154
    %v9156 = vshrl.u32 %v8837, 16
    %v9158 = vrot.slane %v9156, 4
    %v9159 = vor.u32 %v9158, %v9154
    %v9160 = vrot.slane %v9159, 4
    %v9162 = vshll.u32 %v8838, 16
    %v9164 = vrot.slane %v9162, 5
    %v9165 = vsel %vm2381, %v9160, %v9164
    %v9167 = vshrl.u32 %v8839, 16
    %v9169 = vrot.slane %v9167, 4
    %v9170 = vshll.u32 %v8839, 16
    %v9172 = vrot.slane %v9170, 5
    %v9173 = vor.u32 %v9169, %v9172
    %v9174 = vrot.slane %v9173, 4
    %v9176 = vshll.u32 %v8840, 16
    %v9178 = vrot.slane %v9176, 5
    %v9179 = vsel %vm2381, %v9174, %v9178
    %v9180 = vshrl.u32 %v8840, 16
    %v9182 = vrot.slane %v9180, 4
    %v9183 = vor.u32 %v9182, %v9178
    %v9184 = vrot.slane %v9183, 4
    %v9186 = vshll.u32 %v8841, 16
    %v9188 = vrot.slane %v9186, 5
    %v9189 = vsel %vm2381, %v9184, %v9188
    %v9191 = vshrl.u32 %v8842, 16
    %v9193 = vrot.slane %v9191, 4
    %v9194 = vshll.u32 %v8842, 16
    %v9196 = vrot.slane %v9194, 5
    %v9197 = vor.u32 %v9193, %v9196
    %v9198 = vrot.slane %v9197, 4
    %v9200 = vshll.u32 %v8843, 16
    %v9202 = vrot.slane %v9200, 5
    %v9203 = vsel %vm2381, %v9198, %v9202
    %v9204 = vshrl.u32 %v8843, 16
    %v9206 = vrot.slane %v9204, 4
    %v9207 = vor.u32 %v9206, %v9202
    %v9208 = vrot.slane %v9207, 4
    %v9210 = vshll.u32 %v8844, 16
    %v9212 = vrot.slane %v9210, 5
    %v9213 = vsel %vm2381, %v9208, %v9212
    %v9215 = vshrl.u32 %v8845, 16
    %v9217 = vrot.slane %v9215, 4
    %v9218 = vshll.u32 %v8845, 16
    %v9220 = vrot.slane %v9218, 5
    %v9221 = vor.u32 %v9217, %v9220
    %v9222 = vrot.slane %v9221, 4
    %v9224 = vshll.u32 %v8846, 16
    %v9226 = vrot.slane %v9224, 5
    %v9227 = vsel %vm2381, %v9222, %v9226
    %v9228 = vshrl.u32 %v8846, 16
    %v9230 = vrot.slane %v9228, 4
    %v9231 = vor.u32 %v9230, %v9226
    %v9232 = vrot.slane %v9231, 4
    %v9234 = vshll.u32 %v8847, 16
    %v9236 = vrot.slane %v9234, 5
    %v9237 = vsel %vm2381, %v9232, %v9236
    %v9239 = vshrl.u32 %v8848, 16
    %v9241 = vrot.slane %v9239, 4
    %v9242 = vshll.u32 %v8848, 16
    %v9244 = vrot.slane %v9242, 5
    %v9245 = vor.u32 %v9241, %v9244
    %v9246 = vrot.slane %v9245, 4
    %v9248 = vshll.u32 %v8849, 16
    %v9250 = vrot.slane %v9248, 5
    %v9251 = vsel %vm2381, %v9246, %v9250
    %v9252 = vshrl.u32 %v8849, 16
    %v9254 = vrot.slane %v9252, 4
    %v9255 = vor.u32 %v9254, %v9250
    %v9256 = vrot.slane %v9255, 4
    %v9258 = vshll.u32 %v8850, 16
    %v9260 = vrot.slane %v9258, 5
    %v9261 = vsel %vm2381, %v9256, %v9260
    %v9263 = vshrl.u32 %v8851, 16
    %v9265 = vrot.slane %v9263, 4
    %v9266 = vshll.u32 %v8851, 16
    %v9268 = vrot.slane %v9266, 5
    %v9269 = vor.u32 %v9265, %v9268
    %v9270 = vrot.slane %v9269, 4
    %v9272 = vshll.u32 %v8852, 16
    %v9274 = vrot.slane %v9272, 5
    %v9275 = vsel %vm2381, %v9270, %v9274
    %v9276 = vshrl.u32 %v8852, 16
    %v9278 = vrot.slane %v9276, 4
    %v9279 = vor.u32 %v9278, %v9274
    %v9280 = vrot.slane %v9279, 4
    %v9282 = vshll.u32 %v8853, 16
    %v9284 = vrot.slane %v9282, 5
    %v9285 = vsel %vm2381, %v9280, %v9284
    %v9287 = vshrl.u32 %v8854, 16
    %v9289 = vrot.slane %v9287, 4
    %v9290 = vshll.u32 %v8854, 16
    %v9292 = vrot.slane %v9290, 5
    %v9293 = vor.u32 %v9289, %v9292
    %v9294 = vrot.slane %v9293, 4
    %v9296 = vshll.u32 %v8855, 16
    %v9298 = vrot.slane %v9296, 5
    %v9299 = vsel %vm2381, %v9294, %v9298
    %v9300 = vshrl.u32 %v8855, 16
    %v9302 = vrot.slane %v9300, 4
    %v9303 = vor.u32 %v9302, %v9298
    %v9304 = vrot.slane %v9303, 4
    %v9306 = vshll.u32 %v8856, 16
    %v9308 = vrot.slane %v9306, 5
    %v9309 = vsel %vm2381, %v9304, %v9308
    %v9311 = vshrl.u32 %v8857, 16
    %v9313 = vrot.slane %v9311, 4
    %v9314 = vshll.u32 %v8857, 16
    %v9316 = vrot.slane %v9314, 5
    %v9317 = vor.u32 %v9313, %v9316
    %v9318 = vrot.slane %v9317, 4
    %v9320 = vshll.u32 %v8858, 16
    %v9322 = vrot.slane %v9320, 5
    %v9323 = vsel %vm2381, %v9318, %v9322
    %v9324 = vshrl.u32 %v8858, 16
    %v9326 = vrot.slane %v9324, 4
    %v9327 = vor.u32 %v9326, %v9322
    %v9328 = vrot.slane %v9327, 4
    %v9330 = vshll.u32 %v8859, 16
    %v9332 = vrot.slane %v9330, 5
    %v9333 = vsel %vm2381, %v9328, %v9332
    %v9335 = vshrl.u32 %v8860, 16
    %v9337 = vrot.slane %v9335, 4
    %v9338 = vshll.u32 %v8860, 16
    %v9340 = vrot.slane %v9338, 5
    %v9341 = vor.u32 %v9337, %v9340
    %v9342 = vrot.slane %v9341, 4
    %v9344 = vshll.u32 %v8861, 16
    %v9346 = vrot.slane %v9344, 5
    %v9347 = vsel %vm2381, %v9342, %v9346
    %v9348 = vshrl.u32 %v8861, 16
    %v9350 = vrot.slane %v9348, 4
    %v9351 = vor.u32 %v9350, %v9346
    %v9352 = vrot.slane %v9351, 4
    %v9354 = vshll.u32 %v8862, 16
    %v9356 = vrot.slane %v9354, 5
    %v9357 = vsel %vm2381, %v9352, %v9356
    %v9359 = vshrl.u32 %v8863, 16
    %v9361 = vrot.slane %v9359, 4
    %v9362 = vshll.u32 %v8863, 16
    %v9364 = vrot.slane %v9362, 5
    %v9365 = vor.u32 %v9361, %v9364
    %v9366 = vrot.slane %v9365, 4
    %v9368 = vshll.u32 %v8864, 16
    %v9370 = vrot.slane %v9368, 5
    %v9371 = vsel %vm2381, %v9366, %v9370
    %v9372 = vshrl.u32 %v8864, 16
    %v9374 = vrot.slane %v9372, 4
    %v9375 = vor.u32 %v9374, %v9370
    %v9376 = vrot.slane %v9375, 4
    %v9378 = vshll.u32 %v8865, 16
    %v9380 = vrot.slane %v9378, 5
    %v9381 = vsel %vm2381, %v9376, %v9380
    %v9383 = vshrl.u32 %v8866, 16
    %v9385 = vrot.slane %v9383, 4
    %v9386 = vshll.u32 %v8866, 16
    %v9388 = vrot.slane %v9386, 5
    %v9389 = vor.u32 %v9385, %v9388
    %v9390 = vrot.slane %v9389, 4
    %v9392 = vshll.u32 %v8867, 16
    %v9394 = vrot.slane %v9392, 5
    %v9395 = vsel %vm2381, %v9390, %v9394
    %v9396 = vshrl.u32 %v8867, 16
    %v9398 = vrot.slane %v9396, 4
    %v9399 = vor.u32 %v9398, %v9394
    %v9400 = vrot.slane %v9399, 4
    %v9402 = vshll.u32 %v8868, 16
    %v9404 = vrot.slane %v9402, 5
    %v9405 = vsel %vm2381, %v9400, %v9404
    %v9407 = vshrl.u32 %v8869, 16
    %v9409 = vrot.slane %v9407, 4
    %v9410 = vshll.u32 %v8869, 16
    %v9412 = vrot.slane %v9410, 5
    %v9413 = vor.u32 %v9409, %v9412
    %v9414 = vrot.slane %v9413, 4
    %v9416 = vshll.u32 %v8870, 16
    %v9418 = vrot.slane %v9416, 5
    %v9419 = vsel %vm2381, %v9414, %v9418
    %v9420 = vshrl.u32 %v8870, 16
    %v9422 = vrot.slane %v9420, 4
    %v9423 = vor.u32 %v9422, %v9418
    %v9424 = vrot.slane %v9423, 4
    %v9426 = vshll.u32 %v8871, 16
    %v9428 = vrot.slane %v9426, 5
    %v9429 = vsel %vm2381, %v9424, %v9428
    %v9431 = vshrl.u32 %v8872, 16
    %v9433 = vrot.slane %v9431, 4
    %v9434 = vshll.u32 %v8872, 16
    %v9436 = vrot.slane %v9434, 5
    %v9437 = vor.u32 %v9433, %v9436
    %v9438 = vrot.slane %v9437, 4
    %v9440 = vshll.u32 %v8873, 16
    %v9442 = vrot.slane %v9440, 5
    %v9443 = vsel %vm2381, %v9438, %v9442
    %v9444 = vshrl.u32 %v8873, 16
    %v9446 = vrot.slane %v9444, 4
    %v9447 = vor.u32 %v9446, %v9442
    %v9448 = vrot.slane %v9447, 4
    %v9450 = vshll.u32 %v8874, 16
    %v9452 = vrot.slane %v9450, 5
    %v9453 = vsel %vm2381, %v9448, %v9452
    %v9455 = vshrl.u32 %v8875, 16
    %v9457 = vrot.slane %v9455, 4
    %v9458 = vshll.u32 %v8875, 16
    %v9460 = vrot.slane %v9458, 5
    %v9461 = vor.u32 %v9457, %v9460
    %v9462 = vrot.slane %v9461, 4
    %v9464 = vshll.u32 %v8876, 16
    %v9466 = vrot.slane %v9464, 5
    %v9467 = vsel %vm2381, %v9462, %v9466
    %v9468 = vshrl.u32 %v8876, 16
    %v9470 = vrot.slane %v9468, 4
    %v9471 = vor.u32 %v9470, %v9466
    %v9472 = vrot.slane %v9471, 4
    %v9474 = vshll.u32 %v8877, 16
    %v9476 = vrot.slane %v9474, 5
    %v9477 = vsel %vm2381, %v9472, %v9476
    %v9479 = vshrl.u32 %v8878, 16
    %v9481 = vrot.slane %v9479, 4
    %v9482 = vshll.u32 %v8878, 16
    %v9484 = vrot.slane %v9482, 5
    %v9485 = vor.u32 %v9481, %v9484
    %v9486 = vrot.slane %v9485, 4
    %v9488 = vshll.u32 %v8879, 16
    %v9490 = vrot.slane %v9488, 5
    %v9491 = vsel %vm2381, %v9486, %v9490
    %v9492 = vshrl.u32 %v8879, 16
    %v9494 = vrot.slane %v9492, 4
    %v9495 = vor.u32 %v9494, %v9490
    %v9496 = vrot.slane %v9495, 4
    %v9498 = vshll.u32 %v8880, 16
    %v9500 = vrot.slane %v9498, 5
    %v9501 = vsel %vm2381, %v9496, %v9500
    %v9503 = vshrl.u32 %v8881, 16
    %v9505 = vrot.slane %v9503, 4
    %v9506 = vshll.u32 %v8881, 16
    %v9508 = vrot.slane %v9506, 5
    %v9509 = vor.u32 %v9505, %v9508
    %v9510 = vrot.slane %v9509, 4
    %v9512 = vshll.u32 %v8882, 16
    %v9514 = vrot.slane %v9512, 5
    %v9515 = vsel %vm2381, %v9510, %v9514
    %v9516 = vshrl.u32 %v8882, 16
    %v9518 = vrot.slane %v9516, 4
    %v9519 = vor.u32 %v9518, %v9514
    %v9520 = vrot.slane %v9519, 4
    %v9522 = vshll.u32 %v8883, 16
    %v9524 = vrot.slane %v9522, 5
    %v9525 = vsel %vm2381, %v9520, %v9524
    %v9527 = vshrl.u32 %v8884, 16
    %v9529 = vrot.slane %v9527, 4
    %v9530 = vshll.u32 %v8884, 16
    %v9532 = vrot.slane %v9530, 5
    %v9533 = vor.u32 %v9529, %v9532
    %v9534 = vrot.slane %v9533, 4
    %v9536 = vshll.u32 %v8885, 16
    %v9538 = vrot.slane %v9536, 5
    %v9539 = vsel %vm2381, %v9534, %v9538
    %v9540 = vshrl.u32 %v8885, 16
    %v9542 = vrot.slane %v9540, 4
    %v9543 = vor.u32 %v9542, %v9538
    %v9544 = vrot.slane %v9543, 4
    %v9546 = vshll.u32 %v8886, 16
    %v9548 = vrot.slane %v9546, 5
    %v9549 = vsel %vm2381, %v9544, %v9548
    %v9551 = vshrl.u32 %v8887, 16
    %v9553 = vrot.slane %v9551, 4
    %v9554 = vshll.u32 %v8887, 16
    %v9556 = vrot.slane %v9554, 5
    %v9557 = vor.u32 %v9553, %v9556
    %v9558 = vrot.slane %v9557, 4
    %v9560 = vshll.u32 %v8888, 16
    %v9562 = vrot.slane %v9560, 5
    %v9563 = vsel %vm2381, %v9558, %v9562
    %v9564 = vshrl.u32 %v8888, 16
    %v9566 = vrot.slane %v9564, 4
    %v9567 = vor.u32 %v9566, %v9562
    %v9568 = vrot.slane %v9567, 4
    %v9570 = vshll.u32 %v8889, 16
    %v9572 = vrot.slane %v9570, 5
    %v9573 = vsel %vm2381, %v9568, %v9572
    %v9575 = vshrl.u32 %v8890, 16
    %v9577 = vrot.slane %v9575, 4
    %v9578 = vshll.u32 %v8890, 16
    %v9580 = vrot.slane %v9578, 5
    %v9581 = vor.u32 %v9577, %v9580
    %v9582 = vrot.slane %v9581, 4
    %v9584 = vshll.u32 %v8891, 16
    %v9586 = vrot.slane %v9584, 5
    %v9587 = vsel %vm2381, %v9582, %v9586
    %v9588 = vshrl.u32 %v8891, 16
    %v9590 = vrot.slane %v9588, 4
    %v9591 = vor.u32 %v9590, %v9586
    %v9592 = vrot.slane %v9591, 4
    %v9594 = vshll.u32 %v8892, 16
    %v9596 = vrot.slane %v9594, 5
    %v9597 = vsel %vm2381, %v9592, %v9596
    %v9599 = vshrl.u32 %v8893, 16
    %v9601 = vrot.slane %v9599, 4
    %v9602 = vshll.u32 %v8893, 16
    %v9604 = vrot.slane %v9602, 5
    %v9605 = vor.u32 %v9601, %v9604
    %v9606 = vrot.slane %v9605, 4
    %v9608 = vshll.u32 %v8894, 16
    %v9610 = vrot.slane %v9608, 5
    %v9611 = vsel %vm2381, %v9606, %v9610
    %v9612 = vshrl.u32 %v8894, 16
    %v9614 = vrot.slane %v9612, 4
    %v9615 = vor.u32 %v9614, %v9610
    %v9616 = vrot.slane %v9615, 4
    %v9618 = vshll.u32 %v8895, 16
    %v9620 = vrot.slane %v9618, 5
    %v9621 = vsel %vm2381, %v9616, %v9620
    %v9623 = vshrl.u32 %v8896, 16
    %v9625 = vrot.slane %v9623, 4
    %v9626 = vshll.u32 %v8896, 16
    %v9628 = vrot.slane %v9626, 5
    %v9629 = vor.u32 %v9625, %v9628
    %v9630 = vrot.slane %v9629, 4
    %v9632 = vshll.u32 %v8897, 16
    %v9634 = vrot.slane %v9632, 5
    %v9635 = vsel %vm2381, %v9630, %v9634
    %v9636 = vshrl.u32 %v8897, 16
    %v9638 = vrot.slane %v9636, 4
    %v9639 = vor.u32 %v9638, %v9634
    %v9640 = vrot.slane %v9639, 4
    %v9642 = vshll.u32 %v8898, 16
    %v9644 = vrot.slane %v9642, 5
    %v9645 = vsel %vm2381, %v9640, %v9644
    %v9647 = vshrl.u32 %v8899, 16
    %v9649 = vrot.slane %v9647, 4
    %v9650 = vshll.u32 %v8899, 16
    %v9652 = vrot.slane %v9650, 5
    %v9653 = vor.u32 %v9649, %v9652
    %v9654 = vrot.slane %v9653, 4
    %v9656 = vshll.u32 %v8900, 16
    %v9658 = vrot.slane %v9656, 5
    %v9659 = vsel %vm2381, %v9654, %v9658
    %v9660 = vshrl.u32 %v8900, 16
    %v9662 = vrot.slane %v9660, 4
    %v9663 = vor.u32 %v9662, %v9658
    %v9664 = vrot.slane %v9663, 4
    %v9666 = vshll.u32 %v8901, 16
    %v9668 = vrot.slane %v9666, 5
    %v9669 = vsel %vm2381, %v9664, %v9668
    %v9670 = vld [vmem:[%s3 + $0x70] sm:$0xf]
    %v9671 = vld [vmem:[%s3 + $0x74] sm:$0xf]
    %v9672 = vld [vmem:[%s3 + $0x78] sm:$0xf]
    %v9673 = vld [vmem:[%s3 + $0x7c] sm:$0xf]
    %v9674 = vunpack.c.l.b16 %v8915
    %v9675 = vunpack.c.l.b16 %v8925
    %v9676 = vunpack.c.l.b16 %v8939
    %v9677 = vunpack.c.l.b16 %v8949
    %v9678 = vunpack.c.l.b16 %v8963
    %v9679 = vunpack.c.l.b16 %v8973
    %v9680 = vunpack.c.l.b16 %v8987
    %v9681 = vunpack.c.l.b16 %v8997
    %v9682 = vunpack.c.l.b16 %v9011
    %v9683 = vunpack.c.l.b16 %v9021
    %v9684 = vunpack.c.l.b16 %v9035
    %v9685 = vunpack.c.l.b16 %v9045
    %v9686 = vunpack.c.l.b16 %v9059
    %v9687 = vunpack.c.l.b16 %v9069
    %v9688 = vunpack.c.l.b16 %v9083
    %v9689 = vunpack.c.l.b16 %v9093
    %v9690 = vunpack.c.l.b16 %v9107
    %v9691 = vunpack.c.l.b16 %v9117
    %v9692 = vunpack.c.l.b16 %v9131
    %v9693 = vunpack.c.l.b16 %v9141
    %v9694 = vunpack.c.l.b16 %v9155
    %v9695 = vunpack.c.l.b16 %v9165
    %v9696 = vunpack.c.l.b16 %v9179
    %v9697 = vunpack.c.l.b16 %v9189
    %v9698 = vunpack.c.l.b16 %v9203
    %v9699 = vunpack.c.l.b16 %v9213
    %v9700 = vunpack.c.l.b16 %v9227
    %v9701 = vunpack.c.l.b16 %v9237
    %v9702 = vunpack.c.l.b16 %v9251
    %v9703 = vunpack.c.l.b16 %v9261
    %v9704 = vunpack.c.l.b16 %v9275
    %v9705 = vunpack.c.l.b16 %v9285
    %v9706 = vunpack.c.l.b16 %v9299
    %v9707 = vunpack.c.l.b16 %v9309
    %v9708 = vunpack.c.l.b16 %v9323
    %v9709 = vunpack.c.l.b16 %v9333
    %v9710 = vunpack.c.l.b16 %v9347
    %v9711 = vunpack.c.l.b16 %v9357
    %v9712 = vunpack.c.l.b16 %v9371
    %v9713 = vunpack.c.l.b16 %v9381
    %v9714 = vunpack.c.l.b16 %v9395
    %v9715 = vunpack.c.l.b16 %v9405
    %v9716 = vunpack.c.l.b16 %v9419
    %v9717 = vunpack.c.l.b16 %v9429
    %v9718 = vunpack.c.l.b16 %v9443
    %v9719 = vunpack.c.l.b16 %v9453
    %v9720 = vunpack.c.l.b16 %v9467
    %v9721 = vunpack.c.l.b16 %v9477
    %v9722 = vunpack.c.l.b16 %v9491
    %v9723 = vunpack.c.l.b16 %v9501
    %v9724 = vunpack.c.l.b16 %v9515
    %v9725 = vunpack.c.l.b16 %v9525
    %v9726 = vunpack.c.l.b16 %v9539
    %v9727 = vunpack.c.l.b16 %v9549
    %v9728 = vunpack.c.l.b16 %v9563
    %v9729 = vunpack.c.l.b16 %v9573
    %v9730 = vunpack.c.l.b16 %v9587
    %v9731 = vunpack.c.l.b16 %v9597
    %v9732 = vunpack.c.l.b16 %v9611
    %v9733 = vunpack.c.l.b16 %v9621
    %v9734 = vunpack.c.l.b16 %v9635
    %v9735 = vunpack.c.l.b16 %v9645
    %v9736 = vunpack.c.l.b16 %v9659
    %v9737 = vunpack.c.l.b16 %v9669
    %v9738 = vpack.c.b16 %v9675, %v9674
    %v9739 = vpack.c.b16 %v9677, %v9676
    %v9740 = vpack.c.b16 %v9679, %v9678
    %v9741 = vpack.c.b16 %v9681, %v9680
    %v9742 = vpack.c.b16 %v9683, %v9682
    %v9743 = vpack.c.b16 %v9685, %v9684
    %v9744 = vpack.c.b16 %v9687, %v9686
    %v9745 = vpack.c.b16 %v9689, %v9688
    %v9746 = vpack.c.b16 %v9691, %v9690
    %v9747 = vpack.c.b16 %v9693, %v9692
    %v9748 = vpack.c.b16 %v9695, %v9694
    %v9749 = vpack.c.b16 %v9697, %v9696
    %v9750 = vpack.c.b16 %v9699, %v9698
    %v9751 = vpack.c.b16 %v9701, %v9700
    %v9752 = vpack.c.b16 %v9703, %v9702
    %v9753 = vpack.c.b16 %v9705, %v9704
    %v9754 = vpack.c.b16 %v9707, %v9706
    %v9755 = vpack.c.b16 %v9709, %v9708
    %v9756 = vpack.c.b16 %v9711, %v9710
    %v9757 = vpack.c.b16 %v9713, %v9712
    %v9758 = vpack.c.b16 %v9715, %v9714
    %v9759 = vpack.c.b16 %v9717, %v9716
    %v9760 = vpack.c.b16 %v9719, %v9718
    %v9761 = vpack.c.b16 %v9721, %v9720
    %v9762 = vpack.c.b16 %v9723, %v9722
    %v9763 = vpack.c.b16 %v9725, %v9724
    %v9764 = vpack.c.b16 %v9727, %v9726
    %v9765 = vpack.c.b16 %v9729, %v9728
    %v9766 = vpack.c.b16 %v9731, %v9730
    %v9767 = vpack.c.b16 %v9733, %v9732
    %v9768 = vpack.c.b16 %v9735, %v9734
    %v9769 = vpack.c.b16 %v9737, %v9736
    %v9774 = vunpack.c.l.b16 %v9670
    %v9775 = vunpack.c.l.b16 %v9671
    %v9776 = vunpack.c.l.b16 %v9672
    %v9777 = vunpack.c.l.b16 %v9673
    %v9778 = vpack.c.b16 %v9775, %v9774
    %v9779 = vpack.c.b16 %v9777, %v9776
    %v9783 = vsel %vm3262, %v9738, 0
    %v9786 = vsel %vm3262, %v9739, 0
    %v9789 = vsel %vm3262, %v9740, 0
    %v9792 = vsel %vm3262, %v9741, 0
    %v9795 = vsel %vm3262, %v9742, 0
    %v9798 = vsel %vm3262, %v9743, 0
    %v9801 = vsel %vm3262, %v9744, 0
    %v9804 = vsel %vm3262, %v9745, 0
    %v9807 = vsel %vm3262, %v9746, 0
    %v9810 = vsel %vm3262, %v9747, 0
    %v9813 = vsel %vm3262, %v9748, 0
    %v9816 = vsel %vm3262, %v9749, 0
    %v9819 = vsel %vm3262, %v9750, 0
    %v9822 = vsel %vm3262, %v9751, 0
    %v9825 = vsel %vm3262, %v9752, 0
    %v9828 = vsel %vm3262, %v9753, 0
    %v9831 = vsel %vm3262, %v9754, 0
    %v9834 = vsel %vm3262, %v9755, 0
    %v9837 = vsel %vm3262, %v9756, 0
    %v9840 = vsel %vm3262, %v9757, 0
    %v9843 = vsel %vm3262, %v9758, 0
    %v9846 = vsel %vm3262, %v9759, 0
    %v9849 = vsel %vm3262, %v9760, 0
    %v9852 = vsel %vm3262, %v9761, 0
    %v9855 = vsel %vm3262, %v9762, 0
    %v9858 = vsel %vm3262, %v9763, 0
    %v9861 = vsel %vm3262, %v9764, 0
    %v9864 = vsel %vm3262, %v9765, 0
    %v9867 = vsel %vm3262, %v9766, 0
    %v9870 = vsel %vm3262, %v9767, 0
    %v9873 = vsel %vm3262, %v9768, 0
    %v9876 = vsel %vm3262, %v9769, 0
    %9878 = vmatprep.subr.bf16.mxu0 0
    %9879 = vmatpush1.bf16.msra.mxu0 %v9778
    %9880 = vmatprep.subr.bf16.mxu0 0
    %9881 = vmatpush1.bf16.msra.mxu0 %v9779
    %9882 = vmatprep.subr.bf16.mxu0 0
    %9883 = vmatpush1.bf16.msra.mxu0 0
    %9884 = vmatprep.subr.bf16.mxu0 0
    %9885 = vmatpush1.bf16.msra.mxu0 0
    %9886 = vmatprep.subr.bf16.mxu0 0
    %9887 = vmatpush1.bf16.msra.mxu0 0
    %9888 = vmatprep.subr.bf16.mxu0 0
    %9889 = vmatpush1.bf16.msra.mxu0 0
    %9890 = vmatprep.subr.bf16.mxu0 0
    %9891 = vmatpush1.bf16.msra.mxu0 0
    %9892 = vmatprep.subr.bf16.mxu0 0
    %9893 = vmatpush1.bf16.msra.mxu0 0
    %9894 = vmatprep.subr.bf16.mxu0 0
    %9895 = vmatpush1.bf16.msra.mxu0 0
    %9896 = vmatprep.subr.bf16.mxu0 0
    %9897 = vmatpush1.bf16.msra.mxu0 0
    %9898 = vmatprep.subr.bf16.mxu0 0
    %9899 = vmatpush1.bf16.msra.mxu0 0
    %9900 = vmatprep.subr.bf16.mxu0 0
    %9901 = vmatpush1.bf16.msra.mxu0 0
    %9902 = vmatprep.subr.bf16.mxu0 0
    %9903 = vmatpush1.bf16.msra.mxu0 0
    %9904 = vmatprep.subr.bf16.mxu0 0
    %9905 = vmatpush1.bf16.msra.mxu0 0
    %9906 = vmatprep.subr.bf16.mxu0 0
    %9907 = vmatpush1.bf16.msra.mxu0 0
    %9908 = vmatprep.subr.bf16.mxu0 0
    %9909 = vmatpush1.bf16.msra.mxu0 0
    %9910 = vmatprep.mubr.bf16.mxu0 0
    %9911 = vmatmul.mubr.bf16.gmra.mrb[0].mxu0 %v9783
    %v9912 = vpop.f32.mrb[0].mxu0
    %v9913 = vadd.f32 0.0, %v9912
    %v9914 = vpop.f32.mrb[0].mxu0
    %v9915 = vpop.f32.mrb[0].mxu0
    %v9916 = vadd.f32 0.0, %v9915
    %v9917 = vpop.f32.mrb[0].mxu0
    %9918 = vmatprep.mubr.bf16.mxu0 0
    %9919 = vmatmul.mubr.bf16.gmra.mrb[0].mxu0 %v9786
    %v9920 = vpop.f32.mrb[0].mxu0
    %v9921 = vadd.f32 0.0, %v9920
    %v9922 = vpop.f32.mrb[0].mxu0
    %v9923 = vpop.f32.mrb[0].mxu0
    %v9924 = vadd.f32 0.0, %v9923
    %v9925 = vpop.f32.mrb[0].mxu0
    %9926 = vmatprep.mubr.bf16.mxu0 0
    %9927 = vmatmul.mubr.bf16.gmra.mrb[0].mxu0 %v9789
    %v9928 = vpop.f32.mrb[0].mxu0
    %v9929 = vadd.f32 0.0, %v9928
    %v9930 = vpop.f32.mrb[0].mxu0
    %v9931 = vpop.f32.mrb[0].mxu0
    %v9932 = vadd.f32 0.0, %v9931
    %v9933 = vpop.f32.mrb[0].mxu0
    %9934 = vmatprep.mubr.bf16.mxu0 0
    %9935 = vmatmul.mubr.bf16.gmra.mrb[0].mxu0 %v9792
    %v9936 = vpop.f32.mrb[0].mxu0
    %v9937 = vadd.f32 0.0, %v9936
    %v9938 = vpop.f32.mrb[0].mxu0
    %v9939 = vpop.f32.mrb[0].mxu0
    %v9940 = vadd.f32 0.0, %v9939
    %v9941 = vpop.f32.mrb[0].mxu0
    %9942 = vmatprep.mubr.bf16.mxu0 0
    %9943 = vmatmul.mubr.bf16.gmra.mrb[0].mxu0 %v9795
    %v9944 = vpop.f32.mrb[0].mxu0
    %v9945 = vadd.f32 0.0, %v9944
    %v9946 = vpop.f32.mrb[0].mxu0
    %v9947 = vpop.f32.mrb[0].mxu0
    %v9948 = vadd.f32 0.0, %v9947
    %v9949 = vpop.f32.mrb[0].mxu0
    %9950 = vmatprep.mubr.bf16.mxu0 0
    %9951 = vmatmul.mubr.bf16.gmra.mrb[0].mxu0 %v9798
    %v9952 = vpop.f32.mrb[0].mxu0
    %v9953 = vadd.f32 0.0, %v9952
    %v9954 = vpop.f32.mrb[0].mxu0
    %v9955 = vpop.f32.mrb[0].mxu0
    %v9956 = vadd.f32 0.0, %v9955
    %v9957 = vpop.f32.mrb[0].mxu0
    %9958 = vmatprep.mubr.bf16.mxu0 0
    %9959 = vmatmul.mubr.bf16.gmra.mrb[0].mxu0 %v9801
    %v9960 = vpop.f32.mrb[0].mxu0
    %v9961 = vadd.f32 0.0, %v9960
    %v9962 = vpop.f32.mrb[0].mxu0
    %v9963 = vpop.f32.mrb[0].mxu0
    %v9964 = vadd.f32 0.0, %v9963
    %v9965 = vpop.f32.mrb[0].mxu0
    %9966 = vmatprep.mubr.bf16.mxu0 0
    %9967 = vmatmul.mubr.bf16.gmra.mrb[0].mxu0 %v9804
    %v9968 = vpop.f32.mrb[0].mxu0
    %v9969 = vadd.f32 0.0, %v9968
    %v9970 = vpop.f32.mrb[0].mxu0
    %v9971 = vpop.f32.mrb[0].mxu0
    %v9972 = vadd.f32 0.0, %v9971
    %v9973 = vpop.f32.mrb[0].mxu0
    %9974 = vmatprep.mubr.bf16.mxu0 0
    %9975 = vmatmul.mubr.bf16.gmra.mrb[0].mxu0 %v9807
    %v9976 = vpop.f32.mrb[0].mxu0
    %v9977 = vadd.f32 0.0, %v9976
    %v9978 = vpop.f32.mrb[0].mxu0
    %v9979 = vpop.f32.mrb[0].mxu0
    %v9980 = vadd.f32 0.0, %v9979
    %v9981 = vpop.f32.mrb[0].mxu0
    %9982 = vmatprep.mubr.bf16.mxu0 0
    %9983 = vmatmul.mubr.bf16.gmra.mrb[0].mxu0 %v9810
    %v9984 = vpop.f32.mrb[0].mxu0
    %v9985 = vadd.f32 0.0, %v9984
    %v9986 = vpop.f32.mrb[0].mxu0
    %v9987 = vpop.f32.mrb[0].mxu0
    %v9988 = vadd.f32 0.0, %v9987
    %v9989 = vpop.f32.mrb[0].mxu0
    %9990 = vmatprep.mubr.bf16.mxu0 0
    %9991 = vmatmul.mubr.bf16.gmra.mrb[0].mxu0 %v9813
    %v9992 = vpop.f32.mrb[0].mxu0
    %v9993 = vadd.f32 0.0, %v9992
    %v9994 = vpop.f32.mrb[0].mxu0
    %v9995 = vpop.f32.mrb[0].mxu0
    %v9996 = vadd.f32 0.0, %v9995
    %v9997 = vpop.f32.mrb[0].mxu0
    %9998 = vmatprep.mubr.bf16.mxu0 0
    %9999 = vmatmul.mubr.bf16.gmra.mrb[0].mxu0 %v9816
    %v10000 = vpop.f32.mrb[0].mxu0
    %v10001 = vadd.f32 0.0, %v10000
    %v10002 = vpop.f32.mrb[0].mxu0
    %v10003 = vpop.f32.mrb[0].mxu0
    %v10004 = vadd.f32 0.0, %v10003
    %v10005 = vpop.f32.mrb[0].mxu0
    %10006 = vmatprep.mubr.bf16.mxu0 0
    %10007 = vmatmul.mubr.bf16.gmra.mrb[0].mxu0 %v9819
    %v10008 = vpop.f32.mrb[0].mxu0
    %v10009 = vadd.f32 0.0, %v10008
    %v10010 = vpop.f32.mrb[0].mxu0
    %v10011 = vpop.f32.mrb[0].mxu0
    %v10012 = vadd.f32 0.0, %v10011
    %v10013 = vpop.f32.mrb[0].mxu0
    %10014 = vmatprep.mubr.bf16.mxu0 0
    %10015 = vmatmul.mubr.bf16.gmra.mrb[0].mxu0 %v9822
    %v10016 = vpop.f32.mrb[0].mxu0
    %v10017 = vadd.f32 0.0, %v10016
    %v10018 = vpop.f32.mrb[0].mxu0
    %v10019 = vpop.f32.mrb[0].mxu0
    %v10020 = vadd.f32 0.0, %v10019
    %v10021 = vpop.f32.mrb[0].mxu0
    %10022 = vmatprep.mubr.bf16.mxu0 0
    %10023 = vmatmul.mubr.bf16.gmra.mrb[0].mxu0 %v9825
    %v10024 = vpop.f32.mrb[0].mxu0
    %v10025 = vadd.f32 0.0, %v10024
    %v10026 = vpop.f32.mrb[0].mxu0
    %v10027 = vpop.f32.mrb[0].mxu0
    %v10028 = vadd.f32 0.0, %v10027
    %v10029 = vpop.f32.mrb[0].mxu0
    %10030 = vmatprep.mubr.bf16.mxu0 0
    %10031 = vmatmul.mubr.bf16.gmra.mrb[0].mxu0 %v9828
    %v10032 = vpop.f32.mrb[0].mxu0
    %v10033 = vadd.f32 0.0, %v10032
    %v10034 = vpop.f32.mrb[0].mxu0
    %v10035 = vpop.f32.mrb[0].mxu0
    %v10036 = vadd.f32 0.0, %v10035
    %v10037 = vpop.f32.mrb[0].mxu0
    %10038 = vmatprep.mubr.bf16.mxu0 0
    %10039 = vmatmul.mubr.bf16.gmra.mrb[0].mxu0 %v9831
    %v10040 = vpop.f32.mrb[0].mxu0
    %v10041 = vadd.f32 0.0, %v10040
    %v10042 = vpop.f32.mrb[0].mxu0
    %v10043 = vpop.f32.mrb[0].mxu0
    %v10044 = vadd.f32 0.0, %v10043
    %v10045 = vpop.f32.mrb[0].mxu0
    %10046 = vmatprep.mubr.bf16.mxu0 0
    %10047 = vmatmul.mubr.bf16.gmra.mrb[0].mxu0 %v9834
    %v10048 = vpop.f32.mrb[0].mxu0
    %v10049 = vadd.f32 0.0, %v10048
    %v10050 = vpop.f32.mrb[0].mxu0
    %v10051 = vpop.f32.mrb[0].mxu0
    %v10052 = vadd.f32 0.0, %v10051
    %v10053 = vpop.f32.mrb[0].mxu0
    %10054 = vmatprep.mubr.bf16.mxu0 0
    %10055 = vmatmul.mubr.bf16.gmra.mrb[0].mxu0 %v9837
    %v10056 = vpop.f32.mrb[0].mxu0
    %v10057 = vadd.f32 0.0, %v10056
    %v10058 = vpop.f32.mrb[0].mxu0
    %v10059 = vpop.f32.mrb[0].mxu0
    %v10060 = vadd.f32 0.0, %v10059
    %v10061 = vpop.f32.mrb[0].mxu0
    %10062 = vmatprep.mubr.bf16.mxu0 0
    %10063 = vmatmul.mubr.bf16.gmra.mrb[0].mxu0 %v9840
    %v10064 = vpop.f32.mrb[0].mxu0
    %v10065 = vadd.f32 0.0, %v10064
    %v10066 = vpop.f32.mrb[0].mxu0
    %v10067 = vpop.f32.mrb[0].mxu0
    %v10068 = vadd.f32 0.0, %v10067
    %v10069 = vpop.f32.mrb[0].mxu0
    %10070 = vmatprep.mubr.bf16.mxu0 0
    %10071 = vmatmul.mubr.bf16.gmra.mrb[0].mxu0 %v9843
    %v10072 = vpop.f32.mrb[0].mxu0
    %v10073 = vadd.f32 0.0, %v10072
    %v10074 = vpop.f32.mrb[0].mxu0
    %v10075 = vpop.f32.mrb[0].mxu0
    %v10076 = vadd.f32 0.0, %v10075
    %v10077 = vpop.f32.mrb[0].mxu0
    %10078 = vmatprep.mubr.bf16.mxu0 0
    %10079 = vmatmul.mubr.bf16.gmra.mrb[0].mxu0 %v9846
    %v10080 = vpop.f32.mrb[0].mxu0
    %v10081 = vadd.f32 0.0, %v10080
    %v10082 = vpop.f32.mrb[0].mxu0
    %v10083 = vpop.f32.mrb[0].mxu0
    %v10084 = vadd.f32 0.0, %v10083
    %v10085 = vpop.f32.mrb[0].mxu0
    %10086 = vmatprep.mubr.bf16.mxu0 0
    %10087 = vmatmul.mubr.bf16.gmra.mrb[0].mxu0 %v9849
    %v10088 = vpop.f32.mrb[0].mxu0
    %v10089 = vadd.f32 0.0, %v10088
    %v10090 = vpop.f32.mrb[0].mxu0
    %v10091 = vpop.f32.mrb[0].mxu0
    %v10092 = vadd.f32 0.0, %v10091
    %v10093 = vpop.f32.mrb[0].mxu0
    %10094 = vmatprep.mubr.bf16.mxu0 0
    %10095 = vmatmul.mubr.bf16.gmra.mrb[0].mxu0 %v9852
    %v10096 = vpop.f32.mrb[0].mxu0
    %v10097 = vadd.f32 0.0, %v10096
    %v10098 = vpop.f32.mrb[0].mxu0
    %v10099 = vpop.f32.mrb[0].mxu0
    %v10100 = vadd.f32 0.0, %v10099
    %v10101 = vpop.f32.mrb[0].mxu0
    %10102 = vmatprep.mubr.bf16.mxu0 0
    %10103 = vmatmul.mubr.bf16.gmra.mrb[0].mxu0 %v9855
    %v10104 = vpop.f32.mrb[0].mxu0
    %v10105 = vadd.f32 0.0, %v10104
    %v10106 = vpop.f32.mrb[0].mxu0
    %v10107 = vpop.f32.mrb[0].mxu0
    %v10108 = vadd.f32 0.0, %v10107
    %v10109 = vpop.f32.mrb[0].mxu0
    %10110 = vmatprep.mubr.bf16.mxu0 0
    %10111 = vmatmul.mubr.bf16.gmra.mrb[0].mxu0 %v9858
    %v10112 = vpop.f32.mrb[0].mxu0
    %v10113 = vadd.f32 0.0, %v10112
    %v10114 = vpop.f32.mrb[0].mxu0
    %v10115 = vpop.f32.mrb[0].mxu0
    %v10116 = vadd.f32 0.0, %v10115
    %v10117 = vpop.f32.mrb[0].mxu0
    %10118 = vmatprep.mubr.bf16.mxu0 0
    %10119 = vmatmul.mubr.bf16.gmra.mrb[0].mxu0 %v9861
    %v10120 = vpop.f32.mrb[0].mxu0
    %v10121 = vadd.f32 0.0, %v10120
    %v10122 = vpop.f32.mrb[0].mxu0
    %v10123 = vpop.f32.mrb[0].mxu0
    %v10124 = vadd.f32 0.0, %v10123
    %v10125 = vpop.f32.mrb[0].mxu0
    %10126 = vmatprep.mubr.bf16.mxu0 0
    %10127 = vmatmul.mubr.bf16.gmra.mrb[0].mxu0 %v9864
    %v10128 = vpop.f32.mrb[0].mxu0
    %v10129 = vadd.f32 0.0, %v10128
    %v10130 = vpop.f32.mrb[0].mxu0
    %v10131 = vpop.f32.mrb[0].mxu0
    %v10132 = vadd.f32 0.0, %v10131
    %v10133 = vpop.f32.mrb[0].mxu0
    %10134 = vmatprep.mubr.bf16.mxu0 0
    %10135 = vmatmul.mubr.bf16.gmra.mrb[0].mxu0 %v9867
    %v10136 = vpop.f32.mrb[0].mxu0
    %v10137 = vadd.f32 0.0, %v10136
    %v10138 = vpop.f32.mrb[0].mxu0
    %v10139 = vpop.f32.mrb[0].mxu0
    %v10140 = vadd.f32 0.0, %v10139
    %v10141 = vpop.f32.mrb[0].mxu0
    %10142 = vmatprep.mubr.bf16.mxu0 0
    %10143 = vmatmul.mubr.bf16.gmra.mrb[0].mxu0 %v9870
    %v10144 = vpop.f32.mrb[0].mxu0
    %v10145 = vadd.f32 0.0, %v10144
    %v10146 = vpop.f32.mrb[0].mxu0
    %v10147 = vpop.f32.mrb[0].mxu0
    %v10148 = vadd.f32 0.0, %v10147
    %v10149 = vpop.f32.mrb[0].mxu0
    %10150 = vmatprep.mubr.bf16.mxu0 0
    %10151 = vmatmul.mubr.bf16.gmra.mrb[0].mxu0 %v9873
    %v10152 = vpop.f32.mrb[0].mxu0
    %v10153 = vadd.f32 0.0, %v10152
    %v10154 = vpop.f32.mrb[0].mxu0
    %v10155 = vpop.f32.mrb[0].mxu0
    %v10156 = vadd.f32 0.0, %v10155
    %v10157 = vpop.f32.mrb[0].mxu0
    %10158 = vmatprep.mubr.bf16.mxu0 0
    %10159 = vmatmul.mubr.bf16.gmra.mrb[0].mxu0 %v9876
    %v10160 = vpop.f32.mrb[0].mxu0
    %v10161 = vadd.f32 0.0, %v10160
    %v10162 = vpop.f32.mrb[0].mxu0
    %v10163 = vpop.f32.mrb[0].mxu0
    %v10164 = vadd.f32 0.0, %v10163
    %v10165 = vpop.f32.mrb[0].mxu0
    %10166 = vdwg.mxu0
    %v10167 = vadd.f32 %v8742, %v9913
    %v10168 = vadd.f32 %v8743, %v9916
    %v10169 = vadd.f32 %v8744, %v9921
    %v10170 = vadd.f32 %v8745, %v9924
    %v10171 = vadd.f32 %v8746, %v9929
    %v10172 = vadd.f32 %v8747, %v9932
    %v10173 = vadd.f32 %v8748, %v9937
    %v10174 = vadd.f32 %v8749, %v9940
    %v10175 = vadd.f32 %v8750, %v9945
    %v10176 = vadd.f32 %v8751, %v9948
    %v10177 = vadd.f32 %v8752, %v9953
    %v10178 = vadd.f32 %v8753, %v9956
    %v10179 = vadd.f32 %v8754, %v9961
    %v10180 = vadd.f32 %v8755, %v9964
    %v10181 = vadd.f32 %v8756, %v9969
    %v10182 = vadd.f32 %v8757, %v9972
    %v10183 = vadd.f32 %v8758, %v9977
    %v10184 = vadd.f32 %v8759, %v9980
    %v10185 = vadd.f32 %v8760, %v9985
    %v10186 = vadd.f32 %v8761, %v9988
    %v10187 = vadd.f32 %v8762, %v9993
    %v10188 = vadd.f32 %v8763, %v9996
    %v10189 = vadd.f32 %v8764, %v10001
    %v10190 = vadd.f32 %v8765, %v10004
    %v10191 = vadd.f32 %v8766, %v10009
    %v10192 = vadd.f32 %v8767, %v10012
    %v10193 = vadd.f32 %v8768, %v10017
    %v10194 = vadd.f32 %v8769, %v10020
    %v10195 = vadd.f32 %v8770, %v10025
    %v10196 = vadd.f32 %v8771, %v10028
    %v10197 = vadd.f32 %v8772, %v10033
    %v10198 = vadd.f32 %v8773, %v10036
    %v10199 = vadd.f32 %v8774, %v10041
    %v10200 = vadd.f32 %v8775, %v10044
    %v10201 = vadd.f32 %v8776, %v10049
    %v10202 = vadd.f32 %v8777, %v10052
    %v10203 = vadd.f32 %v8778, %v10057
    %v10204 = vadd.f32 %v8779, %v10060
    %v10205 = vadd.f32 %v8780, %v10065
    %v10206 = vadd.f32 %v8781, %v10068
    %v10207 = vadd.f32 %v8782, %v10073
    %v10208 = vadd.f32 %v8783, %v10076
    %v10209 = vadd.f32 %v8784, %v10081
    %v10210 = vadd.f32 %v8785, %v10084
    %v10211 = vadd.f32 %v8786, %v10089
    %v10212 = vadd.f32 %v8787, %v10092
    %v10213 = vadd.f32 %v8788, %v10097
    %v10214 = vadd.f32 %v8789, %v10100
    %v10215 = vadd.f32 %v8790, %v10105
    %v10216 = vadd.f32 %v8791, %v10108
    %v10217 = vadd.f32 %v8792, %v10113
    %v10218 = vadd.f32 %v8793, %v10116
    %v10219 = vadd.f32 %v8794, %v10121
    %v10220 = vadd.f32 %v8795, %v10124
    %v10221 = vadd.f32 %v8796, %v10129
    %v10222 = vadd.f32 %v8797, %v10132
    %v10223 = vadd.f32 %v8798, %v10137
    %v10224 = vadd.f32 %v8799, %v10140
    %v10225 = vadd.f32 %v8800, %v10145
    %v10226 = vadd.f32 %v8801, %v10148
    %v10227 = vadd.f32 %v8802, %v10153
    %v10228 = vadd.f32 %v8803, %v10156
    %v10229 = vadd.f32 %v8804, %v10161
    %v10230 = vadd.f32 %v8805, %v10164
    %v10231 = vld [vmem:[%s8116] sm:$0xe]
    %v10232 = vld [vmem:[%s8116 + $0xc] sm:$0xe]
    %v10233 = vld [vmem:[%s8116 + $0x18] sm:$0xe]
    %v10234 = vld [vmem:[%s8116 + $0x24] sm:$0xe]
    %v10235 = vld [vmem:[%s8116 + $0x30] sm:$0xe]
    %v10236 = vld [vmem:[%s8116 + $0x3c] sm:$0xe]
    %v10237 = vld [vmem:[%s8116 + $0x48] sm:$0xe]
    %v10238 = vld [vmem:[%s8116 + $0x54] sm:$0xe]
    %v10239 = vld [vmem:[%s8116 + $0x60] sm:$0xe]
    %v10240 = vld [vmem:[%s8116 + $0x6c] sm:$0xe]
    %v10241 = vld [vmem:[%s8116 + $0x78] sm:$0xe]
    %v10242 = vld [vmem:[%s8116 + $0x84] sm:$0xe]
    %v10243 = vld [vmem:[%s8116 + $0x90] sm:$0xe]
    %v10244 = vld [vmem:[%s8116 + $0x9c] sm:$0xe]
    %v10245 = vld [vmem:[%s8116 + $0xa8] sm:$0xe]
    %v10246 = vld [vmem:[%s8116 + $0xb4] sm:$0xe]
    %v10247 = vld [vmem:[%s8116 + $0xd8] sm:$0xe]
    %v10248 = vld [vmem:[%s8116 + $0xe4] sm:$0xe]
    %v10249 = vld [vmem:[%s8116 + $0xf0] sm:$0xe]
    %v10250 = vld [vmem:[%s8116 + $0xfc] sm:$0xe]
    %v10251 = vld [vmem:[%s8116 + $0x108] sm:$0xe]
    %v10252 = vld [vmem:[%s8116 + $0x114] sm:$0xe]
    %v10253 = vld [vmem:[%s8116 + $0x120] sm:$0xe]
    %v10254 = vld [vmem:[%s8116 + $0x12c] sm:$0xe]
    %v10255 = vld [vmem:[%s8116 + $0x138] sm:$0xe]
    %v10256 = vld [vmem:[%s8116 + $0x144] sm:$0xe]
    %v10257 = vld [vmem:[%s8116 + $0x150] sm:$0xe]
    %v10258 = vld [vmem:[%s8116 + $0x15c] sm:$0xe]
    %v10259 = vld [vmem:[%s8116 + $0x168] sm:$0xe]
    %v10260 = vld [vmem:[%s8116 + $0x174] sm:$0xe]
    %v10261 = vld [vmem:[%s8116 + $0x180] sm:$0xe]
    %v10262 = vld [vmem:[%s8116 + $0x18c] sm:$0xe]
    %v10359 = vrot.slane %v10231, 5
    %v10360 = vrot.slane %v10359, 4
    %v10361 = vrot.slane %v8807, 5
    %v10362 = vsel %vm4303, %v10360, %v10361
    %v10363 = vrot.slane %v10361, 4
    %v10364 = vrot.slane %v8808, 5
    %v10365 = vsel %vm4303, %v10363, %v10364
    %v10366 = vrot.slane %v10232, 5
    %v10367 = vrot.slane %v10366, 4
    %v10368 = vrot.slane %v8810, 5
    %v10369 = vsel %vm4303, %v10367, %v10368
    %v10370 = vrot.slane %v10368, 4
    %v10371 = vrot.slane %v8811, 5
    %v10372 = vsel %vm4303, %v10370, %v10371
    %v10373 = vrot.slane %v10233, 5
    %v10374 = vrot.slane %v10373, 4
    %v10375 = vrot.slane %v8813, 5
    %v10376 = vsel %vm4303, %v10374, %v10375
    %v10377 = vrot.slane %v10375, 4
    %v10378 = vrot.slane %v8814, 5
    %v10379 = vsel %vm4303, %v10377, %v10378
    %v10380 = vrot.slane %v10234, 5
    %v10381 = vrot.slane %v10380, 4
    %v10382 = vrot.slane %v8816, 5
    %v10383 = vsel %vm4303, %v10381, %v10382
    %v10384 = vrot.slane %v10382, 4
    %v10385 = vrot.slane %v8817, 5
    %v10386 = vsel %vm4303, %v10384, %v10385
    %v10387 = vrot.slane %v10235, 5
    %v10388 = vrot.slane %v10387, 4
    %v10389 = vrot.slane %v8819, 5
    %v10390 = vsel %vm4303, %v10388, %v10389
    %v10391 = vrot.slane %v10389, 4
    %v10392 = vrot.slane %v8820, 5
    %v10393 = vsel %vm4303, %v10391, %v10392
    %v10394 = vrot.slane %v10236, 5
    %v10395 = vrot.slane %v10394, 4
    %v10396 = vrot.slane %v8822, 5
    %v10397 = vsel %vm4303, %v10395, %v10396
    %v10398 = vrot.slane %v10396, 4
    %v10399 = vrot.slane %v8823, 5
    %v10400 = vsel %vm4303, %v10398, %v10399
    %v10401 = vrot.slane %v10237, 5
    %v10402 = vrot.slane %v10401, 4
    %v10403 = vrot.slane %v8825, 5
    %v10404 = vsel %vm4303, %v10402, %v10403
    %v10405 = vrot.slane %v10403, 4
    %v10406 = vrot.slane %v8826, 5
    %v10407 = vsel %vm4303, %v10405, %v10406
    %v10408 = vrot.slane %v10238, 5
    %v10409 = vrot.slane %v10408, 4
    %v10410 = vrot.slane %v8828, 5
    %v10411 = vsel %vm4303, %v10409, %v10410
    %v10412 = vrot.slane %v10410, 4
    %v10413 = vrot.slane %v8829, 5
    %v10414 = vsel %vm4303, %v10412, %v10413
    %v10415 = vrot.slane %v10239, 5
    %v10416 = vrot.slane %v10415, 4
    %v10417 = vrot.slane %v8831, 5
    %v10418 = vsel %vm4303, %v10416, %v10417
    %v10419 = vrot.slane %v10417, 4
    %v10420 = vrot.slane %v8832, 5
    %v10421 = vsel %vm4303, %v10419, %v10420
    %v10422 = vrot.slane %v10240, 5
    %v10423 = vrot.slane %v10422, 4
    %v10424 = vrot.slane %v8834, 5
    %v10425 = vsel %vm4303, %v10423, %v10424
    %v10426 = vrot.slane %v10424, 4
    %v10427 = vrot.slane %v8835, 5
    %v10428 = vsel %vm4303, %v10426, %v10427
    %v10429 = vrot.slane %v10241, 5
    %v10430 = vrot.slane %v10429, 4
    %v10431 = vrot.slane %v8837, 5
    %v10432 = vsel %vm4303, %v10430, %v10431
    %v10433 = vrot.slane %v10431, 4
    %v10434 = vrot.slane %v8838, 5
    %v10435 = vsel %vm4303, %v10433, %v10434
    %v10436 = vrot.slane %v10242, 5
    %v10437 = vrot.slane %v10436, 4
    %v10438 = vrot.slane %v8840, 5
    %v10439 = vsel %vm4303, %v10437, %v10438
    %v10440 = vrot.slane %v10438, 4
    %v10441 = vrot.slane %v8841, 5
    %v10442 = vsel %vm4303, %v10440, %v10441
    %v10443 = vrot.slane %v10243, 5
    %v10444 = vrot.slane %v10443, 4
    %v10445 = vrot.slane %v8843, 5
    %v10446 = vsel %vm4303, %v10444, %v10445
    %v10447 = vrot.slane %v10445, 4
    %v10448 = vrot.slane %v8844, 5
    %v10449 = vsel %vm4303, %v10447, %v10448
    %v10450 = vrot.slane %v10244, 5
    %v10451 = vrot.slane %v10450, 4
    %v10452 = vrot.slane %v8846, 5
    %v10453 = vsel %vm4303, %v10451, %v10452
    %v10454 = vrot.slane %v10452, 4
    %v10455 = vrot.slane %v8847, 5
    %v10456 = vsel %vm4303, %v10454, %v10455
    %v10457 = vrot.slane %v10245, 5
    %v10458 = vrot.slane %v10457, 4
    %v10459 = vrot.slane %v8849, 5
    %v10460 = vsel %vm4303, %v10458, %v10459
    %v10461 = vrot.slane %v10459, 4
    %v10462 = vrot.slane %v8850, 5
    %v10463 = vsel %vm4303, %v10461, %v10462
    %v10464 = vrot.slane %v10246, 5
    %v10465 = vrot.slane %v10464, 4
    %v10466 = vrot.slane %v8852, 5
    %v10467 = vsel %vm4303, %v10465, %v10466
    %v10468 = vrot.slane %v10466, 4
    %v10469 = vrot.slane %v8853, 5
    %v10470 = vsel %vm4303, %v10468, %v10469
    %v10471 = vrot.slane %v10247, 5
    %v10472 = vrot.slane %v10471, 4
    %v10473 = vrot.slane %v8855, 5
    %v10474 = vsel %vm4303, %v10472, %v10473
    %v10475 = vrot.slane %v10473, 4
    %v10476 = vrot.slane %v8856, 5
    %v10477 = vsel %vm4303, %v10475, %v10476
    %v10478 = vrot.slane %v10248, 5
    %v10479 = vrot.slane %v10478, 4
    %v10480 = vrot.slane %v8858, 5
    %v10481 = vsel %vm4303, %v10479, %v10480
    %v10482 = vrot.slane %v10480, 4
    %v10483 = vrot.slane %v8859, 5
    %v10484 = vsel %vm4303, %v10482, %v10483
    %v10485 = vrot.slane %v10249, 5
    %v10486 = vrot.slane %v10485, 4
    %v10487 = vrot.slane %v8861, 5
    %v10488 = vsel %vm4303, %v10486, %v10487
    %v10489 = vrot.slane %v10487, 4
    %v10490 = vrot.slane %v8862, 5
    %v10491 = vsel %vm4303, %v10489, %v10490
    %v10492 = vrot.slane %v10250, 5
    %v10493 = vrot.slane %v10492, 4
    %v10494 = vrot.slane %v8864, 5
    %v10495 = vsel %vm4303, %v10493, %v10494
    %v10496 = vrot.slane %v10494, 4
    %v10497 = vrot.slane %v8865, 5
    %v10498 = vsel %vm4303, %v10496, %v10497
    %v10499 = vrot.slane %v10251, 5
    %v10500 = vrot.slane %v10499, 4
    %v10501 = vrot.slane %v8867, 5
    %v10502 = vsel %vm4303, %v10500, %v10501
    %v10503 = vrot.slane %v10501, 4
    %v10504 = vrot.slane %v8868, 5
    %v10505 = vsel %vm4303, %v10503, %v10504
    %v10506 = vrot.slane %v10252, 5
    %v10507 = vrot.slane %v10506, 4
    %v10508 = vrot.slane %v8870, 5
    %v10509 = vsel %vm4303, %v10507, %v10508
    %v10510 = vrot.slane %v10508, 4
    %v10511 = vrot.slane %v8871, 5
    %v10512 = vsel %vm4303, %v10510, %v10511
    %v10513 = vrot.slane %v10253, 5
    %v10514 = vrot.slane %v10513, 4
    %v10515 = vrot.slane %v8873, 5
    %v10516 = vsel %vm4303, %v10514, %v10515
    %v10517 = vrot.slane %v10515, 4
    %v10518 = vrot.slane %v8874, 5
    %v10519 = vsel %vm4303, %v10517, %v10518
    %v10520 = vrot.slane %v10254, 5
    %v10521 = vrot.slane %v10520, 4
    %v10522 = vrot.slane %v8876, 5
    %v10523 = vsel %vm4303, %v10521, %v10522
    %v10524 = vrot.slane %v10522, 4
    %v10525 = vrot.slane %v8877, 5
    %v10526 = vsel %vm4303, %v10524, %v10525
    %v10527 = vrot.slane %v10255, 5
    %v10528 = vrot.slane %v10527, 4
    %v10529 = vrot.slane %v8879, 5
    %v10530 = vsel %vm4303, %v10528, %v10529
    %v10531 = vrot.slane %v10529, 4
    %v10532 = vrot.slane %v8880, 5
    %v10533 = vsel %vm4303, %v10531, %v10532
    %v10534 = vrot.slane %v10256, 5
    %v10535 = vrot.slane %v10534, 4
    %v10536 = vrot.slane %v8882, 5
    %v10537 = vsel %vm4303, %v10535, %v10536
    %v10538 = vrot.slane %v10536, 4
    %v10539 = vrot.slane %v8883, 5
    %v10540 = vsel %vm4303, %v10538, %v10539
    %v10541 = vrot.slane %v10257, 5
    %v10542 = vrot.slane %v10541, 4
    %v10543 = vrot.slane %v8885, 5
    %v10544 = vsel %vm4303, %v10542, %v10543
    %v10545 = vrot.slane %v10543, 4
    %v10546 = vrot.slane %v8886, 5
    %v10547 = vsel %vm4303, %v10545, %v10546
    %v10548 = vrot.slane %v10258, 5
    %v10549 = vrot.slane %v10548, 4
    %v10550 = vrot.slane %v8888, 5
    %v10551 = vsel %vm4303, %v10549, %v10550
    %v10552 = vrot.slane %v10550, 4
    %v10553 = vrot.slane %v8889, 5
    %v10554 = vsel %vm4303, %v10552, %v10553
    %v10555 = vrot.slane %v10259, 5
    %v10556 = vrot.slane %v10555, 4
    %v10557 = vrot.slane %v8891, 5
    %v10558 = vsel %vm4303, %v10556, %v10557
    %v10559 = vrot.slane %v10557, 4
    %v10560 = vrot.slane %v8892, 5
    %v10561 = vsel %vm4303, %v10559, %v10560
    %v10562 = vrot.slane %v10260, 5
    %v10563 = vrot.slane %v10562, 4
    %v10564 = vrot.slane %v8894, 5
    %v10565 = vsel %vm4303, %v10563, %v10564
    %v10566 = vrot.slane %v10564, 4
    %v10567 = vrot.slane %v8895, 5
    %v10568 = vsel %vm4303, %v10566, %v10567
    %v10569 = vrot.slane %v10261, 5
    %v10570 = vrot.slane %v10569, 4
    %v10571 = vrot.slane %v8897, 5
    %v10572 = vsel %vm4303, %v10570, %v10571
    %v10573 = vrot.slane %v10571, 4
    %v10574 = vrot.slane %v8898, 5
    %v10575 = vsel %vm4303, %v10573, %v10574
    %v10576 = vrot.slane %v10262, 5
    %v10577 = vrot.slane %v10576, 4
    %v10578 = vrot.slane %v8900, 5
    %v10579 = vsel %vm4303, %v10577, %v10578
    %v10580 = vrot.slane %v10578, 4
    %v10581 = vrot.slane %v8901, 5
    %v10582 = vsel %vm4303, %v10580, %v10581
    %v10583 = vld [vmem:[%s3 + $0x80] sm:$0xf]
    %v10584 = vld [vmem:[%s3 + $0x84] sm:$0xf]
    %v10585 = vld [vmem:[%s3 + $0x88] sm:$0xf]
    %v10586 = vld [vmem:[%s3 + $0x8c] sm:$0xf]
    %v10587 = vunpack.c.l.b16 %v10362
    %v10588 = vunpack.c.l.b16 %v10365
    %v10589 = vunpack.c.l.b16 %v10369
    %v10590 = vunpack.c.l.b16 %v10372
    %v10591 = vunpack.c.l.b16 %v10376
    %v10592 = vunpack.c.l.b16 %v10379
    %v10593 = vunpack.c.l.b16 %v10383
    %v10594 = vunpack.c.l.b16 %v10386
    %v10595 = vunpack.c.l.b16 %v10390
    %v10596 = vunpack.c.l.b16 %v10393
    %v10597 = vunpack.c.l.b16 %v10397
    %v10598 = vunpack.c.l.b16 %v10400
    %v10599 = vunpack.c.l.b16 %v10404
    %v10600 = vunpack.c.l.b16 %v10407
    %v10601 = vunpack.c.l.b16 %v10411
    %v10602 = vunpack.c.l.b16 %v10414
    %v10603 = vunpack.c.l.b16 %v10418
    %v10604 = vunpack.c.l.b16 %v10421
    %v10605 = vunpack.c.l.b16 %v10425
    %v10606 = vunpack.c.l.b16 %v10428
    %v10607 = vunpack.c.l.b16 %v10432
    %v10608 = vunpack.c.l.b16 %v10435
    %v10609 = vunpack.c.l.b16 %v10439
    %v10610 = vunpack.c.l.b16 %v10442
    %v10611 = vunpack.c.l.b16 %v10446
    %v10612 = vunpack.c.l.b16 %v10449
    %v10613 = vunpack.c.l.b16 %v10453
    %v10614 = vunpack.c.l.b16 %v10456
    %v10615 = vunpack.c.l.b16 %v10460
    %v10616 = vunpack.c.l.b16 %v10463
    %v10617 = vunpack.c.l.b16 %v10467
    %v10618 = vunpack.c.l.b16 %v10470
    %v10619 = vunpack.c.l.b16 %v10474
    %v10620 = vunpack.c.l.b16 %v10477
    %v10621 = vunpack.c.l.b16 %v10481
    %v10622 = vunpack.c.l.b16 %v10484
    %v10623 = vunpack.c.l.b16 %v10488
    %v10624 = vunpack.c.l.b16 %v10491
    %v10625 = vunpack.c.l.b16 %v10495
    %v10626 = vunpack.c.l.b16 %v10498
    %v10627 = vunpack.c.l.b16 %v10502
    %v10628 = vunpack.c.l.b16 %v10505
    %v10629 = vunpack.c.l.b16 %v10509
    %v10630 = vunpack.c.l.b16 %v10512
    %v10631 = vunpack.c.l.b16 %v10516
    %v10632 = vunpack.c.l.b16 %v10519
    %v10633 = vunpack.c.l.b16 %v10523
    %v10634 = vunpack.c.l.b16 %v10526
    %v10635 = vunpack.c.l.b16 %v10530
    %v10636 = vunpack.c.l.b16 %v10533
    %v10637 = vunpack.c.l.b16 %v10537
    %v10638 = vunpack.c.l.b16 %v10540
    %v10639 = vunpack.c.l.b16 %v10544
    %v10640 = vunpack.c.l.b16 %v10547
    %v10641 = vunpack.c.l.b16 %v10551
    %v10642 = vunpack.c.l.b16 %v10554
    %v10643 = vunpack.c.l.b16 %v10558
    %v10644 = vunpack.c.l.b16 %v10561
    %v10645 = vunpack.c.l.b16 %v10565
    %v10646 = vunpack.c.l.b16 %v10568
    %v10647 = vunpack.c.l.b16 %v10572
    %v10648 = vunpack.c.l.b16 %v10575
    %v10649 = vunpack.c.l.b16 %v10579
    %v10650 = vunpack.c.l.b16 %v10582
    %v10651 = vpack.c.b16 %v10588, %v10587
    %v10652 = vpack.c.b16 %v10590, %v10589
    %v10653 = vpack.c.b16 %v10592, %v10591
    %v10654 = vpack.c.b16 %v10594, %v10593
    %v10655 = vpack.c.b16 %v10596, %v10595
    %v10656 = vpack.c.b16 %v10598, %v10597
    %v10657 = vpack.c.b16 %v10600, %v10599
    %v10658 = vpack.c.b16 %v10602, %v10601
    %v10659 = vpack.c.b16 %v10604, %v10603
    %v10660 = vpack.c.b16 %v10606, %v10605
    %v10661 = vpack.c.b16 %v10608, %v10607
    %v10662 = vpack.c.b16 %v10610, %v10609
    %v10663 = vpack.c.b16 %v10612, %v10611
    %v10664 = vpack.c.b16 %v10614, %v10613
    %v10665 = vpack.c.b16 %v10616, %v10615
    %v10666 = vpack.c.b16 %v10618, %v10617
    %v10667 = vpack.c.b16 %v10620, %v10619
    %v10668 = vpack.c.b16 %v10622, %v10621
    %v10669 = vpack.c.b16 %v10624, %v10623
    %v10670 = vpack.c.b16 %v10626, %v10625
    %v10671 = vpack.c.b16 %v10628, %v10627
    %v10672 = vpack.c.b16 %v10630, %v10629
    %v10673 = vpack.c.b16 %v10632, %v10631
    %v10674 = vpack.c.b16 %v10634, %v10633
    %v10675 = vpack.c.b16 %v10636, %v10635
    %v10676 = vpack.c.b16 %v10638, %v10637
    %v10677 = vpack.c.b16 %v10640, %v10639
    %v10678 = vpack.c.b16 %v10642, %v10641
    %v10679 = vpack.c.b16 %v10644, %v10643
    %v10680 = vpack.c.b16 %v10646, %v10645
    %v10681 = vpack.c.b16 %v10648, %v10647
    %v10682 = vpack.c.b16 %v10650, %v10649
    %v10687 = vunpack.c.l.b16 %v10583
    %v10688 = vunpack.c.l.b16 %v10584
    %v10689 = vunpack.c.l.b16 %v10585
    %v10690 = vunpack.c.l.b16 %v10586
    %v10691 = vpack.c.b16 %v10688, %v10687
    %v10692 = vpack.c.b16 %v10690, %v10689
    %v10696 = vsel %vm3262, %v10651, 0
    %v10699 = vsel %vm3262, %v10652, 0
    %v10702 = vsel %vm3262, %v10653, 0
    %v10705 = vsel %vm3262, %v10654, 0
    %v10708 = vsel %vm3262, %v10655, 0
    %v10711 = vsel %vm3262, %v10656, 0
    %v10714 = vsel %vm3262, %v10657, 0
    %v10717 = vsel %vm3262, %v10658, 0
    %v10720 = vsel %vm3262, %v10659, 0
    %v10723 = vsel %vm3262, %v10660, 0
    %v10726 = vsel %vm3262, %v10661, 0
    %v10729 = vsel %vm3262, %v10662, 0
    %v10732 = vsel %vm3262, %v10663, 0
    %v10735 = vsel %vm3262, %v10664, 0
    %v10738 = vsel %vm3262, %v10665, 0
    %v10741 = vsel %vm3262, %v10666, 0
    %v10744 = vsel %vm3262, %v10667, 0
    %v10747 = vsel %vm3262, %v10668, 0
    %v10750 = vsel %vm3262, %v10669, 0
    %v10753 = vsel %vm3262, %v10670, 0
    %v10756 = vsel %vm3262, %v10671, 0
    %v10759 = vsel %vm3262, %v10672, 0
    %v10762 = vsel %vm3262, %v10673, 0
    %v10765 = vsel %vm3262, %v10674, 0
    %v10768 = vsel %vm3262, %v10675, 0
    %v10771 = vsel %vm3262, %v10676, 0
    %v10774 = vsel %vm3262, %v10677, 0
    %v10777 = vsel %vm3262, %v10678, 0
    %v10780 = vsel %vm3262, %v10679, 0
    %v10783 = vsel %vm3262, %v10680, 0
    %v10786 = vsel %vm3262, %v10681, 0
    %v10789 = vsel %vm3262, %v10682, 0
    %10791 = vmatprep.subr.bf16.mxu0 0
    %10792 = vmatpush1.bf16.msra.mxu0 %v10691
    %10793 = vmatprep.subr.bf16.mxu0 0
    %10794 = vmatpush1.bf16.msra.mxu0 %v10692
    %10795 = vmatprep.subr.bf16.mxu0 0
    %10796 = vmatpush1.bf16.msra.mxu0 0
    %10797 = vmatprep.subr.bf16.mxu0 0
    %10798 = vmatpush1.bf16.msra.mxu0 0
    %10799 = vmatprep.subr.bf16.mxu0 0
    %10800 = vmatpush1.bf16.msra.mxu0 0
    %10801 = vmatprep.subr.bf16.mxu0 0
    %10802 = vmatpush1.bf16.msra.mxu0 0
    %10803 = vmatprep.subr.bf16.mxu0 0
    %10804 = vmatpush1.bf16.msra.mxu0 0
    %10805 = vmatprep.subr.bf16.mxu0 0
    %10806 = vmatpush1.bf16.msra.mxu0 0
    %10807 = vmatprep.subr.bf16.mxu0 0
    %10808 = vmatpush1.bf16.msra.mxu0 0
    %10809 = vmatprep.subr.bf16.mxu0 0
    %10810 = vmatpush1.bf16.msra.mxu0 0
    %10811 = vmatprep.subr.bf16.mxu0 0
    %10812 = vmatpush1.bf16.msra.mxu0 0
    %10813 = vmatprep.subr.bf16.mxu0 0
    %10814 = vmatpush1.bf16.msra.mxu0 0
    %10815 = vmatprep.subr.bf16.mxu0 0
    %10816 = vmatpush1.bf16.msra.mxu0 0
    %10817 = vmatprep.subr.bf16.mxu0 0
    %10818 = vmatpush1.bf16.msra.mxu0 0
    %10819 = vmatprep.subr.bf16.mxu0 0
    %10820 = vmatpush1.bf16.msra.mxu0 0
    %10821 = vmatprep.subr.bf16.mxu0 0
    %10822 = vmatpush1.bf16.msra.mxu0 0
    %10823 = vmatprep.mubr.bf16.mxu0 0
    %10824 = vmatmul.mubr.bf16.gmra.mrb[0].mxu0 %v10696
    %v10825 = vpop.f32.mrb[0].mxu0
    %v10826 = vadd.f32 0.0, %v10825
    %v10827 = vpop.f32.mrb[0].mxu0
    %v10828 = vpop.f32.mrb[0].mxu0
    %v10829 = vadd.f32 0.0, %v10828
    %v10830 = vpop.f32.mrb[0].mxu0
    %10831 = vmatprep.mubr.bf16.mxu0 0
    %10832 = vmatmul.mubr.bf16.gmra.mrb[0].mxu0 %v10699
    %v10833 = vpop.f32.mrb[0].mxu0
    %v10834 = vadd.f32 0.0, %v10833
    %v10835 = vpop.f32.mrb[0].mxu0
    %v10836 = vpop.f32.mrb[0].mxu0
    %v10837 = vadd.f32 0.0, %v10836
    %v10838 = vpop.f32.mrb[0].mxu0
    %10839 = vmatprep.mubr.bf16.mxu0 0
    %10840 = vmatmul.mubr.bf16.gmra.mrb[0].mxu0 %v10702
    %v10841 = vpop.f32.mrb[0].mxu0
    %v10842 = vadd.f32 0.0, %v10841
    %v10843 = vpop.f32.mrb[0].mxu0
    %v10844 = vpop.f32.mrb[0].mxu0
    %v10845 = vadd.f32 0.0, %v10844
    %v10846 = vpop.f32.mrb[0].mxu0
    %10847 = vmatprep.mubr.bf16.mxu0 0
    %10848 = vmatmul.mubr.bf16.gmra.mrb[0].mxu0 %v10705
    %v10849 = vpop.f32.mrb[0].mxu0
    %v10850 = vadd.f32 0.0, %v10849
    %v10851 = vpop.f32.mrb[0].mxu0
    %v10852 = vpop.f32.mrb[0].mxu0
    %v10853 = vadd.f32 0.0, %v10852
    %v10854 = vpop.f32.mrb[0].mxu0
    %10855 = vmatprep.mubr.bf16.mxu0 0
    %10856 = vmatmul.mubr.bf16.gmra.mrb[0].mxu0 %v10708
    %v10857 = vpop.f32.mrb[0].mxu0
    %v10858 = vadd.f32 0.0, %v10857
    %v10859 = vpop.f32.mrb[0].mxu0
    %v10860 = vpop.f32.mrb[0].mxu0
    %v10861 = vadd.f32 0.0, %v10860
    %v10862 = vpop.f32.mrb[0].mxu0
    %10863 = vmatprep.mubr.bf16.mxu0 0
    %10864 = vmatmul.mubr.bf16.gmra.mrb[0].mxu0 %v10711
    %v10865 = vpop.f32.mrb[0].mxu0
    %v10866 = vadd.f32 0.0, %v10865
    %v10867 = vpop.f32.mrb[0].mxu0
    %v10868 = vpop.f32.mrb[0].mxu0
    %v10869 = vadd.f32 0.0, %v10868
    %v10870 = vpop.f32.mrb[0].mxu0
    %10871 = vmatprep.mubr.bf16.mxu0 0
    %10872 = vmatmul.mubr.bf16.gmra.mrb[0].mxu0 %v10714
    %v10873 = vpop.f32.mrb[0].mxu0
    %v10874 = vadd.f32 0.0, %v10873
    %v10875 = vpop.f32.mrb[0].mxu0
    %v10876 = vpop.f32.mrb[0].mxu0
    %v10877 = vadd.f32 0.0, %v10876
    %v10878 = vpop.f32.mrb[0].mxu0
    %10879 = vmatprep.mubr.bf16.mxu0 0
    %10880 = vmatmul.mubr.bf16.gmra.mrb[0].mxu0 %v10717
    %v10881 = vpop.f32.mrb[0].mxu0
    %v10882 = vadd.f32 0.0, %v10881
    %v10883 = vpop.f32.mrb[0].mxu0
    %v10884 = vpop.f32.mrb[0].mxu0
    %v10885 = vadd.f32 0.0, %v10884
    %v10886 = vpop.f32.mrb[0].mxu0
    %10887 = vmatprep.mubr.bf16.mxu0 0
    %10888 = vmatmul.mubr.bf16.gmra.mrb[0].mxu0 %v10720
    %v10889 = vpop.f32.mrb[0].mxu0
    %v10890 = vadd.f32 0.0, %v10889
    %v10891 = vpop.f32.mrb[0].mxu0
    %v10892 = vpop.f32.mrb[0].mxu0
    %v10893 = vadd.f32 0.0, %v10892
    %v10894 = vpop.f32.mrb[0].mxu0
    %10895 = vmatprep.mubr.bf16.mxu0 0
    %10896 = vmatmul.mubr.bf16.gmra.mrb[0].mxu0 %v10723
    %v10897 = vpop.f32.mrb[0].mxu0
    %v10898 = vadd.f32 0.0, %v10897
    %v10899 = vpop.f32.mrb[0].mxu0
    %v10900 = vpop.f32.mrb[0].mxu0
    %v10901 = vadd.f32 0.0, %v10900
    %v10902 = vpop.f32.mrb[0].mxu0
    %10903 = vmatprep.mubr.bf16.mxu0 0
    %10904 = vmatmul.mubr.bf16.gmra.mrb[0].mxu0 %v10726
    %v10905 = vpop.f32.mrb[0].mxu0
    %v10906 = vadd.f32 0.0, %v10905
    %v10907 = vpop.f32.mrb[0].mxu0
    %v10908 = vpop.f32.mrb[0].mxu0
    %v10909 = vadd.f32 0.0, %v10908
    %v10910 = vpop.f32.mrb[0].mxu0
    %10911 = vmatprep.mubr.bf16.mxu0 0
    %10912 = vmatmul.mubr.bf16.gmra.mrb[0].mxu0 %v10729
    %v10913 = vpop.f32.mrb[0].mxu0
    %v10914 = vadd.f32 0.0, %v10913
    %v10915 = vpop.f32.mrb[0].mxu0
    %v10916 = vpop.f32.mrb[0].mxu0
    %v10917 = vadd.f32 0.0, %v10916
    %v10918 = vpop.f32.mrb[0].mxu0
    %10919 = vmatprep.mubr.bf16.mxu0 0
    %10920 = vmatmul.mubr.bf16.gmra.mrb[0].mxu0 %v10732
    %v10921 = vpop.f32.mrb[0].mxu0
    %v10922 = vadd.f32 0.0, %v10921
    %v10923 = vpop.f32.mrb[0].mxu0
    %v10924 = vpop.f32.mrb[0].mxu0
    %v10925 = vadd.f32 0.0, %v10924
    %v10926 = vpop.f32.mrb[0].mxu0
    %10927 = vmatprep.mubr.bf16.mxu0 0
    %10928 = vmatmul.mubr.bf16.gmra.mrb[0].mxu0 %v10735
    %v10929 = vpop.f32.mrb[0].mxu0
    %v10930 = vadd.f32 0.0, %v10929
    %v10931 = vpop.f32.mrb[0].mxu0
    %v10932 = vpop.f32.mrb[0].mxu0
    %v10933 = vadd.f32 0.0, %v10932
    %v10934 = vpop.f32.mrb[0].mxu0
    %10935 = vmatprep.mubr.bf16.mxu0 0
    %10936 = vmatmul.mubr.bf16.gmra.mrb[0].mxu0 %v10738
    %v10937 = vpop.f32.mrb[0].mxu0
    %v10938 = vadd.f32 0.0, %v10937
    %v10939 = vpop.f32.mrb[0].mxu0
    %v10940 = vpop.f32.mrb[0].mxu0
    %v10941 = vadd.f32 0.0, %v10940
    %v10942 = vpop.f32.mrb[0].mxu0
    %10943 = vmatprep.mubr.bf16.mxu0 0
    %10944 = vmatmul.mubr.bf16.gmra.mrb[0].mxu0 %v10741
    %v10945 = vpop.f32.mrb[0].mxu0
    %v10946 = vadd.f32 0.0, %v10945
    %v10947 = vpop.f32.mrb[0].mxu0
    %v10948 = vpop.f32.mrb[0].mxu0
    %v10949 = vadd.f32 0.0, %v10948
    %v10950 = vpop.f32.mrb[0].mxu0
    %10951 = vmatprep.mubr.bf16.mxu0 0
    %10952 = vmatmul.mubr.bf16.gmra.mrb[0].mxu0 %v10744
    %v10953 = vpop.f32.mrb[0].mxu0
    %v10954 = vadd.f32 0.0, %v10953
    %v10955 = vpop.f32.mrb[0].mxu0
    %v10956 = vpop.f32.mrb[0].mxu0
    %v10957 = vadd.f32 0.0, %v10956
    %v10958 = vpop.f32.mrb[0].mxu0
    %10959 = vmatprep.mubr.bf16.mxu0 0
    %10960 = vmatmul.mubr.bf16.gmra.mrb[0].mxu0 %v10747
    %v10961 = vpop.f32.mrb[0].mxu0
    %v10962 = vadd.f32 0.0, %v10961
    %v10963 = vpop.f32.mrb[0].mxu0
    %v10964 = vpop.f32.mrb[0].mxu0
    %v10965 = vadd.f32 0.0, %v10964
    %v10966 = vpop.f32.mrb[0].mxu0
    %10967 = vmatprep.mubr.bf16.mxu0 0
    %10968 = vmatmul.mubr.bf16.gmra.mrb[0].mxu0 %v10750
    %v10969 = vpop.f32.mrb[0].mxu0
    %v10970 = vadd.f32 0.0, %v10969
    %v10971 = vpop.f32.mrb[0].mxu0
    %v10972 = vpop.f32.mrb[0].mxu0
    %v10973 = vadd.f32 0.0, %v10972
    %v10974 = vpop.f32.mrb[0].mxu0
    %10975 = vmatprep.mubr.bf16.mxu0 0
    %10976 = vmatmul.mubr.bf16.gmra.mrb[0].mxu0 %v10753
    %v10977 = vpop.f32.mrb[0].mxu0
    %v10978 = vadd.f32 0.0, %v10977
    %v10979 = vpop.f32.mrb[0].mxu0
    %v10980 = vpop.f32.mrb[0].mxu0
    %v10981 = vadd.f32 0.0, %v10980
    %v10982 = vpop.f32.mrb[0].mxu0
    %10983 = vmatprep.mubr.bf16.mxu0 0
    %10984 = vmatmul.mubr.bf16.gmra.mrb[0].mxu0 %v10756
    %v10985 = vpop.f32.mrb[0].mxu0
    %v10986 = vadd.f32 0.0, %v10985
    %v10987 = vpop.f32.mrb[0].mxu0
    %v10988 = vpop.f32.mrb[0].mxu0
    %v10989 = vadd.f32 0.0, %v10988
    %v10990 = vpop.f32.mrb[0].mxu0
    %10991 = vmatprep.mubr.bf16.mxu0 0
    %10992 = vmatmul.mubr.bf16.gmra.mrb[0].mxu0 %v10759
    %v10993 = vpop.f32.mrb[0].mxu0
    %v10994 = vadd.f32 0.0, %v10993
    %v10995 = vpop.f32.mrb[0].mxu0
    %v10996 = vpop.f32.mrb[0].mxu0
    %v10997 = vadd.f32 0.0, %v10996
    %v10998 = vpop.f32.mrb[0].mxu0
    %10999 = vmatprep.mubr.bf16.mxu0 0
    %11000 = vmatmul.mubr.bf16.gmra.mrb[0].mxu0 %v10762
    %v11001 = vpop.f32.mrb[0].mxu0
    %v11002 = vadd.f32 0.0, %v11001
    %v11003 = vpop.f32.mrb[0].mxu0
    %v11004 = vpop.f32.mrb[0].mxu0
    %v11005 = vadd.f32 0.0, %v11004
    %v11006 = vpop.f32.mrb[0].mxu0
    %11007 = vmatprep.mubr.bf16.mxu0 0
    %11008 = vmatmul.mubr.bf16.gmra.mrb[0].mxu0 %v10765
    %v11009 = vpop.f32.mrb[0].mxu0
    %v11010 = vadd.f32 0.0, %v11009
    %v11011 = vpop.f32.mrb[0].mxu0
    %v11012 = vpop.f32.mrb[0].mxu0
    %v11013 = vadd.f32 0.0, %v11012
    %v11014 = vpop.f32.mrb[0].mxu0
    %11015 = vmatprep.mubr.bf16.mxu0 0
    %11016 = vmatmul.mubr.bf16.gmra.mrb[0].mxu0 %v10768
    %v11017 = vpop.f32.mrb[0].mxu0
    %v11018 = vadd.f32 0.0, %v11017
    %v11019 = vpop.f32.mrb[0].mxu0
    %v11020 = vpop.f32.mrb[0].mxu0
    %v11021 = vadd.f32 0.0, %v11020
    %v11022 = vpop.f32.mrb[0].mxu0
    %11023 = vmatprep.mubr.bf16.mxu0 0
    %11024 = vmatmul.mubr.bf16.gmra.mrb[0].mxu0 %v10771
    %v11025 = vpop.f32.mrb[0].mxu0
    %v11026 = vadd.f32 0.0, %v11025
    %v11027 = vpop.f32.mrb[0].mxu0
    %v11028 = vpop.f32.mrb[0].mxu0
    %v11029 = vadd.f32 0.0, %v11028
    %v11030 = vpop.f32.mrb[0].mxu0
    %11031 = vmatprep.mubr.bf16.mxu0 0
    %11032 = vmatmul.mubr.bf16.gmra.mrb[0].mxu0 %v10774
    %v11033 = vpop.f32.mrb[0].mxu0
    %v11034 = vadd.f32 0.0, %v11033
    %v11035 = vpop.f32.mrb[0].mxu0
    %v11036 = vpop.f32.mrb[0].mxu0
    %v11037 = vadd.f32 0.0, %v11036
    %v11038 = vpop.f32.mrb[0].mxu0
    %11039 = vmatprep.mubr.bf16.mxu0 0
    %11040 = vmatmul.mubr.bf16.gmra.mrb[0].mxu0 %v10777
    %v11041 = vpop.f32.mrb[0].mxu0
    %v11042 = vadd.f32 0.0, %v11041
    %v11043 = vpop.f32.mrb[0].mxu0
    %v11044 = vpop.f32.mrb[0].mxu0
    %v11045 = vadd.f32 0.0, %v11044
    %v11046 = vpop.f32.mrb[0].mxu0
    %11047 = vmatprep.mubr.bf16.mxu0 0
    %11048 = vmatmul.mubr.bf16.gmra.mrb[0].mxu0 %v10780
    %v11049 = vpop.f32.mrb[0].mxu0
    %v11050 = vadd.f32 0.0, %v11049
    %v11051 = vpop.f32.mrb[0].mxu0
    %v11052 = vpop.f32.mrb[0].mxu0
    %v11053 = vadd.f32 0.0, %v11052
    %v11054 = vpop.f32.mrb[0].mxu0
    %11055 = vmatprep.mubr.bf16.mxu0 0
    %11056 = vmatmul.mubr.bf16.gmra.mrb[0].mxu0 %v10783
    %v11057 = vpop.f32.mrb[0].mxu0
    %v11058 = vadd.f32 0.0, %v11057
    %v11059 = vpop.f32.mrb[0].mxu0
    %v11060 = vpop.f32.mrb[0].mxu0
    %v11061 = vadd.f32 0.0, %v11060
    %v11062 = vpop.f32.mrb[0].mxu0
    %11063 = vmatprep.mubr.bf16.mxu0 0
    %11064 = vmatmul.mubr.bf16.gmra.mrb[0].mxu0 %v10786
    %v11065 = vpop.f32.mrb[0].mxu0
    %v11066 = vadd.f32 0.0, %v11065
    %v11067 = vpop.f32.mrb[0].mxu0
    %v11068 = vpop.f32.mrb[0].mxu0
    %v11069 = vadd.f32 0.0, %v11068
    %v11070 = vpop.f32.mrb[0].mxu0
    %11071 = vmatprep.mubr.bf16.mxu0 0
    %11072 = vmatmul.mubr.bf16.gmra.mrb[0].mxu0 %v10789
    %v11073 = vpop.f32.mrb[0].mxu0
    %v11074 = vadd.f32 0.0, %v11073
    %v11075 = vpop.f32.mrb[0].mxu0
    %v11076 = vpop.f32.mrb[0].mxu0
    %v11077 = vadd.f32 0.0, %v11076
    %v11078 = vpop.f32.mrb[0].mxu0
    %11079 = vdwg.mxu0
    %v11080 = vadd.f32 %v10167, %v10826
    %v11081 = vadd.f32 %v10168, %v10829
    %v11082 = vadd.f32 %v10169, %v10834
    %v11083 = vadd.f32 %v10170, %v10837
    %v11084 = vadd.f32 %v10171, %v10842
    %v11085 = vadd.f32 %v10172, %v10845
    %v11086 = vadd.f32 %v10173, %v10850
    %v11087 = vadd.f32 %v10174, %v10853
    %v11088 = vadd.f32 %v10175, %v10858
    %v11089 = vadd.f32 %v10176, %v10861
    %v11090 = vadd.f32 %v10177, %v10866
    %v11091 = vadd.f32 %v10178, %v10869
    %v11092 = vadd.f32 %v10179, %v10874
    %v11093 = vadd.f32 %v10180, %v10877
    %v11094 = vadd.f32 %v10181, %v10882
    %v11095 = vadd.f32 %v10182, %v10885
    %v11096 = vadd.f32 %v10183, %v10890
    %v11097 = vadd.f32 %v10184, %v10893
    %v11098 = vadd.f32 %v10185, %v10898
    %v11099 = vadd.f32 %v10186, %v10901
    %v11100 = vadd.f32 %v10187, %v10906
    %v11101 = vadd.f32 %v10188, %v10909
    %v11102 = vadd.f32 %v10189, %v10914
    %v11103 = vadd.f32 %v10190, %v10917
    %v11104 = vadd.f32 %v10191, %v10922
    %v11105 = vadd.f32 %v10192, %v10925
    %v11106 = vadd.f32 %v10193, %v10930
    %v11107 = vadd.f32 %v10194, %v10933
    %v11108 = vadd.f32 %v10195, %v10938
    %v11109 = vadd.f32 %v10196, %v10941
    %v11110 = vadd.f32 %v10197, %v10946
    %v11111 = vadd.f32 %v10198, %v10949
    %v11112 = vadd.f32 %v10199, %v10954
    %v11113 = vadd.f32 %v10200, %v10957
    %v11114 = vadd.f32 %v10201, %v10962
    %v11115 = vadd.f32 %v10202, %v10965
    %v11116 = vadd.f32 %v10203, %v10970
    %v11117 = vadd.f32 %v10204, %v10973
    %v11118 = vadd.f32 %v10205, %v10978
    %v11119 = vadd.f32 %v10206, %v10981
    %v11120 = vadd.f32 %v10207, %v10986
    %v11121 = vadd.f32 %v10208, %v10989
    %v11122 = vadd.f32 %v10209, %v10994
    %v11123 = vadd.f32 %v10210, %v10997
    %v11124 = vadd.f32 %v10211, %v11002
    %v11125 = vadd.f32 %v10212, %v11005
    %v11126 = vadd.f32 %v10213, %v11010
    %v11127 = vadd.f32 %v10214, %v11013
    %v11128 = vadd.f32 %v10215, %v11018
    %v11129 = vadd.f32 %v10216, %v11021
    %v11130 = vadd.f32 %v10217, %v11026
    %v11131 = vadd.f32 %v10218, %v11029
    %v11132 = vadd.f32 %v10219, %v11034
    %v11133 = vadd.f32 %v10220, %v11037
    %v11134 = vadd.f32 %v10221, %v11042
    %v11135 = vadd.f32 %v10222, %v11045
    %v11136 = vadd.f32 %v10223, %v11050
    %v11137 = vadd.f32 %v10224, %v11053
    %v11138 = vadd.f32 %v10225, %v11058
    %v11139 = vadd.f32 %v10226, %v11061
    %v11140 = vadd.f32 %v10227, %v11066
    %v11141 = vadd.f32 %v10228, %v11069
    %v11142 = vadd.f32 %v10229, %v11074
    %v11143 = vadd.f32 %v10230, %v11077
    %v11144 = vld [vmem:[%s4] sm:$0x1]
    %v11146 = vlaneseq
    %v11147 = vshrl.u32 %v11146, 7
    %v11148 = vsub.s32 0, %v11147
    %v11149 = vrot.slane %v11144, %v11148
    %v11151 = vadd.f32 %v11080, %v11149
    %v11152 = vadd.f32 %v11081, %v11149
    %v11153 = vadd.f32 %v11082, %v11149
    %v11154 = vadd.f32 %v11083, %v11149
    %v11155 = vadd.f32 %v11084, %v11149
    %v11156 = vadd.f32 %v11085, %v11149
    %v11157 = vadd.f32 %v11086, %v11149
    %v11158 = vadd.f32 %v11087, %v11149
    %v11159 = vadd.f32 %v11088, %v11149
    %v11160 = vadd.f32 %v11089, %v11149
    %v11161 = vadd.f32 %v11090, %v11149
    %v11162 = vadd.f32 %v11091, %v11149
    %v11163 = vadd.f32 %v11092, %v11149
    %v11164 = vadd.f32 %v11093, %v11149
    %v11165 = vadd.f32 %v11094, %v11149
    %v11166 = vadd.f32 %v11095, %v11149
    %v11167 = vadd.f32 %v11096, %v11149
    %v11168 = vadd.f32 %v11097, %v11149
    %v11169 = vadd.f32 %v11098, %v11149
    %v11170 = vadd.f32 %v11099, %v11149
    %v11171 = vadd.f32 %v11100, %v11149
    %v11172 = vadd.f32 %v11101, %v11149
    %v11173 = vadd.f32 %v11102, %v11149
    %v11174 = vadd.f32 %v11103, %v11149
    %v11175 = vadd.f32 %v11104, %v11149
    %v11176 = vadd.f32 %v11105, %v11149
    %v11177 = vadd.f32 %v11106, %v11149
    %v11178 = vadd.f32 %v11107, %v11149
    %v11179 = vadd.f32 %v11108, %v11149
    %v11180 = vadd.f32 %v11109, %v11149
    %v11181 = vadd.f32 %v11110, %v11149
    %v11182 = vadd.f32 %v11111, %v11149
    %v11183 = vadd.f32 %v11112, %v11149
    %v11184 = vadd.f32 %v11113, %v11149
    %v11185 = vadd.f32 %v11114, %v11149
    %v11186 = vadd.f32 %v11115, %v11149
    %v11187 = vadd.f32 %v11116, %v11149
    %v11188 = vadd.f32 %v11117, %v11149
    %v11189 = vadd.f32 %v11118, %v11149
    %v11190 = vadd.f32 %v11119, %v11149
    %v11191 = vadd.f32 %v11120, %v11149
    %v11192 = vadd.f32 %v11121, %v11149
    %v11193 = vadd.f32 %v11122, %v11149
    %v11194 = vadd.f32 %v11123, %v11149
    %v11195 = vadd.f32 %v11124, %v11149
    %v11196 = vadd.f32 %v11125, %v11149
    %v11197 = vadd.f32 %v11126, %v11149
    %v11198 = vadd.f32 %v11127, %v11149
    %v11199 = vadd.f32 %v11128, %v11149
    %v11200 = vadd.f32 %v11129, %v11149
    %v11201 = vadd.f32 %v11130, %v11149
    %v11202 = vadd.f32 %v11131, %v11149
    %v11203 = vadd.f32 %v11132, %v11149
    %v11204 = vadd.f32 %v11133, %v11149
    %v11205 = vadd.f32 %v11134, %v11149
    %v11206 = vadd.f32 %v11135, %v11149
    %v11207 = vadd.f32 %v11136, %v11149
    %v11208 = vadd.f32 %v11137, %v11149
    %v11209 = vadd.f32 %v11138, %v11149
    %v11210 = vadd.f32 %v11139, %v11149
    %v11211 = vadd.f32 %v11140, %v11149
    %v11212 = vadd.f32 %v11141, %v11149
    %v11213 = vadd.f32 %v11142, %v11149
    %v11214 = vadd.f32 %v11143, %v11149
    %v11215 = vmul.f32 %v11151, 0.5
    %v11216 = vmul.f32 %v11152, 0.5
    %v11217 = vmul.f32 %v11153, 0.5
    %v11218 = vmul.f32 %v11154, 0.5
    %v11219 = vmul.f32 %v11155, 0.5
    %v11220 = vmul.f32 %v11156, 0.5
    %v11221 = vmul.f32 %v11157, 0.5
    %v11222 = vmul.f32 %v11158, 0.5
    %v11223 = vmul.f32 %v11159, 0.5
    %v11224 = vmul.f32 %v11160, 0.5
    %v11225 = vmul.f32 %v11161, 0.5
    %v11226 = vmul.f32 %v11162, 0.5
    %v11227 = vmul.f32 %v11163, 0.5
    %v11228 = vmul.f32 %v11164, 0.5
    %v11229 = vmul.f32 %v11165, 0.5
    %v11230 = vmul.f32 %v11166, 0.5
    %v11231 = vmul.f32 %v11167, 0.5
    %v11232 = vmul.f32 %v11168, 0.5
    %v11233 = vmul.f32 %v11169, 0.5
    %v11234 = vmul.f32 %v11170, 0.5
    %v11235 = vmul.f32 %v11171, 0.5
    %v11236 = vmul.f32 %v11172, 0.5
    %v11237 = vmul.f32 %v11173, 0.5
    %v11238 = vmul.f32 %v11174, 0.5
    %v11239 = vmul.f32 %v11175, 0.5
    %v11240 = vmul.f32 %v11176, 0.5
    %v11241 = vmul.f32 %v11177, 0.5
    %v11242 = vmul.f32 %v11178, 0.5
    %v11243 = vmul.f32 %v11179, 0.5
    %v11244 = vmul.f32 %v11180, 0.5
    %v11245 = vmul.f32 %v11181, 0.5
    %v11246 = vmul.f32 %v11182, 0.5
    %v11247 = vmul.f32 %v11183, 0.5
    %v11248 = vmul.f32 %v11184, 0.5
    %v11249 = vmul.f32 %v11185, 0.5
    %v11250 = vmul.f32 %v11186, 0.5
    %v11251 = vmul.f32 %v11187, 0.5
    %v11252 = vmul.f32 %v11188, 0.5
    %v11253 = vmul.f32 %v11189, 0.5
    %v11254 = vmul.f32 %v11190, 0.5
    %v11255 = vmul.f32 %v11191, 0.5
    %v11256 = vmul.f32 %v11192, 0.5
    %v11257 = vmul.f32 %v11193, 0.5
    %v11258 = vmul.f32 %v11194, 0.5
    %v11259 = vmul.f32 %v11195, 0.5
    %v11260 = vmul.f32 %v11196, 0.5
    %v11261 = vmul.f32 %v11197, 0.5
    %v11262 = vmul.f32 %v11198, 0.5
    %v11263 = vmul.f32 %v11199, 0.5
    %v11264 = vmul.f32 %v11200, 0.5
    %v11265 = vmul.f32 %v11201, 0.5
    %v11266 = vmul.f32 %v11202, 0.5
    %v11267 = vmul.f32 %v11203, 0.5
    %v11268 = vmul.f32 %v11204, 0.5
    %v11269 = vmul.f32 %v11205, 0.5
    %v11270 = vmul.f32 %v11206, 0.5
    %v11271 = vmul.f32 %v11207, 0.5
    %v11272 = vmul.f32 %v11208, 0.5
    %v11273 = vmul.f32 %v11209, 0.5
    %v11274 = vmul.f32 %v11210, 0.5
    %v11275 = vmul.f32 %v11211, 0.5
    %v11276 = vmul.f32 %v11212, 0.5
    %v11277 = vmul.f32 %v11213, 0.5
    %v11278 = vmul.f32 %v11214, 0.5
    %v11279 = vtanh.pop %v11215
    %v11280 = vtanh.pop %v11216
    %v11281 = vtanh.pop %v11217
    %v11282 = vtanh.pop %v11218
    %v11283 = vtanh.pop %v11219
    %v11284 = vtanh.pop %v11220
    %v11285 = vtanh.pop %v11221
    %v11286 = vtanh.pop %v11222
    %v11287 = vtanh.pop %v11223
    %v11288 = vtanh.pop %v11224
    %v11289 = vtanh.pop %v11225
    %v11290 = vtanh.pop %v11226
    %v11291 = vtanh.pop %v11227
    %v11292 = vtanh.pop %v11228
    %v11293 = vtanh.pop %v11229
    %v11294 = vtanh.pop %v11230
    %v11295 = vtanh.pop %v11231
    %v11296 = vtanh.pop %v11232
    %v11297 = vtanh.pop %v11233
    %v11298 = vtanh.pop %v11234
    %v11299 = vtanh.pop %v11235
    %v11300 = vtanh.pop %v11236
    %v11301 = vtanh.pop %v11237
    %v11302 = vtanh.pop %v11238
    %v11303 = vtanh.pop %v11239
    %v11304 = vtanh.pop %v11240
    %v11305 = vtanh.pop %v11241
    %v11306 = vtanh.pop %v11242
    %v11307 = vtanh.pop %v11243
    %v11308 = vtanh.pop %v11244
    %v11309 = vtanh.pop %v11245
    %v11310 = vtanh.pop %v11246
    %v11311 = vtanh.pop %v11247
    %v11312 = vtanh.pop %v11248
    %v11313 = vtanh.pop %v11249
    %v11314 = vtanh.pop %v11250
    %v11315 = vtanh.pop %v11251
    %v11316 = vtanh.pop %v11252
    %v11317 = vtanh.pop %v11253
    %v11318 = vtanh.pop %v11254
    %v11319 = vtanh.pop %v11255
    %v11320 = vtanh.pop %v11256
    %v11321 = vtanh.pop %v11257
    %v11322 = vtanh.pop %v11258
    %v11323 = vtanh.pop %v11259
    %v11324 = vtanh.pop %v11260
    %v11325 = vtanh.pop %v11261
    %v11326 = vtanh.pop %v11262
    %v11327 = vtanh.pop %v11263
    %v11328 = vtanh.pop %v11264
    %v11329 = vtanh.pop %v11265
    %v11330 = vtanh.pop %v11266
    %v11331 = vtanh.pop %v11267
    %v11332 = vtanh.pop %v11268
    %v11333 = vtanh.pop %v11269
    %v11334 = vtanh.pop %v11270
    %v11335 = vtanh.pop %v11271
    %v11336 = vtanh.pop %v11272
    %v11337 = vtanh.pop %v11273
    %v11338 = vtanh.pop %v11274
    %v11339 = vtanh.pop %v11275
    %v11340 = vtanh.pop %v11276
    %v11341 = vtanh.pop %v11277
    %v11342 = vtanh.pop %v11278
    %v11343 = vadd.f32 %v11279, 1.0
    %v11344 = vadd.f32 %v11280, 1.0
    %v11345 = vadd.f32 %v11281, 1.0
    %v11346 = vadd.f32 %v11282, 1.0
    %v11347 = vadd.f32 %v11283, 1.0
    %v11348 = vadd.f32 %v11284, 1.0
    %v11349 = vadd.f32 %v11285, 1.0
    %v11350 = vadd.f32 %v11286, 1.0
    %v11351 = vadd.f32 %v11287, 1.0
    %v11352 = vadd.f32 %v11288, 1.0
    %v11353 = vadd.f32 %v11289, 1.0
    %v11354 = vadd.f32 %v11290, 1.0
    %v11355 = vadd.f32 %v11291, 1.0
    %v11356 = vadd.f32 %v11292, 1.0
    %v11357 = vadd.f32 %v11293, 1.0
    %v11358 = vadd.f32 %v11294, 1.0
    %v11359 = vadd.f32 %v11295, 1.0
    %v11360 = vadd.f32 %v11296, 1.0
    %v11361 = vadd.f32 %v11297, 1.0
    %v11362 = vadd.f32 %v11298, 1.0
    %v11363 = vadd.f32 %v11299, 1.0
    %v11364 = vadd.f32 %v11300, 1.0
    %v11365 = vadd.f32 %v11301, 1.0
    %v11366 = vadd.f32 %v11302, 1.0
    %v11367 = vadd.f32 %v11303, 1.0
    %v11368 = vadd.f32 %v11304, 1.0
    %v11369 = vadd.f32 %v11305, 1.0
    %v11370 = vadd.f32 %v11306, 1.0
    %v11371 = vadd.f32 %v11307, 1.0
    %v11372 = vadd.f32 %v11308, 1.0
    %v11373 = vadd.f32 %v11309, 1.0
    %v11374 = vadd.f32 %v11310, 1.0
    %v11375 = vadd.f32 %v11311, 1.0
    %v11376 = vadd.f32 %v11312, 1.0
    %v11377 = vadd.f32 %v11313, 1.0
    %v11378 = vadd.f32 %v11314, 1.0
    %v11379 = vadd.f32 %v11315, 1.0
    %v11380 = vadd.f32 %v11316, 1.0
    %v11381 = vadd.f32 %v11317, 1.0
    %v11382 = vadd.f32 %v11318, 1.0
    %v11383 = vadd.f32 %v11319, 1.0
    %v11384 = vadd.f32 %v11320, 1.0
    %v11385 = vadd.f32 %v11321, 1.0
    %v11386 = vadd.f32 %v11322, 1.0
    %v11387 = vadd.f32 %v11323, 1.0
    %v11388 = vadd.f32 %v11324, 1.0
    %v11389 = vadd.f32 %v11325, 1.0
    %v11390 = vadd.f32 %v11326, 1.0
    %v11391 = vadd.f32 %v11327, 1.0
    %v11392 = vadd.f32 %v11328, 1.0
    %v11393 = vadd.f32 %v11329, 1.0
    %v11394 = vadd.f32 %v11330, 1.0
    %v11395 = vadd.f32 %v11331, 1.0
    %v11396 = vadd.f32 %v11332, 1.0
    %v11397 = vadd.f32 %v11333, 1.0
    %v11398 = vadd.f32 %v11334, 1.0
    %v11399 = vadd.f32 %v11335, 1.0
    %v11400 = vadd.f32 %v11336, 1.0
    %v11401 = vadd.f32 %v11337, 1.0
    %v11402 = vadd.f32 %v11338, 1.0
    %v11403 = vadd.f32 %v11339, 1.0
    %v11404 = vadd.f32 %v11340, 1.0
    %v11405 = vadd.f32 %v11341, 1.0
    %v11406 = vadd.f32 %v11342, 1.0
    %v11407 = vmul.f32 %v11215, %v11343
    %v11408 = vmul.f32 %v11216, %v11344
    %v11409 = vmul.f32 %v11217, %v11345
    %v11410 = vmul.f32 %v11218, %v11346
    %v11411 = vmul.f32 %v11219, %v11347
    %v11412 = vmul.f32 %v11220, %v11348
    %v11413 = vmul.f32 %v11221, %v11349
    %v11414 = vmul.f32 %v11222, %v11350
    %v11415 = vmul.f32 %v11223, %v11351
    %v11416 = vmul.f32 %v11224, %v11352
    %v11417 = vmul.f32 %v11225, %v11353
    %v11418 = vmul.f32 %v11226, %v11354
    %v11419 = vmul.f32 %v11227, %v11355
    %v11420 = vmul.f32 %v11228, %v11356
    %v11421 = vmul.f32 %v11229, %v11357
    %v11422 = vmul.f32 %v11230, %v11358
    %v11423 = vmul.f32 %v11231, %v11359
    %v11424 = vmul.f32 %v11232, %v11360
    %v11425 = vmul.f32 %v11233, %v11361
    %v11426 = vmul.f32 %v11234, %v11362
    %v11427 = vmul.f32 %v11235, %v11363
    %v11428 = vmul.f32 %v11236, %v11364
    %v11429 = vmul.f32 %v11237, %v11365
    %v11430 = vmul.f32 %v11238, %v11366
    %v11431 = vmul.f32 %v11239, %v11367
    %v11432 = vmul.f32 %v11240, %v11368
    %v11433 = vmul.f32 %v11241, %v11369
    %v11434 = vmul.f32 %v11242, %v11370
    %v11435 = vmul.f32 %v11243, %v11371
    %v11436 = vmul.f32 %v11244, %v11372
    %v11437 = vmul.f32 %v11245, %v11373
    %v11438 = vmul.f32 %v11246, %v11374
    %v11439 = vmul.f32 %v11247, %v11375
    %v11440 = vmul.f32 %v11248, %v11376
    %v11441 = vmul.f32 %v11249, %v11377
    %v11442 = vmul.f32 %v11250, %v11378
    %v11443 = vmul.f32 %v11251, %v11379
    %v11444 = vmul.f32 %v11252, %v11380
    %v11445 = vmul.f32 %v11253, %v11381
    %v11446 = vmul.f32 %v11254, %v11382
    %v11447 = vmul.f32 %v11255, %v11383
    %v11448 = vmul.f32 %v11256, %v11384
    %v11449 = vmul.f32 %v11257, %v11385
    %v11450 = vmul.f32 %v11258, %v11386
    %v11451 = vmul.f32 %v11259, %v11387
    %v11452 = vmul.f32 %v11260, %v11388
    %v11453 = vmul.f32 %v11261, %v11389
    %v11454 = vmul.f32 %v11262, %v11390
    %v11455 = vmul.f32 %v11263, %v11391
    %v11456 = vmul.f32 %v11264, %v11392
    %v11457 = vmul.f32 %v11265, %v11393
    %v11458 = vmul.f32 %v11266, %v11394
    %v11459 = vmul.f32 %v11267, %v11395
    %v11460 = vmul.f32 %v11268, %v11396
    %v11461 = vmul.f32 %v11269, %v11397
    %v11462 = vmul.f32 %v11270, %v11398
    %v11463 = vmul.f32 %v11271, %v11399
    %v11464 = vmul.f32 %v11272, %v11400
    %v11465 = vmul.f32 %v11273, %v11401
    %v11466 = vmul.f32 %v11274, %v11402
    %v11467 = vmul.f32 %v11275, %v11403
    %v11468 = vmul.f32 %v11276, %v11404
    %v11469 = vmul.f32 %v11277, %v11405
    %v11470 = vmul.f32 %v11278, %v11406
    %v11471 = vpack.c.bf16 %v11408, %v11407
    %v11472 = vpack.c.bf16 %v11410, %v11409
    %v11473 = vpack.c.bf16 %v11412, %v11411
    %v11474 = vpack.c.bf16 %v11414, %v11413
    %v11475 = vpack.c.bf16 %v11416, %v11415
    %v11476 = vpack.c.bf16 %v11418, %v11417
    %v11477 = vpack.c.bf16 %v11420, %v11419
    %v11478 = vpack.c.bf16 %v11422, %v11421
    %v11479 = vpack.c.bf16 %v11424, %v11423
    %v11480 = vpack.c.bf16 %v11426, %v11425
    %v11481 = vpack.c.bf16 %v11428, %v11427
    %v11482 = vpack.c.bf16 %v11430, %v11429
    %v11483 = vpack.c.bf16 %v11432, %v11431
    %v11484 = vpack.c.bf16 %v11434, %v11433
    %v11485 = vpack.c.bf16 %v11436, %v11435
    %v11486 = vpack.c.bf16 %v11438, %v11437
    %v11487 = vpack.c.bf16 %v11440, %v11439
    %v11488 = vpack.c.bf16 %v11442, %v11441
    %v11489 = vpack.c.bf16 %v11444, %v11443
    %v11490 = vpack.c.bf16 %v11446, %v11445
    %v11491 = vpack.c.bf16 %v11448, %v11447
    %v11492 = vpack.c.bf16 %v11450, %v11449
    %v11493 = vpack.c.bf16 %v11452, %v11451
    %v11494 = vpack.c.bf16 %v11454, %v11453
    %v11495 = vpack.c.bf16 %v11456, %v11455
    %v11496 = vpack.c.bf16 %v11458, %v11457
    %v11497 = vpack.c.bf16 %v11460, %v11459
    %v11498 = vpack.c.bf16 %v11462, %v11461
    %v11499 = vpack.c.bf16 %v11464, %v11463
    %v11500 = vpack.c.bf16 %v11466, %v11465
    %v11501 = vpack.c.bf16 %v11468, %v11467
    %v11502 = vpack.c.bf16 %v11470, %v11469
    %v11503 = vld [vmem:[%s5] sm:$0xf]
    %v11504 = vld [vmem:[%s5 + $0x4] sm:$0xf]
    %v11505 = vld [vmem:[%s5 + $0x8] sm:$0xf]
    %v11506 = vld [vmem:[%s5 + $0xc] sm:$0xf]
    %v11507 = vld [vmem:[%s6] sm:$0x1]
    %v11509 = vlaneseq
    %v11510 = vshrl.u32 %v11509, 7
    %v11511 = vsub.s32 0, %v11510
    %v11512 = vrot.slane %v11507, %v11511
    %v11518 = vunpack.c.l.b16 %v11503
    %v11519 = vunpack.c.l.b16 %v11504
    %v11520 = vunpack.c.l.b16 %v11505
    %v11521 = vunpack.c.l.b16 %v11506
    %v11522 = vpack.c.b16 %v11519, %v11518
    %v11523 = vpack.c.b16 %v11521, %v11520
    %v11527 = vsel %vm3262, %v11471, 0
    %v11530 = vsel %vm3262, %v11472, 0
    %v11533 = vsel %vm3262, %v11473, 0
    %v11536 = vsel %vm3262, %v11474, 0
    %v11539 = vsel %vm3262, %v11475, 0
    %v11542 = vsel %vm3262, %v11476, 0
    %v11545 = vsel %vm3262, %v11477, 0
    %v11548 = vsel %vm3262, %v11478, 0
    %v11551 = vsel %vm3262, %v11479, 0
    %v11554 = vsel %vm3262, %v11480, 0
    %v11557 = vsel %vm3262, %v11481, 0
    %v11560 = vsel %vm3262, %v11482, 0
    %v11563 = vsel %vm3262, %v11483, 0
    %v11566 = vsel %vm3262, %v11484, 0
    %v11569 = vsel %vm3262, %v11485, 0
    %v11572 = vsel %vm3262, %v11486, 0
    %v11575 = vsel %vm3262, %v11487, 0
    %v11578 = vsel %vm3262, %v11488, 0
    %v11581 = vsel %vm3262, %v11489, 0
    %v11584 = vsel %vm3262, %v11490, 0
    %v11587 = vsel %vm3262, %v11491, 0
    %v11590 = vsel %vm3262, %v11492, 0
    %v11593 = vsel %vm3262, %v11493, 0
    %v11596 = vsel %vm3262, %v11494, 0
    %v11599 = vsel %vm3262, %v11495, 0
    %v11602 = vsel %vm3262, %v11496, 0
    %v11605 = vsel %vm3262, %v11497, 0
    %v11608 = vsel %vm3262, %v11498, 0
    %v11611 = vsel %vm3262, %v11499, 0
    %v11614 = vsel %vm3262, %v11500, 0
    %v11617 = vsel %vm3262, %v11501, 0
    %v11620 = vsel %vm3262, %v11502, 0
    %11622 = vmatprep.subr.bf16.mxu0 0
    %11623 = vmatpush1.bf16.msra.mxu0 %v11522
    %11624 = vmatprep.subr.bf16.mxu0 0
    %11625 = vmatpush1.bf16.msra.mxu0 %v11523
    %11626 = vmatprep.subr.bf16.mxu0 0
    %11627 = vmatpush1.bf16.msra.mxu0 0
    %11628 = vmatprep.subr.bf16.mxu0 0
    %11629 = vmatpush1.bf16.msra.mxu0 0
    %11630 = vmatprep.subr.bf16.mxu0 0
    %11631 = vmatpush1.bf16.msra.mxu0 0
    %11632 = vmatprep.subr.bf16.mxu0 0
    %11633 = vmatpush1.bf16.msra.mxu0 0
    %11634 = vmatprep.subr.bf16.mxu0 0
    %11635 = vmatpush1.bf16.msra.mxu0 0
    %11636 = vmatprep.subr.bf16.mxu0 0
    %11637 = vmatpush1.bf16.msra.mxu0 0
    %11638 = vmatprep.subr.bf16.mxu0 0
    %11639 = vmatpush1.bf16.msra.mxu0 0
    %11640 = vmatprep.subr.bf16.mxu0 0
    %11641 = vmatpush1.bf16.msra.mxu0 0
    %11642 = vmatprep.subr.bf16.mxu0 0
    %11643 = vmatpush1.bf16.msra.mxu0 0
    %11644 = vmatprep.subr.bf16.mxu0 0
    %11645 = vmatpush1.bf16.msra.mxu0 0
    %11646 = vmatprep.subr.bf16.mxu0 0
    %11647 = vmatpush1.bf16.msra.mxu0 0
    %11648 = vmatprep.subr.bf16.mxu0 0
    %11649 = vmatpush1.bf16.msra.mxu0 0
    %11650 = vmatprep.subr.bf16.mxu0 0
    %11651 = vmatpush1.bf16.msra.mxu0 0
    %11652 = vmatprep.subr.bf16.mxu0 0
    %11653 = vmatpush1.bf16.msra.mxu0 0
    %11654 = vmatprep.mubr.bf16.mxu0 0
    %11655 = vmatmul.mubr.bf16.gmra.mrb[0].mxu0 %v11527
    %v11656 = vpop.f32.mrb[0].mxu0
    %v11657 = vadd.f32 %v11512, %v11656
    %v11658 = vpop.f32.mrb[0].mxu0
    %v11659 = vpop.f32.mrb[0].mxu0
    %v11660 = vadd.f32 %v11512, %v11659
    %v11661 = vpop.f32.mrb[0].mxu0
    %11662 = vmatprep.mubr.bf16.mxu0 0
    %11663 = vmatmul.mubr.bf16.gmra.mrb[0].mxu0 %v11530
    %v11664 = vpop.f32.mrb[0].mxu0
    %v11665 = vadd.f32 %v11512, %v11664
    %v11666 = vpop.f32.mrb[0].mxu0
    %v11667 = vpop.f32.mrb[0].mxu0
    %v11668 = vadd.f32 %v11512, %v11667
    %v11669 = vpop.f32.mrb[0].mxu0
    %11670 = vmatprep.mubr.bf16.mxu0 0
    %11671 = vmatmul.mubr.bf16.gmra.mrb[0].mxu0 %v11533
    %v11672 = vpop.f32.mrb[0].mxu0
    %v11673 = vadd.f32 %v11512, %v11672
    %v11674 = vpop.f32.mrb[0].mxu0
    %v11675 = vpop.f32.mrb[0].mxu0
    %v11676 = vadd.f32 %v11512, %v11675
    %v11677 = vpop.f32.mrb[0].mxu0
    %11678 = vmatprep.mubr.bf16.mxu0 0
    %11679 = vmatmul.mubr.bf16.gmra.mrb[0].mxu0 %v11536
    %v11680 = vpop.f32.mrb[0].mxu0
    %v11681 = vadd.f32 %v11512, %v11680
    %v11682 = vpop.f32.mrb[0].mxu0
    %v11683 = vpop.f32.mrb[0].mxu0
    %v11684 = vadd.f32 %v11512, %v11683
    %v11685 = vpop.f32.mrb[0].mxu0
    %11686 = vmatprep.mubr.bf16.mxu0 0
    %11687 = vmatmul.mubr.bf16.gmra.mrb[0].mxu0 %v11539
    %v11688 = vpop.f32.mrb[0].mxu0
    %v11689 = vadd.f32 %v11512, %v11688
    %v11690 = vpop.f32.mrb[0].mxu0
    %v11691 = vpop.f32.mrb[0].mxu0
    %v11692 = vadd.f32 %v11512, %v11691
    %v11693 = vpop.f32.mrb[0].mxu0
    %11694 = vmatprep.mubr.bf16.mxu0 0
    %11695 = vmatmul.mubr.bf16.gmra.mrb[0].mxu0 %v11542
    %v11696 = vpop.f32.mrb[0].mxu0
    %v11697 = vadd.f32 %v11512, %v11696
    %v11698 = vpop.f32.mrb[0].mxu0
    %v11699 = vpop.f32.mrb[0].mxu0
    %v11700 = vadd.f32 %v11512, %v11699
    %v11701 = vpop.f32.mrb[0].mxu0
    %11702 = vmatprep.mubr.bf16.mxu0 0
    %11703 = vmatmul.mubr.bf16.gmra.mrb[0].mxu0 %v11545
    %v11704 = vpop.f32.mrb[0].mxu0
    %v11705 = vadd.f32 %v11512, %v11704
    %v11706 = vpop.f32.mrb[0].mxu0
    %v11707 = vpop.f32.mrb[0].mxu0
    %v11708 = vadd.f32 %v11512, %v11707
    %v11709 = vpop.f32.mrb[0].mxu0
    %11710 = vmatprep.mubr.bf16.mxu0 0
    %11711 = vmatmul.mubr.bf16.gmra.mrb[0].mxu0 %v11548
    %v11712 = vpop.f32.mrb[0].mxu0
    %v11713 = vadd.f32 %v11512, %v11712
    %v11714 = vpop.f32.mrb[0].mxu0
    %v11715 = vpop.f32.mrb[0].mxu0
    %v11716 = vadd.f32 %v11512, %v11715
    %v11717 = vpop.f32.mrb[0].mxu0
    %11718 = vmatprep.mubr.bf16.mxu0 0
    %11719 = vmatmul.mubr.bf16.gmra.mrb[0].mxu0 %v11551
    %v11720 = vpop.f32.mrb[0].mxu0
    %v11721 = vadd.f32 %v11512, %v11720
    %v11722 = vpop.f32.mrb[0].mxu0
    %v11723 = vpop.f32.mrb[0].mxu0
    %v11724 = vadd.f32 %v11512, %v11723
    %v11725 = vpop.f32.mrb[0].mxu0
    %11726 = vmatprep.mubr.bf16.mxu0 0
    %11727 = vmatmul.mubr.bf16.gmra.mrb[0].mxu0 %v11554
    %v11728 = vpop.f32.mrb[0].mxu0
    %v11729 = vadd.f32 %v11512, %v11728
    %v11730 = vpop.f32.mrb[0].mxu0
    %v11731 = vpop.f32.mrb[0].mxu0
    %v11732 = vadd.f32 %v11512, %v11731
    %v11733 = vpop.f32.mrb[0].mxu0
    %11734 = vmatprep.mubr.bf16.mxu0 0
    %11735 = vmatmul.mubr.bf16.gmra.mrb[0].mxu0 %v11557
    %v11736 = vpop.f32.mrb[0].mxu0
    %v11737 = vadd.f32 %v11512, %v11736
    %v11738 = vpop.f32.mrb[0].mxu0
    %v11739 = vpop.f32.mrb[0].mxu0
    %v11740 = vadd.f32 %v11512, %v11739
    %v11741 = vpop.f32.mrb[0].mxu0
    %11742 = vmatprep.mubr.bf16.mxu0 0
    %11743 = vmatmul.mubr.bf16.gmra.mrb[0].mxu0 %v11560
    %v11744 = vpop.f32.mrb[0].mxu0
    %v11745 = vadd.f32 %v11512, %v11744
    %v11746 = vpop.f32.mrb[0].mxu0
    %v11747 = vpop.f32.mrb[0].mxu0
    %v11748 = vadd.f32 %v11512, %v11747
    %v11749 = vpop.f32.mrb[0].mxu0
    %11750 = vmatprep.mubr.bf16.mxu0 0
    %11751 = vmatmul.mubr.bf16.gmra.mrb[0].mxu0 %v11563
    %v11752 = vpop.f32.mrb[0].mxu0
    %v11753 = vadd.f32 %v11512, %v11752
    %v11754 = vpop.f32.mrb[0].mxu0
    %v11755 = vpop.f32.mrb[0].mxu0
    %v11756 = vadd.f32 %v11512, %v11755
    %v11757 = vpop.f32.mrb[0].mxu0
    %11758 = vmatprep.mubr.bf16.mxu0 0
    %11759 = vmatmul.mubr.bf16.gmra.mrb[0].mxu0 %v11566
    %v11760 = vpop.f32.mrb[0].mxu0
    %v11761 = vadd.f32 %v11512, %v11760
    %v11762 = vpop.f32.mrb[0].mxu0
    %v11763 = vpop.f32.mrb[0].mxu0
    %v11764 = vadd.f32 %v11512, %v11763
    %v11765 = vpop.f32.mrb[0].mxu0
    %11766 = vmatprep.mubr.bf16.mxu0 0
    %11767 = vmatmul.mubr.bf16.gmra.mrb[0].mxu0 %v11569
    %v11768 = vpop.f32.mrb[0].mxu0
    %v11769 = vadd.f32 %v11512, %v11768
    %v11770 = vpop.f32.mrb[0].mxu0
    %v11771 = vpop.f32.mrb[0].mxu0
    %v11772 = vadd.f32 %v11512, %v11771
    %v11773 = vpop.f32.mrb[0].mxu0
    %11774 = vmatprep.mubr.bf16.mxu0 0
    %11775 = vmatmul.mubr.bf16.gmra.mrb[0].mxu0 %v11572
    %v11776 = vpop.f32.mrb[0].mxu0
    %v11777 = vadd.f32 %v11512, %v11776
    %v11778 = vpop.f32.mrb[0].mxu0
    %v11779 = vpop.f32.mrb[0].mxu0
    %v11780 = vadd.f32 %v11512, %v11779
    %v11781 = vpop.f32.mrb[0].mxu0
    %11782 = vmatprep.mubr.bf16.mxu0 0
    %11783 = vmatmul.mubr.bf16.gmra.mrb[0].mxu0 %v11575
    %v11784 = vpop.f32.mrb[0].mxu0
    %v11785 = vadd.f32 %v11512, %v11784
    %v11786 = vpop.f32.mrb[0].mxu0
    %v11787 = vpop.f32.mrb[0].mxu0
    %v11788 = vadd.f32 %v11512, %v11787
    %v11789 = vpop.f32.mrb[0].mxu0
    %11790 = vmatprep.mubr.bf16.mxu0 0
    %11791 = vmatmul.mubr.bf16.gmra.mrb[0].mxu0 %v11578
    %v11792 = vpop.f32.mrb[0].mxu0
    %v11793 = vadd.f32 %v11512, %v11792
    %v11794 = vpop.f32.mrb[0].mxu0
    %v11795 = vpop.f32.mrb[0].mxu0
    %v11796 = vadd.f32 %v11512, %v11795
    %v11797 = vpop.f32.mrb[0].mxu0
    %11798 = vmatprep.mubr.bf16.mxu0 0
    %11799 = vmatmul.mubr.bf16.gmra.mrb[0].mxu0 %v11581
    %v11800 = vpop.f32.mrb[0].mxu0
    %v11801 = vadd.f32 %v11512, %v11800
    %v11802 = vpop.f32.mrb[0].mxu0
    %v11803 = vpop.f32.mrb[0].mxu0
    %v11804 = vadd.f32 %v11512, %v11803
    %v11805 = vpop.f32.mrb[0].mxu0
    %11806 = vmatprep.mubr.bf16.mxu0 0
    %11807 = vmatmul.mubr.bf16.gmra.mrb[0].mxu0 %v11584
    %v11808 = vpop.f32.mrb[0].mxu0
    %v11809 = vadd.f32 %v11512, %v11808
    %v11810 = vpop.f32.mrb[0].mxu0
    %v11811 = vpop.f32.mrb[0].mxu0
    %v11812 = vadd.f32 %v11512, %v11811
    %v11813 = vpop.f32.mrb[0].mxu0
    %11814 = vmatprep.mubr.bf16.mxu0 0
    %11815 = vmatmul.mubr.bf16.gmra.mrb[0].mxu0 %v11587
    %v11816 = vpop.f32.mrb[0].mxu0
    %v11817 = vadd.f32 %v11512, %v11816
    %v11818 = vpop.f32.mrb[0].mxu0
    %v11819 = vpop.f32.mrb[0].mxu0
    %v11820 = vadd.f32 %v11512, %v11819
    %v11821 = vpop.f32.mrb[0].mxu0
    %11822 = vmatprep.mubr.bf16.mxu0 0
    %11823 = vmatmul.mubr.bf16.gmra.mrb[0].mxu0 %v11590
    %v11824 = vpop.f32.mrb[0].mxu0
    %v11825 = vadd.f32 %v11512, %v11824
    %v11826 = vpop.f32.mrb[0].mxu0
    %v11827 = vpop.f32.mrb[0].mxu0
    %v11828 = vadd.f32 %v11512, %v11827
    %v11829 = vpop.f32.mrb[0].mxu0
    %11830 = vmatprep.mubr.bf16.mxu0 0
    %11831 = vmatmul.mubr.bf16.gmra.mrb[0].mxu0 %v11593
    %v11832 = vpop.f32.mrb[0].mxu0
    %v11833 = vadd.f32 %v11512, %v11832
    %v11834 = vpop.f32.mrb[0].mxu0
    %v11835 = vpop.f32.mrb[0].mxu0
    %v11836 = vadd.f32 %v11512, %v11835
    %v11837 = vpop.f32.mrb[0].mxu0
    %11838 = vmatprep.mubr.bf16.mxu0 0
    %11839 = vmatmul.mubr.bf16.gmra.mrb[0].mxu0 %v11596
    %v11840 = vpop.f32.mrb[0].mxu0
    %v11841 = vadd.f32 %v11512, %v11840
    %v11842 = vpop.f32.mrb[0].mxu0
    %v11843 = vpop.f32.mrb[0].mxu0
    %v11844 = vadd.f32 %v11512, %v11843
    %v11845 = vpop.f32.mrb[0].mxu0
    %11846 = vmatprep.mubr.bf16.mxu0 0
    %11847 = vmatmul.mubr.bf16.gmra.mrb[0].mxu0 %v11599
    %v11848 = vpop.f32.mrb[0].mxu0
    %v11849 = vadd.f32 %v11512, %v11848
    %v11850 = vpop.f32.mrb[0].mxu0
    %v11851 = vpop.f32.mrb[0].mxu0
    %v11852 = vadd.f32 %v11512, %v11851
    %v11853 = vpop.f32.mrb[0].mxu0
    %11854 = vmatprep.mubr.bf16.mxu0 0
    %11855 = vmatmul.mubr.bf16.gmra.mrb[0].mxu0 %v11602
    %v11856 = vpop.f32.mrb[0].mxu0
    %v11857 = vadd.f32 %v11512, %v11856
    %v11858 = vpop.f32.mrb[0].mxu0
    %v11859 = vpop.f32.mrb[0].mxu0
    %v11860 = vadd.f32 %v11512, %v11859
    %v11861 = vpop.f32.mrb[0].mxu0
    %11862 = vmatprep.mubr.bf16.mxu0 0
    %11863 = vmatmul.mubr.bf16.gmra.mrb[0].mxu0 %v11605
    %v11864 = vpop.f32.mrb[0].mxu0
    %v11865 = vadd.f32 %v11512, %v11864
    %v11866 = vpop.f32.mrb[0].mxu0
    %v11867 = vpop.f32.mrb[0].mxu0
    %v11868 = vadd.f32 %v11512, %v11867
    %v11869 = vpop.f32.mrb[0].mxu0
    %11870 = vmatprep.mubr.bf16.mxu0 0
    %11871 = vmatmul.mubr.bf16.gmra.mrb[0].mxu0 %v11608
    %v11872 = vpop.f32.mrb[0].mxu0
    %v11873 = vadd.f32 %v11512, %v11872
    %v11874 = vpop.f32.mrb[0].mxu0
    %v11875 = vpop.f32.mrb[0].mxu0
    %v11876 = vadd.f32 %v11512, %v11875
    %v11877 = vpop.f32.mrb[0].mxu0
    %11878 = vmatprep.mubr.bf16.mxu0 0
    %11879 = vmatmul.mubr.bf16.gmra.mrb[0].mxu0 %v11611
    %v11880 = vpop.f32.mrb[0].mxu0
    %v11881 = vadd.f32 %v11512, %v11880
    %v11882 = vpop.f32.mrb[0].mxu0
    %v11883 = vpop.f32.mrb[0].mxu0
    %v11884 = vadd.f32 %v11512, %v11883
    %v11885 = vpop.f32.mrb[0].mxu0
    %11886 = vmatprep.mubr.bf16.mxu0 0
    %11887 = vmatmul.mubr.bf16.gmra.mrb[0].mxu0 %v11614
    %v11888 = vpop.f32.mrb[0].mxu0
    %v11889 = vadd.f32 %v11512, %v11888
    %v11890 = vpop.f32.mrb[0].mxu0
    %v11891 = vpop.f32.mrb[0].mxu0
    %v11892 = vadd.f32 %v11512, %v11891
    %v11893 = vpop.f32.mrb[0].mxu0
    %11894 = vmatprep.mubr.bf16.mxu0 0
    %11895 = vmatmul.mubr.bf16.gmra.mrb[0].mxu0 %v11617
    %v11896 = vpop.f32.mrb[0].mxu0
    %v11897 = vadd.f32 %v11512, %v11896
    %v11898 = vpop.f32.mrb[0].mxu0
    %v11899 = vpop.f32.mrb[0].mxu0
    %v11900 = vadd.f32 %v11512, %v11899
    %v11901 = vpop.f32.mrb[0].mxu0
    %11902 = vmatprep.mubr.bf16.mxu0 0
    %11903 = vmatmul.mubr.bf16.gmra.mrb[0].mxu0 %v11620
    %v11904 = vpop.f32.mrb[0].mxu0
    %v11905 = vadd.f32 %v11512, %v11904
    %v11906 = vpop.f32.mrb[0].mxu0
    %v11907 = vpop.f32.mrb[0].mxu0
    %v11908 = vadd.f32 %v11512, %v11907
    %v11909 = vpop.f32.mrb[0].mxu0
    %11910 = vdwg.mxu0
    %v11911 = vadd.f32 %v11657, %v408
    %v11912 = vadd.f32 %v11660, %v412
    %v11913 = vadd.f32 %v11665, %v418
    %v11914 = vadd.f32 %v11668, %v422
    %v11915 = vadd.f32 %v11673, %v428
    %v11916 = vadd.f32 %v11676, %v432
    %v11917 = vadd.f32 %v11681, %v438
    %v11918 = vadd.f32 %v11684, %v442
    %v11919 = vadd.f32 %v11689, %v448
    %v11920 = vadd.f32 %v11692, %v452
    %v11921 = vadd.f32 %v11697, %v458
    %v11922 = vadd.f32 %v11700, %v462
    %v11923 = vadd.f32 %v11705, %v468
    %v11924 = vadd.f32 %v11708, %v472
    %v11925 = vadd.f32 %v11713, %v478
    %v11926 = vadd.f32 %v11716, %v482
    %v11927 = vadd.f32 %v11721, %v488
    %v11928 = vadd.f32 %v11724, %v492
    %v11929 = vadd.f32 %v11729, %v498
    %v11930 = vadd.f32 %v11732, %v502
    %v11931 = vadd.f32 %v11737, %v508
    %v11932 = vadd.f32 %v11740, %v512
    %v11933 = vadd.f32 %v11745, %v518
    %v11934 = vadd.f32 %v11748, %v522
    %v11935 = vadd.f32 %v11753, %v528
    %v11936 = vadd.f32 %v11756, %v532
    %v11937 = vadd.f32 %v11761, %v538
    %v11938 = vadd.f32 %v11764, %v542
    %v11939 = vadd.f32 %v11769, %v548
    %v11940 = vadd.f32 %v11772, %v552
    %v11941 = vadd.f32 %v11777, %v558
    %v11942 = vadd.f32 %v11780, %v562
    %v11943 = vadd.f32 %v11785, %v568
    %v11944 = vadd.f32 %v11788, %v572
    %v11945 = vadd.f32 %v11793, %v578
    %v11946 = vadd.f32 %v11796, %v582
    %v11947 = vadd.f32 %v11801, %v588
    %v11948 = vadd.f32 %v11804, %v592
    %v11949 = vadd.f32 %v11809, %v598
    %v11950 = vadd.f32 %v11812, %v602
    %v11951 = vadd.f32 %v11817, %v608
    %v11952 = vadd.f32 %v11820, %v612
    %v11953 = vadd.f32 %v11825, %v618
    %v11954 = vadd.f32 %v11828, %v622
    %v11955 = vadd.f32 %v11833, %v628
    %v11956 = vadd.f32 %v11836, %v632
    %v11957 = vadd.f32 %v11841, %v638
    %v11958 = vadd.f32 %v11844, %v642
    %v11959 = vadd.f32 %v11849, %v648
    %v11960 = vadd.f32 %v11852, %v652
    %v11961 = vadd.f32 %v11857, %v658
    %v11962 = vadd.f32 %v11860, %v662
    %v11963 = vadd.f32 %v11865, %v668
    %v11964 = vadd.f32 %v11868, %v672
    %v11965 = vadd.f32 %v11873, %v678
    %v11966 = vadd.f32 %v11876, %v682
    %v11967 = vadd.f32 %v11881, %v688
    %v11968 = vadd.f32 %v11884, %v692
    %v11969 = vadd.f32 %v11889, %v698
    %v11970 = vadd.f32 %v11892, %v702
    %v11971 = vadd.f32 %v11897, %v708
    %v11972 = vadd.f32 %v11900, %v712
    %v11973 = vadd.f32 %v11905, %v718
    %v11974 = vadd.f32 %v11908, %v722
    %v11975 = vmax.f32 %v11911, 0.0
    %v11976 = vmax.f32 %v11912, 0.0
    %v11977 = vmax.f32 %v11913, 0.0
    %v11978 = vmax.f32 %v11914, 0.0
    %v11979 = vmax.f32 %v11915, 0.0
    %v11980 = vmax.f32 %v11916, 0.0
    %v11981 = vmax.f32 %v11917, 0.0
    %v11982 = vmax.f32 %v11918, 0.0
    %v11983 = vmax.f32 %v11919, 0.0
    %v11984 = vmax.f32 %v11920, 0.0
    %v11985 = vmax.f32 %v11921, 0.0
    %v11986 = vmax.f32 %v11922, 0.0
    %v11987 = vmax.f32 %v11923, 0.0
    %v11988 = vmax.f32 %v11924, 0.0
    %v11989 = vmax.f32 %v11925, 0.0
    %v11990 = vmax.f32 %v11926, 0.0
    %v11991 = vmax.f32 %v11927, 0.0
    %v11992 = vmax.f32 %v11928, 0.0
    %v11993 = vmax.f32 %v11929, 0.0
    %v11994 = vmax.f32 %v11930, 0.0
    %v11995 = vmax.f32 %v11931, 0.0
    %v11996 = vmax.f32 %v11932, 0.0
    %v11997 = vmax.f32 %v11933, 0.0
    %v11998 = vmax.f32 %v11934, 0.0
    %v11999 = vmax.f32 %v11935, 0.0
    %v12000 = vmax.f32 %v11936, 0.0
    %v12001 = vmax.f32 %v11937, 0.0
    %v12002 = vmax.f32 %v11938, 0.0
    %v12003 = vmax.f32 %v11939, 0.0
    %v12004 = vmax.f32 %v11940, 0.0
    %v12005 = vmax.f32 %v11941, 0.0
    %v12006 = vmax.f32 %v11942, 0.0
    %v12007 = vmax.f32 %v11943, 0.0
    %v12008 = vmax.f32 %v11944, 0.0
    %v12009 = vmax.f32 %v11945, 0.0
    %v12010 = vmax.f32 %v11946, 0.0
    %v12011 = vmax.f32 %v11947, 0.0
    %v12012 = vmax.f32 %v11948, 0.0
    %v12013 = vmax.f32 %v11949, 0.0
    %v12014 = vmax.f32 %v11950, 0.0
    %v12015 = vmax.f32 %v11951, 0.0
    %v12016 = vmax.f32 %v11952, 0.0
    %v12017 = vmax.f32 %v11953, 0.0
    %v12018 = vmax.f32 %v11954, 0.0
    %v12019 = vmax.f32 %v11955, 0.0
    %v12020 = vmax.f32 %v11956, 0.0
    %v12021 = vmax.f32 %v11957, 0.0
    %v12022 = vmax.f32 %v11958, 0.0
    %v12023 = vmax.f32 %v11959, 0.0
    %v12024 = vmax.f32 %v11960, 0.0
    %v12025 = vmax.f32 %v11961, 0.0
    %v12026 = vmax.f32 %v11962, 0.0
    %v12027 = vmax.f32 %v11963, 0.0
    %v12028 = vmax.f32 %v11964, 0.0
    %v12029 = vmax.f32 %v11965, 0.0
    %v12030 = vmax.f32 %v11966, 0.0
    %v12031 = vmax.f32 %v11967, 0.0
    %v12032 = vmax.f32 %v11968, 0.0
    %v12033 = vmax.f32 %v11969, 0.0
    %v12034 = vmax.f32 %v11970, 0.0
    %v12035 = vmax.f32 %v11971, 0.0
    %v12036 = vmax.f32 %v11972, 0.0
    %v12037 = vmax.f32 %v11973, 0.0
    %v12038 = vmax.f32 %v11974, 0.0
    %v12039 = vpack.c.bf16 %v11976, %v11975
    %v12040 = vpack.c.bf16 %v11978, %v11977
    %v12041 = vpack.c.bf16 %v11980, %v11979
    %v12042 = vpack.c.bf16 %v11982, %v11981
    %v12043 = vpack.c.bf16 %v11984, %v11983
    %v12044 = vpack.c.bf16 %v11986, %v11985
    %v12045 = vpack.c.bf16 %v11988, %v11987
    %v12046 = vpack.c.bf16 %v11990, %v11989
    %v12047 = vpack.c.bf16 %v11992, %v11991
    %v12048 = vpack.c.bf16 %v11994, %v11993
    %v12049 = vpack.c.bf16 %v11996, %v11995
    %v12050 = vpack.c.bf16 %v11998, %v11997
    %v12051 = vpack.c.bf16 %v12000, %v11999
    %v12052 = vpack.c.bf16 %v12002, %v12001
    %v12053 = vpack.c.bf16 %v12004, %v12003
    %v12054 = vpack.c.bf16 %v12006, %v12005
    %v12055 = vpack.c.bf16 %v12008, %v12007
    %v12056 = vpack.c.bf16 %v12010, %v12009
    %v12057 = vpack.c.bf16 %v12012, %v12011
    %v12058 = vpack.c.bf16 %v12014, %v12013
    %v12059 = vpack.c.bf16 %v12016, %v12015
    %v12060 = vpack.c.bf16 %v12018, %v12017
    %v12061 = vpack.c.bf16 %v12020, %v12019
    %v12062 = vpack.c.bf16 %v12022, %v12021
    %v12063 = vpack.c.bf16 %v12024, %v12023
    %v12064 = vpack.c.bf16 %v12026, %v12025
    %v12065 = vpack.c.bf16 %v12028, %v12027
    %v12066 = vpack.c.bf16 %v12030, %v12029
    %v12067 = vpack.c.bf16 %v12032, %v12031
    %v12068 = vpack.c.bf16 %v12034, %v12033
    %v12069 = vpack.c.bf16 %v12036, %v12035
    %v12070 = vpack.c.bf16 %v12038, %v12037
    %v12103 = vunpack.c.l.b16 %v12039
    %v12104 = vunpack.c.h.b16 %v12039
    %v12105 = vunpack.c.l.b16 %v12040
    %v12106 = vunpack.c.h.b16 %v12040
    %v12107 = vunpack.c.l.b16 %v12041
    %v12108 = vunpack.c.h.b16 %v12041
    %v12109 = vunpack.c.l.b16 %v12042
    %v12110 = vunpack.c.h.b16 %v12042
    %v12111 = vunpack.c.l.b16 %v12043
    %v12112 = vunpack.c.h.b16 %v12043
    %v12113 = vunpack.c.l.b16 %v12044
    %v12114 = vunpack.c.h.b16 %v12044
    %v12115 = vunpack.c.l.b16 %v12045
    %v12116 = vunpack.c.h.b16 %v12045
    %v12117 = vunpack.c.l.b16 %v12046
    %v12118 = vunpack.c.h.b16 %v12046
    %v12119 = vunpack.c.l.b16 %v12047
    %v12120 = vunpack.c.h.b16 %v12047
    %v12121 = vunpack.c.l.b16 %v12048
    %v12122 = vunpack.c.h.b16 %v12048
    %v12123 = vunpack.c.l.b16 %v12049
    %v12124 = vunpack.c.h.b16 %v12049
    %v12125 = vunpack.c.l.b16 %v12050
    %v12126 = vunpack.c.h.b16 %v12050
    %v12127 = vunpack.c.l.b16 %v12051
    %v12128 = vunpack.c.h.b16 %v12051
    %v12129 = vunpack.c.l.b16 %v12052
    %v12130 = vunpack.c.h.b16 %v12052
    %v12131 = vunpack.c.l.b16 %v12053
    %v12132 = vunpack.c.h.b16 %v12053
    %v12133 = vunpack.c.l.b16 %v12054
    %v12134 = vunpack.c.h.b16 %v12054
    %v12135 = vunpack.c.l.b16 %v12055
    %v12136 = vunpack.c.h.b16 %v12055
    %v12137 = vunpack.c.l.b16 %v12056
    %v12138 = vunpack.c.h.b16 %v12056
    %v12139 = vunpack.c.l.b16 %v12057
    %v12140 = vunpack.c.h.b16 %v12057
    %v12141 = vunpack.c.l.b16 %v12058
    %v12142 = vunpack.c.h.b16 %v12058
    %v12143 = vunpack.c.l.b16 %v12059
    %v12144 = vunpack.c.h.b16 %v12059
    %v12145 = vunpack.c.l.b16 %v12060
    %v12146 = vunpack.c.h.b16 %v12060
    %v12147 = vunpack.c.l.b16 %v12061
    %v12148 = vunpack.c.h.b16 %v12061
    %v12149 = vunpack.c.l.b16 %v12062
    %v12150 = vunpack.c.h.b16 %v12062
    %v12151 = vunpack.c.l.b16 %v12063
    %v12152 = vunpack.c.h.b16 %v12063
    %v12153 = vunpack.c.l.b16 %v12064
    %v12154 = vunpack.c.h.b16 %v12064
    %v12155 = vunpack.c.l.b16 %v12065
    %v12156 = vunpack.c.h.b16 %v12065
    %v12157 = vunpack.c.l.b16 %v12066
    %v12158 = vunpack.c.h.b16 %v12066
    %v12159 = vunpack.c.l.b16 %v12067
    %v12160 = vunpack.c.h.b16 %v12067
    %v12161 = vunpack.c.l.b16 %v12068
    %v12162 = vunpack.c.h.b16 %v12068
    %v12163 = vunpack.c.l.b16 %v12069
    %v12164 = vunpack.c.h.b16 %v12069
    %v12165 = vunpack.c.l.b16 %v12070
    %v12166 = vunpack.c.h.b16 %v12070
    %v12167 = vpack.c.b16 %v12103, %v12103
    %v12168 = vpack.c.b16 %v12104, %v12104
    %v12169 = vpack.c.b16 %v12105, %v12105
    %v12170 = vpack.c.b16 %v12106, %v12106
    %v12171 = vpack.c.b16 %v12107, %v12107
    %v12172 = vpack.c.b16 %v12108, %v12108
    %v12173 = vpack.c.b16 %v12109, %v12109
    %v12174 = vpack.c.b16 %v12110, %v12110
    %v12175 = vpack.c.b16 %v12111, %v12111
    %v12176 = vpack.c.b16 %v12112, %v12112
    %v12177 = vpack.c.b16 %v12113, %v12113
    %v12178 = vpack.c.b16 %v12114, %v12114
    %v12179 = vpack.c.b16 %v12115, %v12115
    %v12180 = vpack.c.b16 %v12116, %v12116
    %v12181 = vpack.c.b16 %v12117, %v12117
    %v12182 = vpack.c.b16 %v12118, %v12118
    %v12183 = vpack.c.b16 %v12119, %v12119
    %v12184 = vpack.c.b16 %v12120, %v12120
    %v12185 = vpack.c.b16 %v12121, %v12121
    %v12186 = vpack.c.b16 %v12122, %v12122
    %v12187 = vpack.c.b16 %v12123, %v12123
    %v12188 = vpack.c.b16 %v12124, %v12124
    %v12189 = vpack.c.b16 %v12125, %v12125
    %v12190 = vpack.c.b16 %v12126, %v12126
    %v12191 = vpack.c.b16 %v12127, %v12127
    %v12192 = vpack.c.b16 %v12128, %v12128
    %v12193 = vpack.c.b16 %v12129, %v12129
    %v12194 = vpack.c.b16 %v12130, %v12130
    %v12195 = vpack.c.b16 %v12131, %v12131
    %v12196 = vpack.c.b16 %v12132, %v12132
    %v12197 = vpack.c.b16 %v12133, %v12133
    %v12198 = vpack.c.b16 %v12134, %v12134
    %v12199 = vpack.c.b16 %v12135, %v12135
    %v12200 = vpack.c.b16 %v12136, %v12136
    %v12201 = vpack.c.b16 %v12137, %v12137
    %v12202 = vpack.c.b16 %v12138, %v12138
    %v12203 = vpack.c.b16 %v12139, %v12139
    %v12204 = vpack.c.b16 %v12140, %v12140
    %v12205 = vpack.c.b16 %v12141, %v12141
    %v12206 = vpack.c.b16 %v12142, %v12142
    %v12207 = vpack.c.b16 %v12143, %v12143
    %v12208 = vpack.c.b16 %v12144, %v12144
    %v12209 = vpack.c.b16 %v12145, %v12145
    %v12210 = vpack.c.b16 %v12146, %v12146
    %v12211 = vpack.c.b16 %v12147, %v12147
    %v12212 = vpack.c.b16 %v12148, %v12148
    %v12213 = vpack.c.b16 %v12149, %v12149
    %v12214 = vpack.c.b16 %v12150, %v12150
    %v12215 = vpack.c.b16 %v12151, %v12151
    %v12216 = vpack.c.b16 %v12152, %v12152
    %v12217 = vpack.c.b16 %v12153, %v12153
    %v12218 = vpack.c.b16 %v12154, %v12154
    %v12219 = vpack.c.b16 %v12155, %v12155
    %v12220 = vpack.c.b16 %v12156, %v12156
    %v12221 = vpack.c.b16 %v12157, %v12157
    %v12222 = vpack.c.b16 %v12158, %v12158
    %v12223 = vpack.c.b16 %v12159, %v12159
    %v12224 = vpack.c.b16 %v12160, %v12160
    %v12225 = vpack.c.b16 %v12161, %v12161
    %v12226 = vpack.c.b16 %v12162, %v12162
    %v12227 = vpack.c.b16 %v12163, %v12163
    %v12228 = vpack.c.b16 %v12164, %v12164
    %v12229 = vpack.c.b16 %v12165, %v12165
    %v12230 = vpack.c.b16 %v12166, %v12166
    %12295 = vst [vmem:[#allocation3] sm:$0xf] %v12167
    %12296 = vst [vmem:[#allocation3 + $0x4] sm:$0xf] %v12168
    %12297 = vst [vmem:[#allocation3 + $0x8] sm:$0xf] %v12169
    %12298 = vst [vmem:[#allocation3 + $0xc] sm:$0xf] %v12170
    %12299 = vst [vmem:[#allocation3 + $0x10] sm:$0xf] %v12171
    %12300 = vst [vmem:[#allocation3 + $0x14] sm:$0xf] %v12172
    %12301 = vst [vmem:[#allocation3 + $0x18] sm:$0xf] %v12173
    %12302 = vst [vmem:[#allocation3 + $0x1c] sm:$0xf] %v12174
    %12303 = vst [vmem:[#allocation3 + $0x20] sm:$0xf] %v12175
    %12304 = vst [vmem:[#allocation3 + $0x24] sm:$0xf] %v12176
    %12305 = vst [vmem:[#allocation3 + $0x28] sm:$0xf] %v12177
    %12306 = vst [vmem:[#allocation3 + $0x2c] sm:$0xf] %v12178
    %12307 = vst [vmem:[#allocation3 + $0x30] sm:$0xf] %v12179
    %12308 = vst [vmem:[#allocation3 + $0x34] sm:$0xf] %v12180
    %12309 = vst [vmem:[#allocation3 + $0x38] sm:$0xf] %v12181
    %12310 = vst [vmem:[#allocation3 + $0x3c] sm:$0xf] %v12182
    %12311 = vst [vmem:[#allocation3 + $0x40] sm:$0xf] %v12183
    %12312 = vst [vmem:[#allocation3 + $0x44] sm:$0xf] %v12184
    %12313 = vst [vmem:[#allocation3 + $0x48] sm:$0xf] %v12185
    %12314 = vst [vmem:[#allocation3 + $0x4c] sm:$0xf] %v12186
    %12315 = vst [vmem:[#allocation3 + $0x50] sm:$0xf] %v12187
    %12316 = vst [vmem:[#allocation3 + $0x54] sm:$0xf] %v12188
    %12317 = vst [vmem:[#allocation3 + $0x58] sm:$0xf] %v12189
    %12318 = vst [vmem:[#allocation3 + $0x5c] sm:$0xf] %v12190
    %12319 = vst [vmem:[#allocation3 + $0x60] sm:$0xf] %v12191
    %12320 = vst [vmem:[#allocation3 + $0x64] sm:$0xf] %v12192
    %12321 = vst [vmem:[#allocation3 + $0x68] sm:$0xf] %v12193
    %12322 = vst [vmem:[#allocation3 + $0x6c] sm:$0xf] %v12194
    %12323 = vst [vmem:[#allocation3 + $0x70] sm:$0xf] %v12195
    %12324 = vst [vmem:[#allocation3 + $0x74] sm:$0xf] %v12196
    %12325 = vst [vmem:[#allocation3 + $0x78] sm:$0xf] %v12197
    %12326 = vst [vmem:[#allocation3 + $0x7c] sm:$0xf] %v12198
    %12327 = vst [vmem:[#allocation3 + $0x80] sm:$0xf] %v12199
    %12328 = vst [vmem:[#allocation3 + $0x84] sm:$0xf] %v12200
    %12329 = vst [vmem:[#allocation3 + $0x88] sm:$0xf] %v12201
    %12330 = vst [vmem:[#allocation3 + $0x8c] sm:$0xf] %v12202
    %12331 = vst [vmem:[#allocation3 + $0x90] sm:$0xf] %v12203
    %12332 = vst [vmem:[#allocation3 + $0x94] sm:$0xf] %v12204
    %12333 = vst [vmem:[#allocation3 + $0x98] sm:$0xf] %v12205
    %12334 = vst [vmem:[#allocation3 + $0x9c] sm:$0xf] %v12206
    %12335 = vst [vmem:[#allocation3 + $0xa0] sm:$0xf] %v12207
    %12336 = vst [vmem:[#allocation3 + $0xa4] sm:$0xf] %v12208
    %12337 = vst [vmem:[#allocation3 + $0xa8] sm:$0xf] %v12209
    %12338 = vst [vmem:[#allocation3 + $0xac] sm:$0xf] %v12210
    %12339 = vst [vmem:[#allocation3 + $0xb0] sm:$0xf] %v12211
    %12340 = vst [vmem:[#allocation3 + $0xb4] sm:$0xf] %v12212
    %12341 = vst [vmem:[#allocation3 + $0xb8] sm:$0xf] %v12213
    %12342 = vst [vmem:[#allocation3 + $0xbc] sm:$0xf] %v12214
    %12343 = vst [vmem:[#allocation3 + $0xc0] sm:$0xf] %v12215
    %12344 = vst [vmem:[#allocation3 + $0xc4] sm:$0xf] %v12216
    %12345 = vst [vmem:[#allocation3 + $0xc8] sm:$0xf] %v12217
    %12346 = vst [vmem:[#allocation3 + $0xcc] sm:$0xf] %v12218
    %12347 = vst [vmem:[#allocation3 + $0xd0] sm:$0xf] %v12219
    %12348 = vst [vmem:[#allocation3 + $0xd4] sm:$0xf] %v12220
    %12349 = vst [vmem:[#allocation3 + $0xd8] sm:$0xf] %v12221
    %12350 = vst [vmem:[#allocation3 + $0xdc] sm:$0xf] %v12222
    %12351 = vst [vmem:[#allocation3 + $0xe0] sm:$0xf] %v12223
    %12352 = vst [vmem:[#allocation3 + $0xe4] sm:$0xf] %v12224
    %12353 = vst [vmem:[#allocation3 + $0xe8] sm:$0xf] %v12225
    %12354 = vst [vmem:[#allocation3 + $0xec] sm:$0xf] %v12226
    %12355 = vst [vmem:[#allocation3 + $0xf0] sm:$0xf] %v12227
    %12356 = vst [vmem:[#allocation3 + $0xf4] sm:$0xf] %v12228
    %12357 = vst [vmem:[#allocation3 + $0xf8] sm:$0xf] %v12229
    %12358 = vst [vmem:[#allocation3 + $0xfc] sm:$0xf] %v12230
    // Predicated region
    $region30: #{resnet_block_forward.1} parent=1 // pred_check
      _
    $region31: #{resnet_block_forward.1} parent=1 // pred_check_branch
      %12360 = sbr.rel (0) target = $region33
    $region32: #{resnet_block_forward.1} parent=1 // pred_region
      %s12362 = ssub.s32 4096, 4096
      %12363 = vsyncadd [#allocation4], %s12362
      %s12364 = sshll.u32 [#allocation3], 4
      %s12365 = int_to_ptr.vmem [resolvable:$true] %s12364
      %12370 = dma.vmem_to_hbm [thread:$0]  %s12365, 4096, %s7, [#allocation4], 64, 64, 4
    $region33: #{resnet_block_forward.1} parent=1 // pred_fallthru
      _
    // Predicated region
    $region34: #{resnet_block_forward.1} parent=1 // pred_check
      _
    $region35: #{resnet_block_forward.1} parent=1 // pred_check_branch
      %12372 = sbr.rel (0) target = $region37
    $region36: #{resnet_block_forward.1} parent=1 // pred_region
      %12373 = dma.done [#allocation4], 4096
    $region37: #{resnet_block_forward.1} parent=1 // pred_fallthru
      _
    %12374 = vsyncpa [#allocation4], 1

</llo_original>
